<compile_context>
chip_gen: v5e
topology: v5e:2x2
jax: 0.10.0
libtpu: 0.0.40
codegen_flags: <defaults>
</compile_context>

<pallas_src>
import functools

import jax
import jax.numpy as jnp
import numpy as np
from jax.experimental import pallas as pl
from jax.experimental.pallas import tpu as pltpu


def _aggregator_kernel(root_ref, ztime_ref, nnode_ref, nedge_ref, etime_ref,
                       wq_n_ref, wq_t_ref, bq_ref,
                       wk_n_ref, wk_e_ref, wk_t_ref, bk_ref,
                       wv_n_ref, wv_e_ref, wv_t_ref, bv_ref,
                       wo_n_ref, wo_r_ref, bo_ref,
                       gamma_ref, beta_ref, pool_ref, pool_t_ref,
                       out_ref, *, prod_in_bf16=False):
    f32, bf16 = jnp.float32, jnp.bfloat16
    bt = root_ref.shape[0]                    # roots in this grid step
    btn = nnode_ref.shape[0]                  # bt * N neighbor rows
    n = btn // bt
    d = wq_n_ref.shape[1]                     # dim_out

    # raw features -> bf16 in-register (no wrapper-side concat / astype copies)
    root = root_ref[...].astype(bf16)
    ztime = ztime_ref[...].astype(bf16)
    nnode = nnode_ref[...].astype(bf16)
    nedge = nedge_ref[...].astype(bf16)
    etime = etime_ref[...].astype(bf16)

    # --- projections: Linear(cat(...)) == sum of per-segment matmuls (f32 accumulate) -
    hq = (jnp.dot(root, wq_n_ref[...], preferred_element_type=f32)
          + jnp.dot(ztime, wq_t_ref[...], preferred_element_type=f32)
          + bq_ref[...])                                                     # [bt, D]
    hk = (jnp.dot(nnode, wk_n_ref[...], preferred_element_type=f32)
          + jnp.dot(nedge, wk_e_ref[...], preferred_element_type=f32)
          + jnp.dot(etime, wk_t_ref[...], preferred_element_type=f32)
          + bk_ref[...]).reshape(bt, n, d)                                   # [bt, N, D]
    hv = (jnp.dot(nnode, wv_n_ref[...], preferred_element_type=f32)
          + jnp.dot(nedge, wv_e_ref[...], preferred_element_type=f32)
          + jnp.dot(etime, wv_t_ref[...], preferred_element_type=f32)
          + bv_ref[...]).reshape(bt, n, d)                                   # [bt, N, D]

    # --- per-head scores: sum each head's dh lanes via 0/1 head-pooling matmul --------
    if prod_in_bf16:          # v6e / v7x: bf16 VALUs -> halve the largest VPU temp
        prod = hq.astype(bf16)[:, None, :] * hk.astype(bf16)
    else:                     # v5e: no bf16 VPU, keep the multiply in f32
        prod = hq[:, None, :] * hk
    att = jnp.dot(prod.reshape(btn, d).astype(bf16), pool_ref[...],
                  preferred_element_type=f32).reshape(bt, n, -1)             # [bt, N, H]
    att = jnp.where(att > 0, att, 0.2 * att)                                 # LeakyReLU(0.2)

    # softmax over the neighbor axis per (root, head); divide on the EUP
    att = att - jnp.max(att, axis=1, keepdims=True)
    e = jnp.exp(att)
    att = e * pl.reciprocal(jnp.sum(e, axis=1, keepdims=True), approx=True)  # [bt, N, H]
    # att_dropout(p=0.0) == identity

    # broadcast head weights over their dh lanes, aggregate neighbors
    # TODO(synk): compare against a VPU/XLU path (hv.reshape(bt,n,H,dh) * att[...,None])
    #             on v5e where the shallow (K=H) MXU matmul is least attractive.
    att_full = jnp.dot(att.reshape(btn, -1).astype(bf16), pool_t_ref[...],
                       preferred_element_type=f32).reshape(bt, n, d)         # [bt, N, D]
    h_neigh = jnp.sum(hv * att_full, axis=1)                                 # [bt, D]

    # --- w_out(cat([h_neigh, root])) as two matmuls (no in-kernel concat) -------------
    h = (jnp.dot(h_neigh.astype(bf16), wo_n_ref[...], preferred_element_type=f32)
         + jnp.dot(root, wo_r_ref[...], preferred_element_type=f32)
         + bo_ref[...])                                                      # [bt, D]
    # dropout(p=0.0) == identity
    h = jnp.maximum(h, 0.0)                                                  # ReLU

    # LayerNorm over the feature axis, eps = 1e-5 (torch default)
    mean = jnp.mean(h, axis=1, keepdims=True)
    var = jnp.mean((h - mean) ** 2, axis=1, keepdims=True)
    hn = (h - mean) * jax.lax.rsqrt(var + 1e-5)
    res = hn * gamma_ref[...] + beta_ref[...]
    # lane-dense store: `pack` roots per 128-lane output row when D < 128
    out_ref[...] = res.reshape(out_ref.shape).astype(out_ref.dtype)


def _tpu_config():
    """Generation-aware knobs: (working-set budget, vmem_limit_bytes, megacore?, bf16 VPU?)."""
    mib = 1 << 20
    kind = ""
    try:
        kind = jax.devices()[0].device_kind.lower()
    except Exception:
        pass
    vmem_cap = None
    try:
        vmem_cap = int(pltpu.get_tpu_info().vmem_capacity_bytes)
    except Exception:
        vmem_cap = None
    if vmem_cap is None:
        vmem_cap = 64 * mib if "7" in kind else 128 * mib
    is_v7 = vmem_cap <= 64 * mib or "7" in kind
    megacore = is_v7 or ("v4" in kind) or ("v5p" in kind) or ("v5 p" in kind)
    bf16_vpu = is_v7 or ("v6" in kind)            # v6e / v7x have bf16 VALUs; v5e does not
    if is_v7:
        budget, limit = 24 * mib, 32 * mib        # v7x: 64 MiB physical VMEM, stay tight
    else:
        budget, limit = 56 * mib, 96 * mib        # v5e / v6e: 128 MiB VMEM, big tiles / DMAs
    return budget, limit, megacore, bf16_vpu


def _choose_b_tile(B, N, dn, dt, de, D, H, pack, budget_bytes, megacore):
    """Roots per grid step.  Counts the full per-step VMEM working set (double-buffered
    f32 feature/output blocks, weight blocks, and the f32 attention intermediates),
    keeps it under the generation-aware budget, and returns the LARGEST fitting tile
    (fewest ~600-cycle grid steps, largest DMAs).  On megacore parts (v7x) it prefers
    tiles that give an even grid length so the 'parallel' axis uses both TensorCores."""
    f32, bf16 = 4, 2

    def step_bytes(bt):
        rows = bt * N
        feat = 2 * f32 * (bt * (dn + dt) + rows * (dn + de + dt))    # double-buffered inputs
        outb = 2 * f32 * bt * D                                      # double-buffered output
        wgt = 2 * (bf16 * ((dn + dt) * D + 2 * (dn + de + dt) * D    # conservative x2 even if
                           + D * D + dn * D + 2 * D * H)             # Buffered(1) is accepted
                   + f32 * 5 * D)
        inter = f32 * (4 * rows * D + 2 * rows * H + 4 * bt * D)     # hk/hv/prod/att_full/att/..
        return feat + outb + wgt + inter

    step = 8 * pack                     # (8,128) sublane rule + output row packing
    cands = sorted({t for t in range(step, B + 1, step) if B % t == 0} | {B})
    fits = [t for t in cands if step_bytes(t) <= budget_bytes] or [min(cands)]
    if megacore:
        even = [t for t in fits if (B // t) % 2 == 0]
        if even:
            fits = even
    return max(fits)


def transformer_aggregator(root_node_feature, zero_time_feat,
                           neighbor_node_feature, neighbor_edge_feature, edge_time_feat,
                           params, num_head):
    B, dn = root_node_feature.shape
    N = neighbor_node_feature.shape[0] // B
    dt = zero_time_feat.shape[1]
    de = neighbor_edge_feature.shape[1]
    D = params['w_q'].shape[1]
    H = num_head
    dh = D // H
    f32, bf16 = jnp.float32, jnp.bfloat16

    budget, vmem_limit, megacore, bf16_vpu = _tpu_config()

    # per-segment weight row blocks, split once at trace time (no in-kernel concat or
    # lane-boundary slices); matmul weights in bf16, biases / LN params in f32
    wq, wk, wv, wo = params['w_q'], params['w_k'], params['w_v'], params['w_out']
    wq_n, wq_t = wq[:dn].astype(bf16), wq[dn:].astype(bf16)
    wk_n, wk_e, wk_t = wk[:dn].astype(bf16), wk[dn:dn + de].astype(bf16), wk[dn + de:].astype(bf16)
    wv_n, wv_e, wv_t = wv[:dn].astype(bf16), wv[dn:dn + de].astype(bf16), wv[dn + de:].astype(bf16)
    wo_n, wo_r = wo[:D].astype(bf16), wo[D:].astype(bf16)   # [h_neigh | root] row order
    bq = params['b_q'][None, :].astype(f32)
    bk = params['b_k'][None, :].astype(f32)
    bv = params['b_v'][None, :].astype(f32)
    bo = params['b_out'][None, :].astype(f32)
    gamma = params['ln_gamma'][None, :].astype(f32)
    beta = params['ln_beta'][None, :].astype(f32)

    # 0/1 head-pooling matrix: pool[j, h] = 1 iff lane j belongs to head h (exact in bf16)
    pool = (jnp.arange(D)[:, None] // dh == jnp.arange(H)[None, :]).astype(bf16)   # [D, H]
    pool_t = pool.T                                                                 # [H, D]

    feats = [root_node_feature, zero_time_feat,
             neighbor_node_feature, neighbor_edge_feature, edge_time_feat]
    consts = [wq_n, wq_t, bq, wk_n, wk_e, wk_t, bk, wv_n, wv_e, wv_t, bv,
              wo_n, wo_r, bo, gamma, beta, pool, pool_t]

    # lane-dense output: pack `pack` roots per stored 128-lane row when D < 128
    pack_best = 1
    if D < 128 and 128 % D == 0 and B % (128 // D) == 0:
        pack_best = 128 // D

    kernel = functools.partial(_aggregator_kernel, prod_in_bf16=bf16_vpu)

    def build(pack, const_buffered):
        B_tile = _choose_b_tile(B, N, dn, dt, de, D, H, pack, budget, megacore)
        grid = (B // B_tile,)

        def feat_spec(rows_per_root, cols):
            return pl.BlockSpec((B_tile * rows_per_root, cols), lambda b: (b, 0))

        def const_spec(arr):
            if const_buffered:
                # grid-invariant block: single buffer, don't double-buffer constants
                return pl.BlockSpec(arr.shape, lambda b: (0, 0),
                                    pipeline_mode=pl.Buffered(1))
            return pl.BlockSpec(arr.shape, lambda b: (0, 0))

        in_specs = [feat_spec(1, dn), feat_spec(1, dt),
                    feat_spec(N, dn), feat_spec(N, de), feat_spec(N, dt)]
        in_specs += [const_spec(a) for a in consts]

        call = pl.pallas_call(
            kernel,
            out_shape=jax.ShapeDtypeStruct((B // pack, pack * D), jnp.float32),
            grid=grid,
            in_specs=in_specs,
            out_specs=pl.BlockSpec((B_tile // pack, pack * D), lambda b: (b, 0)),
            compiler_params=pltpu.CompilerParams(
                dimension_semantics=("parallel",),   # batch axis shards across v7x's 2 TCs
                vmem_limit_bytes=vmem_limit,
            ),
        )
        return call(*feats, *consts)

    # Prefer single-buffered constants + lane-dense packed output; fall back gracefully
    # if this Pallas/Mosaic build rejects Buffered(1) or the output-packing reshape.
    configs = list(dict.fromkeys(
        [(pack_best, True), (pack_best, False), (1, True), (1, False)]))
    last_err = None
    for pack, const_buffered in configs:
        try:
            out = build(pack, const_buffered)
            return out.reshape(B, D)
        except Exception as err:   # depends on installed jax / Mosaic feature set
            last_err = err
    raise last_err


def reference_forward(root, ztime, nnode, nedge, etime, params, num_head):
    """Pure-JAX (f32) reimplementation of the PyTorch forward for validation."""
    B = root.shape[0]
    D = params['w_q'].shape[1]
    dh = D // num_head
    hq = jnp.concatenate([root, ztime], axis=1) @ params['w_q'] + params['b_q']
    kv = jnp.concatenate([nnode, nedge, etime], axis=1)
    hk = kv @ params['w_k'] + params['b_k']
    hv = kv @ params['w_v'] + params['b_v']
    hq = hq.reshape(B, 1, num_head, dh)
    hk = hk.reshape(B, -1, num_head, dh)
    hv = hv.reshape(B, -1, num_head, dh)
    att = jnp.sum(hq * hk, axis=3)
    att = jnp.where(att > 0, att, 0.2 * att)
    att = jax.nn.softmax(att, axis=1)[..., None]
    h_neigh = (hv * att).sum(axis=1).reshape(B, -1)
    h = jnp.concatenate([h_neigh, root], axis=1) @ params['w_out'] + params['b_out']
    h = jnp.maximum(h, 0.0)
    mean = h.mean(-1, keepdims=True)
    var = ((h - mean) ** 2).mean(-1, keepdims=True)
    return (h - mean) / jnp.sqrt(var + 1e-5) * params['ln_gamma'] + params['ln_beta']


if __name__ == "__main__":
    # small shapes consistent with the module
    B, N = 64, 8
    dim_node_feat, dim_time, dim_edge_feat = 16, 8, 8
    dim_memory = 0                      # -> effective node dim is dim_node_feat
    dim_out, num_head = 32, 4

    dq = dim_node_feat + dim_time
    dkv = dim_node_feat + dim_edge_feat + dim_time

    key = jax.random.PRNGKey(0)
    ks = jax.random.split(key, 16)

    # deterministic synthetic parameters (weights stored as [in, out])
    params = {
        'w_q':   0.1 * jax.random.normal(ks[0], (dq, dim_out), jnp.float32),
        'b_q':   0.1 * jax.random.normal(ks[1], (dim_out,), jnp.float32),
        'w_k':   0.1 * jax.random.normal(ks[2], (dkv, dim_out), jnp.float32),
        'b_k':   0.1 * jax.random.normal(ks[3], (dim_out,), jnp.float32),
        'w_v':   0.1 * jax.random.normal(ks[4], (dkv, dim_out), jnp.float32),
        'b_v':   0.1 * jax.random.normal(ks[5], (dim_out,), jnp.float32),
        'w_out': 0.1 * jax.random.normal(ks[6], (dim_out + dim_node_feat, dim_out), jnp.float32),
        'b_out': 0.1 * jax.random.normal(ks[7], (dim_out,), jnp.float32),
        'ln_gamma': jnp.ones((dim_out,), jnp.float32),
        'ln_beta':  jnp.zeros((dim_out,), jnp.float32),
    }

    # deterministic synthetic inputs
    root_node_feature = jax.random.normal(ks[8], (B, dim_node_feat), jnp.float32)
    zero_time_feat = jax.random.normal(ks[9], (B, dim_time), jnp.float32)
    neighbor_node_feature = jax.random.normal(ks[10], (B * N, dim_node_feat), jnp.float32)
    neighbor_edge_feature = jax.random.normal(ks[11], (B * N, dim_edge_feat), jnp.float32)
    edge_time_feat = jax.random.normal(ks[12], (B * N, dim_time), jnp.float32)

    out = transformer_aggregator(root_node_feature, zero_time_feat,
                                 neighbor_node_feature, neighbor_edge_feature,
                                 edge_time_feat, params, num_head)
    out = jax.block_until_ready(out)

    ref = reference_forward(root_node_feature, zero_time_feat,
                            neighbor_node_feature, neighbor_edge_feature,
                            edge_time_feat, params, num_head)
    ref = jax.block_until_ready(ref)

    assert out.shape == (B, dim_out)
    # bf16 matmul operands + approx-EUP reciprocal vs. an all-f32 reference: tolerance
    # 5e-2 (values are LayerNorm-scaled, ~O(1)).
    np.testing.assert_allclose(np.asarray(out), np.asarray(ref), rtol=5e-2, atol=5e-2)
    print("KERNEL_OK")
</pallas_src>

<mosaic_0001>
module attributes {stable_mosaic.version = 11 : i64} {
  func.func @_aggregator_kernel(%arg0: i32, %arg1: memref<64x16xf32, #tpu.memory_space<vmem>>, %arg2: memref<64x8xf32, #tpu.memory_space<vmem>>, %arg3: memref<512x16xf32, #tpu.memory_space<vmem>>, %arg4: memref<512x8xf32, #tpu.memory_space<vmem>>, %arg5: memref<512x8xf32, #tpu.memory_space<vmem>>, %arg6: memref<16x32xbf16, #tpu.memory_space<vmem>>, %arg7: memref<8x32xbf16, #tpu.memory_space<vmem>>, %arg8: memref<1x32xf32, #tpu.memory_space<vmem>>, %arg9: memref<16x32xbf16, #tpu.memory_space<vmem>>, %arg10: memref<8x32xbf16, #tpu.memory_space<vmem>>, %arg11: memref<8x32xbf16, #tpu.memory_space<vmem>>, %arg12: memref<1x32xf32, #tpu.memory_space<vmem>>, %arg13: memref<16x32xbf16, #tpu.memory_space<vmem>>, %arg14: memref<8x32xbf16, #tpu.memory_space<vmem>>, %arg15: memref<8x32xbf16, #tpu.memory_space<vmem>>, %arg16: memref<1x32xf32, #tpu.memory_space<vmem>>, %arg17: memref<32x32xbf16, #tpu.memory_space<vmem>>, %arg18: memref<16x32xbf16, #tpu.memory_space<vmem>>, %arg19: memref<1x32xf32, #tpu.memory_space<vmem>>, %arg20: memref<1x32xf32, #tpu.memory_space<vmem>>, %arg21: memref<1x32xf32, #tpu.memory_space<vmem>>, %arg22: memref<32x4xbf16, #tpu.memory_space<vmem>>, %arg23: memref<4x32xbf16, #tpu.memory_space<vmem>>, %arg24: memref<16x128xf32, #tpu.memory_space<vmem>>) attributes {dimension_semantics = [#tpu.dimension_semantics<parallel>], iteration_bounds = array<i64: 1>, scalar_prefetch = 0 : i64, scratch_operands = 0 : i64, tpu.core_type = #tpu.core_type<tc>, window_params = [{transform_indices = @transform_0, window_bounds = array<i64: 64, 16>}, {transform_indices = @transform_1, window_bounds = array<i64: 64, 8>}, {transform_indices = @transform_2, window_bounds = array<i64: 512, 16>}, {transform_indices = @transform_3, window_bounds = array<i64: 512, 8>}, {transform_indices = @transform_4, window_bounds = array<i64: 512, 8>}, {pipeline_mode = #tpu.pipeline_mode<synchronous>, transform_indices = @transform_5, window_bounds = array<i64: 16, 32>}, {pipeline_mode = #tpu.pipeline_mode<synchronous>, transform_indices = @transform_6, window_bounds = array<i64: 8, 32>}, {pipeline_mode = #tpu.pipeline_mode<synchronous>, transform_indices = @transform_7, window_bounds = array<i64: 1, 32>}, {pipeline_mode = #tpu.pipeline_mode<synchronous>, transform_indices = @transform_8, window_bounds = array<i64: 16, 32>}, {pipeline_mode = #tpu.pipeline_mode<synchronous>, transform_indices = @transform_9, window_bounds = array<i64: 8, 32>}, {pipeline_mode = #tpu.pipeline_mode<synchronous>, transform_indices = @transform_10, window_bounds = array<i64: 8, 32>}, {pipeline_mode = #tpu.pipeline_mode<synchronous>, transform_indices = @transform_11, window_bounds = array<i64: 1, 32>}, {pipeline_mode = #tpu.pipeline_mode<synchronous>, transform_indices = @transform_12, window_bounds = array<i64: 16, 32>}, {pipeline_mode = #tpu.pipeline_mode<synchronous>, transform_indices = @transform_13, window_bounds = array<i64: 8, 32>}, {pipeline_mode = #tpu.pipeline_mode<synchronous>, transform_indices = @transform_14, window_bounds = array<i64: 8, 32>}, {pipeline_mode = #tpu.pipeline_mode<synchronous>, transform_indices = @transform_15, window_bounds = array<i64: 1, 32>}, {pipeline_mode = #tpu.pipeline_mode<synchronous>, transform_indices = @transform_16, window_bounds = array<i64: 32, 32>}, {pipeline_mode = #tpu.pipeline_mode<synchronous>, transform_indices = @transform_17, window_bounds = array<i64: 16, 32>}, {pipeline_mode = #tpu.pipeline_mode<synchronous>, transform_indices = @transform_18, window_bounds = array<i64: 1, 32>}, {pipeline_mode = #tpu.pipeline_mode<synchronous>, transform_indices = @transform_19, window_bounds = array<i64: 1, 32>}, {pipeline_mode = #tpu.pipeline_mode<synchronous>, transform_indices = @transform_20, window_bounds = array<i64: 1, 32>}, {pipeline_mode = #tpu.pipeline_mode<synchronous>, transform_indices = @transform_21, window_bounds = array<i64: 32, 4>}, {pipeline_mode = #tpu.pipeline_mode<synchronous>, transform_indices = @transform_22, window_bounds = array<i64: 4, 32>}, {transform_indices = @transform_23, window_bounds = array<i64: 16, 128>}]} {
    %c0 = arith.constant 0 : index
    %c0_0 = arith.constant 0 : index
    %0 = vector.load %arg1[%c0, %c0_0] : memref<64x16xf32, #tpu.memory_space<vmem>>, vector<64x16xf32>
    %1 = arith.truncf %0 : vector<64x16xf32> to vector<64x16xbf16>
    %c0_1 = arith.constant 0 : index
    %c0_2 = arith.constant 0 : index
    %2 = vector.load %arg2[%c0_1, %c0_2] : memref<64x8xf32, #tpu.memory_space<vmem>>, vector<64x8xf32>
    %3 = arith.truncf %2 : vector<64x8xf32> to vector<64x8xbf16>
    %c0_3 = arith.constant 0 : index
    %c0_4 = arith.constant 0 : index
    %4 = vector.load %arg3[%c0_3, %c0_4] : memref<512x16xf32, #tpu.memory_space<vmem>>, vector<512x16xf32>
    %5 = arith.truncf %4 : vector<512x16xf32> to vector<512x16xbf16>
    %c0_5 = arith.constant 0 : index
    %c0_6 = arith.constant 0 : index
    %6 = vector.load %arg4[%c0_5, %c0_6] : memref<512x8xf32, #tpu.memory_space<vmem>>, vector<512x8xf32>
    %7 = arith.truncf %6 : vector<512x8xf32> to vector<512x8xbf16>
    %c0_7 = arith.constant 0 : index
    %c0_8 = arith.constant 0 : index
    %8 = vector.load %arg5[%c0_7, %c0_8] : memref<512x8xf32, #tpu.memory_space<vmem>>, vector<512x8xf32>
    %9 = arith.truncf %8 : vector<512x8xf32> to vector<512x8xbf16>
    %c0_9 = arith.constant 0 : index
    %c0_10 = arith.constant 0 : index
    %10 = vector.load %arg6[%c0_9, %c0_10] : memref<16x32xbf16, #tpu.memory_space<vmem>>, vector<16x32xbf16>
    %cst = arith.constant dense<0.000000e+00> : vector<64x32xf32>
    %11 = tpu.matmul %1, %10, %cst {dimension_numbers = #tpu.dot_dimension_numbers<[1], [0], [0], [1], [0, 0, 1, 1], [], []>} : vector<64x16xbf16>, vector<16x32xbf16>, vector<64x32xf32> -> vector<64x32xf32>
    %c0_11 = arith.constant 0 : index
    %c0_12 = arith.constant 0 : index
    %12 = vector.load %arg7[%c0_11, %c0_12] : memref<8x32xbf16, #tpu.memory_space<vmem>>, vector<8x32xbf16>
    %cst_13 = arith.constant dense<0.000000e+00> : vector<64x32xf32>
    %13 = tpu.matmul %3, %12, %cst_13 {dimension_numbers = #tpu.dot_dimension_numbers<[1], [0], [0], [1], [0, 0, 1, 1], [], []>} : vector<64x8xbf16>, vector<8x32xbf16>, vector<64x32xf32> -> vector<64x32xf32>
    %14 = arith.addf %11, %13 : vector<64x32xf32>
    %c0_14 = arith.constant 0 : index
    %c0_15 = arith.constant 0 : index
    %15 = vector.load %arg8[%c0_14, %c0_15] : memref<1x32xf32, #tpu.memory_space<vmem>>, vector<1x32xf32>
    %16 = vector.broadcast %15 : vector<1x32xf32> to vector<64x32xf32>
    %17 = arith.addf %14, %16 : vector<64x32xf32>
    %c0_16 = arith.constant 0 : index
    %c0_17 = arith.constant 0 : index
    %18 = vector.load %arg9[%c0_16, %c0_17] : memref<16x32xbf16, #tpu.memory_space<vmem>>, vector<16x32xbf16>
    %cst_18 = arith.constant dense<0.000000e+00> : vector<512x32xf32>
    %19 = tpu.matmul %5, %18, %cst_18 {dimension_numbers = #tpu.dot_dimension_numbers<[1], [0], [0], [1], [0, 0, 1, 1], [], []>} : vector<512x16xbf16>, vector<16x32xbf16>, vector<512x32xf32> -> vector<512x32xf32>
    %c0_19 = arith.constant 0 : index
    %c0_20 = arith.constant 0 : index
    %20 = vector.load %arg10[%c0_19, %c0_20] : memref<8x32xbf16, #tpu.memory_space<vmem>>, vector<8x32xbf16>
    %cst_21 = arith.constant dense<0.000000e+00> : vector<512x32xf32>
    %21 = tpu.matmul %7, %20, %cst_21 {dimension_numbers = #tpu.dot_dimension_numbers<[1], [0], [0], [1], [0, 0, 1, 1], [], []>} : vector<512x8xbf16>, vector<8x32xbf16>, vector<512x32xf32> -> vector<512x32xf32>
    %22 = arith.addf %19, %21 : vector<512x32xf32>
    %c0_22 = arith.constant 0 : index
    %c0_23 = arith.constant 0 : index
    %23 = vector.load %arg11[%c0_22, %c0_23] : memref<8x32xbf16, #tpu.memory_space<vmem>>, vector<8x32xbf16>
    %cst_24 = arith.constant dense<0.000000e+00> : vector<512x32xf32>
    %24 = tpu.matmul %9, %23, %cst_24 {dimension_numbers = #tpu.dot_dimension_numbers<[1], [0], [0], [1], [0, 0, 1, 1], [], []>} : vector<512x8xbf16>, vector<8x32xbf16>, vector<512x32xf32> -> vector<512x32xf32>
    %25 = arith.addf %22, %24 : vector<512x32xf32>
    %c0_25 = arith.constant 0 : index
    %c0_26 = arith.constant 0 : index
    %26 = vector.load %arg12[%c0_25, %c0_26] : memref<1x32xf32, #tpu.memory_space<vmem>>, vector<1x32xf32>
    %27 = vector.broadcast %26 : vector<1x32xf32> to vector<512x32xf32>
    %28 = arith.addf %25, %27 : vector<512x32xf32>
    %29 = vector.shape_cast %28 : vector<512x32xf32> to vector<64x8x32xf32>
    %c0_27 = arith.constant 0 : index
    %c0_28 = arith.constant 0 : index
    %30 = vector.load %arg13[%c0_27, %c0_28] : memref<16x32xbf16, #tpu.memory_space<vmem>>, vector<16x32xbf16>
    %cst_29 = arith.constant dense<0.000000e+00> : vector<512x32xf32>
    %31 = tpu.matmul %5, %30, %cst_29 {dimension_numbers = #tpu.dot_dimension_numbers<[1], [0], [0], [1], [0, 0, 1, 1], [], []>} : vector<512x16xbf16>, vector<16x32xbf16>, vector<512x32xf32> -> vector<512x32xf32>
    %c0_30 = arith.constant 0 : index
    %c0_31 = arith.constant 0 : index
    %32 = vector.load %arg14[%c0_30, %c0_31] : memref<8x32xbf16, #tpu.memory_space<vmem>>, vector<8x32xbf16>
    %cst_32 = arith.constant dense<0.000000e+00> : vector<512x32xf32>
    %33 = tpu.matmul %7, %32, %cst_32 {dimension_numbers = #tpu.dot_dimension_numbers<[1], [0], [0], [1], [0, 0, 1, 1], [], []>} : vector<512x8xbf16>, vector<8x32xbf16>, vector<512x32xf32> -> vector<512x32xf32>
    %34 = arith.addf %31, %33 : vector<512x32xf32>
    %c0_33 = arith.constant 0 : index
    %c0_34 = arith.constant 0 : index
    %35 = vector.load %arg15[%c0_33, %c0_34] : memref<8x32xbf16, #tpu.memory_space<vmem>>, vector<8x32xbf16>
    %cst_35 = arith.constant dense<0.000000e+00> : vector<512x32xf32>
    %36 = tpu.matmul %9, %35, %cst_35 {dimension_numbers = #tpu.dot_dimension_numbers<[1], [0], [0], [1], [0, 0, 1, 1], [], []>} : vector<512x8xbf16>, vector<8x32xbf16>, vector<512x32xf32> -> vector<512x32xf32>
    %37 = arith.addf %34, %36 : vector<512x32xf32>
    %c0_36 = arith.constant 0 : index
    %c0_37 = arith.constant 0 : index
    %38 = vector.load %arg16[%c0_36, %c0_37] : memref<1x32xf32, #tpu.memory_space<vmem>>, vector<1x32xf32>
    %39 = vector.broadcast %38 : vector<1x32xf32> to vector<512x32xf32>
    %40 = arith.addf %37, %39 : vector<512x32xf32>
    %41 = vector.shape_cast %40 : vector<512x32xf32> to vector<64x8x32xf32>
    %42 = vector.shape_cast %17 : vector<64x32xf32> to vector<64x1x32xf32>
    %43 = vector.broadcast %42 : vector<64x1x32xf32> to vector<64x8x32xf32>
    %44 = arith.mulf %43, %29 : vector<64x8x32xf32>
    %45 = vector.shape_cast %44 : vector<64x8x32xf32> to vector<512x32xf32>
    %46 = arith.truncf %45 : vector<512x32xf32> to vector<512x32xbf16>
    %c0_38 = arith.constant 0 : index
    %c0_39 = arith.constant 0 : index
    %47 = vector.load %arg22[%c0_38, %c0_39] : memref<32x4xbf16, #tpu.memory_space<vmem>>, vector<32x4xbf16>
    %cst_40 = arith.constant dense<0.000000e+00> : vector<512x4xf32>
    %48 = tpu.matmul %46, %47, %cst_40 {dimension_numbers = #tpu.dot_dimension_numbers<[1], [0], [0], [1], [0, 0, 1, 1], [], []>} : vector<512x32xbf16>, vector<32x4xbf16>, vector<512x4xf32> -> vector<512x4xf32>
    %49 = vector.shape_cast %48 : vector<512x4xf32> to vector<64x8x4xf32>
    %cst_41 = arith.constant 0.000000e+00 : f32
    %50 = vector.broadcast %cst_41 : f32 to vector<64x8x4xf32>
    %51 = arith.cmpf ogt, %49, %50 : vector<64x8x4xf32>
    %cst_42 = arith.constant 2.000000e-01 : f32
    %52 = vector.broadcast %cst_42 : f32 to vector<64x8x4xf32>
    %53 = arith.mulf %52, %49 : vector<64x8x4xf32>
    %54 = arith.select %51, %49, %53 : vector<64x8x4xi1>, vector<64x8x4xf32>
    %cst_43 = arith.constant dense<0xFF800000> : vector<64x4xf32>
    %55 = vector.multi_reduction <maximumf>, %54, %cst_43 [1] : vector<64x8x4xf32> to vector<64x4xf32>
    %56 = vector.shape_cast %55 : vector<64x4xf32> to vector<64x1x4xf32>
    %57 = vector.broadcast %56 : vector<64x1x4xf32> to vector<64x8x4xf32>
    %58 = arith.subf %54, %57 : vector<64x8x4xf32>
    %59 = math.exp %58 : vector<64x8x4xf32>
    %cst_44 = arith.constant dense<0.000000e+00> : vector<64x4xf32>
    %60 = vector.multi_reduction <add>, %59, %cst_44 [1] : vector<64x8x4xf32> to vector<64x4xf32>
    %61 = vector.shape_cast %60 : vector<64x4xf32> to vector<64x1x4xf32>
    %62 = tpu.reciprocal %61 {approx = true} : vector<64x1x4xf32> -> vector<64x1x4xf32>
    %63 = vector.broadcast %62 : vector<64x1x4xf32> to vector<64x8x4xf32>
    %64 = arith.mulf %59, %63 : vector<64x8x4xf32>
    %65 = vector.shape_cast %64 : vector<64x8x4xf32> to vector<512x4xf32>
    %66 = arith.truncf %65 : vector<512x4xf32> to vector<512x4xbf16>
    %c0_45 = arith.constant 0 : index
    %c0_46 = arith.constant 0 : index
    %67 = vector.load %arg23[%c0_45, %c0_46] : memref<4x32xbf16, #tpu.memory_space<vmem>>, vector<4x32xbf16>
    %cst_47 = arith.constant dense<0.000000e+00> : vector<512x32xf32>
    %68 = tpu.matmul %66, %67, %cst_47 {dimension_numbers = #tpu.dot_dimension_numbers<[1], [0], [0], [1], [0, 0, 1, 1], [], []>} : vector<512x4xbf16>, vector<4x32xbf16>, vector<512x32xf32> -> vector<512x32xf32>
    %69 = vector.shape_cast %68 : vector<512x32xf32> to vector<64x8x32xf32>
    %70 = arith.mulf %41, %69 : vector<64x8x32xf32>
    %cst_48 = arith.constant dense<0.000000e+00> : vector<64x32xf32>
    %71 = vector.multi_reduction <add>, %70, %cst_48 [1] : vector<64x8x32xf32> to vector<64x32xf32>
    %72 = arith.truncf %71 : vector<64x32xf32> to vector<64x32xbf16>
    %c0_49 = arith.constant 0 : index
    %c0_50 = arith.constant 0 : index
    %73 = vector.load %arg17[%c0_49, %c0_50] : memref<32x32xbf16, #tpu.memory_space<vmem>>, vector<32x32xbf16>
    %cst_51 = arith.constant dense<0.000000e+00> : vector<64x32xf32>
    %74 = tpu.matmul %72, %73, %cst_51 {dimension_numbers = #tpu.dot_dimension_numbers<[1], [0], [0], [1], [0, 0, 1, 1], [], []>} : vector<64x32xbf16>, vector<32x32xbf16>, vector<64x32xf32> -> vector<64x32xf32>
    %c0_52 = arith.constant 0 : index
    %c0_53 = arith.constant 0 : index
    %75 = vector.load %arg18[%c0_52, %c0_53] : memref<16x32xbf16, #tpu.memory_space<vmem>>, vector<16x32xbf16>
    %cst_54 = arith.constant dense<0.000000e+00> : vector<64x32xf32>
    %76 = tpu.matmul %1, %75, %cst_54 {dimension_numbers = #tpu.dot_dimension_numbers<[1], [0], [0], [1], [0, 0, 1, 1], [], []>} : vector<64x16xbf16>, vector<16x32xbf16>, vector<64x32xf32> -> vector<64x32xf32>
    %77 = arith.addf %74, %76 : vector<64x32xf32>
    %c0_55 = arith.constant 0 : index
    %c0_56 = arith.constant 0 : index
    %78 = vector.load %arg19[%c0_55, %c0_56] : memref<1x32xf32, #tpu.memory_space<vmem>>, vector<1x32xf32>
    %79 = vector.broadcast %78 : vector<1x32xf32> to vector<64x32xf32>
    %80 = arith.addf %77, %79 : vector<64x32xf32>
    %cst_57 = arith.constant 0.000000e+00 : f32
    %81 = vector.broadcast %cst_57 : f32 to vector<64x32xf32>
    %82 = arith.maximumf %80, %81 : vector<64x32xf32>
    %cst_58 = arith.constant dense<0.000000e+00> : vector<64xf32>
    %83 = vector.multi_reduction <add>, %82, %cst_58 [1] : vector<64x32xf32> to vector<64xf32>
    %84 = vector.shape_cast %83 : vector<64xf32> to vector<64x1xf32>
    %cst_59 = arith.constant 3.200000e+01 : f32
    %85 = vector.broadcast %cst_59 : f32 to vector<64x1xf32>
    %86 = arith.divf %84, %85 : vector<64x1xf32>
    %87 = vector.broadcast %86 : vector<64x1xf32> to vector<64x32xf32>
    %88 = arith.subf %82, %87 : vector<64x32xf32>
    %89 = arith.mulf %88, %88 : vector<64x32xf32>
    %cst_60 = arith.constant dense<0.000000e+00> : vector<64xf32>
    %90 = vector.multi_reduction <add>, %89, %cst_60 [1] : vector<64x32xf32> to vector<64xf32>
    %91 = vector.shape_cast %90 : vector<64xf32> to vector<64x1xf32>
    %cst_61 = arith.constant 3.200000e+01 : f32
    %92 = vector.broadcast %cst_61 : f32 to vector<64x1xf32>
    %93 = arith.divf %91, %92 : vector<64x1xf32>
    %94 = vector.broadcast %86 : vector<64x1xf32> to vector<64x32xf32>
    %95 = arith.subf %82, %94 : vector<64x32xf32>
    %cst_62 = arith.constant 9.99999974E-6 : f32
    %96 = vector.broadcast %cst_62 : f32 to vector<64x1xf32>
    %97 = arith.addf %93, %96 : vector<64x1xf32>
    %98 = math.rsqrt %97 : vector<64x1xf32>
    %99 = vector.broadcast %98 : vector<64x1xf32> to vector<64x32xf32>
    %100 = arith.mulf %95, %99 : vector<64x32xf32>
    %c0_63 = arith.constant 0 : index
    %c0_64 = arith.constant 0 : index
    %101 = vector.load %arg20[%c0_63, %c0_64] : memref<1x32xf32, #tpu.memory_space<vmem>>, vector<1x32xf32>
    %102 = vector.broadcast %101 : vector<1x32xf32> to vector<64x32xf32>
    %103 = arith.mulf %100, %102 : vector<64x32xf32>
    %c0_65 = arith.constant 0 : index
    %c0_66 = arith.constant 0 : index
    %104 = vector.load %arg21[%c0_65, %c0_66] : memref<1x32xf32, #tpu.memory_space<vmem>>, vector<1x32xf32>
    %105 = vector.broadcast %104 : vector<1x32xf32> to vector<64x32xf32>
    %106 = arith.addf %103, %105 : vector<64x32xf32>
    %107 = vector.shape_cast %106 : vector<64x32xf32> to vector<16x128xf32>
    %c0_67 = arith.constant 0 : index
    %c0_68 = arith.constant 0 : index
    %108 = vector.load %arg24[%c0_67, %c0_68] : memref<16x128xf32, #tpu.memory_space<vmem>>, vector<16x128xf32>
    tpu.vector_store %arg24[%c0_67, %c0_68], %107 {strides = array<i32>} : memref<16x128xf32, #tpu.memory_space<vmem>>, vector<16x128xf32>,
    return
  }
  func.func @transform_0(%arg0: i32) -> (i32, i32) {
    %c0_i32 = arith.constant 0 : i32
    %c0_i32_0 = arith.constant 0 : i32
    return %arg0, %c0_i32 : i32, i32
  }
  func.func @transform_1(%arg0: i32) -> (i32, i32) {
    %c0_i32 = arith.constant 0 : i32
    %c0_i32_0 = arith.constant 0 : i32
    return %arg0, %c0_i32 : i32, i32
  }
  func.func @transform_2(%arg0: i32) -> (i32, i32) {
    %c0_i32 = arith.constant 0 : i32
    %c0_i32_0 = arith.constant 0 : i32
    return %arg0, %c0_i32 : i32, i32
  }
  func.func @transform_3(%arg0: i32) -> (i32, i32) {
    %c0_i32 = arith.constant 0 : i32
    %c0_i32_0 = arith.constant 0 : i32
    return %arg0, %c0_i32 : i32, i32
  }
  func.func @transform_4(%arg0: i32) -> (i32, i32) {
    %c0_i32 = arith.constant 0 : i32
    %c0_i32_0 = arith.constant 0 : i32
    return %arg0, %c0_i32 : i32, i32
  }
  func.func @transform_5(%arg0: i32) -> (i32, i32) {
    %c0_i32 = arith.constant 0 : i32
    %c0_i32_0 = arith.constant 0 : i32
    %c0_i32_1 = arith.constant 0 : i32
    return %c0_i32, %c0_i32_0 : i32, i32
  }
  func.func @transform_6(%arg0: i32) -> (i32, i32) {
    %c0_i32 = arith.constant 0 : i32
    %c0_i32_0 = arith.constant 0 : i32
    %c0_i32_1 = arith.constant 0 : i32
    return %c0_i32, %c0_i32_0 : i32, i32
  }
  func.func @transform_7(%arg0: i32) -> (i32, i32) {
    %c0_i32 = arith.constant 0 : i32
    %c0_i32_0 = arith.constant 0 : i32
    %c0_i32_1 = arith.constant 0 : i32
    return %c0_i32, %c0_i32_0 : i32, i32
  }
  func.func @transform_8(%arg0: i32) -> (i32, i32) {
    %c0_i32 = arith.constant 0 : i32
    %c0_i32_0 = arith.constant 0 : i32
    %c0_i32_1 = arith.constant 0 : i32
    return %c0_i32, %c0_i32_0 : i32, i32
  }
  func.func @transform_9(%arg0: i32) -> (i32, i32) {
    %c0_i32 = arith.constant 0 : i32
    %c0_i32_0 = arith.constant 0 : i32
    %c0_i32_1 = arith.constant 0 : i32
    return %c0_i32, %c0_i32_0 : i32, i32
  }
  func.func @transform_10(%arg0: i32) -> (i32, i32) {
    %c0_i32 = arith.constant 0 : i32
    %c0_i32_0 = arith.constant 0 : i32
    %c0_i32_1 = arith.constant 0 : i32
    return %c0_i32, %c0_i32_0 : i32, i32
  }
  func.func @transform_11(%arg0: i32) -> (i32, i32) {
    %c0_i32 = arith.constant 0 : i32
    %c0_i32_0 = arith.constant 0 : i32
    %c0_i32_1 = arith.constant 0 : i32
    return %c0_i32, %c0_i32_0 : i32, i32
  }
  func.func @transform_12(%arg0: i32) -> (i32, i32) {
    %c0_i32 = arith.constant 0 : i32
    %c0_i32_0 = arith.constant 0 : i32
    %c0_i32_1 = arith.constant 0 : i32
    return %c0_i32, %c0_i32_0 : i32, i32
  }
  func.func @transform_13(%arg0: i32) -> (i32, i32) {
    %c0_i32 = arith.constant 0 : i32
    %c0_i32_0 = arith.constant 0 : i32
    %c0_i32_1 = arith.constant 0 : i32
    return %c0_i32, %c0_i32_0 : i32, i32
  }
  func.func @transform_14(%arg0: i32) -> (i32, i32) {
    %c0_i32 = arith.constant 0 : i32
    %c0_i32_0 = arith.constant 0 : i32
    %c0_i32_1 = arith.constant 0 : i32
    return %c0_i32, %c0_i32_0 : i32, i32
  }
  func.func @transform_15(%arg0: i32) -> (i32, i32) {
    %c0_i32 = arith.constant 0 : i32
    %c0_i32_0 = arith.constant 0 : i32
    %c0_i32_1 = arith.constant 0 : i32
    return %c0_i32, %c0_i32_0 : i32, i32
  }
  func.func @transform_16(%arg0: i32) -> (i32, i32) {
    %c0_i32 = arith.constant 0 : i32
    %c0_i32_0 = arith.constant 0 : i32
    %c0_i32_1 = arith.constant 0 : i32
    return %c0_i32, %c0_i32_0 : i32, i32
  }
  func.func @transform_17(%arg0: i32) -> (i32, i32) {
    %c0_i32 = arith.constant 0 : i32
    %c0_i32_0 = arith.constant 0 : i32
    %c0_i32_1 = arith.constant 0 : i32
    return %c0_i32, %c0_i32_0 : i32, i32
  }
  func.func @transform_18(%arg0: i32) -> (i32, i32) {
    %c0_i32 = arith.constant 0 : i32
    %c0_i32_0 = arith.constant 0 : i32
    %c0_i32_1 = arith.constant 0 : i32
    return %c0_i32, %c0_i32_0 : i32, i32
  }
  func.func @transform_19(%arg0: i32) -> (i32, i32) {
    %c0_i32 = arith.constant 0 : i32
    %c0_i32_0 = arith.constant 0 : i32
    %c0_i32_1 = arith.constant 0 : i32
    return %c0_i32, %c0_i32_0 : i32, i32
  }
  func.func @transform_20(%arg0: i32) -> (i32, i32) {
    %c0_i32 = arith.constant 0 : i32
    %c0_i32_0 = arith.constant 0 : i32
    %c0_i32_1 = arith.constant 0 : i32
    return %c0_i32, %c0_i32_0 : i32, i32
  }
  func.func @transform_21(%arg0: i32) -> (i32, i32) {
    %c0_i32 = arith.constant 0 : i32
    %c0_i32_0 = arith.constant 0 : i32
    %c0_i32_1 = arith.constant 0 : i32
    return %c0_i32, %c0_i32_0 : i32, i32
  }
  func.func @transform_22(%arg0: i32) -> (i32, i32) {
    %c0_i32 = arith.constant 0 : i32
    %c0_i32_0 = arith.constant 0 : i32
    %c0_i32_1 = arith.constant 0 : i32
    return %c0_i32, %c0_i32_0 : i32, i32
  }
  func.func @transform_23(%arg0: i32) -> (i32, i32) {
    %c0_i32 = arith.constant 0 : i32
    %c0_i32_0 = arith.constant 0 : i32
    return %arg0, %c0_i32 : i32, i32
  }
}

module attributes {stable_mosaic.version = 11 : i64} {
  func.func @_aggregator_kernel(%arg0: i32, %arg1: memref<64x16xf32, #tpu.memory_space<vmem>>, %arg2: memref<64x8xf32, #tpu.memory_space<vmem>>, %arg3: memref<512x16xf32, #tpu.memory_space<vmem>>, %arg4: memref<512x8xf32, #tpu.memory_space<vmem>>, %arg5: memref<512x8xf32, #tpu.memory_space<vmem>>, %arg6: memref<16x32xbf16, #tpu.memory_space<vmem>>, %arg7: memref<8x32xbf16, #tpu.memory_space<vmem>>, %arg8: memref<1x32xf32, #tpu.memory_space<vmem>>, %arg9: memref<16x32xbf16, #tpu.memory_space<vmem>>, %arg10: memref<8x32xbf16, #tpu.memory_space<vmem>>, %arg11: memref<8x32xbf16, #tpu.memory_space<vmem>>, %arg12: memref<1x32xf32, #tpu.memory_space<vmem>>, %arg13: memref<16x32xbf16, #tpu.memory_space<vmem>>, %arg14: memref<8x32xbf16, #tpu.memory_space<vmem>>, %arg15: memref<8x32xbf16, #tpu.memory_space<vmem>>, %arg16: memref<1x32xf32, #tpu.memory_space<vmem>>, %arg17: memref<32x32xbf16, #tpu.memory_space<vmem>>, %arg18: memref<16x32xbf16, #tpu.memory_space<vmem>>, %arg19: memref<1x32xf32, #tpu.memory_space<vmem>>, %arg20: memref<1x32xf32, #tpu.memory_space<vmem>>, %arg21: memref<1x32xf32, #tpu.memory_space<vmem>>, %arg22: memref<32x4xbf16, #tpu.memory_space<vmem>>, %arg23: memref<4x32xbf16, #tpu.memory_space<vmem>>, %arg24: memref<16x128xf32, #tpu.memory_space<vmem>>) attributes {dimension_semantics = [#tpu.dimension_semantics<parallel>], iteration_bounds = array<i64: 1>, scalar_prefetch = 0 : i64, scratch_operands = 0 : i64, tpu.core_type = #tpu.core_type<tc>, window_params = [{transform_indices = @transform_0, window_bounds = array<i64: 64, 16>}, {transform_indices = @transform_1, window_bounds = array<i64: 64, 8>}, {transform_indices = @transform_2, window_bounds = array<i64: 512, 16>}, {transform_indices = @transform_3, window_bounds = array<i64: 512, 8>}, {transform_indices = @transform_4, window_bounds = array<i64: 512, 8>}, {pipeline_mode = #tpu.pipeline_mode<synchronous>, transform_indices = @transform_5, window_bounds = array<i64: 16, 32>}, {pipeline_mode = #tpu.pipeline_mode<synchronous>, transform_indices = @transform_6, window_bounds = array<i64: 8, 32>}, {pipeline_mode = #tpu.pipeline_mode<synchronous>, transform_indices = @transform_7, window_bounds = array<i64: 1, 32>}, {pipeline_mode = #tpu.pipeline_mode<synchronous>, transform_indices = @transform_8, window_bounds = array<i64: 16, 32>}, {pipeline_mode = #tpu.pipeline_mode<synchronous>, transform_indices = @transform_9, window_bounds = array<i64: 8, 32>}, {pipeline_mode = #tpu.pipeline_mode<synchronous>, transform_indices = @transform_10, window_bounds = array<i64: 8, 32>}, {pipeline_mode = #tpu.pipeline_mode<synchronous>, transform_indices = @transform_11, window_bounds = array<i64: 1, 32>}, {pipeline_mode = #tpu.pipeline_mode<synchronous>, transform_indices = @transform_12, window_bounds = array<i64: 16, 32>}, {pipeline_mode = #tpu.pipeline_mode<synchronous>, transform_indices = @transform_13, window_bounds = array<i64: 8, 32>}, {pipeline_mode = #tpu.pipeline_mode<synchronous>, transform_indices = @transform_14, window_bounds = array<i64: 8, 32>}, {pipeline_mode = #tpu.pipeline_mode<synchronous>, transform_indices = @transform_15, window_bounds = array<i64: 1, 32>}, {pipeline_mode = #tpu.pipeline_mode<synchronous>, transform_indices = @transform_16, window_bounds = array<i64: 32, 32>}, {pipeline_mode = #tpu.pipeline_mode<synchronous>, transform_indices = @transform_17, window_bounds = array<i64: 16, 32>}, {pipeline_mode = #tpu.pipeline_mode<synchronous>, transform_indices = @transform_18, window_bounds = array<i64: 1, 32>}, {pipeline_mode = #tpu.pipeline_mode<synchronous>, transform_indices = @transform_19, window_bounds = array<i64: 1, 32>}, {pipeline_mode = #tpu.pipeline_mode<synchronous>, transform_indices = @transform_20, window_bounds = array<i64: 1, 32>}, {pipeline_mode = #tpu.pipeline_mode<synchronous>, transform_indices = @transform_21, window_bounds = array<i64: 32, 4>}, {pipeline_mode = #tpu.pipeline_mode<synchronous>, transform_indices = @transform_22, window_bounds = array<i64: 4, 32>}, {transform_indices = @transform_23, window_bounds = array<i64: 16, 128>}]} {
    %c0 = arith.constant 0 : index
    %c0_0 = arith.constant 0 : index
    %0 = vector.load %arg1[%c0, %c0_0] : memref<64x16xf32, #tpu.memory_space<vmem>>, vector<64x16xf32>
    %1 = arith.truncf %0 : vector<64x16xf32> to vector<64x16xbf16>
    %c0_1 = arith.constant 0 : index
    %c0_2 = arith.constant 0 : index
    %2 = vector.load %arg2[%c0_1, %c0_2] : memref<64x8xf32, #tpu.memory_space<vmem>>, vector<64x8xf32>
    %3 = arith.truncf %2 : vector<64x8xf32> to vector<64x8xbf16>
    %c0_3 = arith.constant 0 : index
    %c0_4 = arith.constant 0 : index
    %4 = vector.load %arg3[%c0_3, %c0_4] : memref<512x16xf32, #tpu.memory_space<vmem>>, vector<512x16xf32>
    %5 = arith.truncf %4 : vector<512x16xf32> to vector<512x16xbf16>
    %c0_5 = arith.constant 0 : index
    %c0_6 = arith.constant 0 : index
    %6 = vector.load %arg4[%c0_5, %c0_6] : memref<512x8xf32, #tpu.memory_space<vmem>>, vector<512x8xf32>
    %7 = arith.truncf %6 : vector<512x8xf32> to vector<512x8xbf16>
    %c0_7 = arith.constant 0 : index
    %c0_8 = arith.constant 0 : index
    %8 = vector.load %arg5[%c0_7, %c0_8] : memref<512x8xf32, #tpu.memory_space<vmem>>, vector<512x8xf32>
    %9 = arith.truncf %8 : vector<512x8xf32> to vector<512x8xbf16>
    %c0_9 = arith.constant 0 : index
    %c0_10 = arith.constant 0 : index
    %10 = vector.load %arg6[%c0_9, %c0_10] : memref<16x32xbf16, #tpu.memory_space<vmem>>, vector<16x32xbf16>
    %cst = arith.constant dense<0.000000e+00> : vector<64x32xf32>
    %11 = tpu.matmul %1, %10, %cst {dimension_numbers = #tpu.dot_dimension_numbers<[1], [0], [0], [1], [0, 0, 1, 1], [], []>} : vector<64x16xbf16>, vector<16x32xbf16>, vector<64x32xf32> -> vector<64x32xf32>
    %c0_11 = arith.constant 0 : index
    %c0_12 = arith.constant 0 : index
    %12 = vector.load %arg7[%c0_11, %c0_12] : memref<8x32xbf16, #tpu.memory_space<vmem>>, vector<8x32xbf16>
    %cst_13 = arith.constant dense<0.000000e+00> : vector<64x32xf32>
    %13 = tpu.matmul %3, %12, %cst_13 {dimension_numbers = #tpu.dot_dimension_numbers<[1], [0], [0], [1], [0, 0, 1, 1], [], []>} : vector<64x8xbf16>, vector<8x32xbf16>, vector<64x32xf32> -> vector<64x32xf32>
    %14 = arith.addf %11, %13 : vector<64x32xf32>
    %c0_14 = arith.constant 0 : index
    %c0_15 = arith.constant 0 : index
    %15 = vector.load %arg8[%c0_14, %c0_15] : memref<1x32xf32, #tpu.memory_space<vmem>>, vector<1x32xf32>
    %16 = vector.broadcast %15 : vector<1x32xf32> to vector<64x32xf32>
    %17 = arith.addf %14, %16 : vector<64x32xf32>
    %c0_16 = arith.constant 0 : index
    %c0_17 = arith.constant 0 : index
    %18 = vector.load %arg9[%c0_16, %c0_17] : memref<16x32xbf16, #tpu.memory_space<vmem>>, vector<16x32xbf16>
    %cst_18 = arith.constant dense<0.000000e+00> : vector<512x32xf32>
    %19 = tpu.matmul %5, %18, %cst_18 {dimension_numbers = #tpu.dot_dimension_numbers<[1], [0], [0], [1], [0, 0, 1, 1], [], []>} : vector<512x16xbf16>, vector<16x32xbf16>, vector<512x32xf32> -> vector<512x32xf32>
    %c0_19 = arith.constant 0 : index
    %c0_20 = arith.constant 0 : index
    %20 = vector.load %arg10[%c0_19, %c0_20] : memref<8x32xbf16, #tpu.memory_space<vmem>>, vector<8x32xbf16>
    %cst_21 = arith.constant dense<0.000000e+00> : vector<512x32xf32>
    %21 = tpu.matmul %7, %20, %cst_21 {dimension_numbers = #tpu.dot_dimension_numbers<[1], [0], [0], [1], [0, 0, 1, 1], [], []>} : vector<512x8xbf16>, vector<8x32xbf16>, vector<512x32xf32> -> vector<512x32xf32>
    %22 = arith.addf %19, %21 : vector<512x32xf32>
    %c0_22 = arith.constant 0 : index
    %c0_23 = arith.constant 0 : index
    %23 = vector.load %arg11[%c0_22, %c0_23] : memref<8x32xbf16, #tpu.memory_space<vmem>>, vector<8x32xbf16>
    %cst_24 = arith.constant dense<0.000000e+00> : vector<512x32xf32>
    %24 = tpu.matmul %9, %23, %cst_24 {dimension_numbers = #tpu.dot_dimension_numbers<[1], [0], [0], [1], [0, 0, 1, 1], [], []>} : vector<512x8xbf16>, vector<8x32xbf16>, vector<512x32xf32> -> vector<512x32xf32>
    %25 = arith.addf %22, %24 : vector<512x32xf32>
    %c0_25 = arith.constant 0 : index
    %c0_26 = arith.constant 0 : index
    %26 = vector.load %arg12[%c0_25, %c0_26] : memref<1x32xf32, #tpu.memory_space<vmem>>, vector<1x32xf32>
    %27 = vector.broadcast %26 : vector<1x32xf32> to vector<512x32xf32>
    %28 = arith.addf %25, %27 : vector<512x32xf32>
    %29 = vector.shape_cast %28 : vector<512x32xf32> to vector<64x8x32xf32>
    %c0_27 = arith.constant 0 : index
    %c0_28 = arith.constant 0 : index
    %30 = vector.load %arg13[%c0_27, %c0_28] : memref<16x32xbf16, #tpu.memory_space<vmem>>, vector<16x32xbf16>
    %cst_29 = arith.constant dense<0.000000e+00> : vector<512x32xf32>
    %31 = tpu.matmul %5, %30, %cst_29 {dimension_numbers = #tpu.dot_dimension_numbers<[1], [0], [0], [1], [0, 0, 1, 1], [], []>} : vector<512x16xbf16>, vector<16x32xbf16>, vector<512x32xf32> -> vector<512x32xf32>
    %c0_30 = arith.constant 0 : index
    %c0_31 = arith.constant 0 : index
    %32 = vector.load %arg14[%c0_30, %c0_31] : memref<8x32xbf16, #tpu.memory_space<vmem>>, vector<8x32xbf16>
    %cst_32 = arith.constant dense<0.000000e+00> : vector<512x32xf32>
    %33 = tpu.matmul %7, %32, %cst_32 {dimension_numbers = #tpu.dot_dimension_numbers<[1], [0], [0], [1], [0, 0, 1, 1], [], []>} : vector<512x8xbf16>, vector<8x32xbf16>, vector<512x32xf32> -> vector<512x32xf32>
    %34 = arith.addf %31, %33 : vector<512x32xf32>
    %c0_33 = arith.constant 0 : index
    %c0_34 = arith.constant 0 : index
    %35 = vector.load %arg15[%c0_33, %c0_34] : memref<8x32xbf16, #tpu.memory_space<vmem>>, vector<8x32xbf16>
    %cst_35 = arith.constant dense<0.000000e+00> : vector<512x32xf32>
    %36 = tpu.matmul %9, %35, %cst_35 {dimension_numbers = #tpu.dot_dimension_numbers<[1], [0], [0], [1], [0, 0, 1, 1], [], []>} : vector<512x8xbf16>, vector<8x32xbf16>, vector<512x32xf32> -> vector<512x32xf32>
    %37 = arith.addf %34, %36 : vector<512x32xf32>
    %c0_36 = arith.constant 0 : index
    %c0_37 = arith.constant 0 : index
    %38 = vector.load %arg16[%c0_36, %c0_37] : memref<1x32xf32, #tpu.memory_space<vmem>>, vector<1x32xf32>
    %39 = vector.broadcast %38 : vector<1x32xf32> to vector<512x32xf32>
    %40 = arith.addf %37, %39 : vector<512x32xf32>
    %41 = vector.shape_cast %40 : vector<512x32xf32> to vector<64x8x32xf32>
    %42 = vector.shape_cast %17 : vector<64x32xf32> to vector<64x1x32xf32>
    %43 = vector.broadcast %42 : vector<64x1x32xf32> to vector<64x8x32xf32>
    %44 = arith.mulf %43, %29 : vector<64x8x32xf32>
    %45 = vector.shape_cast %44 : vector<64x8x32xf32> to vector<512x32xf32>
    %46 = arith.truncf %45 : vector<512x32xf32> to vector<512x32xbf16>
    %c0_38 = arith.constant 0 : index
    %c0_39 = arith.constant 0 : index
    %47 = vector.load %arg22[%c0_38, %c0_39] : memref<32x4xbf16, #tpu.memory_space<vmem>>, vector<32x4xbf16>
    %cst_40 = arith.constant dense<0.000000e+00> : vector<512x4xf32>
    %48 = tpu.matmul %46, %47, %cst_40 {dimension_numbers = #tpu.dot_dimension_numbers<[1], [0], [0], [1], [0, 0, 1, 1], [], []>} : vector<512x32xbf16>, vector<32x4xbf16>, vector<512x4xf32> -> vector<512x4xf32>
    %49 = vector.shape_cast %48 : vector<512x4xf32> to vector<64x8x4xf32>
    %cst_41 = arith.constant 0.000000e+00 : f32
    %50 = vector.broadcast %cst_41 : f32 to vector<64x8x4xf32>
    %51 = arith.cmpf ogt, %49, %50 : vector<64x8x4xf32>
    %cst_42 = arith.constant 2.000000e-01 : f32
    %52 = vector.broadcast %cst_42 : f32 to vector<64x8x4xf32>
    %53 = arith.mulf %52, %49 : vector<64x8x4xf32>
    %54 = arith.select %51, %49, %53 : vector<64x8x4xi1>, vector<64x8x4xf32>
    %cst_43 = arith.constant dense<0xFF800000> : vector<64x4xf32>
    %55 = vector.multi_reduction <maximumf>, %54, %cst_43 [1] : vector<64x8x4xf32> to vector<64x4xf32>
    %56 = vector.shape_cast %55 : vector<64x4xf32> to vector<64x1x4xf32>
    %57 = vector.broadcast %56 : vector<64x1x4xf32> to vector<64x8x4xf32>
    %58 = arith.subf %54, %57 : vector<64x8x4xf32>
    %59 = math.exp %58 : vector<64x8x4xf32>
    %cst_44 = arith.constant dense<0.000000e+00> : vector<64x4xf32>
    %60 = vector.multi_reduction <add>, %59, %cst_44 [1] : vector<64x8x4xf32> to vector<64x4xf32>
    %61 = vector.shape_cast %60 : vector<64x4xf32> to vector<64x1x4xf32>
    %62 = tpu.reciprocal %61 {approx = true} : vector<64x1x4xf32> -> vector<64x1x4xf32>
    %63 = vector.broadcast %62 : vector<64x1x4xf32> to vector<64x8x4xf32>
    %64 = arith.mulf %59, %63 : vector<64x8x4xf32>
    %65 = vector.shape_cast %64 : vector<64x8x4xf32> to vector<512x4xf32>
    %66 = arith.truncf %65 : vector<512x4xf32> to vector<512x4xbf16>
    %c0_45 = arith.constant 0 : index
    %c0_46 = arith.constant 0 : index
    %67 = vector.load %arg23[%c0_45, %c0_46] : memref<4x32xbf16, #tpu.memory_space<vmem>>, vector<4x32xbf16>
    %cst_47 = arith.constant dense<0.000000e+00> : vector<512x32xf32>
    %68 = tpu.matmul %66, %67, %cst_47 {dimension_numbers = #tpu.dot_dimension_numbers<[1], [0], [0], [1], [0, 0, 1, 1], [], []>} : vector<512x4xbf16>, vector<4x32xbf16>, vector<512x32xf32> -> vector<512x32xf32>
    %69 = vector.shape_cast %68 : vector<512x32xf32> to vector<64x8x32xf32>
    %70 = arith.mulf %41, %69 : vector<64x8x32xf32>
    %cst_48 = arith.constant dense<0.000000e+00> : vector<64x32xf32>
    %71 = vector.multi_reduction <add>, %70, %cst_48 [1] : vector<64x8x32xf32> to vector<64x32xf32>
    %72 = arith.truncf %71 : vector<64x32xf32> to vector<64x32xbf16>
    %c0_49 = arith.constant 0 : index
    %c0_50 = arith.constant 0 : index
    %73 = vector.load %arg17[%c0_49, %c0_50] : memref<32x32xbf16, #tpu.memory_space<vmem>>, vector<32x32xbf16>
    %cst_51 = arith.constant dense<0.000000e+00> : vector<64x32xf32>
    %74 = tpu.matmul %72, %73, %cst_51 {dimension_numbers = #tpu.dot_dimension_numbers<[1], [0], [0], [1], [0, 0, 1, 1], [], []>} : vector<64x32xbf16>, vector<32x32xbf16>, vector<64x32xf32> -> vector<64x32xf32>
    %c0_52 = arith.constant 0 : index
    %c0_53 = arith.constant 0 : index
    %75 = vector.load %arg18[%c0_52, %c0_53] : memref<16x32xbf16, #tpu.memory_space<vmem>>, vector<16x32xbf16>
    %cst_54 = arith.constant dense<0.000000e+00> : vector<64x32xf32>
    %76 = tpu.matmul %1, %75, %cst_54 {dimension_numbers = #tpu.dot_dimension_numbers<[1], [0], [0], [1], [0, 0, 1, 1], [], []>} : vector<64x16xbf16>, vector<16x32xbf16>, vector<64x32xf32> -> vector<64x32xf32>
    %77 = arith.addf %74, %76 : vector<64x32xf32>
    %c0_55 = arith.constant 0 : index
    %c0_56 = arith.constant 0 : index
    %78 = vector.load %arg19[%c0_55, %c0_56] : memref<1x32xf32, #tpu.memory_space<vmem>>, vector<1x32xf32>
    %79 = vector.broadcast %78 : vector<1x32xf32> to vector<64x32xf32>
    %80 = arith.addf %77, %79 : vector<64x32xf32>
    %cst_57 = arith.constant 0.000000e+00 : f32
    %81 = vector.broadcast %cst_57 : f32 to vector<64x32xf32>
    %82 = arith.maximumf %80, %81 : vector<64x32xf32>
    %cst_58 = arith.constant dense<0.000000e+00> : vector<64xf32>
    %83 = vector.multi_reduction <add>, %82, %cst_58 [1] : vector<64x32xf32> to vector<64xf32>
    %84 = vector.shape_cast %83 : vector<64xf32> to vector<64x1xf32>
    %cst_59 = arith.constant 3.200000e+01 : f32
    %85 = vector.broadcast %cst_59 : f32 to vector<64x1xf32>
    %86 = arith.divf %84, %85 : vector<64x1xf32>
    %87 = vector.broadcast %86 : vector<64x1xf32> to vector<64x32xf32>
    %88 = arith.subf %82, %87 : vector<64x32xf32>
    %89 = arith.mulf %88, %88 : vector<64x32xf32>
    %cst_60 = arith.constant dense<0.000000e+00> : vector<64xf32>
    %90 = vector.multi_reduction <add>, %89, %cst_60 [1] : vector<64x32xf32> to vector<64xf32>
    %91 = vector.shape_cast %90 : vector<64xf32> to vector<64x1xf32>
    %cst_61 = arith.constant 3.200000e+01 : f32
    %92 = vector.broadcast %cst_61 : f32 to vector<64x1xf32>
    %93 = arith.divf %91, %92 : vector<64x1xf32>
    %94 = vector.broadcast %86 : vector<64x1xf32> to vector<64x32xf32>
    %95 = arith.subf %82, %94 : vector<64x32xf32>
    %cst_62 = arith.constant 9.99999974E-6 : f32
    %96 = vector.broadcast %cst_62 : f32 to vector<64x1xf32>
    %97 = arith.addf %93, %96 : vector<64x1xf32>
    %98 = math.rsqrt %97 : vector<64x1xf32>
    %99 = vector.broadcast %98 : vector<64x1xf32> to vector<64x32xf32>
    %100 = arith.mulf %95, %99 : vector<64x32xf32>
    %c0_63 = arith.constant 0 : index
    %c0_64 = arith.constant 0 : index
    %101 = vector.load %arg20[%c0_63, %c0_64] : memref<1x32xf32, #tpu.memory_space<vmem>>, vector<1x32xf32>
    %102 = vector.broadcast %101 : vector<1x32xf32> to vector<64x32xf32>
    %103 = arith.mulf %100, %102 : vector<64x32xf32>
    %c0_65 = arith.constant 0 : index
    %c0_66 = arith.constant 0 : index
    %104 = vector.load %arg21[%c0_65, %c0_66] : memref<1x32xf32, #tpu.memory_space<vmem>>, vector<1x32xf32>
    %105 = vector.broadcast %104 : vector<1x32xf32> to vector<64x32xf32>
    %106 = arith.addf %103, %105 : vector<64x32xf32>
    %107 = vector.shape_cast %106 : vector<64x32xf32> to vector<16x128xf32>
    %c0_67 = arith.constant 0 : index
    %c0_68 = arith.constant 0 : index
    %108 = vector.load %arg24[%c0_67, %c0_68] : memref<16x128xf32, #tpu.memory_space<vmem>>, vector<16x128xf32>
    tpu.vector_store %arg24[%c0_67, %c0_68], %107 {strides = array<i32>} : memref<16x128xf32, #tpu.memory_space<vmem>>, vector<16x128xf32>,
    return
  }
  func.func @transform_0(%arg0: i32) -> (i32, i32) {
    %c0_i32 = arith.constant 0 : i32
    %c0_i32_0 = arith.constant 0 : i32
    return %arg0, %c0_i32 : i32, i32
  }
  func.func @transform_1(%arg0: i32) -> (i32, i32) {
    %c0_i32 = arith.constant 0 : i32
    %c0_i32_0 = arith.constant 0 : i32
    return %arg0, %c0_i32 : i32, i32
  }
  func.func @transform_2(%arg0: i32) -> (i32, i32) {
    %c0_i32 = arith.constant 0 : i32
    %c0_i32_0 = arith.constant 0 : i32
    return %arg0, %c0_i32 : i32, i32
  }
  func.func @transform_3(%arg0: i32) -> (i32, i32) {
    %c0_i32 = arith.constant 0 : i32
    %c0_i32_0 = arith.constant 0 : i32
    return %arg0, %c0_i32 : i32, i32
  }
  func.func @transform_4(%arg0: i32) -> (i32, i32) {
    %c0_i32 = arith.constant 0 : i32
    %c0_i32_0 = arith.constant 0 : i32
    return %arg0, %c0_i32 : i32, i32
  }
  func.func @transform_5(%arg0: i32) -> (i32, i32) {
    %c0_i32 = arith.constant 0 : i32
    %c0_i32_0 = arith.constant 0 : i32
    %c0_i32_1 = arith.constant 0 : i32
    return %c0_i32, %c0_i32_0 : i32, i32
  }
  func.func @transform_6(%arg0: i32) -> (i32, i32) {
    %c0_i32 = arith.constant 0 : i32
    %c0_i32_0 = arith.constant 0 : i32
    %c0_i32_1 = arith.constant 0 : i32
    return %c0_i32, %c0_i32_0 : i32, i32
  }
  func.func @transform_7(%arg0: i32) -> (i32, i32) {
    %c0_i32 = arith.constant 0 : i32
    %c0_i32_0 = arith.constant 0 : i32
    %c0_i32_1 = arith.constant 0 : i32
    return %c0_i32, %c0_i32_0 : i32, i32
  }
  func.func @transform_8(%arg0: i32) -> (i32, i32) {
    %c0_i32 = arith.constant 0 : i32
    %c0_i32_0 = arith.constant 0 : i32
    %c0_i32_1 = arith.constant 0 : i32
    return %c0_i32, %c0_i32_0 : i32, i32
  }
  func.func @transform_9(%arg0: i32) -> (i32, i32) {
    %c0_i32 = arith.constant 0 : i32
    %c0_i32_0 = arith.constant 0 : i32
    %c0_i32_1 = arith.constant 0 : i32
    return %c0_i32, %c0_i32_0 : i32, i32
  }
  func.func @transform_10(%arg0: i32) -> (i32, i32) {
    %c0_i32 = arith.constant 0 : i32
    %c0_i32_0 = arith.constant 0 : i32
    %c0_i32_1 = arith.constant 0 : i32
    return %c0_i32, %c0_i32_0 : i32, i32
  }
  func.func @transform_11(%arg0: i32) -> (i32, i32) {
    %c0_i32 = arith.constant 0 : i32
    %c0_i32_0 = arith.constant 0 : i32
    %c0_i32_1 = arith.constant 0 : i32
    return %c0_i32, %c0_i32_0 : i32, i32
  }
  func.func @transform_12(%arg0: i32) -> (i32, i32) {
    %c0_i32 = arith.constant 0 : i32
    %c0_i32_0 = arith.constant 0 : i32
    %c0_i32_1 = arith.constant 0 : i32
    return %c0_i32, %c0_i32_0 : i32, i32
  }
  func.func @transform_13(%arg0: i32) -> (i32, i32) {
    %c0_i32 = arith.constant 0 : i32
    %c0_i32_0 = arith.constant 0 : i32
    %c0_i32_1 = arith.constant 0 : i32
    return %c0_i32, %c0_i32_0 : i32, i32
  }
  func.func @transform_14(%arg0: i32) -> (i32, i32) {
    %c0_i32 = arith.constant 0 : i32
    %c0_i32_0 = arith.constant 0 : i32
    %c0_i32_1 = arith.constant 0 : i32
    return %c0_i32, %c0_i32_0 : i32, i32
  }
  func.func @transform_15(%arg0: i32) -> (i32, i32) {
    %c0_i32 = arith.constant 0 : i32
    %c0_i32_0 = arith.constant 0 : i32
    %c0_i32_1 = arith.constant 0 : i32
    return %c0_i32, %c0_i32_0 : i32, i32
  }
  func.func @transform_16(%arg0: i32) -> (i32, i32) {
    %c0_i32 = arith.constant 0 : i32
    %c0_i32_0 = arith.constant 0 : i32
    %c0_i32_1 = arith.constant 0 : i32
    return %c0_i32, %c0_i32_0 : i32, i32
  }
  func.func @transform_17(%arg0: i32) -> (i32, i32) {
    %c0_i32 = arith.constant 0 : i32
    %c0_i32_0 = arith.constant 0 : i32
    %c0_i32_1 = arith.constant 0 : i32
    return %c0_i32, %c0_i32_0 : i32, i32
  }
  func.func @transform_18(%arg0: i32) -> (i32, i32) {
    %c0_i32 = arith.constant 0 : i32
    %c0_i32_0 = arith.constant 0 : i32
    %c0_i32_1 = arith.constant 0 : i32
    return %c0_i32, %c0_i32_0 : i32, i32
  }
  func.func @transform_19(%arg0: i32) -> (i32, i32) {
    %c0_i32 = arith.constant 0 : i32
    %c0_i32_0 = arith.constant 0 : i32
    %c0_i32_1 = arith.constant 0 : i32
    return %c0_i32, %c0_i32_0 : i32, i32
  }
  func.func @transform_20(%arg0: i32) -> (i32, i32) {
    %c0_i32 = arith.constant 0 : i32
    %c0_i32_0 = arith.constant 0 : i32
    %c0_i32_1 = arith.constant 0 : i32
    return %c0_i32, %c0_i32_0 : i32, i32
  }
  func.func @transform_21(%arg0: i32) -> (i32, i32) {
    %c0_i32 = arith.constant 0 : i32
    %c0_i32_0 = arith.constant 0 : i32
    %c0_i32_1 = arith.constant 0 : i32
    return %c0_i32, %c0_i32_0 : i32, i32
  }
  func.func @transform_22(%arg0: i32) -> (i32, i32) {
    %c0_i32 = arith.constant 0 : i32
    %c0_i32_0 = arith.constant 0 : i32
    %c0_i32_1 = arith.constant 0 : i32
    return %c0_i32, %c0_i32_0 : i32, i32
  }
  func.func @transform_23(%arg0: i32) -> (i32, i32) {
    %c0_i32 = arith.constant 0 : i32
    %c0_i32_0 = arith.constant 0 : i32
    return %arg0, %c0_i32 : i32, i32
  }
}

module attributes {stable_mosaic.version = 11 : i64} {
  func.func @_aggregator_kernel(%arg0: i32, %arg1: memref<64x16xf32, #tpu.memory_space<vmem>>, %arg2: memref<64x8xf32, #tpu.memory_space<vmem>>, %arg3: memref<512x16xf32, #tpu.memory_space<vmem>>, %arg4: memref<512x8xf32, #tpu.memory_space<vmem>>, %arg5: memref<512x8xf32, #tpu.memory_space<vmem>>, %arg6: memref<16x32xbf16, #tpu.memory_space<vmem>>, %arg7: memref<8x32xbf16, #tpu.memory_space<vmem>>, %arg8: memref<1x32xf32, #tpu.memory_space<vmem>>, %arg9: memref<16x32xbf16, #tpu.memory_space<vmem>>, %arg10: memref<8x32xbf16, #tpu.memory_space<vmem>>, %arg11: memref<8x32xbf16, #tpu.memory_space<vmem>>, %arg12: memref<1x32xf32, #tpu.memory_space<vmem>>, %arg13: memref<16x32xbf16, #tpu.memory_space<vmem>>, %arg14: memref<8x32xbf16, #tpu.memory_space<vmem>>, %arg15: memref<8x32xbf16, #tpu.memory_space<vmem>>, %arg16: memref<1x32xf32, #tpu.memory_space<vmem>>, %arg17: memref<32x32xbf16, #tpu.memory_space<vmem>>, %arg18: memref<16x32xbf16, #tpu.memory_space<vmem>>, %arg19: memref<1x32xf32, #tpu.memory_space<vmem>>, %arg20: memref<1x32xf32, #tpu.memory_space<vmem>>, %arg21: memref<1x32xf32, #tpu.memory_space<vmem>>, %arg22: memref<32x4xbf16, #tpu.memory_space<vmem>>, %arg23: memref<4x32xbf16, #tpu.memory_space<vmem>>, %arg24: memref<64x32xf32, #tpu.memory_space<vmem>>) attributes {dimension_semantics = [#tpu.dimension_semantics<parallel>], iteration_bounds = array<i64: 1>, scalar_prefetch = 0 : i64, scratch_operands = 0 : i64, tpu.core_type = #tpu.core_type<tc>, window_params = [{transform_indices = @transform_0, window_bounds = array<i64: 64, 16>}, {transform_indices = @transform_1, window_bounds = array<i64: 64, 8>}, {transform_indices = @transform_2, window_bounds = array<i64: 512, 16>}, {transform_indices = @transform_3, window_bounds = array<i64: 512, 8>}, {transform_indices = @transform_4, window_bounds = array<i64: 512, 8>}, {pipeline_mode = #tpu.pipeline_mode<synchronous>, transform_indices = @transform_5, window_bounds = array<i64: 16, 32>}, {pipeline_mode = #tpu.pipeline_mode<synchronous>, transform_indices = @transform_6, window_bounds = array<i64: 8, 32>}, {pipeline_mode = #tpu.pipeline_mode<synchronous>, transform_indices = @transform_7, window_bounds = array<i64: 1, 32>}, {pipeline_mode = #tpu.pipeline_mode<synchronous>, transform_indices = @transform_8, window_bounds = array<i64: 16, 32>}, {pipeline_mode = #tpu.pipeline_mode<synchronous>, transform_indices = @transform_9, window_bounds = array<i64: 8, 32>}, {pipeline_mode = #tpu.pipeline_mode<synchronous>, transform_indices = @transform_10, window_bounds = array<i64: 8, 32>}, {pipeline_mode = #tpu.pipeline_mode<synchronous>, transform_indices = @transform_11, window_bounds = array<i64: 1, 32>}, {pipeline_mode = #tpu.pipeline_mode<synchronous>, transform_indices = @transform_12, window_bounds = array<i64: 16, 32>}, {pipeline_mode = #tpu.pipeline_mode<synchronous>, transform_indices = @transform_13, window_bounds = array<i64: 8, 32>}, {pipeline_mode = #tpu.pipeline_mode<synchronous>, transform_indices = @transform_14, window_bounds = array<i64: 8, 32>}, {pipeline_mode = #tpu.pipeline_mode<synchronous>, transform_indices = @transform_15, window_bounds = array<i64: 1, 32>}, {pipeline_mode = #tpu.pipeline_mode<synchronous>, transform_indices = @transform_16, window_bounds = array<i64: 32, 32>}, {pipeline_mode = #tpu.pipeline_mode<synchronous>, transform_indices = @transform_17, window_bounds = array<i64: 16, 32>}, {pipeline_mode = #tpu.pipeline_mode<synchronous>, transform_indices = @transform_18, window_bounds = array<i64: 1, 32>}, {pipeline_mode = #tpu.pipeline_mode<synchronous>, transform_indices = @transform_19, window_bounds = array<i64: 1, 32>}, {pipeline_mode = #tpu.pipeline_mode<synchronous>, transform_indices = @transform_20, window_bounds = array<i64: 1, 32>}, {pipeline_mode = #tpu.pipeline_mode<synchronous>, transform_indices = @transform_21, window_bounds = array<i64: 32, 4>}, {pipeline_mode = #tpu.pipeline_mode<synchronous>, transform_indices = @transform_22, window_bounds = array<i64: 4, 32>}, {transform_indices = @transform_23, window_bounds = array<i64: 64, 32>}]} {
    %c0 = arith.constant 0 : index
    %c0_0 = arith.constant 0 : index
    %0 = vector.load %arg1[%c0, %c0_0] : memref<64x16xf32, #tpu.memory_space<vmem>>, vector<64x16xf32>
    %1 = arith.truncf %0 : vector<64x16xf32> to vector<64x16xbf16>
    %c0_1 = arith.constant 0 : index
    %c0_2 = arith.constant 0 : index
    %2 = vector.load %arg2[%c0_1, %c0_2] : memref<64x8xf32, #tpu.memory_space<vmem>>, vector<64x8xf32>
    %3 = arith.truncf %2 : vector<64x8xf32> to vector<64x8xbf16>
    %c0_3 = arith.constant 0 : index
    %c0_4 = arith.constant 0 : index
    %4 = vector.load %arg3[%c0_3, %c0_4] : memref<512x16xf32, #tpu.memory_space<vmem>>, vector<512x16xf32>
    %5 = arith.truncf %4 : vector<512x16xf32> to vector<512x16xbf16>
    %c0_5 = arith.constant 0 : index
    %c0_6 = arith.constant 0 : index
    %6 = vector.load %arg4[%c0_5, %c0_6] : memref<512x8xf32, #tpu.memory_space<vmem>>, vector<512x8xf32>
    %7 = arith.truncf %6 : vector<512x8xf32> to vector<512x8xbf16>
    %c0_7 = arith.constant 0 : index
    %c0_8 = arith.constant 0 : index
    %8 = vector.load %arg5[%c0_7, %c0_8] : memref<512x8xf32, #tpu.memory_space<vmem>>, vector<512x8xf32>
    %9 = arith.truncf %8 : vector<512x8xf32> to vector<512x8xbf16>
    %c0_9 = arith.constant 0 : index
    %c0_10 = arith.constant 0 : index
    %10 = vector.load %arg6[%c0_9, %c0_10] : memref<16x32xbf16, #tpu.memory_space<vmem>>, vector<16x32xbf16>
    %cst = arith.constant dense<0.000000e+00> : vector<64x32xf32>
    %11 = tpu.matmul %1, %10, %cst {dimension_numbers = #tpu.dot_dimension_numbers<[1], [0], [0], [1], [0, 0, 1, 1], [], []>} : vector<64x16xbf16>, vector<16x32xbf16>, vector<64x32xf32> -> vector<64x32xf32>
    %c0_11 = arith.constant 0 : index
    %c0_12 = arith.constant 0 : index
    %12 = vector.load %arg7[%c0_11, %c0_12] : memref<8x32xbf16, #tpu.memory_space<vmem>>, vector<8x32xbf16>
    %cst_13 = arith.constant dense<0.000000e+00> : vector<64x32xf32>
    %13 = tpu.matmul %3, %12, %cst_13 {dimension_numbers = #tpu.dot_dimension_numbers<[1], [0], [0], [1], [0, 0, 1, 1], [], []>} : vector<64x8xbf16>, vector<8x32xbf16>, vector<64x32xf32> -> vector<64x32xf32>
    %14 = arith.addf %11, %13 : vector<64x32xf32>
    %c0_14 = arith.constant 0 : index
    %c0_15 = arith.constant 0 : index
    %15 = vector.load %arg8[%c0_14, %c0_15] : memref<1x32xf32, #tpu.memory_space<vmem>>, vector<1x32xf32>
    %16 = vector.broadcast %15 : vector<1x32xf32> to vector<64x32xf32>
    %17 = arith.addf %14, %16 : vector<64x32xf32>
    %c0_16 = arith.constant 0 : index
    %c0_17 = arith.constant 0 : index
    %18 = vector.load %arg9[%c0_16, %c0_17] : memref<16x32xbf16, #tpu.memory_space<vmem>>, vector<16x32xbf16>
    %cst_18 = arith.constant dense<0.000000e+00> : vector<512x32xf32>
    %19 = tpu.matmul %5, %18, %cst_18 {dimension_numbers = #tpu.dot_dimension_numbers<[1], [0], [0], [1], [0, 0, 1, 1], [], []>} : vector<512x16xbf16>, vector<16x32xbf16>, vector<512x32xf32> -> vector<512x32xf32>
    %c0_19 = arith.constant 0 : index
    %c0_20 = arith.constant 0 : index
    %20 = vector.load %arg10[%c0_19, %c0_20] : memref<8x32xbf16, #tpu.memory_space<vmem>>, vector<8x32xbf16>
    %cst_21 = arith.constant dense<0.000000e+00> : vector<512x32xf32>
    %21 = tpu.matmul %7, %20, %cst_21 {dimension_numbers = #tpu.dot_dimension_numbers<[1], [0], [0], [1], [0, 0, 1, 1], [], []>} : vector<512x8xbf16>, vector<8x32xbf16>, vector<512x32xf32> -> vector<512x32xf32>
    %22 = arith.addf %19, %21 : vector<512x32xf32>
    %c0_22 = arith.constant 0 : index
    %c0_23 = arith.constant 0 : index
    %23 = vector.load %arg11[%c0_22, %c0_23] : memref<8x32xbf16, #tpu.memory_space<vmem>>, vector<8x32xbf16>
    %cst_24 = arith.constant dense<0.000000e+00> : vector<512x32xf32>
    %24 = tpu.matmul %9, %23, %cst_24 {dimension_numbers = #tpu.dot_dimension_numbers<[1], [0], [0], [1], [0, 0, 1, 1], [], []>} : vector<512x8xbf16>, vector<8x32xbf16>, vector<512x32xf32> -> vector<512x32xf32>
    %25 = arith.addf %22, %24 : vector<512x32xf32>
    %c0_25 = arith.constant 0 : index
    %c0_26 = arith.constant 0 : index
    %26 = vector.load %arg12[%c0_25, %c0_26] : memref<1x32xf32, #tpu.memory_space<vmem>>, vector<1x32xf32>
    %27 = vector.broadcast %26 : vector<1x32xf32> to vector<512x32xf32>
    %28 = arith.addf %25, %27 : vector<512x32xf32>
    %29 = vector.shape_cast %28 : vector<512x32xf32> to vector<64x8x32xf32>
    %c0_27 = arith.constant 0 : index
    %c0_28 = arith.constant 0 : index
    %30 = vector.load %arg13[%c0_27, %c0_28] : memref<16x32xbf16, #tpu.memory_space<vmem>>, vector<16x32xbf16>
    %cst_29 = arith.constant dense<0.000000e+00> : vector<512x32xf32>
    %31 = tpu.matmul %5, %30, %cst_29 {dimension_numbers = #tpu.dot_dimension_numbers<[1], [0], [0], [1], [0, 0, 1, 1], [], []>} : vector<512x16xbf16>, vector<16x32xbf16>, vector<512x32xf32> -> vector<512x32xf32>
    %c0_30 = arith.constant 0 : index
    %c0_31 = arith.constant 0 : index
    %32 = vector.load %arg14[%c0_30, %c0_31] : memref<8x32xbf16, #tpu.memory_space<vmem>>, vector<8x32xbf16>
    %cst_32 = arith.constant dense<0.000000e+00> : vector<512x32xf32>
    %33 = tpu.matmul %7, %32, %cst_32 {dimension_numbers = #tpu.dot_dimension_numbers<[1], [0], [0], [1], [0, 0, 1, 1], [], []>} : vector<512x8xbf16>, vector<8x32xbf16>, vector<512x32xf32> -> vector<512x32xf32>
    %34 = arith.addf %31, %33 : vector<512x32xf32>
    %c0_33 = arith.constant 0 : index
    %c0_34 = arith.constant 0 : index
    %35 = vector.load %arg15[%c0_33, %c0_34] : memref<8x32xbf16, #tpu.memory_space<vmem>>, vector<8x32xbf16>
    %cst_35 = arith.constant dense<0.000000e+00> : vector<512x32xf32>
    %36 = tpu.matmul %9, %35, %cst_35 {dimension_numbers = #tpu.dot_dimension_numbers<[1], [0], [0], [1], [0, 0, 1, 1], [], []>} : vector<512x8xbf16>, vector<8x32xbf16>, vector<512x32xf32> -> vector<512x32xf32>
    %37 = arith.addf %34, %36 : vector<512x32xf32>
    %c0_36 = arith.constant 0 : index
    %c0_37 = arith.constant 0 : index
    %38 = vector.load %arg16[%c0_36, %c0_37] : memref<1x32xf32, #tpu.memory_space<vmem>>, vector<1x32xf32>
    %39 = vector.broadcast %38 : vector<1x32xf32> to vector<512x32xf32>
    %40 = arith.addf %37, %39 : vector<512x32xf32>
    %41 = vector.shape_cast %40 : vector<512x32xf32> to vector<64x8x32xf32>
    %42 = vector.shape_cast %17 : vector<64x32xf32> to vector<64x1x32xf32>
    %43 = vector.broadcast %42 : vector<64x1x32xf32> to vector<64x8x32xf32>
    %44 = arith.mulf %43, %29 : vector<64x8x32xf32>
    %45 = vector.shape_cast %44 : vector<64x8x32xf32> to vector<512x32xf32>
    %46 = arith.truncf %45 : vector<512x32xf32> to vector<512x32xbf16>
    %c0_38 = arith.constant 0 : index
    %c0_39 = arith.constant 0 : index
    %47 = vector.load %arg22[%c0_38, %c0_39] : memref<32x4xbf16, #tpu.memory_space<vmem>>, vector<32x4xbf16>
    %cst_40 = arith.constant dense<0.000000e+00> : vector<512x4xf32>
    %48 = tpu.matmul %46, %47, %cst_40 {dimension_numbers = #tpu.dot_dimension_numbers<[1], [0], [0], [1], [0, 0, 1, 1], [], []>} : vector<512x32xbf16>, vector<32x4xbf16>, vector<512x4xf32> -> vector<512x4xf32>
    %49 = vector.shape_cast %48 : vector<512x4xf32> to vector<64x8x4xf32>
    %cst_41 = arith.constant 0.000000e+00 : f32
    %50 = vector.broadcast %cst_41 : f32 to vector<64x8x4xf32>
    %51 = arith.cmpf ogt, %49, %50 : vector<64x8x4xf32>
    %cst_42 = arith.constant 2.000000e-01 : f32
    %52 = vector.broadcast %cst_42 : f32 to vector<64x8x4xf32>
    %53 = arith.mulf %52, %49 : vector<64x8x4xf32>
    %54 = arith.select %51, %49, %53 : vector<64x8x4xi1>, vector<64x8x4xf32>
    %cst_43 = arith.constant dense<0xFF800000> : vector<64x4xf32>
    %55 = vector.multi_reduction <maximumf>, %54, %cst_43 [1] : vector<64x8x4xf32> to vector<64x4xf32>
    %56 = vector.shape_cast %55 : vector<64x4xf32> to vector<64x1x4xf32>
    %57 = vector.broadcast %56 : vector<64x1x4xf32> to vector<64x8x4xf32>
    %58 = arith.subf %54, %57 : vector<64x8x4xf32>
    %59 = math.exp %58 : vector<64x8x4xf32>
    %cst_44 = arith.constant dense<0.000000e+00> : vector<64x4xf32>
    %60 = vector.multi_reduction <add>, %59, %cst_44 [1] : vector<64x8x4xf32> to vector<64x4xf32>
    %61 = vector.shape_cast %60 : vector<64x4xf32> to vector<64x1x4xf32>
    %62 = tpu.reciprocal %61 {approx = true} : vector<64x1x4xf32> -> vector<64x1x4xf32>
    %63 = vector.broadcast %62 : vector<64x1x4xf32> to vector<64x8x4xf32>
    %64 = arith.mulf %59, %63 : vector<64x8x4xf32>
    %65 = vector.shape_cast %64 : vector<64x8x4xf32> to vector<512x4xf32>
    %66 = arith.truncf %65 : vector<512x4xf32> to vector<512x4xbf16>
    %c0_45 = arith.constant 0 : index
    %c0_46 = arith.constant 0 : index
    %67 = vector.load %arg23[%c0_45, %c0_46] : memref<4x32xbf16, #tpu.memory_space<vmem>>, vector<4x32xbf16>
    %cst_47 = arith.constant dense<0.000000e+00> : vector<512x32xf32>
    %68 = tpu.matmul %66, %67, %cst_47 {dimension_numbers = #tpu.dot_dimension_numbers<[1], [0], [0], [1], [0, 0, 1, 1], [], []>} : vector<512x4xbf16>, vector<4x32xbf16>, vector<512x32xf32> -> vector<512x32xf32>
    %69 = vector.shape_cast %68 : vector<512x32xf32> to vector<64x8x32xf32>
    %70 = arith.mulf %41, %69 : vector<64x8x32xf32>
    %cst_48 = arith.constant dense<0.000000e+00> : vector<64x32xf32>
    %71 = vector.multi_reduction <add>, %70, %cst_48 [1] : vector<64x8x32xf32> to vector<64x32xf32>
    %72 = arith.truncf %71 : vector<64x32xf32> to vector<64x32xbf16>
    %c0_49 = arith.constant 0 : index
    %c0_50 = arith.constant 0 : index
    %73 = vector.load %arg17[%c0_49, %c0_50] : memref<32x32xbf16, #tpu.memory_space<vmem>>, vector<32x32xbf16>
    %cst_51 = arith.constant dense<0.000000e+00> : vector<64x32xf32>
    %74 = tpu.matmul %72, %73, %cst_51 {dimension_numbers = #tpu.dot_dimension_numbers<[1], [0], [0], [1], [0, 0, 1, 1], [], []>} : vector<64x32xbf16>, vector<32x32xbf16>, vector<64x32xf32> -> vector<64x32xf32>
    %c0_52 = arith.constant 0 : index
    %c0_53 = arith.constant 0 : index
    %75 = vector.load %arg18[%c0_52, %c0_53] : memref<16x32xbf16, #tpu.memory_space<vmem>>, vector<16x32xbf16>
    %cst_54 = arith.constant dense<0.000000e+00> : vector<64x32xf32>
    %76 = tpu.matmul %1, %75, %cst_54 {dimension_numbers = #tpu.dot_dimension_numbers<[1], [0], [0], [1], [0, 0, 1, 1], [], []>} : vector<64x16xbf16>, vector<16x32xbf16>, vector<64x32xf32> -> vector<64x32xf32>
    %77 = arith.addf %74, %76 : vector<64x32xf32>
    %c0_55 = arith.constant 0 : index
    %c0_56 = arith.constant 0 : index
    %78 = vector.load %arg19[%c0_55, %c0_56] : memref<1x32xf32, #tpu.memory_space<vmem>>, vector<1x32xf32>
    %79 = vector.broadcast %78 : vector<1x32xf32> to vector<64x32xf32>
    %80 = arith.addf %77, %79 : vector<64x32xf32>
    %cst_57 = arith.constant 0.000000e+00 : f32
    %81 = vector.broadcast %cst_57 : f32 to vector<64x32xf32>
    %82 = arith.maximumf %80, %81 : vector<64x32xf32>
    %cst_58 = arith.constant dense<0.000000e+00> : vector<64xf32>
    %83 = vector.multi_reduction <add>, %82, %cst_58 [1] : vector<64x32xf32> to vector<64xf32>
    %84 = vector.shape_cast %83 : vector<64xf32> to vector<64x1xf32>
    %cst_59 = arith.constant 3.200000e+01 : f32
    %85 = vector.broadcast %cst_59 : f32 to vector<64x1xf32>
    %86 = arith.divf %84, %85 : vector<64x1xf32>
    %87 = vector.broadcast %86 : vector<64x1xf32> to vector<64x32xf32>
    %88 = arith.subf %82, %87 : vector<64x32xf32>
    %89 = arith.mulf %88, %88 : vector<64x32xf32>
    %cst_60 = arith.constant dense<0.000000e+00> : vector<64xf32>
    %90 = vector.multi_reduction <add>, %89, %cst_60 [1] : vector<64x32xf32> to vector<64xf32>
    %91 = vector.shape_cast %90 : vector<64xf32> to vector<64x1xf32>
    %cst_61 = arith.constant 3.200000e+01 : f32
    %92 = vector.broadcast %cst_61 : f32 to vector<64x1xf32>
    %93 = arith.divf %91, %92 : vector<64x1xf32>
    %94 = vector.broadcast %86 : vector<64x1xf32> to vector<64x32xf32>
    %95 = arith.subf %82, %94 : vector<64x32xf32>
    %cst_62 = arith.constant 9.99999974E-6 : f32
    %96 = vector.broadcast %cst_62 : f32 to vector<64x1xf32>
    %97 = arith.addf %93, %96 : vector<64x1xf32>
    %98 = math.rsqrt %97 : vector<64x1xf32>
    %99 = vector.broadcast %98 : vector<64x1xf32> to vector<64x32xf32>
    %100 = arith.mulf %95, %99 : vector<64x32xf32>
    %c0_63 = arith.constant 0 : index
    %c0_64 = arith.constant 0 : index
    %101 = vector.load %arg20[%c0_63, %c0_64] : memref<1x32xf32, #tpu.memory_space<vmem>>, vector<1x32xf32>
    %102 = vector.broadcast %101 : vector<1x32xf32> to vector<64x32xf32>
    %103 = arith.mulf %100, %102 : vector<64x32xf32>
    %c0_65 = arith.constant 0 : index
    %c0_66 = arith.constant 0 : index
    %104 = vector.load %arg21[%c0_65, %c0_66] : memref<1x32xf32, #tpu.memory_space<vmem>>, vector<1x32xf32>
    %105 = vector.broadcast %104 : vector<1x32xf32> to vector<64x32xf32>
    %106 = arith.addf %103, %105 : vector<64x32xf32>
    %c0_67 = arith.constant 0 : index
    %c0_68 = arith.constant 0 : index
    %107 = vector.load %arg24[%c0_67, %c0_68] : memref<64x32xf32, #tpu.memory_space<vmem>>, vector<64x32xf32>
    tpu.vector_store %arg24[%c0_67, %c0_68], %106 {strides = array<i32>} : memref<64x32xf32, #tpu.memory_space<vmem>>, vector<64x32xf32>,
    return
  }
  func.func @transform_0(%arg0: i32) -> (i32, i32) {
    %c0_i32 = arith.constant 0 : i32
    %c0_i32_0 = arith.constant 0 : i32
    return %arg0, %c0_i32 : i32, i32
  }
  func.func @transform_1(%arg0: i32) -> (i32, i32) {
    %c0_i32 = arith.constant 0 : i32
    %c0_i32_0 = arith.constant 0 : i32
    return %arg0, %c0_i32 : i32, i32
  }
  func.func @transform_2(%arg0: i32) -> (i32, i32) {
    %c0_i32 = arith.constant 0 : i32
    %c0_i32_0 = arith.constant 0 : i32
    return %arg0, %c0_i32 : i32, i32
  }
  func.func @transform_3(%arg0: i32) -> (i32, i32) {
    %c0_i32 = arith.constant 0 : i32
    %c0_i32_0 = arith.constant 0 : i32
    return %arg0, %c0_i32 : i32, i32
  }
  func.func @transform_4(%arg0: i32) -> (i32, i32) {
    %c0_i32 = arith.constant 0 : i32
    %c0_i32_0 = arith.constant 0 : i32
    return %arg0, %c0_i32 : i32, i32
  }
  func.func @transform_5(%arg0: i32) -> (i32, i32) {
    %c0_i32 = arith.constant 0 : i32
    %c0_i32_0 = arith.constant 0 : i32
    %c0_i32_1 = arith.constant 0 : i32
    return %c0_i32, %c0_i32_0 : i32, i32
  }
  func.func @transform_6(%arg0: i32) -> (i32, i32) {
    %c0_i32 = arith.constant 0 : i32
    %c0_i32_0 = arith.constant 0 : i32
    %c0_i32_1 = arith.constant 0 : i32
    return %c0_i32, %c0_i32_0 : i32, i32
  }
  func.func @transform_7(%arg0: i32) -> (i32, i32) {
    %c0_i32 = arith.constant 0 : i32
    %c0_i32_0 = arith.constant 0 : i32
    %c0_i32_1 = arith.constant 0 : i32
    return %c0_i32, %c0_i32_0 : i32, i32
  }
  func.func @transform_8(%arg0: i32) -> (i32, i32) {
    %c0_i32 = arith.constant 0 : i32
    %c0_i32_0 = arith.constant 0 : i32
    %c0_i32_1 = arith.constant 0 : i32
    return %c0_i32, %c0_i32_0 : i32, i32
  }
  func.func @transform_9(%arg0: i32) -> (i32, i32) {
    %c0_i32 = arith.constant 0 : i32
    %c0_i32_0 = arith.constant 0 : i32
    %c0_i32_1 = arith.constant 0 : i32
    return %c0_i32, %c0_i32_0 : i32, i32
  }
  func.func @transform_10(%arg0: i32) -> (i32, i32) {
    %c0_i32 = arith.constant 0 : i32
    %c0_i32_0 = arith.constant 0 : i32
    %c0_i32_1 = arith.constant 0 : i32
    return %c0_i32, %c0_i32_0 : i32, i32
  }
  func.func @transform_11(%arg0: i32) -> (i32, i32) {
    %c0_i32 = arith.constant 0 : i32
    %c0_i32_0 = arith.constant 0 : i32
    %c0_i32_1 = arith.constant 0 : i32
    return %c0_i32, %c0_i32_0 : i32, i32
  }
  func.func @transform_12(%arg0: i32) -> (i32, i32) {
    %c0_i32 = arith.constant 0 : i32
    %c0_i32_0 = arith.constant 0 : i32
    %c0_i32_1 = arith.constant 0 : i32
    return %c0_i32, %c0_i32_0 : i32, i32
  }
  func.func @transform_13(%arg0: i32) -> (i32, i32) {
    %c0_i32 = arith.constant 0 : i32
    %c0_i32_0 = arith.constant 0 : i32
    %c0_i32_1 = arith.constant 0 : i32
    return %c0_i32, %c0_i32_0 : i32, i32
  }
  func.func @transform_14(%arg0: i32) -> (i32, i32) {
    %c0_i32 = arith.constant 0 : i32
    %c0_i32_0 = arith.constant 0 : i32
    %c0_i32_1 = arith.constant 0 : i32
    return %c0_i32, %c0_i32_0 : i32, i32
  }
  func.func @transform_15(%arg0: i32) -> (i32, i32) {
    %c0_i32 = arith.constant 0 : i32
    %c0_i32_0 = arith.constant 0 : i32
    %c0_i32_1 = arith.constant 0 : i32
    return %c0_i32, %c0_i32_0 : i32, i32
  }
  func.func @transform_16(%arg0: i32) -> (i32, i32) {
    %c0_i32 = arith.constant 0 : i32
    %c0_i32_0 = arith.constant 0 : i32
    %c0_i32_1 = arith.constant 0 : i32
    return %c0_i32, %c0_i32_0 : i32, i32
  }
  func.func @transform_17(%arg0: i32) -> (i32, i32) {
    %c0_i32 = arith.constant 0 : i32
    %c0_i32_0 = arith.constant 0 : i32
    %c0_i32_1 = arith.constant 0 : i32
    return %c0_i32, %c0_i32_0 : i32, i32
  }
  func.func @transform_18(%arg0: i32) -> (i32, i32) {
    %c0_i32 = arith.constant 0 : i32
    %c0_i32_0 = arith.constant 0 : i32
    %c0_i32_1 = arith.constant 0 : i32
    return %c0_i32, %c0_i32_0 : i32, i32
  }
  func.func @transform_19(%arg0: i32) -> (i32, i32) {
    %c0_i32 = arith.constant 0 : i32
    %c0_i32_0 = arith.constant 0 : i32
    %c0_i32_1 = arith.constant 0 : i32
    return %c0_i32, %c0_i32_0 : i32, i32
  }
  func.func @transform_20(%arg0: i32) -> (i32, i32) {
    %c0_i32 = arith.constant 0 : i32
    %c0_i32_0 = arith.constant 0 : i32
    %c0_i32_1 = arith.constant 0 : i32
    return %c0_i32, %c0_i32_0 : i32, i32
  }
  func.func @transform_21(%arg0: i32) -> (i32, i32) {
    %c0_i32 = arith.constant 0 : i32
    %c0_i32_0 = arith.constant 0 : i32
    %c0_i32_1 = arith.constant 0 : i32
    return %c0_i32, %c0_i32_0 : i32, i32
  }
  func.func @transform_22(%arg0: i32) -> (i32, i32) {
    %c0_i32 = arith.constant 0 : i32
    %c0_i32_0 = arith.constant 0 : i32
    %c0_i32_1 = arith.constant 0 : i32
    return %c0_i32, %c0_i32_0 : i32, i32
  }
  func.func @transform_23(%arg0: i32) -> (i32, i32) {
    %c0_i32 = arith.constant 0 : i32
    %c0_i32_0 = arith.constant 0 : i32
    return %arg0, %c0_i32 : i32, i32
  }
}

module attributes {stable_mosaic.version = 11 : i64} {
  func.func @_aggregator_kernel(%arg0: i32, %arg1: memref<64x16xf32, #tpu.memory_space<vmem>>, %arg2: memref<64x8xf32, #tpu.memory_space<vmem>>, %arg3: memref<512x16xf32, #tpu.memory_space<vmem>>, %arg4: memref<512x8xf32, #tpu.memory_space<vmem>>, %arg5: memref<512x8xf32, #tpu.memory_space<vmem>>, %arg6: memref<16x32xbf16, #tpu.memory_space<vmem>>, %arg7: memref<8x32xbf16, #tpu.memory_space<vmem>>, %arg8: memref<1x32xf32, #tpu.memory_space<vmem>>, %arg9: memref<16x32xbf16, #tpu.memory_space<vmem>>, %arg10: memref<8x32xbf16, #tpu.memory_space<vmem>>, %arg11: memref<8x32xbf16, #tpu.memory_space<vmem>>, %arg12: memref<1x32xf32, #tpu.memory_space<vmem>>, %arg13: memref<16x32xbf16, #tpu.memory_space<vmem>>, %arg14: memref<8x32xbf16, #tpu.memory_space<vmem>>, %arg15: memref<8x32xbf16, #tpu.memory_space<vmem>>, %arg16: memref<1x32xf32, #tpu.memory_space<vmem>>, %arg17: memref<32x32xbf16, #tpu.memory_space<vmem>>, %arg18: memref<16x32xbf16, #tpu.memory_space<vmem>>, %arg19: memref<1x32xf32, #tpu.memory_space<vmem>>, %arg20: memref<1x32xf32, #tpu.memory_space<vmem>>, %arg21: memref<1x32xf32, #tpu.memory_space<vmem>>, %arg22: memref<32x4xbf16, #tpu.memory_space<vmem>>, %arg23: memref<4x32xbf16, #tpu.memory_space<vmem>>, %arg24: memref<64x32xf32, #tpu.memory_space<vmem>>) attributes {dimension_semantics = [#tpu.dimension_semantics<parallel>], iteration_bounds = array<i64: 1>, scalar_prefetch = 0 : i64, scratch_operands = 0 : i64, tpu.core_type = #tpu.core_type<tc>, window_params = [{transform_indices = @transform_0, window_bounds = array<i64: 64, 16>}, {transform_indices = @transform_1, window_bounds = array<i64: 64, 8>}, {transform_indices = @transform_2, window_bounds = array<i64: 512, 16>}, {transform_indices = @transform_3, window_bounds = array<i64: 512, 8>}, {transform_indices = @transform_4, window_bounds = array<i64: 512, 8>}, {pipeline_mode = #tpu.pipeline_mode<synchronous>, transform_indices = @transform_5, window_bounds = array<i64: 16, 32>}, {pipeline_mode = #tpu.pipeline_mode<synchronous>, transform_indices = @transform_6, window_bounds = array<i64: 8, 32>}, {pipeline_mode = #tpu.pipeline_mode<synchronous>, transform_indices = @transform_7, window_bounds = array<i64: 1, 32>}, {pipeline_mode = #tpu.pipeline_mode<synchronous>, transform_indices = @transform_8, window_bounds = array<i64: 16, 32>}, {pipeline_mode = #tpu.pipeline_mode<synchronous>, transform_indices = @transform_9, window_bounds = array<i64: 8, 32>}, {pipeline_mode = #tpu.pipeline_mode<synchronous>, transform_indices = @transform_10, window_bounds = array<i64: 8, 32>}, {pipeline_mode = #tpu.pipeline_mode<synchronous>, transform_indices = @transform_11, window_bounds = array<i64: 1, 32>}, {pipeline_mode = #tpu.pipeline_mode<synchronous>, transform_indices = @transform_12, window_bounds = array<i64: 16, 32>}, {pipeline_mode = #tpu.pipeline_mode<synchronous>, transform_indices = @transform_13, window_bounds = array<i64: 8, 32>}, {pipeline_mode = #tpu.pipeline_mode<synchronous>, transform_indices = @transform_14, window_bounds = array<i64: 8, 32>}, {pipeline_mode = #tpu.pipeline_mode<synchronous>, transform_indices = @transform_15, window_bounds = array<i64: 1, 32>}, {pipeline_mode = #tpu.pipeline_mode<synchronous>, transform_indices = @transform_16, window_bounds = array<i64: 32, 32>}, {pipeline_mode = #tpu.pipeline_mode<synchronous>, transform_indices = @transform_17, window_bounds = array<i64: 16, 32>}, {pipeline_mode = #tpu.pipeline_mode<synchronous>, transform_indices = @transform_18, window_bounds = array<i64: 1, 32>}, {pipeline_mode = #tpu.pipeline_mode<synchronous>, transform_indices = @transform_19, window_bounds = array<i64: 1, 32>}, {pipeline_mode = #tpu.pipeline_mode<synchronous>, transform_indices = @transform_20, window_bounds = array<i64: 1, 32>}, {pipeline_mode = #tpu.pipeline_mode<synchronous>, transform_indices = @transform_21, window_bounds = array<i64: 32, 4>}, {pipeline_mode = #tpu.pipeline_mode<synchronous>, transform_indices = @transform_22, window_bounds = array<i64: 4, 32>}, {transform_indices = @transform_23, window_bounds = array<i64: 64, 32>}]} {
    %c0 = arith.constant 0 : index
    %c0_0 = arith.constant 0 : index
    %0 = vector.load %arg1[%c0, %c0_0] : memref<64x16xf32, #tpu.memory_space<vmem>>, vector<64x16xf32>
    %1 = arith.truncf %0 : vector<64x16xf32> to vector<64x16xbf16>
    %c0_1 = arith.constant 0 : index
    %c0_2 = arith.constant 0 : index
    %2 = vector.load %arg2[%c0_1, %c0_2] : memref<64x8xf32, #tpu.memory_space<vmem>>, vector<64x8xf32>
    %3 = arith.truncf %2 : vector<64x8xf32> to vector<64x8xbf16>
    %c0_3 = arith.constant 0 : index
    %c0_4 = arith.constant 0 : index
    %4 = vector.load %arg3[%c0_3, %c0_4] : memref<512x16xf32, #tpu.memory_space<vmem>>, vector<512x16xf32>
    %5 = arith.truncf %4 : vector<512x16xf32> to vector<512x16xbf16>
    %c0_5 = arith.constant 0 : index
    %c0_6 = arith.constant 0 : index
    %6 = vector.load %arg4[%c0_5, %c0_6] : memref<512x8xf32, #tpu.memory_space<vmem>>, vector<512x8xf32>
    %7 = arith.truncf %6 : vector<512x8xf32> to vector<512x8xbf16>
    %c0_7 = arith.constant 0 : index
    %c0_8 = arith.constant 0 : index
    %8 = vector.load %arg5[%c0_7, %c0_8] : memref<512x8xf32, #tpu.memory_space<vmem>>, vector<512x8xf32>
    %9 = arith.truncf %8 : vector<512x8xf32> to vector<512x8xbf16>
    %c0_9 = arith.constant 0 : index
    %c0_10 = arith.constant 0 : index
    %10 = vector.load %arg6[%c0_9, %c0_10] : memref<16x32xbf16, #tpu.memory_space<vmem>>, vector<16x32xbf16>
    %cst = arith.constant dense<0.000000e+00> : vector<64x32xf32>
    %11 = tpu.matmul %1, %10, %cst {dimension_numbers = #tpu.dot_dimension_numbers<[1], [0], [0], [1], [0, 0, 1, 1], [], []>} : vector<64x16xbf16>, vector<16x32xbf16>, vector<64x32xf32> -> vector<64x32xf32>
    %c0_11 = arith.constant 0 : index
    %c0_12 = arith.constant 0 : index
    %12 = vector.load %arg7[%c0_11, %c0_12] : memref<8x32xbf16, #tpu.memory_space<vmem>>, vector<8x32xbf16>
    %cst_13 = arith.constant dense<0.000000e+00> : vector<64x32xf32>
    %13 = tpu.matmul %3, %12, %cst_13 {dimension_numbers = #tpu.dot_dimension_numbers<[1], [0], [0], [1], [0, 0, 1, 1], [], []>} : vector<64x8xbf16>, vector<8x32xbf16>, vector<64x32xf32> -> vector<64x32xf32>
    %14 = arith.addf %11, %13 : vector<64x32xf32>
    %c0_14 = arith.constant 0 : index
    %c0_15 = arith.constant 0 : index
    %15 = vector.load %arg8[%c0_14, %c0_15] : memref<1x32xf32, #tpu.memory_space<vmem>>, vector<1x32xf32>
    %16 = vector.broadcast %15 : vector<1x32xf32> to vector<64x32xf32>
    %17 = arith.addf %14, %16 : vector<64x32xf32>
    %c0_16 = arith.constant 0 : index
    %c0_17 = arith.constant 0 : index
    %18 = vector.load %arg9[%c0_16, %c0_17] : memref<16x32xbf16, #tpu.memory_space<vmem>>, vector<16x32xbf16>
    %cst_18 = arith.constant dense<0.000000e+00> : vector<512x32xf32>
    %19 = tpu.matmul %5, %18, %cst_18 {dimension_numbers = #tpu.dot_dimension_numbers<[1], [0], [0], [1], [0, 0, 1, 1], [], []>} : vector<512x16xbf16>, vector<16x32xbf16>, vector<512x32xf32> -> vector<512x32xf32>
    %c0_19 = arith.constant 0 : index
    %c0_20 = arith.constant 0 : index
    %20 = vector.load %arg10[%c0_19, %c0_20] : memref<8x32xbf16, #tpu.memory_space<vmem>>, vector<8x32xbf16>
    %cst_21 = arith.constant dense<0.000000e+00> : vector<512x32xf32>
    %21 = tpu.matmul %7, %20, %cst_21 {dimension_numbers = #tpu.dot_dimension_numbers<[1], [0], [0], [1], [0, 0, 1, 1], [], []>} : vector<512x8xbf16>, vector<8x32xbf16>, vector<512x32xf32> -> vector<512x32xf32>
    %22 = arith.addf %19, %21 : vector<512x32xf32>
    %c0_22 = arith.constant 0 : index
    %c0_23 = arith.constant 0 : index
    %23 = vector.load %arg11[%c0_22, %c0_23] : memref<8x32xbf16, #tpu.memory_space<vmem>>, vector<8x32xbf16>
    %cst_24 = arith.constant dense<0.000000e+00> : vector<512x32xf32>
    %24 = tpu.matmul %9, %23, %cst_24 {dimension_numbers = #tpu.dot_dimension_numbers<[1], [0], [0], [1], [0, 0, 1, 1], [], []>} : vector<512x8xbf16>, vector<8x32xbf16>, vector<512x32xf32> -> vector<512x32xf32>
    %25 = arith.addf %22, %24 : vector<512x32xf32>
    %c0_25 = arith.constant 0 : index
    %c0_26 = arith.constant 0 : index
    %26 = vector.load %arg12[%c0_25, %c0_26] : memref<1x32xf32, #tpu.memory_space<vmem>>, vector<1x32xf32>
    %27 = vector.broadcast %26 : vector<1x32xf32> to vector<512x32xf32>
    %28 = arith.addf %25, %27 : vector<512x32xf32>
    %29 = vector.shape_cast %28 : vector<512x32xf32> to vector<64x8x32xf32>
    %c0_27 = arith.constant 0 : index
    %c0_28 = arith.constant 0 : index
    %30 = vector.load %arg13[%c0_27, %c0_28] : memref<16x32xbf16, #tpu.memory_space<vmem>>, vector<16x32xbf16>
    %cst_29 = arith.constant dense<0.000000e+00> : vector<512x32xf32>
    %31 = tpu.matmul %5, %30, %cst_29 {dimension_numbers = #tpu.dot_dimension_numbers<[1], [0], [0], [1], [0, 0, 1, 1], [], []>} : vector<512x16xbf16>, vector<16x32xbf16>, vector<512x32xf32> -> vector<512x32xf32>
    %c0_30 = arith.constant 0 : index
    %c0_31 = arith.constant 0 : index
    %32 = vector.load %arg14[%c0_30, %c0_31] : memref<8x32xbf16, #tpu.memory_space<vmem>>, vector<8x32xbf16>
    %cst_32 = arith.constant dense<0.000000e+00> : vector<512x32xf32>
    %33 = tpu.matmul %7, %32, %cst_32 {dimension_numbers = #tpu.dot_dimension_numbers<[1], [0], [0], [1], [0, 0, 1, 1], [], []>} : vector<512x8xbf16>, vector<8x32xbf16>, vector<512x32xf32> -> vector<512x32xf32>
    %34 = arith.addf %31, %33 : vector<512x32xf32>
    %c0_33 = arith.constant 0 : index
    %c0_34 = arith.constant 0 : index
    %35 = vector.load %arg15[%c0_33, %c0_34] : memref<8x32xbf16, #tpu.memory_space<vmem>>, vector<8x32xbf16>
    %cst_35 = arith.constant dense<0.000000e+00> : vector<512x32xf32>
    %36 = tpu.matmul %9, %35, %cst_35 {dimension_numbers = #tpu.dot_dimension_numbers<[1], [0], [0], [1], [0, 0, 1, 1], [], []>} : vector<512x8xbf16>, vector<8x32xbf16>, vector<512x32xf32> -> vector<512x32xf32>
    %37 = arith.addf %34, %36 : vector<512x32xf32>
    %c0_36 = arith.constant 0 : index
    %c0_37 = arith.constant 0 : index
    %38 = vector.load %arg16[%c0_36, %c0_37] : memref<1x32xf32, #tpu.memory_space<vmem>>, vector<1x32xf32>
    %39 = vector.broadcast %38 : vector<1x32xf32> to vector<512x32xf32>
    %40 = arith.addf %37, %39 : vector<512x32xf32>
    %41 = vector.shape_cast %40 : vector<512x32xf32> to vector<64x8x32xf32>
    %42 = vector.shape_cast %17 : vector<64x32xf32> to vector<64x1x32xf32>
    %43 = vector.broadcast %42 : vector<64x1x32xf32> to vector<64x8x32xf32>
    %44 = arith.mulf %43, %29 : vector<64x8x32xf32>
    %45 = vector.shape_cast %44 : vector<64x8x32xf32> to vector<512x32xf32>
    %46 = arith.truncf %45 : vector<512x32xf32> to vector<512x32xbf16>
    %c0_38 = arith.constant 0 : index
    %c0_39 = arith.constant 0 : index
    %47 = vector.load %arg22[%c0_38, %c0_39] : memref<32x4xbf16, #tpu.memory_space<vmem>>, vector<32x4xbf16>
    %cst_40 = arith.constant dense<0.000000e+00> : vector<512x4xf32>
    %48 = tpu.matmul %46, %47, %cst_40 {dimension_numbers = #tpu.dot_dimension_numbers<[1], [0], [0], [1], [0, 0, 1, 1], [], []>} : vector<512x32xbf16>, vector<32x4xbf16>, vector<512x4xf32> -> vector<512x4xf32>
    %49 = vector.shape_cast %48 : vector<512x4xf32> to vector<64x8x4xf32>
    %cst_41 = arith.constant 0.000000e+00 : f32
    %50 = vector.broadcast %cst_41 : f32 to vector<64x8x4xf32>
    %51 = arith.cmpf ogt, %49, %50 : vector<64x8x4xf32>
    %cst_42 = arith.constant 2.000000e-01 : f32
    %52 = vector.broadcast %cst_42 : f32 to vector<64x8x4xf32>
    %53 = arith.mulf %52, %49 : vector<64x8x4xf32>
    %54 = arith.select %51, %49, %53 : vector<64x8x4xi1>, vector<64x8x4xf32>
    %cst_43 = arith.constant dense<0xFF800000> : vector<64x4xf32>
    %55 = vector.multi_reduction <maximumf>, %54, %cst_43 [1] : vector<64x8x4xf32> to vector<64x4xf32>
    %56 = vector.shape_cast %55 : vector<64x4xf32> to vector<64x1x4xf32>
    %57 = vector.broadcast %56 : vector<64x1x4xf32> to vector<64x8x4xf32>
    %58 = arith.subf %54, %57 : vector<64x8x4xf32>
    %59 = math.exp %58 : vector<64x8x4xf32>
    %cst_44 = arith.constant dense<0.000000e+00> : vector<64x4xf32>
    %60 = vector.multi_reduction <add>, %59, %cst_44 [1] : vector<64x8x4xf32> to vector<64x4xf32>
    %61 = vector.shape_cast %60 : vector<64x4xf32> to vector<64x1x4xf32>
    %62 = tpu.reciprocal %61 {approx = true} : vector<64x1x4xf32> -> vector<64x1x4xf32>
    %63 = vector.broadcast %62 : vector<64x1x4xf32> to vector<64x8x4xf32>
    %64 = arith.mulf %59, %63 : vector<64x8x4xf32>
    %65 = vector.shape_cast %64 : vector<64x8x4xf32> to vector<512x4xf32>
    %66 = arith.truncf %65 : vector<512x4xf32> to vector<512x4xbf16>
    %c0_45 = arith.constant 0 : index
    %c0_46 = arith.constant 0 : index
    %67 = vector.load %arg23[%c0_45, %c0_46] : memref<4x32xbf16, #tpu.memory_space<vmem>>, vector<4x32xbf16>
    %cst_47 = arith.constant dense<0.000000e+00> : vector<512x32xf32>
    %68 = tpu.matmul %66, %67, %cst_47 {dimension_numbers = #tpu.dot_dimension_numbers<[1], [0], [0], [1], [0, 0, 1, 1], [], []>} : vector<512x4xbf16>, vector<4x32xbf16>, vector<512x32xf32> -> vector<512x32xf32>
    %69 = vector.shape_cast %68 : vector<512x32xf32> to vector<64x8x32xf32>
    %70 = arith.mulf %41, %69 : vector<64x8x32xf32>
    %cst_48 = arith.constant dense<0.000000e+00> : vector<64x32xf32>
    %71 = vector.multi_reduction <add>, %70, %cst_48 [1] : vector<64x8x32xf32> to vector<64x32xf32>
    %72 = arith.truncf %71 : vector<64x32xf32> to vector<64x32xbf16>
    %c0_49 = arith.constant 0 : index
    %c0_50 = arith.constant 0 : index
    %73 = vector.load %arg17[%c0_49, %c0_50] : memref<32x32xbf16, #tpu.memory_space<vmem>>, vector<32x32xbf16>
    %cst_51 = arith.constant dense<0.000000e+00> : vector<64x32xf32>
    %74 = tpu.matmul %72, %73, %cst_51 {dimension_numbers = #tpu.dot_dimension_numbers<[1], [0], [0], [1], [0, 0, 1, 1], [], []>} : vector<64x32xbf16>, vector<32x32xbf16>, vector<64x32xf32> -> vector<64x32xf32>
    %c0_52 = arith.constant 0 : index
    %c0_53 = arith.constant 0 : index
    %75 = vector.load %arg18[%c0_52, %c0_53] : memref<16x32xbf16, #tpu.memory_space<vmem>>, vector<16x32xbf16>
    %cst_54 = arith.constant dense<0.000000e+00> : vector<64x32xf32>
    %76 = tpu.matmul %1, %75, %cst_54 {dimension_numbers = #tpu.dot_dimension_numbers<[1], [0], [0], [1], [0, 0, 1, 1], [], []>} : vector<64x16xbf16>, vector<16x32xbf16>, vector<64x32xf32> -> vector<64x32xf32>
    %77 = arith.addf %74, %76 : vector<64x32xf32>
    %c0_55 = arith.constant 0 : index
    %c0_56 = arith.constant 0 : index
    %78 = vector.load %arg19[%c0_55, %c0_56] : memref<1x32xf32, #tpu.memory_space<vmem>>, vector<1x32xf32>
    %79 = vector.broadcast %78 : vector<1x32xf32> to vector<64x32xf32>
    %80 = arith.addf %77, %79 : vector<64x32xf32>
    %cst_57 = arith.constant 0.000000e+00 : f32
    %81 = vector.broadcast %cst_57 : f32 to vector<64x32xf32>
    %82 = arith.maximumf %80, %81 : vector<64x32xf32>
    %cst_58 = arith.constant dense<0.000000e+00> : vector<64xf32>
    %83 = vector.multi_reduction <add>, %82, %cst_58 [1] : vector<64x32xf32> to vector<64xf32>
    %84 = vector.shape_cast %83 : vector<64xf32> to vector<64x1xf32>
    %cst_59 = arith.constant 3.200000e+01 : f32
    %85 = vector.broadcast %cst_59 : f32 to vector<64x1xf32>
    %86 = arith.divf %84, %85 : vector<64x1xf32>
    %87 = vector.broadcast %86 : vector<64x1xf32> to vector<64x32xf32>
    %88 = arith.subf %82, %87 : vector<64x32xf32>
    %89 = arith.mulf %88, %88 : vector<64x32xf32>
    %cst_60 = arith.constant dense<0.000000e+00> : vector<64xf32>
    %90 = vector.multi_reduction <add>, %89, %cst_60 [1] : vector<64x32xf32> to vector<64xf32>
    %91 = vector.shape_cast %90 : vector<64xf32> to vector<64x1xf32>
    %cst_61 = arith.constant 3.200000e+01 : f32
    %92 = vector.broadcast %cst_61 : f32 to vector<64x1xf32>
    %93 = arith.divf %91, %92 : vector<64x1xf32>
    %94 = vector.broadcast %86 : vector<64x1xf32> to vector<64x32xf32>
    %95 = arith.subf %82, %94 : vector<64x32xf32>
    %cst_62 = arith.constant 9.99999974E-6 : f32
    %96 = vector.broadcast %cst_62 : f32 to vector<64x1xf32>
    %97 = arith.addf %93, %96 : vector<64x1xf32>
    %98 = math.rsqrt %97 : vector<64x1xf32>
    %99 = vector.broadcast %98 : vector<64x1xf32> to vector<64x32xf32>
    %100 = arith.mulf %95, %99 : vector<64x32xf32>
    %c0_63 = arith.constant 0 : index
    %c0_64 = arith.constant 0 : index
    %101 = vector.load %arg20[%c0_63, %c0_64] : memref<1x32xf32, #tpu.memory_space<vmem>>, vector<1x32xf32>
    %102 = vector.broadcast %101 : vector<1x32xf32> to vector<64x32xf32>
    %103 = arith.mulf %100, %102 : vector<64x32xf32>
    %c0_65 = arith.constant 0 : index
    %c0_66 = arith.constant 0 : index
    %104 = vector.load %arg21[%c0_65, %c0_66] : memref<1x32xf32, #tpu.memory_space<vmem>>, vector<1x32xf32>
    %105 = vector.broadcast %104 : vector<1x32xf32> to vector<64x32xf32>
    %106 = arith.addf %103, %105 : vector<64x32xf32>
    %c0_67 = arith.constant 0 : index
    %c0_68 = arith.constant 0 : index
    %107 = vector.load %arg24[%c0_67, %c0_68] : memref<64x32xf32, #tpu.memory_space<vmem>>, vector<64x32xf32>
    tpu.vector_store %arg24[%c0_67, %c0_68], %106 {strides = array<i32>} : memref<64x32xf32, #tpu.memory_space<vmem>>, vector<64x32xf32>,
    return
  }
  func.func @transform_0(%arg0: i32) -> (i32, i32) {
    %c0_i32 = arith.constant 0 : i32
    %c0_i32_0 = arith.constant 0 : i32
    return %arg0, %c0_i32 : i32, i32
  }
  func.func @transform_1(%arg0: i32) -> (i32, i32) {
    %c0_i32 = arith.constant 0 : i32
    %c0_i32_0 = arith.constant 0 : i32
    return %arg0, %c0_i32 : i32, i32
  }
  func.func @transform_2(%arg0: i32) -> (i32, i32) {
    %c0_i32 = arith.constant 0 : i32
    %c0_i32_0 = arith.constant 0 : i32
    return %arg0, %c0_i32 : i32, i32
  }
  func.func @transform_3(%arg0: i32) -> (i32, i32) {
    %c0_i32 = arith.constant 0 : i32
    %c0_i32_0 = arith.constant 0 : i32
    return %arg0, %c0_i32 : i32, i32
  }
  func.func @transform_4(%arg0: i32) -> (i32, i32) {
    %c0_i32 = arith.constant 0 : i32
    %c0_i32_0 = arith.constant 0 : i32
    return %arg0, %c0_i32 : i32, i32
  }
  func.func @transform_5(%arg0: i32) -> (i32, i32) {
    %c0_i32 = arith.constant 0 : i32
    %c0_i32_0 = arith.constant 0 : i32
    %c0_i32_1 = arith.constant 0 : i32
    return %c0_i32, %c0_i32_0 : i32, i32
  }
  func.func @transform_6(%arg0: i32) -> (i32, i32) {
    %c0_i32 = arith.constant 0 : i32
    %c0_i32_0 = arith.constant 0 : i32
    %c0_i32_1 = arith.constant 0 : i32
    return %c0_i32, %c0_i32_0 : i32, i32
  }
  func.func @transform_7(%arg0: i32) -> (i32, i32) {
    %c0_i32 = arith.constant 0 : i32
    %c0_i32_0 = arith.constant 0 : i32
    %c0_i32_1 = arith.constant 0 : i32
    return %c0_i32, %c0_i32_0 : i32, i32
  }
  func.func @transform_8(%arg0: i32) -> (i32, i32) {
    %c0_i32 = arith.constant 0 : i32
    %c0_i32_0 = arith.constant 0 : i32
    %c0_i32_1 = arith.constant 0 : i32
    return %c0_i32, %c0_i32_0 : i32, i32
  }
  func.func @transform_9(%arg0: i32) -> (i32, i32) {
    %c0_i32 = arith.constant 0 : i32
    %c0_i32_0 = arith.constant 0 : i32
    %c0_i32_1 = arith.constant 0 : i32
    return %c0_i32, %c0_i32_0 : i32, i32
  }
  func.func @transform_10(%arg0: i32) -> (i32, i32) {
    %c0_i32 = arith.constant 0 : i32
    %c0_i32_0 = arith.constant 0 : i32
    %c0_i32_1 = arith.constant 0 : i32
    return %c0_i32, %c0_i32_0 : i32, i32
  }
  func.func @transform_11(%arg0: i32) -> (i32, i32) {
    %c0_i32 = arith.constant 0 : i32
    %c0_i32_0 = arith.constant 0 : i32
    %c0_i32_1 = arith.constant 0 : i32
    return %c0_i32, %c0_i32_0 : i32, i32
  }
  func.func @transform_12(%arg0: i32) -> (i32, i32) {
    %c0_i32 = arith.constant 0 : i32
    %c0_i32_0 = arith.constant 0 : i32
    %c0_i32_1 = arith.constant 0 : i32
    return %c0_i32, %c0_i32_0 : i32, i32
  }
  func.func @transform_13(%arg0: i32) -> (i32, i32) {
    %c0_i32 = arith.constant 0 : i32
    %c0_i32_0 = arith.constant 0 : i32
    %c0_i32_1 = arith.constant 0 : i32
    return %c0_i32, %c0_i32_0 : i32, i32
  }
  func.func @transform_14(%arg0: i32) -> (i32, i32) {
    %c0_i32 = arith.constant 0 : i32
    %c0_i32_0 = arith.constant 0 : i32
    %c0_i32_1 = arith.constant 0 : i32
    return %c0_i32, %c0_i32_0 : i32, i32
  }
  func.func @transform_15(%arg0: i32) -> (i32, i32) {
    %c0_i32 = arith.constant 0 : i32
    %c0_i32_0 = arith.constant 0 : i32
    %c0_i32_1 = arith.constant 0 : i32
    return %c0_i32, %c0_i32_0 : i32, i32
  }
  func.func @transform_16(%arg0: i32) -> (i32, i32) {
    %c0_i32 = arith.constant 0 : i32
    %c0_i32_0 = arith.constant 0 : i32
    %c0_i32_1 = arith.constant 0 : i32
    return %c0_i32, %c0_i32_0 : i32, i32
  }
  func.func @transform_17(%arg0: i32) -> (i32, i32) {
    %c0_i32 = arith.constant 0 : i32
    %c0_i32_0 = arith.constant 0 : i32
    %c0_i32_1 = arith.constant 0 : i32
    return %c0_i32, %c0_i32_0 : i32, i32
  }
  func.func @transform_18(%arg0: i32) -> (i32, i32) {
    %c0_i32 = arith.constant 0 : i32
    %c0_i32_0 = arith.constant 0 : i32
    %c0_i32_1 = arith.constant 0 : i32
    return %c0_i32, %c0_i32_0 : i32, i32
  }
  func.func @transform_19(%arg0: i32) -> (i32, i32) {
    %c0_i32 = arith.constant 0 : i32
    %c0_i32_0 = arith.constant 0 : i32
    %c0_i32_1 = arith.constant 0 : i32
    return %c0_i32, %c0_i32_0 : i32, i32
  }
  func.func @transform_20(%arg0: i32) -> (i32, i32) {
    %c0_i32 = arith.constant 0 : i32
    %c0_i32_0 = arith.constant 0 : i32
    %c0_i32_1 = arith.constant 0 : i32
    return %c0_i32, %c0_i32_0 : i32, i32
  }
  func.func @transform_21(%arg0: i32) -> (i32, i32) {
    %c0_i32 = arith.constant 0 : i32
    %c0_i32_0 = arith.constant 0 : i32
    %c0_i32_1 = arith.constant 0 : i32
    return %c0_i32, %c0_i32_0 : i32, i32
  }
  func.func @transform_22(%arg0: i32) -> (i32, i32) {
    %c0_i32 = arith.constant 0 : i32
    %c0_i32_0 = arith.constant 0 : i32
    %c0_i32_1 = arith.constant 0 : i32
    return %c0_i32, %c0_i32_0 : i32, i32
  }
  func.func @transform_23(%arg0: i32) -> (i32, i32) {
    %c0_i32 = arith.constant 0 : i32
    %c0_i32_0 = arith.constant 0 : i32
    return %arg0, %c0_i32 : i32, i32
  }
}

</mosaic_0001>

<llo_original>
// kernel: tpu_custom_call.1
$region0: #{tpu_custom_call.1}
  #allocation0 [shape = 'u32[]', space=smem, size = 0x4, offset = 0x4, fixed_abs, tag = 'smem constant byte address 0x4 - core index']
  #allocation1 [shape = 'u32[72,128]{1,0:T(1,128)}', space=vmem, size = 0x9000, scoped, tag = 'internal scratch']
  %s0 = inlined_call_operand.vmem [shape: f32[64,16], index: 0, kind: input, shape index: {}]
  %s1 = inlined_call_operand.vmem [shape: f32[64,8], index: 1, kind: input, shape index: {}]
  %s2 = inlined_call_operand.vmem [shape: f32[512,16], index: 2, kind: input, shape index: {}]
  %s3 = inlined_call_operand.vmem [shape: f32[512,8], index: 3, kind: input, shape index: {}]
  %s4 = inlined_call_operand.vmem [shape: f32[512,8], index: 4, kind: input, shape index: {}]
  %s5 = inlined_call_operand.vmem [shape: bf16[16,32], index: 5, kind: input, shape index: {}]
  %s6 = inlined_call_operand.vmem [shape: bf16[8,32], index: 6, kind: input, shape index: {}]
  %s7 = inlined_call_operand.vmem [shape: f32[1,32], index: 7, kind: input, shape index: {}]
  %s8 = inlined_call_operand.vmem [shape: bf16[16,32], index: 8, kind: input, shape index: {}]
  %s9 = inlined_call_operand.vmem [shape: bf16[8,32], index: 9, kind: input, shape index: {}]
  %s10 = inlined_call_operand.vmem [shape: bf16[8,32], index: 10, kind: input, shape index: {}]
  %s11 = inlined_call_operand.vmem [shape: f32[1,32], index: 11, kind: input, shape index: {}]
  %s12 = inlined_call_operand.vmem [shape: bf16[16,32], index: 12, kind: input, shape index: {}]
  %s13 = inlined_call_operand.vmem [shape: bf16[8,32], index: 13, kind: input, shape index: {}]
  %s14 = inlined_call_operand.vmem [shape: bf16[8,32], index: 14, kind: input, shape index: {}]
  %s15 = inlined_call_operand.vmem [shape: f32[1,32], index: 15, kind: input, shape index: {}]
  %s16 = inlined_call_operand.vmem [shape: bf16[32,32], index: 16, kind: input, shape index: {}]
  %s17 = inlined_call_operand.vmem [shape: bf16[16,32], index: 17, kind: input, shape index: {}]
  %s18 = inlined_call_operand.vmem [shape: f32[1,32], index: 18, kind: input, shape index: {}]
  %s19 = inlined_call_operand.vmem [shape: f32[1,32], index: 19, kind: input, shape index: {}]
  %s20 = inlined_call_operand.vmem [shape: f32[1,32], index: 20, kind: input, shape index: {}]
  %s21 = inlined_call_operand.vmem [shape: bf16[32,4], index: 21, kind: input, shape index: {}]
  %s22 = inlined_call_operand.vmem [shape: bf16[4,32], index: 22, kind: input, shape index: {}]
  %s23 = inlined_call_operand.vmem [shape: f32[64,32], index: 23, kind: output, shape index: {}]
  %s24 = sld [smem:[#allocation0]]
  $region102: #{tpu_custom_call.1} parent=0
    _
  %s26 = ssub.s32 1, %s24
  %s27 = scalar_select 0, %s26, %s24
  // Predicated region
  $region2: #{tpu_custom_call.1} parent=0 // pred_check
    _
  $region3: #{tpu_custom_call.1} parent=0 // pred_check_branch
    %29 = sbr.rel (0) target = $region5
  $region4: #{tpu_custom_call.1} parent=0 // pred_region
    _
  $region5: #{tpu_custom_call.1} parent=0 // pred_fallthru
    _
  // Predicated region
  $region6: #{tpu_custom_call.1} parent=0 // pred_check
    _
  $region7: #{tpu_custom_call.1} parent=0 // pred_check_branch
    %31 = sbr.rel (0) target = $region9
  $region8: #{tpu_custom_call.1} parent=0 // pred_region
    _
  $region9: #{tpu_custom_call.1} parent=0 // pred_fallthru
    _
  // Predicated region
  $region10: #{tpu_custom_call.1} parent=0 // pred_check
    _
  $region11: #{tpu_custom_call.1} parent=0 // pred_check_branch
    %33 = sbr.rel (0) target = $region13
  $region12: #{tpu_custom_call.1} parent=0 // pred_region
    _
  $region13: #{tpu_custom_call.1} parent=0 // pred_fallthru
    _
  // Predicated region
  $region14: #{tpu_custom_call.1} parent=0 // pred_check
    _
  $region15: #{tpu_custom_call.1} parent=0 // pred_check_branch
    %35 = sbr.rel (0) target = $region17
  $region16: #{tpu_custom_call.1} parent=0 // pred_region
    _
  $region17: #{tpu_custom_call.1} parent=0 // pred_fallthru
    _
  // Predicated region
  $region18: #{tpu_custom_call.1} parent=0 // pred_check
    _
  $region19: #{tpu_custom_call.1} parent=0 // pred_check_branch
    %37 = sbr.rel (0) target = $region21
  $region20: #{tpu_custom_call.1} parent=0 // pred_region
    _
  $region21: #{tpu_custom_call.1} parent=0 // pred_fallthru
    _
  // Predicated region
  $region22: #{tpu_custom_call.1} parent=0 // pred_check
    _
  $region23: #{tpu_custom_call.1} parent=0 // pred_check_branch
    %39 = sbr.rel (0) target = $region25
  $region24: #{tpu_custom_call.1} parent=0 // pred_region
    _
  $region25: #{tpu_custom_call.1} parent=0 // pred_fallthru
    _
  // Predicated region
  $region26: #{tpu_custom_call.1} parent=0 // pred_check
    _
  $region27: #{tpu_custom_call.1} parent=0 // pred_check_branch
    %41 = sbr.rel (0) target = $region29
  $region28: #{tpu_custom_call.1} parent=0 // pred_region
    _
  $region29: #{tpu_custom_call.1} parent=0 // pred_fallthru
    _
  // Predicated region
  $region30: #{tpu_custom_call.1} parent=0 // pred_check
    _
  $region31: #{tpu_custom_call.1} parent=0 // pred_check_branch
    %43 = sbr.rel (0) target = $region33
  $region32: #{tpu_custom_call.1} parent=0 // pred_region
    _
  $region33: #{tpu_custom_call.1} parent=0 // pred_fallthru
    _
  // Predicated region
  $region34: #{tpu_custom_call.1} parent=0 // pred_check
    _
  $region35: #{tpu_custom_call.1} parent=0 // pred_check_branch
    %45 = sbr.rel (0) target = $region37
  $region36: #{tpu_custom_call.1} parent=0 // pred_region
    _
  $region37: #{tpu_custom_call.1} parent=0 // pred_fallthru
    _
  // Predicated region
  $region38: #{tpu_custom_call.1} parent=0 // pred_check
    _
  $region39: #{tpu_custom_call.1} parent=0 // pred_check_branch
    %47 = sbr.rel (0) target = $region41
  $region40: #{tpu_custom_call.1} parent=0 // pred_region
    _
  $region41: #{tpu_custom_call.1} parent=0 // pred_fallthru
    _
  // Predicated region
  $region42: #{tpu_custom_call.1} parent=0 // pred_check
    _
  $region43: #{tpu_custom_call.1} parent=0 // pred_check_branch
    %49 = sbr.rel (0) target = $region45
  $region44: #{tpu_custom_call.1} parent=0 // pred_region
    _
  $region45: #{tpu_custom_call.1} parent=0 // pred_fallthru
    _
  // Predicated region
  $region46: #{tpu_custom_call.1} parent=0 // pred_check
    _
  $region47: #{tpu_custom_call.1} parent=0 // pred_check_branch
    %51 = sbr.rel (0) target = $region49
  $region48: #{tpu_custom_call.1} parent=0 // pred_region
    _
  $region49: #{tpu_custom_call.1} parent=0 // pred_fallthru
    _
  // Predicated region
  $region50: #{tpu_custom_call.1} parent=0 // pred_check
    _
  $region51: #{tpu_custom_call.1} parent=0 // pred_check_branch
    %53 = sbr.rel (0) target = $region53
  $region52: #{tpu_custom_call.1} parent=0 // pred_region
    _
  $region53: #{tpu_custom_call.1} parent=0 // pred_fallthru
    _
  // Predicated region
  $region54: #{tpu_custom_call.1} parent=0 // pred_check
    _
  $region55: #{tpu_custom_call.1} parent=0 // pred_check_branch
    %55 = sbr.rel (0) target = $region57
  $region56: #{tpu_custom_call.1} parent=0 // pred_region
    _
  $region57: #{tpu_custom_call.1} parent=0 // pred_fallthru
    _
  // Predicated region
  $region58: #{tpu_custom_call.1} parent=0 // pred_check
    _
  $region59: #{tpu_custom_call.1} parent=0 // pred_check_branch
    %57 = sbr.rel (0) target = $region61
  $region60: #{tpu_custom_call.1} parent=0 // pred_region
    _
  $region61: #{tpu_custom_call.1} parent=0 // pred_fallthru
    _
  // Predicated region
  $region62: #{tpu_custom_call.1} parent=0 // pred_check
    _
  $region63: #{tpu_custom_call.1} parent=0 // pred_check_branch
    %59 = sbr.rel (0) target = $region65
  $region64: #{tpu_custom_call.1} parent=0 // pred_region
    _
  $region65: #{tpu_custom_call.1} parent=0 // pred_fallthru
    _
  // Predicated region
  $region66: #{tpu_custom_call.1} parent=0 // pred_check
    _
  $region67: #{tpu_custom_call.1} parent=0 // pred_check_branch
    %61 = sbr.rel (0) target = $region69
  $region68: #{tpu_custom_call.1} parent=0 // pred_region
    _
  $region69: #{tpu_custom_call.1} parent=0 // pred_fallthru
    _
  // Predicated region
  $region70: #{tpu_custom_call.1} parent=0 // pred_check
    _
  $region71: #{tpu_custom_call.1} parent=0 // pred_check_branch
    %63 = sbr.rel (0) target = $region73
  $region72: #{tpu_custom_call.1} parent=0 // pred_region
    _
  $region73: #{tpu_custom_call.1} parent=0 // pred_fallthru
    _
  // Predicated region
  $region74: #{tpu_custom_call.1} parent=0 // pred_check
    _
  $region75: #{tpu_custom_call.1} parent=0 // pred_check_branch
    %65 = sbr.rel (0) target = $region77
  $region76: #{tpu_custom_call.1} parent=0 // pred_region
    _
  $region77: #{tpu_custom_call.1} parent=0 // pred_fallthru
    _
  // Predicated region
  $region78: #{tpu_custom_call.1} parent=0 // pred_check
    _
  $region79: #{tpu_custom_call.1} parent=0 // pred_check_branch
    %67 = sbr.rel (0) target = $region81
  $region80: #{tpu_custom_call.1} parent=0 // pred_region
    _
  $region81: #{tpu_custom_call.1} parent=0 // pred_fallthru
    _
  // Predicated region
  $region82: #{tpu_custom_call.1} parent=0 // pred_check
    _
  $region83: #{tpu_custom_call.1} parent=0 // pred_check_branch
    %69 = sbr.rel (0) target = $region85
  $region84: #{tpu_custom_call.1} parent=0 // pred_region
    _
  $region85: #{tpu_custom_call.1} parent=0 // pred_fallthru
    _
  // Predicated region
  $region86: #{tpu_custom_call.1} parent=0 // pred_check
    _
  $region87: #{tpu_custom_call.1} parent=0 // pred_check_branch
    %71 = sbr.rel (0) target = $region89
  $region88: #{tpu_custom_call.1} parent=0 // pred_region
    _
  $region89: #{tpu_custom_call.1} parent=0 // pred_fallthru
    _
  // Predicated region
  $region90: #{tpu_custom_call.1} parent=0 // pred_check
    _
  $region91: #{tpu_custom_call.1} parent=0 // pred_check_branch
    %73 = sbr.rel (0) target = $region93
  $region92: #{tpu_custom_call.1} parent=0 // pred_region
    _
  $region93: #{tpu_custom_call.1} parent=0 // pred_fallthru
    _
  %v75 = vld [vmem:[%s0] sm:$0xff]
  %v76 = vld [vmem:[%s0 + $0x8] sm:$0xff]
  %v77 = vld [vmem:[%s0 + $0x10] sm:$0xff]
  %v78 = vld [vmem:[%s0 + $0x18] sm:$0xff]
  %v79 = vld [vmem:[%s0 + $0x20] sm:$0xff]
  %v80 = vld [vmem:[%s0 + $0x28] sm:$0xff]
  %v81 = vld [vmem:[%s0 + $0x30] sm:$0xff]
  %v82 = vld [vmem:[%s0 + $0x38] sm:$0xff]
  %v83 = vpack.c.bf16 %v76, %v75
  %v84 = vpack.c.bf16 %v78, %v77
  %v85 = vpack.c.bf16 %v80, %v79
  %v86 = vpack.c.bf16 %v82, %v81
  %v87 = vld [vmem:[%s1] sm:$0xff]
  %v88 = vld [vmem:[%s1 + $0x8] sm:$0xff]
  %v89 = vld [vmem:[%s1 + $0x10] sm:$0xff]
  %v90 = vld [vmem:[%s1 + $0x18] sm:$0xff]
  %v91 = vld [vmem:[%s1 + $0x20] sm:$0xff]
  %v92 = vld [vmem:[%s1 + $0x28] sm:$0xff]
  %v93 = vld [vmem:[%s1 + $0x30] sm:$0xff]
  %v94 = vld [vmem:[%s1 + $0x38] sm:$0xff]
  %v95 = vpack.c.bf16 %v88, %v87
  %v96 = vpack.c.bf16 %v90, %v89
  %v97 = vpack.c.bf16 %v92, %v91
  %v98 = vpack.c.bf16 %v94, %v93
  %v99 = vld [vmem:[%s2] sm:$0xff]
  %v100 = vld [vmem:[%s2 + $0x8] sm:$0xff]
  %v101 = vld [vmem:[%s2 + $0x10] sm:$0xff]
  %v102 = vld [vmem:[%s2 + $0x18] sm:$0xff]
  %v103 = vld [vmem:[%s2 + $0x20] sm:$0xff]
  %v104 = vld [vmem:[%s2 + $0x28] sm:$0xff]
  %v105 = vld [vmem:[%s2 + $0x30] sm:$0xff]
  %v106 = vld [vmem:[%s2 + $0x38] sm:$0xff]
  %v107 = vld [vmem:[%s2 + $0x40] sm:$0xff]
  %v108 = vld [vmem:[%s2 + $0x48] sm:$0xff]
  %v109 = vld [vmem:[%s2 + $0x50] sm:$0xff]
  %v110 = vld [vmem:[%s2 + $0x58] sm:$0xff]
  %v111 = vld [vmem:[%s2 + $0x60] sm:$0xff]
  %v112 = vld [vmem:[%s2 + $0x68] sm:$0xff]
  %v113 = vld [vmem:[%s2 + $0x70] sm:$0xff]
  %v114 = vld [vmem:[%s2 + $0x78] sm:$0xff]
  %v115 = vld [vmem:[%s2 + $0x80] sm:$0xff]
  %v116 = vld [vmem:[%s2 + $0x88] sm:$0xff]
  %v117 = vld [vmem:[%s2 + $0x90] sm:$0xff]
  %v118 = vld [vmem:[%s2 + $0x98] sm:$0xff]
  %v119 = vld [vmem:[%s2 + $0xa0] sm:$0xff]
  %v120 = vld [vmem:[%s2 + $0xa8] sm:$0xff]
  %v121 = vld [vmem:[%s2 + $0xb0] sm:$0xff]
  %v122 = vld [vmem:[%s2 + $0xb8] sm:$0xff]
  %v123 = vld [vmem:[%s2 + $0xc0] sm:$0xff]
  %v124 = vld [vmem:[%s2 + $0xc8] sm:$0xff]
  %v125 = vld [vmem:[%s2 + $0xd0] sm:$0xff]
  %v126 = vld [vmem:[%s2 + $0xd8] sm:$0xff]
  %v127 = vld [vmem:[%s2 + $0xe0] sm:$0xff]
  %v128 = vld [vmem:[%s2 + $0xe8] sm:$0xff]
  %v129 = vld [vmem:[%s2 + $0xf0] sm:$0xff]
  %v130 = vld [vmem:[%s2 + $0xf8] sm:$0xff]
  %v131 = vld [vmem:[%s2 + $0x100] sm:$0xff]
  %v132 = vld [vmem:[%s2 + $0x108] sm:$0xff]
  %v133 = vld [vmem:[%s2 + $0x110] sm:$0xff]
  %v134 = vld [vmem:[%s2 + $0x118] sm:$0xff]
  %v135 = vld [vmem:[%s2 + $0x120] sm:$0xff]
  %v136 = vld [vmem:[%s2 + $0x128] sm:$0xff]
  %v137 = vld [vmem:[%s2 + $0x130] sm:$0xff]
  %v138 = vld [vmem:[%s2 + $0x138] sm:$0xff]
  %v139 = vld [vmem:[%s2 + $0x140] sm:$0xff]
  %v140 = vld [vmem:[%s2 + $0x148] sm:$0xff]
  %v141 = vld [vmem:[%s2 + $0x150] sm:$0xff]
  %v142 = vld [vmem:[%s2 + $0x158] sm:$0xff]
  %v143 = vld [vmem:[%s2 + $0x160] sm:$0xff]
  %v144 = vld [vmem:[%s2 + $0x168] sm:$0xff]
  %v145 = vld [vmem:[%s2 + $0x170] sm:$0xff]
  %v146 = vld [vmem:[%s2 + $0x178] sm:$0xff]
  %v147 = vld [vmem:[%s2 + $0x180] sm:$0xff]
  %v148 = vld [vmem:[%s2 + $0x188] sm:$0xff]
  %v149 = vld [vmem:[%s2 + $0x190] sm:$0xff]
  %v150 = vld [vmem:[%s2 + $0x198] sm:$0xff]
  %v151 = vld [vmem:[%s2 + $0x1a0] sm:$0xff]
  %v152 = vld [vmem:[%s2 + $0x1a8] sm:$0xff]
  %v153 = vld [vmem:[%s2 + $0x1b0] sm:$0xff]
  %v154 = vld [vmem:[%s2 + $0x1b8] sm:$0xff]
  %v155 = vld [vmem:[%s2 + $0x1c0] sm:$0xff]
  %v156 = vld [vmem:[%s2 + $0x1c8] sm:$0xff]
  %v157 = vld [vmem:[%s2 + $0x1d0] sm:$0xff]
  %v158 = vld [vmem:[%s2 + $0x1d8] sm:$0xff]
  %v159 = vld [vmem:[%s2 + $0x1e0] sm:$0xff]
  %v160 = vld [vmem:[%s2 + $0x1e8] sm:$0xff]
  %v161 = vld [vmem:[%s2 + $0x1f0] sm:$0xff]
  %v162 = vld [vmem:[%s2 + $0x1f8] sm:$0xff]
  %v163 = vpack.c.bf16 %v100, %v99
  %v164 = vpack.c.bf16 %v102, %v101
  %v165 = vpack.c.bf16 %v104, %v103
  %v166 = vpack.c.bf16 %v106, %v105
  %v167 = vpack.c.bf16 %v108, %v107
  %v168 = vpack.c.bf16 %v110, %v109
  %v169 = vpack.c.bf16 %v112, %v111
  %v170 = vpack.c.bf16 %v114, %v113
  %v171 = vpack.c.bf16 %v116, %v115
  %v172 = vpack.c.bf16 %v118, %v117
  %v173 = vpack.c.bf16 %v120, %v119
  %v174 = vpack.c.bf16 %v122, %v121
  %v175 = vpack.c.bf16 %v124, %v123
  %v176 = vpack.c.bf16 %v126, %v125
  %v177 = vpack.c.bf16 %v128, %v127
  %v178 = vpack.c.bf16 %v130, %v129
  %v179 = vpack.c.bf16 %v132, %v131
  %v180 = vpack.c.bf16 %v134, %v133
  %v181 = vpack.c.bf16 %v136, %v135
  %v182 = vpack.c.bf16 %v138, %v137
  %v183 = vpack.c.bf16 %v140, %v139
  %v184 = vpack.c.bf16 %v142, %v141
  %v185 = vpack.c.bf16 %v144, %v143
  %v186 = vpack.c.bf16 %v146, %v145
  %v187 = vpack.c.bf16 %v148, %v147
  %v188 = vpack.c.bf16 %v150, %v149
  %v189 = vpack.c.bf16 %v152, %v151
  %v190 = vpack.c.bf16 %v154, %v153
  %v191 = vpack.c.bf16 %v156, %v155
  %v192 = vpack.c.bf16 %v158, %v157
  %v193 = vpack.c.bf16 %v160, %v159
  %v194 = vpack.c.bf16 %v162, %v161
  %v195 = vld [vmem:[%s3] sm:$0xff]
  %v196 = vld [vmem:[%s3 + $0x8] sm:$0xff]
  %v197 = vld [vmem:[%s3 + $0x10] sm:$0xff]
  %v198 = vld [vmem:[%s3 + $0x18] sm:$0xff]
  %v199 = vld [vmem:[%s3 + $0x20] sm:$0xff]
  %v200 = vld [vmem:[%s3 + $0x28] sm:$0xff]
  %v201 = vld [vmem:[%s3 + $0x30] sm:$0xff]
  %v202 = vld [vmem:[%s3 + $0x38] sm:$0xff]
  %v203 = vld [vmem:[%s3 + $0x40] sm:$0xff]
  %v204 = vld [vmem:[%s3 + $0x48] sm:$0xff]
  %v205 = vld [vmem:[%s3 + $0x50] sm:$0xff]
  %v206 = vld [vmem:[%s3 + $0x58] sm:$0xff]
  %v207 = vld [vmem:[%s3 + $0x60] sm:$0xff]
  %v208 = vld [vmem:[%s3 + $0x68] sm:$0xff]
  %v209 = vld [vmem:[%s3 + $0x70] sm:$0xff]
  %v210 = vld [vmem:[%s3 + $0x78] sm:$0xff]
  %v211 = vld [vmem:[%s3 + $0x80] sm:$0xff]
  %v212 = vld [vmem:[%s3 + $0x88] sm:$0xff]
  %v213 = vld [vmem:[%s3 + $0x90] sm:$0xff]
  %v214 = vld [vmem:[%s3 + $0x98] sm:$0xff]
  %v215 = vld [vmem:[%s3 + $0xa0] sm:$0xff]
  %v216 = vld [vmem:[%s3 + $0xa8] sm:$0xff]
  %v217 = vld [vmem:[%s3 + $0xb0] sm:$0xff]
  %v218 = vld [vmem:[%s3 + $0xb8] sm:$0xff]
  %v219 = vld [vmem:[%s3 + $0xc0] sm:$0xff]
  %v220 = vld [vmem:[%s3 + $0xc8] sm:$0xff]
  %v221 = vld [vmem:[%s3 + $0xd0] sm:$0xff]
  %v222 = vld [vmem:[%s3 + $0xd8] sm:$0xff]
  %v223 = vld [vmem:[%s3 + $0xe0] sm:$0xff]
  %v224 = vld [vmem:[%s3 + $0xe8] sm:$0xff]
  %v225 = vld [vmem:[%s3 + $0xf0] sm:$0xff]
  %v226 = vld [vmem:[%s3 + $0xf8] sm:$0xff]
  %v227 = vld [vmem:[%s3 + $0x100] sm:$0xff]
  %v228 = vld [vmem:[%s3 + $0x108] sm:$0xff]
  %v229 = vld [vmem:[%s3 + $0x110] sm:$0xff]
  %v230 = vld [vmem:[%s3 + $0x118] sm:$0xff]
  %v231 = vld [vmem:[%s3 + $0x120] sm:$0xff]
  %v232 = vld [vmem:[%s3 + $0x128] sm:$0xff]
  %v233 = vld [vmem:[%s3 + $0x130] sm:$0xff]
  %v234 = vld [vmem:[%s3 + $0x138] sm:$0xff]
  %v235 = vld [vmem:[%s3 + $0x140] sm:$0xff]
  %v236 = vld [vmem:[%s3 + $0x148] sm:$0xff]
  %v237 = vld [vmem:[%s3 + $0x150] sm:$0xff]
  %v238 = vld [vmem:[%s3 + $0x158] sm:$0xff]
  %v239 = vld [vmem:[%s3 + $0x160] sm:$0xff]
  %v240 = vld [vmem:[%s3 + $0x168] sm:$0xff]
  %v241 = vld [vmem:[%s3 + $0x170] sm:$0xff]
  %v242 = vld [vmem:[%s3 + $0x178] sm:$0xff]
  %v243 = vld [vmem:[%s3 + $0x180] sm:$0xff]
  %v244 = vld [vmem:[%s3 + $0x188] sm:$0xff]
  %v245 = vld [vmem:[%s3 + $0x190] sm:$0xff]
  %v246 = vld [vmem:[%s3 + $0x198] sm:$0xff]
  %v247 = vld [vmem:[%s3 + $0x1a0] sm:$0xff]
  %v248 = vld [vmem:[%s3 + $0x1a8] sm:$0xff]
  %v249 = vld [vmem:[%s3 + $0x1b0] sm:$0xff]
  %v250 = vld [vmem:[%s3 + $0x1b8] sm:$0xff]
  %v251 = vld [vmem:[%s3 + $0x1c0] sm:$0xff]
  %v252 = vld [vmem:[%s3 + $0x1c8] sm:$0xff]
  %v253 = vld [vmem:[%s3 + $0x1d0] sm:$0xff]
  %v254 = vld [vmem:[%s3 + $0x1d8] sm:$0xff]
  %v255 = vld [vmem:[%s3 + $0x1e0] sm:$0xff]
  %v256 = vld [vmem:[%s3 + $0x1e8] sm:$0xff]
  %v257 = vld [vmem:[%s3 + $0x1f0] sm:$0xff]
  %v258 = vld [vmem:[%s3 + $0x1f8] sm:$0xff]
  %v259 = vpack.c.bf16 %v196, %v195
  %v260 = vpack.c.bf16 %v198, %v197
  %v261 = vpack.c.bf16 %v200, %v199
  %v262 = vpack.c.bf16 %v202, %v201
  %v263 = vpack.c.bf16 %v204, %v203
  %v264 = vpack.c.bf16 %v206, %v205
  %v265 = vpack.c.bf16 %v208, %v207
  %v266 = vpack.c.bf16 %v210, %v209
  %v267 = vpack.c.bf16 %v212, %v211
  %v268 = vpack.c.bf16 %v214, %v213
  %v269 = vpack.c.bf16 %v216, %v215
  %v270 = vpack.c.bf16 %v218, %v217
  %v271 = vpack.c.bf16 %v220, %v219
  %v272 = vpack.c.bf16 %v222, %v221
  %v273 = vpack.c.bf16 %v224, %v223
  %v274 = vpack.c.bf16 %v226, %v225
  %v275 = vpack.c.bf16 %v228, %v227
  %v276 = vpack.c.bf16 %v230, %v229
  %v277 = vpack.c.bf16 %v232, %v231
  %v278 = vpack.c.bf16 %v234, %v233
  %v279 = vpack.c.bf16 %v236, %v235
  %v280 = vpack.c.bf16 %v238, %v237
  %v281 = vpack.c.bf16 %v240, %v239
  %v282 = vpack.c.bf16 %v242, %v241
  %v283 = vpack.c.bf16 %v244, %v243
  %v284 = vpack.c.bf16 %v246, %v245
  %v285 = vpack.c.bf16 %v248, %v247
  %v286 = vpack.c.bf16 %v250, %v249
  %v287 = vpack.c.bf16 %v252, %v251
  %v288 = vpack.c.bf16 %v254, %v253
  %v289 = vpack.c.bf16 %v256, %v255
  %v290 = vpack.c.bf16 %v258, %v257
  %v291 = vld [vmem:[%s4] sm:$0xff]
  %v292 = vld [vmem:[%s4 + $0x8] sm:$0xff]
  %v293 = vld [vmem:[%s4 + $0x10] sm:$0xff]
  %v294 = vld [vmem:[%s4 + $0x18] sm:$0xff]
  %v295 = vld [vmem:[%s4 + $0x20] sm:$0xff]
  %v296 = vld [vmem:[%s4 + $0x28] sm:$0xff]
  %v297 = vld [vmem:[%s4 + $0x30] sm:$0xff]
  %v298 = vld [vmem:[%s4 + $0x38] sm:$0xff]
  %v299 = vld [vmem:[%s4 + $0x40] sm:$0xff]
  %v300 = vld [vmem:[%s4 + $0x48] sm:$0xff]
  %v301 = vld [vmem:[%s4 + $0x50] sm:$0xff]
  %v302 = vld [vmem:[%s4 + $0x58] sm:$0xff]
  %v303 = vld [vmem:[%s4 + $0x60] sm:$0xff]
  %v304 = vld [vmem:[%s4 + $0x68] sm:$0xff]
  %v305 = vld [vmem:[%s4 + $0x70] sm:$0xff]
  %v306 = vld [vmem:[%s4 + $0x78] sm:$0xff]
  %v307 = vld [vmem:[%s4 + $0x80] sm:$0xff]
  %v308 = vld [vmem:[%s4 + $0x88] sm:$0xff]
  %v309 = vld [vmem:[%s4 + $0x90] sm:$0xff]
  %v310 = vld [vmem:[%s4 + $0x98] sm:$0xff]
  %v311 = vld [vmem:[%s4 + $0xa0] sm:$0xff]
  %v312 = vld [vmem:[%s4 + $0xa8] sm:$0xff]
  %v313 = vld [vmem:[%s4 + $0xb0] sm:$0xff]
  %v314 = vld [vmem:[%s4 + $0xb8] sm:$0xff]
  %v315 = vld [vmem:[%s4 + $0xc0] sm:$0xff]
  %v316 = vld [vmem:[%s4 + $0xc8] sm:$0xff]
  %v317 = vld [vmem:[%s4 + $0xd0] sm:$0xff]
  %v318 = vld [vmem:[%s4 + $0xd8] sm:$0xff]
  %v319 = vld [vmem:[%s4 + $0xe0] sm:$0xff]
  %v320 = vld [vmem:[%s4 + $0xe8] sm:$0xff]
  %v321 = vld [vmem:[%s4 + $0xf0] sm:$0xff]
  %v322 = vld [vmem:[%s4 + $0xf8] sm:$0xff]
  %v323 = vld [vmem:[%s4 + $0x100] sm:$0xff]
  %v324 = vld [vmem:[%s4 + $0x108] sm:$0xff]
  %v325 = vld [vmem:[%s4 + $0x110] sm:$0xff]
  %v326 = vld [vmem:[%s4 + $0x118] sm:$0xff]
  %v327 = vld [vmem:[%s4 + $0x120] sm:$0xff]
  %v328 = vld [vmem:[%s4 + $0x128] sm:$0xff]
  %v329 = vld [vmem:[%s4 + $0x130] sm:$0xff]
  %v330 = vld [vmem:[%s4 + $0x138] sm:$0xff]
  %v331 = vld [vmem:[%s4 + $0x140] sm:$0xff]
  %v332 = vld [vmem:[%s4 + $0x148] sm:$0xff]
  %v333 = vld [vmem:[%s4 + $0x150] sm:$0xff]
  %v334 = vld [vmem:[%s4 + $0x158] sm:$0xff]
  %v335 = vld [vmem:[%s4 + $0x160] sm:$0xff]
  %v336 = vld [vmem:[%s4 + $0x168] sm:$0xff]
  %v337 = vld [vmem:[%s4 + $0x170] sm:$0xff]
  %v338 = vld [vmem:[%s4 + $0x178] sm:$0xff]
  %v339 = vld [vmem:[%s4 + $0x180] sm:$0xff]
  %v340 = vld [vmem:[%s4 + $0x188] sm:$0xff]
  %v341 = vld [vmem:[%s4 + $0x190] sm:$0xff]
  %v342 = vld [vmem:[%s4 + $0x198] sm:$0xff]
  %v343 = vld [vmem:[%s4 + $0x1a0] sm:$0xff]
  %v344 = vld [vmem:[%s4 + $0x1a8] sm:$0xff]
  %v345 = vld [vmem:[%s4 + $0x1b0] sm:$0xff]
  %v346 = vld [vmem:[%s4 + $0x1b8] sm:$0xff]
  %v347 = vld [vmem:[%s4 + $0x1c0] sm:$0xff]
  %v348 = vld [vmem:[%s4 + $0x1c8] sm:$0xff]
  %v349 = vld [vmem:[%s4 + $0x1d0] sm:$0xff]
  %v350 = vld [vmem:[%s4 + $0x1d8] sm:$0xff]
  %v351 = vld [vmem:[%s4 + $0x1e0] sm:$0xff]
  %v352 = vld [vmem:[%s4 + $0x1e8] sm:$0xff]
  %v353 = vld [vmem:[%s4 + $0x1f0] sm:$0xff]
  %v354 = vld [vmem:[%s4 + $0x1f8] sm:$0xff]
  %v355 = vpack.c.bf16 %v292, %v291
  %v356 = vpack.c.bf16 %v294, %v293
  %v357 = vpack.c.bf16 %v296, %v295
  %v358 = vpack.c.bf16 %v298, %v297
  %v359 = vpack.c.bf16 %v300, %v299
  %v360 = vpack.c.bf16 %v302, %v301
  %v361 = vpack.c.bf16 %v304, %v303
  %v362 = vpack.c.bf16 %v306, %v305
  %v363 = vpack.c.bf16 %v308, %v307
  %v364 = vpack.c.bf16 %v310, %v309
  %v365 = vpack.c.bf16 %v312, %v311
  %v366 = vpack.c.bf16 %v314, %v313
  %v367 = vpack.c.bf16 %v316, %v315
  %v368 = vpack.c.bf16 %v318, %v317
  %v369 = vpack.c.bf16 %v320, %v319
  %v370 = vpack.c.bf16 %v322, %v321
  %v371 = vpack.c.bf16 %v324, %v323
  %v372 = vpack.c.bf16 %v326, %v325
  %v373 = vpack.c.bf16 %v328, %v327
  %v374 = vpack.c.bf16 %v330, %v329
  %v375 = vpack.c.bf16 %v332, %v331
  %v376 = vpack.c.bf16 %v334, %v333
  %v377 = vpack.c.bf16 %v336, %v335
  %v378 = vpack.c.bf16 %v338, %v337
  %v379 = vpack.c.bf16 %v340, %v339
  %v380 = vpack.c.bf16 %v342, %v341
  %v381 = vpack.c.bf16 %v344, %v343
  %v382 = vpack.c.bf16 %v346, %v345
  %v383 = vpack.c.bf16 %v348, %v347
  %v384 = vpack.c.bf16 %v350, %v349
  %v385 = vpack.c.bf16 %v352, %v351
  %v386 = vpack.c.bf16 %v354, %v353
  %v387 = vld [vmem:[%s5] sm:$0xf]
  %v388 = vld [vmem:[%s5 + $0x4] sm:$0xf]
  %v389 = vld [vmem:[%s6] sm:$0xf]
  %vm390 = vcmask 64512
  %v392 = vsel %vm390, %v95, 0
  %v395 = vsel %vm390, %v96, 0
  %v398 = vsel %vm390, %v97, 0
  %v401 = vsel %vm390, %v98, 0
  %vm403 = vcmask 1043456
  %v405 = vsel %vm403, %v389, 0
  %407 = vmatpush.bf16.msra.mxu0 0
  %408 = vmatpush.bf16.msra.mxu0 0
  %409 = vmatpush.bf16.msra.mxu0 0
  %410 = vmatpush.bf16.msra.mxu0 0
  %411 = vmatpush.bf16.msra.mxu0 0
  %412 = vmatpush.bf16.msra.mxu0 0
  %413 = vmatpush.bf16.msra.mxu0 0
  %414 = vmatpush.bf16.msra.mxu0 %v405
  %415 = vmatmul.bf16.gmra.mxu0 %v392
  %v416 = vpop.f32.mrf.mxu0
  %v417 = vadd.f32 0.0, %v416
  %v418 = vpop.f32.mrf.mxu0
  %v419 = vadd.f32 0.0, %v418
  %420 = vmatmul.bf16.gmra.mxu0 %v395
  %v421 = vpop.f32.mrf.mxu0
  %v422 = vadd.f32 0.0, %v421
  %v423 = vpop.f32.mrf.mxu0
  %v424 = vadd.f32 0.0, %v423
  %425 = vmatmul.bf16.gmra.mxu0 %v398
  %v426 = vpop.f32.mrf.mxu0
  %v427 = vadd.f32 0.0, %v426
  %v428 = vpop.f32.mrf.mxu0
  %v429 = vadd.f32 0.0, %v428
  %430 = vmatmul.bf16.gmra.mxu0 %v401
  %v431 = vpop.f32.mrf.mxu0
  %v432 = vadd.f32 0.0, %v431
  %v433 = vpop.f32.mrf.mxu0
  %v434 = vadd.f32 0.0, %v433
  %435 = vdwg.mxu0
  %v438 = vunpack.c.l.b16 %v387
  %v439 = vunpack.c.l.b16 %v388
  %v440 = vpack.c.b16 %v439, %v438
  %vm442 = vcmask 130048
  %v444 = vsel %vm442, %v83, 0
  %v447 = vsel %vm442, %v84, 0
  %v450 = vsel %vm442, %v85, 0
  %v453 = vsel %vm442, %v86, 0
  %455 = vmatpush.bf16.msra.mxu0 0
  %456 = vmatpush.bf16.msra.mxu0 0
  %457 = vmatpush.bf16.msra.mxu0 0
  %458 = vmatpush.bf16.msra.mxu0 0
  %459 = vmatpush.bf16.msra.mxu0 0
  %460 = vmatpush.bf16.msra.mxu0 0
  %461 = vmatpush.bf16.msra.mxu0 0
  %462 = vmatpush.bf16.msra.mxu0 %v440
  %463 = vmatmul.bf16.gmra.mxu0 %v444
  %v464 = vpop.f32.mrf.mxu0
  %v465 = vadd.f32 %v417, %v464
  %v466 = vpop.f32.mrf.mxu0
  %v467 = vadd.f32 %v419, %v466
  %468 = vmatmul.bf16.gmra.mxu0 %v447
  %v469 = vpop.f32.mrf.mxu0
  %v470 = vadd.f32 %v422, %v469
  %v471 = vpop.f32.mrf.mxu0
  %v472 = vadd.f32 %v424, %v471
  %473 = vmatmul.bf16.gmra.mxu0 %v450
  %v474 = vpop.f32.mrf.mxu0
  %v475 = vadd.f32 %v427, %v474
  %v476 = vpop.f32.mrf.mxu0
  %v477 = vadd.f32 %v429, %v476
  %478 = vmatmul.bf16.gmra.mxu0 %v453
  %v479 = vpop.f32.mrf.mxu0
  %v480 = vadd.f32 %v432, %v479
  %v481 = vpop.f32.mrf.mxu0
  %v482 = vadd.f32 %v434, %v481
  %483 = vdwg.mxu0
  %v484 = vld [vmem:[%s7] sm:$0x1]
  %v486 = vperm.slane %v484, 0
  %v488 = vadd.f32 %v465, %v486
  %v489 = vadd.f32 %v467, %v486
  %v490 = vadd.f32 %v470, %v486
  %v491 = vadd.f32 %v472, %v486
  %v492 = vadd.f32 %v475, %v486
  %v493 = vadd.f32 %v477, %v486
  %v494 = vadd.f32 %v480, %v486
  %v495 = vadd.f32 %v482, %v486
  %v496 = vld [vmem:[%s8] sm:$0xf]
  %v497 = vld [vmem:[%s8 + $0x4] sm:$0xf]
  %v498 = vld [vmem:[%s9] sm:$0xf]
  %v500 = vsel %vm390, %v259, 0
  %v503 = vsel %vm390, %v260, 0
  %v506 = vsel %vm390, %v261, 0
  %v509 = vsel %vm390, %v262, 0
  %v512 = vsel %vm390, %v263, 0
  %v515 = vsel %vm390, %v264, 0
  %v518 = vsel %vm390, %v265, 0
  %v521 = vsel %vm390, %v266, 0
  %v524 = vsel %vm390, %v267, 0
  %v527 = vsel %vm390, %v268, 0
  %v530 = vsel %vm390, %v269, 0
  %v533 = vsel %vm390, %v270, 0
  %v536 = vsel %vm390, %v271, 0
  %v539 = vsel %vm390, %v272, 0
  %v542 = vsel %vm390, %v273, 0
  %v545 = vsel %vm390, %v274, 0
  %v548 = vsel %vm390, %v275, 0
  %v551 = vsel %vm390, %v276, 0
  %v554 = vsel %vm390, %v277, 0
  %v557 = vsel %vm390, %v278, 0
  %v560 = vsel %vm390, %v279, 0
  %v563 = vsel %vm390, %v280, 0
  %v566 = vsel %vm390, %v281, 0
  %v569 = vsel %vm390, %v282, 0
  %v572 = vsel %vm390, %v283, 0
  %v575 = vsel %vm390, %v284, 0
  %v578 = vsel %vm390, %v285, 0
  %v581 = vsel %vm390, %v286, 0
  %v584 = vsel %vm390, %v287, 0
  %v587 = vsel %vm390, %v288, 0
  %v590 = vsel %vm390, %v289, 0
  %v593 = vsel %vm390, %v290, 0
  %v596 = vsel %vm403, %v498, 0
  %598 = vmatpush.bf16.msra.mxu0 0
  %599 = vmatpush.bf16.msra.mxu0 0
  %600 = vmatpush.bf16.msra.mxu0 0
  %601 = vmatpush.bf16.msra.mxu0 0
  %602 = vmatpush.bf16.msra.mxu0 0
  %603 = vmatpush.bf16.msra.mxu0 0
  %604 = vmatpush.bf16.msra.mxu0 0
  %605 = vmatpush.bf16.msra.mxu0 %v596
  %606 = vmatmul.bf16.gmra.mxu0 %v500
  %v607 = vpop.f32.mrf.mxu0
  %v608 = vadd.f32 0.0, %v607
  %v609 = vpop.f32.mrf.mxu0
  %v610 = vadd.f32 0.0, %v609
  %611 = vmatmul.bf16.gmra.mxu0 %v503
  %v612 = vpop.f32.mrf.mxu0
  %v613 = vadd.f32 0.0, %v612
  %v614 = vpop.f32.mrf.mxu0
  %v615 = vadd.f32 0.0, %v614
  %616 = vmatmul.bf16.gmra.mxu0 %v506
  %v617 = vpop.f32.mrf.mxu0
  %v618 = vadd.f32 0.0, %v617
  %v619 = vpop.f32.mrf.mxu0
  %v620 = vadd.f32 0.0, %v619
  %621 = vmatmul.bf16.gmra.mxu0 %v509
  %v622 = vpop.f32.mrf.mxu0
  %v623 = vadd.f32 0.0, %v622
  %v624 = vpop.f32.mrf.mxu0
  %v625 = vadd.f32 0.0, %v624
  %626 = vmatmul.bf16.gmra.mxu0 %v512
  %v627 = vpop.f32.mrf.mxu0
  %v628 = vadd.f32 0.0, %v627
  %v629 = vpop.f32.mrf.mxu0
  %v630 = vadd.f32 0.0, %v629
  %631 = vmatmul.bf16.gmra.mxu0 %v515
  %v632 = vpop.f32.mrf.mxu0
  %v633 = vadd.f32 0.0, %v632
  %v634 = vpop.f32.mrf.mxu0
  %v635 = vadd.f32 0.0, %v634
  %636 = vmatmul.bf16.gmra.mxu0 %v518
  %v637 = vpop.f32.mrf.mxu0
  %v638 = vadd.f32 0.0, %v637
  %v639 = vpop.f32.mrf.mxu0
  %v640 = vadd.f32 0.0, %v639
  %641 = vmatmul.bf16.gmra.mxu0 %v521
  %v642 = vpop.f32.mrf.mxu0
  %v643 = vadd.f32 0.0, %v642
  %v644 = vpop.f32.mrf.mxu0
  %v645 = vadd.f32 0.0, %v644
  %646 = vmatmul.bf16.gmra.mxu0 %v524
  %v647 = vpop.f32.mrf.mxu0
  %v648 = vadd.f32 0.0, %v647
  %v649 = vpop.f32.mrf.mxu0
  %v650 = vadd.f32 0.0, %v649
  %651 = vmatmul.bf16.gmra.mxu0 %v527
  %v652 = vpop.f32.mrf.mxu0
  %v653 = vadd.f32 0.0, %v652
  %v654 = vpop.f32.mrf.mxu0
  %v655 = vadd.f32 0.0, %v654
  %656 = vmatmul.bf16.gmra.mxu0 %v530
  %v657 = vpop.f32.mrf.mxu0
  %v658 = vadd.f32 0.0, %v657
  %v659 = vpop.f32.mrf.mxu0
  %v660 = vadd.f32 0.0, %v659
  %661 = vmatmul.bf16.gmra.mxu0 %v533
  %v662 = vpop.f32.mrf.mxu0
  %v663 = vadd.f32 0.0, %v662
  %v664 = vpop.f32.mrf.mxu0
  %v665 = vadd.f32 0.0, %v664
  %666 = vmatmul.bf16.gmra.mxu0 %v536
  %v667 = vpop.f32.mrf.mxu0
  %v668 = vadd.f32 0.0, %v667
  %v669 = vpop.f32.mrf.mxu0
  %v670 = vadd.f32 0.0, %v669
  %671 = vmatmul.bf16.gmra.mxu0 %v539
  %v672 = vpop.f32.mrf.mxu0
  %v673 = vadd.f32 0.0, %v672
  %v674 = vpop.f32.mrf.mxu0
  %v675 = vadd.f32 0.0, %v674
  %676 = vmatmul.bf16.gmra.mxu0 %v542
  %v677 = vpop.f32.mrf.mxu0
  %v678 = vadd.f32 0.0, %v677
  %v679 = vpop.f32.mrf.mxu0
  %v680 = vadd.f32 0.0, %v679
  %681 = vmatmul.bf16.gmra.mxu0 %v545
  %v682 = vpop.f32.mrf.mxu0
  %v683 = vadd.f32 0.0, %v682
  %v684 = vpop.f32.mrf.mxu0
  %v685 = vadd.f32 0.0, %v684
  %686 = vmatmul.bf16.gmra.mxu0 %v548
  %v687 = vpop.f32.mrf.mxu0
  %v688 = vadd.f32 0.0, %v687
  %v689 = vpop.f32.mrf.mxu0
  %v690 = vadd.f32 0.0, %v689
  %691 = vmatmul.bf16.gmra.mxu0 %v551
  %v692 = vpop.f32.mrf.mxu0
  %v693 = vadd.f32 0.0, %v692
  %v694 = vpop.f32.mrf.mxu0
  %v695 = vadd.f32 0.0, %v694
  %696 = vmatmul.bf16.gmra.mxu0 %v554
  %v697 = vpop.f32.mrf.mxu0
  %v698 = vadd.f32 0.0, %v697
  %v699 = vpop.f32.mrf.mxu0
  %v700 = vadd.f32 0.0, %v699
  %701 = vmatmul.bf16.gmra.mxu0 %v557
  %v702 = vpop.f32.mrf.mxu0
  %v703 = vadd.f32 0.0, %v702
  %v704 = vpop.f32.mrf.mxu0
  %v705 = vadd.f32 0.0, %v704
  %706 = vmatmul.bf16.gmra.mxu0 %v560
  %v707 = vpop.f32.mrf.mxu0
  %v708 = vadd.f32 0.0, %v707
  %v709 = vpop.f32.mrf.mxu0
  %v710 = vadd.f32 0.0, %v709
  %711 = vmatmul.bf16.gmra.mxu0 %v563
  %v712 = vpop.f32.mrf.mxu0
  %v713 = vadd.f32 0.0, %v712
  %v714 = vpop.f32.mrf.mxu0
  %v715 = vadd.f32 0.0, %v714
  %716 = vmatmul.bf16.gmra.mxu0 %v566
  %v717 = vpop.f32.mrf.mxu0
  %v718 = vadd.f32 0.0, %v717
  %v719 = vpop.f32.mrf.mxu0
  %v720 = vadd.f32 0.0, %v719
  %721 = vmatmul.bf16.gmra.mxu0 %v569
  %v722 = vpop.f32.mrf.mxu0
  %v723 = vadd.f32 0.0, %v722
  %v724 = vpop.f32.mrf.mxu0
  %v725 = vadd.f32 0.0, %v724
  %726 = vmatmul.bf16.gmra.mxu0 %v572
  %v727 = vpop.f32.mrf.mxu0
  %v728 = vadd.f32 0.0, %v727
  %v729 = vpop.f32.mrf.mxu0
  %v730 = vadd.f32 0.0, %v729
  %731 = vmatmul.bf16.gmra.mxu0 %v575
  %v732 = vpop.f32.mrf.mxu0
  %v733 = vadd.f32 0.0, %v732
  %v734 = vpop.f32.mrf.mxu0
  %v735 = vadd.f32 0.0, %v734
  %736 = vmatmul.bf16.gmra.mxu0 %v578
  %v737 = vpop.f32.mrf.mxu0
  %v738 = vadd.f32 0.0, %v737
  %v739 = vpop.f32.mrf.mxu0
  %v740 = vadd.f32 0.0, %v739
  %741 = vmatmul.bf16.gmra.mxu0 %v581
  %v742 = vpop.f32.mrf.mxu0
  %v743 = vadd.f32 0.0, %v742
  %v744 = vpop.f32.mrf.mxu0
  %v745 = vadd.f32 0.0, %v744
  %746 = vmatmul.bf16.gmra.mxu0 %v584
  %v747 = vpop.f32.mrf.mxu0
  %v748 = vadd.f32 0.0, %v747
  %v749 = vpop.f32.mrf.mxu0
  %v750 = vadd.f32 0.0, %v749
  %751 = vmatmul.bf16.gmra.mxu0 %v587
  %v752 = vpop.f32.mrf.mxu0
  %v753 = vadd.f32 0.0, %v752
  %v754 = vpop.f32.mrf.mxu0
  %v755 = vadd.f32 0.0, %v754
  %756 = vmatmul.bf16.gmra.mxu0 %v590
  %v757 = vpop.f32.mrf.mxu0
  %v758 = vadd.f32 0.0, %v757
  %v759 = vpop.f32.mrf.mxu0
  %v760 = vadd.f32 0.0, %v759
  %761 = vmatmul.bf16.gmra.mxu0 %v593
  %v762 = vpop.f32.mrf.mxu0
  %v763 = vadd.f32 0.0, %v762
  %v764 = vpop.f32.mrf.mxu0
  %v765 = vadd.f32 0.0, %v764
  %766 = vdwg.mxu0
  %v769 = vunpack.c.l.b16 %v496
  %v770 = vunpack.c.l.b16 %v497
  %v771 = vpack.c.b16 %v770, %v769
  %v774 = vsel %vm442, %v163, 0
  %v777 = vsel %vm442, %v164, 0
  %v780 = vsel %vm442, %v165, 0
  %v783 = vsel %vm442, %v166, 0
  %v786 = vsel %vm442, %v167, 0
  %v789 = vsel %vm442, %v168, 0
  %v792 = vsel %vm442, %v169, 0
  %v795 = vsel %vm442, %v170, 0
  %v798 = vsel %vm442, %v171, 0
  %v801 = vsel %vm442, %v172, 0
  %v804 = vsel %vm442, %v173, 0
  %v807 = vsel %vm442, %v174, 0
  %v810 = vsel %vm442, %v175, 0
  %v813 = vsel %vm442, %v176, 0
  %v816 = vsel %vm442, %v177, 0
  %v819 = vsel %vm442, %v178, 0
  %v822 = vsel %vm442, %v179, 0
  %v825 = vsel %vm442, %v180, 0
  %v828 = vsel %vm442, %v181, 0
  %v831 = vsel %vm442, %v182, 0
  %v834 = vsel %vm442, %v183, 0
  %v837 = vsel %vm442, %v184, 0
  %v840 = vsel %vm442, %v185, 0
  %v843 = vsel %vm442, %v186, 0
  %v846 = vsel %vm442, %v187, 0
  %v849 = vsel %vm442, %v188, 0
  %v852 = vsel %vm442, %v189, 0
  %v855 = vsel %vm442, %v190, 0
  %v858 = vsel %vm442, %v191, 0
  %v861 = vsel %vm442, %v192, 0
  %v864 = vsel %vm442, %v193, 0
  %v867 = vsel %vm442, %v194, 0
  %869 = vmatpush.bf16.msra.mxu0 0
  %870 = vmatpush.bf16.msra.mxu0 0
  %871 = vmatpush.bf16.msra.mxu0 0
  %872 = vmatpush.bf16.msra.mxu0 0
  %873 = vmatpush.bf16.msra.mxu0 0
  %874 = vmatpush.bf16.msra.mxu0 0
  %875 = vmatpush.bf16.msra.mxu0 0
  %876 = vmatpush.bf16.msra.mxu0 %v771
  %877 = vmatmul.bf16.gmra.mxu0 %v774
  %v878 = vpop.f32.mrf.mxu0
  %v879 = vadd.f32 %v608, %v878
  %v880 = vpop.f32.mrf.mxu0
  %v881 = vadd.f32 %v610, %v880
  %882 = vmatmul.bf16.gmra.mxu0 %v777
  %v883 = vpop.f32.mrf.mxu0
  %v884 = vadd.f32 %v613, %v883
  %v885 = vpop.f32.mrf.mxu0
  %v886 = vadd.f32 %v615, %v885
  %887 = vmatmul.bf16.gmra.mxu0 %v780
  %v888 = vpop.f32.mrf.mxu0
  %v889 = vadd.f32 %v618, %v888
  %v890 = vpop.f32.mrf.mxu0
  %v891 = vadd.f32 %v620, %v890
  %892 = vmatmul.bf16.gmra.mxu0 %v783
  %v893 = vpop.f32.mrf.mxu0
  %v894 = vadd.f32 %v623, %v893
  %v895 = vpop.f32.mrf.mxu0
  %v896 = vadd.f32 %v625, %v895
  %897 = vmatmul.bf16.gmra.mxu0 %v786
  %v898 = vpop.f32.mrf.mxu0
  %v899 = vadd.f32 %v628, %v898
  %v900 = vpop.f32.mrf.mxu0
  %v901 = vadd.f32 %v630, %v900
  %902 = vmatmul.bf16.gmra.mxu0 %v789
  %v903 = vpop.f32.mrf.mxu0
  %v904 = vadd.f32 %v633, %v903
  %v905 = vpop.f32.mrf.mxu0
  %v906 = vadd.f32 %v635, %v905
  %907 = vmatmul.bf16.gmra.mxu0 %v792
  %v908 = vpop.f32.mrf.mxu0
  %v909 = vadd.f32 %v638, %v908
  %v910 = vpop.f32.mrf.mxu0
  %v911 = vadd.f32 %v640, %v910
  %912 = vmatmul.bf16.gmra.mxu0 %v795
  %v913 = vpop.f32.mrf.mxu0
  %v914 = vadd.f32 %v643, %v913
  %v915 = vpop.f32.mrf.mxu0
  %v916 = vadd.f32 %v645, %v915
  %917 = vmatmul.bf16.gmra.mxu0 %v798
  %v918 = vpop.f32.mrf.mxu0
  %v919 = vadd.f32 %v648, %v918
  %v920 = vpop.f32.mrf.mxu0
  %v921 = vadd.f32 %v650, %v920
  %922 = vmatmul.bf16.gmra.mxu0 %v801
  %v923 = vpop.f32.mrf.mxu0
  %v924 = vadd.f32 %v653, %v923
  %v925 = vpop.f32.mrf.mxu0
  %v926 = vadd.f32 %v655, %v925
  %927 = vmatmul.bf16.gmra.mxu0 %v804
  %v928 = vpop.f32.mrf.mxu0
  %v929 = vadd.f32 %v658, %v928
  %v930 = vpop.f32.mrf.mxu0
  %v931 = vadd.f32 %v660, %v930
  %932 = vmatmul.bf16.gmra.mxu0 %v807
  %v933 = vpop.f32.mrf.mxu0
  %v934 = vadd.f32 %v663, %v933
  %v935 = vpop.f32.mrf.mxu0
  %v936 = vadd.f32 %v665, %v935
  %937 = vmatmul.bf16.gmra.mxu0 %v810
  %v938 = vpop.f32.mrf.mxu0
  %v939 = vadd.f32 %v668, %v938
  %v940 = vpop.f32.mrf.mxu0
  %v941 = vadd.f32 %v670, %v940
  %942 = vmatmul.bf16.gmra.mxu0 %v813
  %v943 = vpop.f32.mrf.mxu0
  %v944 = vadd.f32 %v673, %v943
  %v945 = vpop.f32.mrf.mxu0
  %v946 = vadd.f32 %v675, %v945
  %947 = vmatmul.bf16.gmra.mxu0 %v816
  %v948 = vpop.f32.mrf.mxu0
  %v949 = vadd.f32 %v678, %v948
  %v950 = vpop.f32.mrf.mxu0
  %v951 = vadd.f32 %v680, %v950
  %952 = vmatmul.bf16.gmra.mxu0 %v819
  %v953 = vpop.f32.mrf.mxu0
  %v954 = vadd.f32 %v683, %v953
  %v955 = vpop.f32.mrf.mxu0
  %v956 = vadd.f32 %v685, %v955
  %957 = vmatmul.bf16.gmra.mxu0 %v822
  %v958 = vpop.f32.mrf.mxu0
  %v959 = vadd.f32 %v688, %v958
  %v960 = vpop.f32.mrf.mxu0
  %v961 = vadd.f32 %v690, %v960
  %962 = vmatmul.bf16.gmra.mxu0 %v825
  %v963 = vpop.f32.mrf.mxu0
  %v964 = vadd.f32 %v693, %v963
  %v965 = vpop.f32.mrf.mxu0
  %v966 = vadd.f32 %v695, %v965
  %967 = vmatmul.bf16.gmra.mxu0 %v828
  %v968 = vpop.f32.mrf.mxu0
  %v969 = vadd.f32 %v698, %v968
  %v970 = vpop.f32.mrf.mxu0
  %v971 = vadd.f32 %v700, %v970
  %972 = vmatmul.bf16.gmra.mxu0 %v831
  %v973 = vpop.f32.mrf.mxu0
  %v974 = vadd.f32 %v703, %v973
  %v975 = vpop.f32.mrf.mxu0
  %v976 = vadd.f32 %v705, %v975
  %977 = vmatmul.bf16.gmra.mxu0 %v834
  %v978 = vpop.f32.mrf.mxu0
  %v979 = vadd.f32 %v708, %v978
  %v980 = vpop.f32.mrf.mxu0
  %v981 = vadd.f32 %v710, %v980
  %982 = vmatmul.bf16.gmra.mxu0 %v837
  %v983 = vpop.f32.mrf.mxu0
  %v984 = vadd.f32 %v713, %v983
  %v985 = vpop.f32.mrf.mxu0
  %v986 = vadd.f32 %v715, %v985
  %987 = vmatmul.bf16.gmra.mxu0 %v840
  %v988 = vpop.f32.mrf.mxu0
  %v989 = vadd.f32 %v718, %v988
  %v990 = vpop.f32.mrf.mxu0
  %v991 = vadd.f32 %v720, %v990
  %992 = vmatmul.bf16.gmra.mxu0 %v843
  %v993 = vpop.f32.mrf.mxu0
  %v994 = vadd.f32 %v723, %v993
  %v995 = vpop.f32.mrf.mxu0
  %v996 = vadd.f32 %v725, %v995
  %997 = vmatmul.bf16.gmra.mxu0 %v846
  %v998 = vpop.f32.mrf.mxu0
  %v999 = vadd.f32 %v728, %v998
  %v1000 = vpop.f32.mrf.mxu0
  %v1001 = vadd.f32 %v730, %v1000
  %1002 = vmatmul.bf16.gmra.mxu0 %v849
  %v1003 = vpop.f32.mrf.mxu0
  %v1004 = vadd.f32 %v733, %v1003
  %v1005 = vpop.f32.mrf.mxu0
  %v1006 = vadd.f32 %v735, %v1005
  %1007 = vmatmul.bf16.gmra.mxu0 %v852
  %v1008 = vpop.f32.mrf.mxu0
  %v1009 = vadd.f32 %v738, %v1008
  %v1010 = vpop.f32.mrf.mxu0
  %v1011 = vadd.f32 %v740, %v1010
  %1012 = vmatmul.bf16.gmra.mxu0 %v855
  %v1013 = vpop.f32.mrf.mxu0
  %v1014 = vadd.f32 %v743, %v1013
  %v1015 = vpop.f32.mrf.mxu0
  %v1016 = vadd.f32 %v745, %v1015
  %1017 = vmatmul.bf16.gmra.mxu0 %v858
  %v1018 = vpop.f32.mrf.mxu0
  %v1019 = vadd.f32 %v748, %v1018
  %v1020 = vpop.f32.mrf.mxu0
  %v1021 = vadd.f32 %v750, %v1020
  %1022 = vmatmul.bf16.gmra.mxu0 %v861
  %v1023 = vpop.f32.mrf.mxu0
  %v1024 = vadd.f32 %v753, %v1023
  %v1025 = vpop.f32.mrf.mxu0
  %v1026 = vadd.f32 %v755, %v1025
  %1027 = vmatmul.bf16.gmra.mxu0 %v864
  %v1028 = vpop.f32.mrf.mxu0
  %v1029 = vadd.f32 %v758, %v1028
  %v1030 = vpop.f32.mrf.mxu0
  %v1031 = vadd.f32 %v760, %v1030
  %1032 = vmatmul.bf16.gmra.mxu0 %v867
  %v1033 = vpop.f32.mrf.mxu0
  %v1034 = vadd.f32 %v763, %v1033
  %v1035 = vpop.f32.mrf.mxu0
  %v1036 = vadd.f32 %v765, %v1035
  %1037 = vdwg.mxu0
  %v1038 = vld [vmem:[%s10] sm:$0xf]
  %v1040 = vsel %vm390, %v355, 0
  %v1043 = vsel %vm390, %v356, 0
  %v1046 = vsel %vm390, %v357, 0
  %v1049 = vsel %vm390, %v358, 0
  %v1052 = vsel %vm390, %v359, 0
  %v1055 = vsel %vm390, %v360, 0
  %v1058 = vsel %vm390, %v361, 0
  %v1061 = vsel %vm390, %v362, 0
  %v1064 = vsel %vm390, %v363, 0
  %v1067 = vsel %vm390, %v364, 0
  %v1070 = vsel %vm390, %v365, 0
  %v1073 = vsel %vm390, %v366, 0
  %v1076 = vsel %vm390, %v367, 0
  %v1079 = vsel %vm390, %v368, 0
  %v1082 = vsel %vm390, %v369, 0
  %v1085 = vsel %vm390, %v370, 0
  %v1088 = vsel %vm390, %v371, 0
  %v1091 = vsel %vm390, %v372, 0
  %v1094 = vsel %vm390, %v373, 0
  %v1097 = vsel %vm390, %v374, 0
  %v1100 = vsel %vm390, %v375, 0
  %v1103 = vsel %vm390, %v376, 0
  %v1106 = vsel %vm390, %v377, 0
  %v1109 = vsel %vm390, %v378, 0
  %v1112 = vsel %vm390, %v379, 0
  %v1115 = vsel %vm390, %v380, 0
  %v1118 = vsel %vm390, %v381, 0
  %v1121 = vsel %vm390, %v382, 0
  %v1124 = vsel %vm390, %v383, 0
  %v1127 = vsel %vm390, %v384, 0
  %v1130 = vsel %vm390, %v385, 0
  %v1133 = vsel %vm390, %v386, 0
  %v1136 = vsel %vm403, %v1038, 0
  %1138 = vmatpush.bf16.msra.mxu0 0
  %1139 = vmatpush.bf16.msra.mxu0 0
  %1140 = vmatpush.bf16.msra.mxu0 0
  %1141 = vmatpush.bf16.msra.mxu0 0
  %1142 = vmatpush.bf16.msra.mxu0 0
  %1143 = vmatpush.bf16.msra.mxu0 0
  %1144 = vmatpush.bf16.msra.mxu0 0
  %1145 = vmatpush.bf16.msra.mxu0 %v1136
  %1146 = vmatmul.bf16.gmra.mxu0 %v1040
  %v1147 = vpop.f32.mrf.mxu0
  %v1148 = vadd.f32 0.0, %v1147
  %v1149 = vpop.f32.mrf.mxu0
  %v1150 = vadd.f32 0.0, %v1149
  %1151 = vmatmul.bf16.gmra.mxu0 %v1043
  %v1152 = vpop.f32.mrf.mxu0
  %v1153 = vadd.f32 0.0, %v1152
  %v1154 = vpop.f32.mrf.mxu0
  %v1155 = vadd.f32 0.0, %v1154
  %1156 = vmatmul.bf16.gmra.mxu0 %v1046
  %v1157 = vpop.f32.mrf.mxu0
  %v1158 = vadd.f32 0.0, %v1157
  %v1159 = vpop.f32.mrf.mxu0
  %v1160 = vadd.f32 0.0, %v1159
  %1161 = vmatmul.bf16.gmra.mxu0 %v1049
  %v1162 = vpop.f32.mrf.mxu0
  %v1163 = vadd.f32 0.0, %v1162
  %v1164 = vpop.f32.mrf.mxu0
  %v1165 = vadd.f32 0.0, %v1164
  %1166 = vmatmul.bf16.gmra.mxu0 %v1052
  %v1167 = vpop.f32.mrf.mxu0
  %v1168 = vadd.f32 0.0, %v1167
  %v1169 = vpop.f32.mrf.mxu0
  %v1170 = vadd.f32 0.0, %v1169
  %1171 = vmatmul.bf16.gmra.mxu0 %v1055
  %v1172 = vpop.f32.mrf.mxu0
  %v1173 = vadd.f32 0.0, %v1172
  %v1174 = vpop.f32.mrf.mxu0
  %v1175 = vadd.f32 0.0, %v1174
  %1176 = vmatmul.bf16.gmra.mxu0 %v1058
  %v1177 = vpop.f32.mrf.mxu0
  %v1178 = vadd.f32 0.0, %v1177
  %v1179 = vpop.f32.mrf.mxu0
  %v1180 = vadd.f32 0.0, %v1179
  %1181 = vmatmul.bf16.gmra.mxu0 %v1061
  %v1182 = vpop.f32.mrf.mxu0
  %v1183 = vadd.f32 0.0, %v1182
  %v1184 = vpop.f32.mrf.mxu0
  %v1185 = vadd.f32 0.0, %v1184
  %1186 = vmatmul.bf16.gmra.mxu0 %v1064
  %v1187 = vpop.f32.mrf.mxu0
  %v1188 = vadd.f32 0.0, %v1187
  %v1189 = vpop.f32.mrf.mxu0
  %v1190 = vadd.f32 0.0, %v1189
  %1191 = vmatmul.bf16.gmra.mxu0 %v1067
  %v1192 = vpop.f32.mrf.mxu0
  %v1193 = vadd.f32 0.0, %v1192
  %v1194 = vpop.f32.mrf.mxu0
  %v1195 = vadd.f32 0.0, %v1194
  %1196 = vmatmul.bf16.gmra.mxu0 %v1070
  %v1197 = vpop.f32.mrf.mxu0
  %v1198 = vadd.f32 0.0, %v1197
  %v1199 = vpop.f32.mrf.mxu0
  %v1200 = vadd.f32 0.0, %v1199
  %1201 = vmatmul.bf16.gmra.mxu0 %v1073
  %v1202 = vpop.f32.mrf.mxu0
  %v1203 = vadd.f32 0.0, %v1202
  %v1204 = vpop.f32.mrf.mxu0
  %v1205 = vadd.f32 0.0, %v1204
  %1206 = vmatmul.bf16.gmra.mxu0 %v1076
  %v1207 = vpop.f32.mrf.mxu0
  %v1208 = vadd.f32 0.0, %v1207
  %v1209 = vpop.f32.mrf.mxu0
  %v1210 = vadd.f32 0.0, %v1209
  %1211 = vmatmul.bf16.gmra.mxu0 %v1079
  %v1212 = vpop.f32.mrf.mxu0
  %v1213 = vadd.f32 0.0, %v1212
  %v1214 = vpop.f32.mrf.mxu0
  %v1215 = vadd.f32 0.0, %v1214
  %1216 = vmatmul.bf16.gmra.mxu0 %v1082
  %v1217 = vpop.f32.mrf.mxu0
  %v1218 = vadd.f32 0.0, %v1217
  %v1219 = vpop.f32.mrf.mxu0
  %v1220 = vadd.f32 0.0, %v1219
  %1221 = vmatmul.bf16.gmra.mxu0 %v1085
  %v1222 = vpop.f32.mrf.mxu0
  %v1223 = vadd.f32 0.0, %v1222
  %v1224 = vpop.f32.mrf.mxu0
  %v1225 = vadd.f32 0.0, %v1224
  %1226 = vmatmul.bf16.gmra.mxu0 %v1088
  %v1227 = vpop.f32.mrf.mxu0
  %v1228 = vadd.f32 0.0, %v1227
  %v1229 = vpop.f32.mrf.mxu0
  %v1230 = vadd.f32 0.0, %v1229
  %1231 = vmatmul.bf16.gmra.mxu0 %v1091
  %v1232 = vpop.f32.mrf.mxu0
  %v1233 = vadd.f32 0.0, %v1232
  %v1234 = vpop.f32.mrf.mxu0
  %v1235 = vadd.f32 0.0, %v1234
  %1236 = vmatmul.bf16.gmra.mxu0 %v1094
  %v1237 = vpop.f32.mrf.mxu0
  %v1238 = vadd.f32 0.0, %v1237
  %v1239 = vpop.f32.mrf.mxu0
  %v1240 = vadd.f32 0.0, %v1239
  %1241 = vmatmul.bf16.gmra.mxu0 %v1097
  %v1242 = vpop.f32.mrf.mxu0
  %v1243 = vadd.f32 0.0, %v1242
  %v1244 = vpop.f32.mrf.mxu0
  %v1245 = vadd.f32 0.0, %v1244
  %1246 = vmatmul.bf16.gmra.mxu0 %v1100
  %v1247 = vpop.f32.mrf.mxu0
  %v1248 = vadd.f32 0.0, %v1247
  %v1249 = vpop.f32.mrf.mxu0
  %v1250 = vadd.f32 0.0, %v1249
  %1251 = vmatmul.bf16.gmra.mxu0 %v1103
  %v1252 = vpop.f32.mrf.mxu0
  %v1253 = vadd.f32 0.0, %v1252
  %v1254 = vpop.f32.mrf.mxu0
  %v1255 = vadd.f32 0.0, %v1254
  %1256 = vmatmul.bf16.gmra.mxu0 %v1106
  %v1257 = vpop.f32.mrf.mxu0
  %v1258 = vadd.f32 0.0, %v1257
  %v1259 = vpop.f32.mrf.mxu0
  %v1260 = vadd.f32 0.0, %v1259
  %1261 = vmatmul.bf16.gmra.mxu0 %v1109
  %v1262 = vpop.f32.mrf.mxu0
  %v1263 = vadd.f32 0.0, %v1262
  %v1264 = vpop.f32.mrf.mxu0
  %v1265 = vadd.f32 0.0, %v1264
  %1266 = vmatmul.bf16.gmra.mxu0 %v1112
  %v1267 = vpop.f32.mrf.mxu0
  %v1268 = vadd.f32 0.0, %v1267
  %v1269 = vpop.f32.mrf.mxu0
  %v1270 = vadd.f32 0.0, %v1269
  %1271 = vmatmul.bf16.gmra.mxu0 %v1115
  %v1272 = vpop.f32.mrf.mxu0
  %v1273 = vadd.f32 0.0, %v1272
  %v1274 = vpop.f32.mrf.mxu0
  %v1275 = vadd.f32 0.0, %v1274
  %1276 = vmatmul.bf16.gmra.mxu0 %v1118
  %v1277 = vpop.f32.mrf.mxu0
  %v1278 = vadd.f32 0.0, %v1277
  %v1279 = vpop.f32.mrf.mxu0
  %v1280 = vadd.f32 0.0, %v1279
  %1281 = vmatmul.bf16.gmra.mxu0 %v1121
  %v1282 = vpop.f32.mrf.mxu0
  %v1283 = vadd.f32 0.0, %v1282
  %v1284 = vpop.f32.mrf.mxu0
  %v1285 = vadd.f32 0.0, %v1284
  %1286 = vmatmul.bf16.gmra.mxu0 %v1124
  %v1287 = vpop.f32.mrf.mxu0
  %v1288 = vadd.f32 0.0, %v1287
  %v1289 = vpop.f32.mrf.mxu0
  %v1290 = vadd.f32 0.0, %v1289
  %1291 = vmatmul.bf16.gmra.mxu0 %v1127
  %v1292 = vpop.f32.mrf.mxu0
  %v1293 = vadd.f32 0.0, %v1292
  %v1294 = vpop.f32.mrf.mxu0
  %v1295 = vadd.f32 0.0, %v1294
  %1296 = vmatmul.bf16.gmra.mxu0 %v1130
  %v1297 = vpop.f32.mrf.mxu0
  %v1298 = vadd.f32 0.0, %v1297
  %v1299 = vpop.f32.mrf.mxu0
  %v1300 = vadd.f32 0.0, %v1299
  %1301 = vmatmul.bf16.gmra.mxu0 %v1133
  %v1302 = vpop.f32.mrf.mxu0
  %v1303 = vadd.f32 0.0, %v1302
  %v1304 = vpop.f32.mrf.mxu0
  %v1305 = vadd.f32 0.0, %v1304
  %1306 = vdwg.mxu0
  %v1307 = vadd.f32 %v879, %v1148
  %v1308 = vadd.f32 %v881, %v1150
  %v1309 = vadd.f32 %v884, %v1153
  %v1310 = vadd.f32 %v886, %v1155
  %v1311 = vadd.f32 %v889, %v1158
  %v1312 = vadd.f32 %v891, %v1160
  %v1313 = vadd.f32 %v894, %v1163
  %v1314 = vadd.f32 %v896, %v1165
  %v1315 = vadd.f32 %v899, %v1168
  %v1316 = vadd.f32 %v901, %v1170
  %v1317 = vadd.f32 %v904, %v1173
  %v1318 = vadd.f32 %v906, %v1175
  %v1319 = vadd.f32 %v909, %v1178
  %v1320 = vadd.f32 %v911, %v1180
  %v1321 = vadd.f32 %v914, %v1183
  %v1322 = vadd.f32 %v916, %v1185
  %v1323 = vadd.f32 %v919, %v1188
  %v1324 = vadd.f32 %v921, %v1190
  %v1325 = vadd.f32 %v924, %v1193
  %v1326 = vadd.f32 %v926, %v1195
  %v1327 = vadd.f32 %v929, %v1198
  %v1328 = vadd.f32 %v931, %v1200
  %v1329 = vadd.f32 %v934, %v1203
  %v1330 = vadd.f32 %v936, %v1205
  %v1331 = vadd.f32 %v939, %v1208
  %v1332 = vadd.f32 %v941, %v1210
  %v1333 = vadd.f32 %v944, %v1213
  %v1334 = vadd.f32 %v946, %v1215
  %v1335 = vadd.f32 %v949, %v1218
  %v1336 = vadd.f32 %v951, %v1220
  %v1337 = vadd.f32 %v954, %v1223
  %v1338 = vadd.f32 %v956, %v1225
  %v1339 = vadd.f32 %v959, %v1228
  %v1340 = vadd.f32 %v961, %v1230
  %v1341 = vadd.f32 %v964, %v1233
  %v1342 = vadd.f32 %v966, %v1235
  %v1343 = vadd.f32 %v969, %v1238
  %v1344 = vadd.f32 %v971, %v1240
  %v1345 = vadd.f32 %v974, %v1243
  %v1346 = vadd.f32 %v976, %v1245
  %v1347 = vadd.f32 %v979, %v1248
  %v1348 = vadd.f32 %v981, %v1250
  %v1349 = vadd.f32 %v984, %v1253
  %v1350 = vadd.f32 %v986, %v1255
  %v1351 = vadd.f32 %v989, %v1258
  %v1352 = vadd.f32 %v991, %v1260
  %v1353 = vadd.f32 %v994, %v1263
  %v1354 = vadd.f32 %v996, %v1265
  %v1355 = vadd.f32 %v999, %v1268
  %v1356 = vadd.f32 %v1001, %v1270
  %v1357 = vadd.f32 %v1004, %v1273
  %v1358 = vadd.f32 %v1006, %v1275
  %v1359 = vadd.f32 %v1009, %v1278
  %v1360 = vadd.f32 %v1011, %v1280
  %v1361 = vadd.f32 %v1014, %v1283
  %v1362 = vadd.f32 %v1016, %v1285
  %v1363 = vadd.f32 %v1019, %v1288
  %v1364 = vadd.f32 %v1021, %v1290
  %v1365 = vadd.f32 %v1024, %v1293
  %v1366 = vadd.f32 %v1026, %v1295
  %v1367 = vadd.f32 %v1029, %v1298
  %v1368 = vadd.f32 %v1031, %v1300
  %v1369 = vadd.f32 %v1034, %v1303
  %v1370 = vadd.f32 %v1036, %v1305
  %v1371 = vld [vmem:[%s11] sm:$0x1]
  %v1373 = vperm.slane %v1371, 0
  %v1375 = vadd.f32 %v1307, %v1373
  %v1376 = vadd.f32 %v1308, %v1373
  %v1377 = vadd.f32 %v1309, %v1373
  %v1378 = vadd.f32 %v1310, %v1373
  %v1379 = vadd.f32 %v1311, %v1373
  %v1380 = vadd.f32 %v1312, %v1373
  %v1381 = vadd.f32 %v1313, %v1373
  %v1382 = vadd.f32 %v1314, %v1373
  %v1383 = vadd.f32 %v1315, %v1373
  %v1384 = vadd.f32 %v1316, %v1373
  %v1385 = vadd.f32 %v1317, %v1373
  %v1386 = vadd.f32 %v1318, %v1373
  %v1387 = vadd.f32 %v1319, %v1373
  %v1388 = vadd.f32 %v1320, %v1373
  %v1389 = vadd.f32 %v1321, %v1373
  %v1390 = vadd.f32 %v1322, %v1373
  %v1391 = vadd.f32 %v1323, %v1373
  %v1392 = vadd.f32 %v1324, %v1373
  %v1393 = vadd.f32 %v1325, %v1373
  %v1394 = vadd.f32 %v1326, %v1373
  %v1395 = vadd.f32 %v1327, %v1373
  %v1396 = vadd.f32 %v1328, %v1373
  %v1397 = vadd.f32 %v1329, %v1373
  %v1398 = vadd.f32 %v1330, %v1373
  %v1399 = vadd.f32 %v1331, %v1373
  %v1400 = vadd.f32 %v1332, %v1373
  %v1401 = vadd.f32 %v1333, %v1373
  %v1402 = vadd.f32 %v1334, %v1373
  %v1403 = vadd.f32 %v1335, %v1373
  %v1404 = vadd.f32 %v1336, %v1373
  %v1405 = vadd.f32 %v1337, %v1373
  %v1406 = vadd.f32 %v1338, %v1373
  %v1407 = vadd.f32 %v1339, %v1373
  %v1408 = vadd.f32 %v1340, %v1373
  %v1409 = vadd.f32 %v1341, %v1373
  %v1410 = vadd.f32 %v1342, %v1373
  %v1411 = vadd.f32 %v1343, %v1373
  %v1412 = vadd.f32 %v1344, %v1373
  %v1413 = vadd.f32 %v1345, %v1373
  %v1414 = vadd.f32 %v1346, %v1373
  %v1415 = vadd.f32 %v1347, %v1373
  %v1416 = vadd.f32 %v1348, %v1373
  %v1417 = vadd.f32 %v1349, %v1373
  %v1418 = vadd.f32 %v1350, %v1373
  %v1419 = vadd.f32 %v1351, %v1373
  %v1420 = vadd.f32 %v1352, %v1373
  %v1421 = vadd.f32 %v1353, %v1373
  %v1422 = vadd.f32 %v1354, %v1373
  %v1423 = vadd.f32 %v1355, %v1373
  %v1424 = vadd.f32 %v1356, %v1373
  %v1425 = vadd.f32 %v1357, %v1373
  %v1426 = vadd.f32 %v1358, %v1373
  %v1427 = vadd.f32 %v1359, %v1373
  %v1428 = vadd.f32 %v1360, %v1373
  %v1429 = vadd.f32 %v1361, %v1373
  %v1430 = vadd.f32 %v1362, %v1373
  %v1431 = vadd.f32 %v1363, %v1373
  %v1432 = vadd.f32 %v1364, %v1373
  %v1433 = vadd.f32 %v1365, %v1373
  %v1434 = vadd.f32 %v1366, %v1373
  %v1435 = vadd.f32 %v1367, %v1373
  %v1436 = vadd.f32 %v1368, %v1373
  %v1437 = vadd.f32 %v1369, %v1373
  %v1438 = vadd.f32 %v1370, %v1373
  %v1439 = vld [vmem:[%s12] sm:$0xf]
  %v1440 = vld [vmem:[%s12 + $0x4] sm:$0xf]
  %v1441 = vld [vmem:[%s13] sm:$0xf]
  %v1443 = vsel %vm403, %v1441, 0
  %1445 = vmatpush.bf16.msra.mxu0 0
  %1446 = vmatpush.bf16.msra.mxu0 0
  %1447 = vmatpush.bf16.msra.mxu0 0
  %1448 = vmatpush.bf16.msra.mxu0 0
  %1449 = vmatpush.bf16.msra.mxu0 0
  %1450 = vmatpush.bf16.msra.mxu0 0
  %1451 = vmatpush.bf16.msra.mxu0 0
  %1452 = vmatpush.bf16.msra.mxu0 %v1443
  %1453 = vmatmul.bf16.gmra.mxu0 %v500
  %v1454 = vpop.f32.mrf.mxu0
  %v1455 = vadd.f32 0.0, %v1454
  %v1456 = vpop.f32.mrf.mxu0
  %v1457 = vadd.f32 0.0, %v1456
  %1458 = vmatmul.bf16.gmra.mxu0 %v503
  %v1459 = vpop.f32.mrf.mxu0
  %v1460 = vadd.f32 0.0, %v1459
  %v1461 = vpop.f32.mrf.mxu0
  %v1462 = vadd.f32 0.0, %v1461
  %1463 = vmatmul.bf16.gmra.mxu0 %v506
  %v1464 = vpop.f32.mrf.mxu0
  %v1465 = vadd.f32 0.0, %v1464
  %v1466 = vpop.f32.mrf.mxu0
  %v1467 = vadd.f32 0.0, %v1466
  %1468 = vmatmul.bf16.gmra.mxu0 %v509
  %v1469 = vpop.f32.mrf.mxu0
  %v1470 = vadd.f32 0.0, %v1469
  %v1471 = vpop.f32.mrf.mxu0
  %v1472 = vadd.f32 0.0, %v1471
  %1473 = vmatmul.bf16.gmra.mxu0 %v512
  %v1474 = vpop.f32.mrf.mxu0
  %v1475 = vadd.f32 0.0, %v1474
  %v1476 = vpop.f32.mrf.mxu0
  %v1477 = vadd.f32 0.0, %v1476
  %1478 = vmatmul.bf16.gmra.mxu0 %v515
  %v1479 = vpop.f32.mrf.mxu0
  %v1480 = vadd.f32 0.0, %v1479
  %v1481 = vpop.f32.mrf.mxu0
  %v1482 = vadd.f32 0.0, %v1481
  %1483 = vmatmul.bf16.gmra.mxu0 %v518
  %v1484 = vpop.f32.mrf.mxu0
  %v1485 = vadd.f32 0.0, %v1484
  %v1486 = vpop.f32.mrf.mxu0
  %v1487 = vadd.f32 0.0, %v1486
  %1488 = vmatmul.bf16.gmra.mxu0 %v521
  %v1489 = vpop.f32.mrf.mxu0
  %v1490 = vadd.f32 0.0, %v1489
  %v1491 = vpop.f32.mrf.mxu0
  %v1492 = vadd.f32 0.0, %v1491
  %1493 = vmatmul.bf16.gmra.mxu0 %v524
  %v1494 = vpop.f32.mrf.mxu0
  %v1495 = vadd.f32 0.0, %v1494
  %v1496 = vpop.f32.mrf.mxu0
  %v1497 = vadd.f32 0.0, %v1496
  %1498 = vmatmul.bf16.gmra.mxu0 %v527
  %v1499 = vpop.f32.mrf.mxu0
  %v1500 = vadd.f32 0.0, %v1499
  %v1501 = vpop.f32.mrf.mxu0
  %v1502 = vadd.f32 0.0, %v1501
  %1503 = vmatmul.bf16.gmra.mxu0 %v530
  %v1504 = vpop.f32.mrf.mxu0
  %v1505 = vadd.f32 0.0, %v1504
  %v1506 = vpop.f32.mrf.mxu0
  %v1507 = vadd.f32 0.0, %v1506
  %1508 = vmatmul.bf16.gmra.mxu0 %v533
  %v1509 = vpop.f32.mrf.mxu0
  %v1510 = vadd.f32 0.0, %v1509
  %v1511 = vpop.f32.mrf.mxu0
  %v1512 = vadd.f32 0.0, %v1511
  %1513 = vmatmul.bf16.gmra.mxu0 %v536
  %v1514 = vpop.f32.mrf.mxu0
  %v1515 = vadd.f32 0.0, %v1514
  %v1516 = vpop.f32.mrf.mxu0
  %v1517 = vadd.f32 0.0, %v1516
  %1518 = vmatmul.bf16.gmra.mxu0 %v539
  %v1519 = vpop.f32.mrf.mxu0
  %v1520 = vadd.f32 0.0, %v1519
  %v1521 = vpop.f32.mrf.mxu0
  %v1522 = vadd.f32 0.0, %v1521
  %1523 = vmatmul.bf16.gmra.mxu0 %v542
  %v1524 = vpop.f32.mrf.mxu0
  %v1525 = vadd.f32 0.0, %v1524
  %v1526 = vpop.f32.mrf.mxu0
  %v1527 = vadd.f32 0.0, %v1526
  %1528 = vmatmul.bf16.gmra.mxu0 %v545
  %v1529 = vpop.f32.mrf.mxu0
  %v1530 = vadd.f32 0.0, %v1529
  %v1531 = vpop.f32.mrf.mxu0
  %v1532 = vadd.f32 0.0, %v1531
  %1533 = vmatmul.bf16.gmra.mxu0 %v548
  %v1534 = vpop.f32.mrf.mxu0
  %v1535 = vadd.f32 0.0, %v1534
  %v1536 = vpop.f32.mrf.mxu0
  %v1537 = vadd.f32 0.0, %v1536
  %1538 = vmatmul.bf16.gmra.mxu0 %v551
  %v1539 = vpop.f32.mrf.mxu0
  %v1540 = vadd.f32 0.0, %v1539
  %v1541 = vpop.f32.mrf.mxu0
  %v1542 = vadd.f32 0.0, %v1541
  %1543 = vmatmul.bf16.gmra.mxu0 %v554
  %v1544 = vpop.f32.mrf.mxu0
  %v1545 = vadd.f32 0.0, %v1544
  %v1546 = vpop.f32.mrf.mxu0
  %v1547 = vadd.f32 0.0, %v1546
  %1548 = vmatmul.bf16.gmra.mxu0 %v557
  %v1549 = vpop.f32.mrf.mxu0
  %v1550 = vadd.f32 0.0, %v1549
  %v1551 = vpop.f32.mrf.mxu0
  %v1552 = vadd.f32 0.0, %v1551
  %1553 = vmatmul.bf16.gmra.mxu0 %v560
  %v1554 = vpop.f32.mrf.mxu0
  %v1555 = vadd.f32 0.0, %v1554
  %v1556 = vpop.f32.mrf.mxu0
  %v1557 = vadd.f32 0.0, %v1556
  %1558 = vmatmul.bf16.gmra.mxu0 %v563
  %v1559 = vpop.f32.mrf.mxu0
  %v1560 = vadd.f32 0.0, %v1559
  %v1561 = vpop.f32.mrf.mxu0
  %v1562 = vadd.f32 0.0, %v1561
  %1563 = vmatmul.bf16.gmra.mxu0 %v566
  %v1564 = vpop.f32.mrf.mxu0
  %v1565 = vadd.f32 0.0, %v1564
  %v1566 = vpop.f32.mrf.mxu0
  %v1567 = vadd.f32 0.0, %v1566
  %1568 = vmatmul.bf16.gmra.mxu0 %v569
  %v1569 = vpop.f32.mrf.mxu0
  %v1570 = vadd.f32 0.0, %v1569
  %v1571 = vpop.f32.mrf.mxu0
  %v1572 = vadd.f32 0.0, %v1571
  %1573 = vmatmul.bf16.gmra.mxu0 %v572
  %v1574 = vpop.f32.mrf.mxu0
  %v1575 = vadd.f32 0.0, %v1574
  %v1576 = vpop.f32.mrf.mxu0
  %v1577 = vadd.f32 0.0, %v1576
  %1578 = vmatmul.bf16.gmra.mxu0 %v575
  %v1579 = vpop.f32.mrf.mxu0
  %v1580 = vadd.f32 0.0, %v1579
  %v1581 = vpop.f32.mrf.mxu0
  %v1582 = vadd.f32 0.0, %v1581
  %1583 = vmatmul.bf16.gmra.mxu0 %v578
  %v1584 = vpop.f32.mrf.mxu0
  %v1585 = vadd.f32 0.0, %v1584
  %v1586 = vpop.f32.mrf.mxu0
  %v1587 = vadd.f32 0.0, %v1586
  %1588 = vmatmul.bf16.gmra.mxu0 %v581
  %v1589 = vpop.f32.mrf.mxu0
  %v1590 = vadd.f32 0.0, %v1589
  %v1591 = vpop.f32.mrf.mxu0
  %v1592 = vadd.f32 0.0, %v1591
  %1593 = vmatmul.bf16.gmra.mxu0 %v584
  %v1594 = vpop.f32.mrf.mxu0
  %v1595 = vadd.f32 0.0, %v1594
  %v1596 = vpop.f32.mrf.mxu0
  %v1597 = vadd.f32 0.0, %v1596
  %1598 = vmatmul.bf16.gmra.mxu0 %v587
  %v1599 = vpop.f32.mrf.mxu0
  %v1600 = vadd.f32 0.0, %v1599
  %v1601 = vpop.f32.mrf.mxu0
  %v1602 = vadd.f32 0.0, %v1601
  %1603 = vmatmul.bf16.gmra.mxu0 %v590
  %v1604 = vpop.f32.mrf.mxu0
  %v1605 = vadd.f32 0.0, %v1604
  %v1606 = vpop.f32.mrf.mxu0
  %v1607 = vadd.f32 0.0, %v1606
  %1608 = vmatmul.bf16.gmra.mxu0 %v593
  %v1609 = vpop.f32.mrf.mxu0
  %v1610 = vadd.f32 0.0, %v1609
  %v1611 = vpop.f32.mrf.mxu0
  %v1612 = vadd.f32 0.0, %v1611
  %1613 = vdwg.mxu0
  %v1616 = vunpack.c.l.b16 %v1439
  %v1617 = vunpack.c.l.b16 %v1440
  %v1618 = vpack.c.b16 %v1617, %v1616
  %1620 = vmatpush.bf16.msra.mxu0 0
  %1621 = vmatpush.bf16.msra.mxu0 0
  %1622 = vmatpush.bf16.msra.mxu0 0
  %1623 = vmatpush.bf16.msra.mxu0 0
  %1624 = vmatpush.bf16.msra.mxu0 0
  %1625 = vmatpush.bf16.msra.mxu0 0
  %1626 = vmatpush.bf16.msra.mxu0 0
  %1627 = vmatpush.bf16.msra.mxu0 %v1618
  %1628 = vmatmul.bf16.gmra.mxu0 %v774
  %v1629 = vpop.f32.mrf.mxu0
  %v1630 = vadd.f32 %v1455, %v1629
  %v1631 = vpop.f32.mrf.mxu0
  %v1632 = vadd.f32 %v1457, %v1631
  %1633 = vmatmul.bf16.gmra.mxu0 %v777
  %v1634 = vpop.f32.mrf.mxu0
  %v1635 = vadd.f32 %v1460, %v1634
  %v1636 = vpop.f32.mrf.mxu0
  %v1637 = vadd.f32 %v1462, %v1636
  %1638 = vmatmul.bf16.gmra.mxu0 %v780
  %v1639 = vpop.f32.mrf.mxu0
  %v1640 = vadd.f32 %v1465, %v1639
  %v1641 = vpop.f32.mrf.mxu0
  %v1642 = vadd.f32 %v1467, %v1641
  %1643 = vmatmul.bf16.gmra.mxu0 %v783
  %v1644 = vpop.f32.mrf.mxu0
  %v1645 = vadd.f32 %v1470, %v1644
  %v1646 = vpop.f32.mrf.mxu0
  %v1647 = vadd.f32 %v1472, %v1646
  %1648 = vmatmul.bf16.gmra.mxu0 %v786
  %v1649 = vpop.f32.mrf.mxu0
  %v1650 = vadd.f32 %v1475, %v1649
  %v1651 = vpop.f32.mrf.mxu0
  %v1652 = vadd.f32 %v1477, %v1651
  %1653 = vmatmul.bf16.gmra.mxu0 %v789
  %v1654 = vpop.f32.mrf.mxu0
  %v1655 = vadd.f32 %v1480, %v1654
  %v1656 = vpop.f32.mrf.mxu0
  %v1657 = vadd.f32 %v1482, %v1656
  %1658 = vmatmul.bf16.gmra.mxu0 %v792
  %v1659 = vpop.f32.mrf.mxu0
  %v1660 = vadd.f32 %v1485, %v1659
  %v1661 = vpop.f32.mrf.mxu0
  %v1662 = vadd.f32 %v1487, %v1661
  %1663 = vmatmul.bf16.gmra.mxu0 %v795
  %v1664 = vpop.f32.mrf.mxu0
  %v1665 = vadd.f32 %v1490, %v1664
  %v1666 = vpop.f32.mrf.mxu0
  %v1667 = vadd.f32 %v1492, %v1666
  %1668 = vmatmul.bf16.gmra.mxu0 %v798
  %v1669 = vpop.f32.mrf.mxu0
  %v1670 = vadd.f32 %v1495, %v1669
  %v1671 = vpop.f32.mrf.mxu0
  %v1672 = vadd.f32 %v1497, %v1671
  %1673 = vmatmul.bf16.gmra.mxu0 %v801
  %v1674 = vpop.f32.mrf.mxu0
  %v1675 = vadd.f32 %v1500, %v1674
  %v1676 = vpop.f32.mrf.mxu0
  %v1677 = vadd.f32 %v1502, %v1676
  %1678 = vmatmul.bf16.gmra.mxu0 %v804
  %v1679 = vpop.f32.mrf.mxu0
  %v1680 = vadd.f32 %v1505, %v1679
  %v1681 = vpop.f32.mrf.mxu0
  %v1682 = vadd.f32 %v1507, %v1681
  %1683 = vmatmul.bf16.gmra.mxu0 %v807
  %v1684 = vpop.f32.mrf.mxu0
  %v1685 = vadd.f32 %v1510, %v1684
  %v1686 = vpop.f32.mrf.mxu0
  %v1687 = vadd.f32 %v1512, %v1686
  %1688 = vmatmul.bf16.gmra.mxu0 %v810
  %v1689 = vpop.f32.mrf.mxu0
  %v1690 = vadd.f32 %v1515, %v1689
  %v1691 = vpop.f32.mrf.mxu0
  %v1692 = vadd.f32 %v1517, %v1691
  %1693 = vmatmul.bf16.gmra.mxu0 %v813
  %v1694 = vpop.f32.mrf.mxu0
  %v1695 = vadd.f32 %v1520, %v1694
  %v1696 = vpop.f32.mrf.mxu0
  %v1697 = vadd.f32 %v1522, %v1696
  %1698 = vmatmul.bf16.gmra.mxu0 %v816
  %v1699 = vpop.f32.mrf.mxu0
  %v1700 = vadd.f32 %v1525, %v1699
  %v1701 = vpop.f32.mrf.mxu0
  %v1702 = vadd.f32 %v1527, %v1701
  %1703 = vmatmul.bf16.gmra.mxu0 %v819
  %v1704 = vpop.f32.mrf.mxu0
  %v1705 = vadd.f32 %v1530, %v1704
  %v1706 = vpop.f32.mrf.mxu0
  %v1707 = vadd.f32 %v1532, %v1706
  %1708 = vmatmul.bf16.gmra.mxu0 %v822
  %v1709 = vpop.f32.mrf.mxu0
  %v1710 = vadd.f32 %v1535, %v1709
  %v1711 = vpop.f32.mrf.mxu0
  %v1712 = vadd.f32 %v1537, %v1711
  %1713 = vmatmul.bf16.gmra.mxu0 %v825
  %v1714 = vpop.f32.mrf.mxu0
  %v1715 = vadd.f32 %v1540, %v1714
  %v1716 = vpop.f32.mrf.mxu0
  %v1717 = vadd.f32 %v1542, %v1716
  %1718 = vmatmul.bf16.gmra.mxu0 %v828
  %v1719 = vpop.f32.mrf.mxu0
  %v1720 = vadd.f32 %v1545, %v1719
  %v1721 = vpop.f32.mrf.mxu0
  %v1722 = vadd.f32 %v1547, %v1721
  %1723 = vmatmul.bf16.gmra.mxu0 %v831
  %v1724 = vpop.f32.mrf.mxu0
  %v1725 = vadd.f32 %v1550, %v1724
  %v1726 = vpop.f32.mrf.mxu0
  %v1727 = vadd.f32 %v1552, %v1726
  %1728 = vmatmul.bf16.gmra.mxu0 %v834
  %v1729 = vpop.f32.mrf.mxu0
  %v1730 = vadd.f32 %v1555, %v1729
  %v1731 = vpop.f32.mrf.mxu0
  %v1732 = vadd.f32 %v1557, %v1731
  %1733 = vmatmul.bf16.gmra.mxu0 %v837
  %v1734 = vpop.f32.mrf.mxu0
  %v1735 = vadd.f32 %v1560, %v1734
  %v1736 = vpop.f32.mrf.mxu0
  %v1737 = vadd.f32 %v1562, %v1736
  %1738 = vmatmul.bf16.gmra.mxu0 %v840
  %v1739 = vpop.f32.mrf.mxu0
  %v1740 = vadd.f32 %v1565, %v1739
  %v1741 = vpop.f32.mrf.mxu0
  %v1742 = vadd.f32 %v1567, %v1741
  %1743 = vmatmul.bf16.gmra.mxu0 %v843
  %v1744 = vpop.f32.mrf.mxu0
  %v1745 = vadd.f32 %v1570, %v1744
  %v1746 = vpop.f32.mrf.mxu0
  %v1747 = vadd.f32 %v1572, %v1746
  %1748 = vmatmul.bf16.gmra.mxu0 %v846
  %v1749 = vpop.f32.mrf.mxu0
  %v1750 = vadd.f32 %v1575, %v1749
  %v1751 = vpop.f32.mrf.mxu0
  %v1752 = vadd.f32 %v1577, %v1751
  %1753 = vmatmul.bf16.gmra.mxu0 %v849
  %v1754 = vpop.f32.mrf.mxu0
  %v1755 = vadd.f32 %v1580, %v1754
  %v1756 = vpop.f32.mrf.mxu0
  %v1757 = vadd.f32 %v1582, %v1756
  %1758 = vmatmul.bf16.gmra.mxu0 %v852
  %v1759 = vpop.f32.mrf.mxu0
  %v1760 = vadd.f32 %v1585, %v1759
  %v1761 = vpop.f32.mrf.mxu0
  %v1762 = vadd.f32 %v1587, %v1761
  %1763 = vmatmul.bf16.gmra.mxu0 %v855
  %v1764 = vpop.f32.mrf.mxu0
  %v1765 = vadd.f32 %v1590, %v1764
  %v1766 = vpop.f32.mrf.mxu0
  %v1767 = vadd.f32 %v1592, %v1766
  %1768 = vmatmul.bf16.gmra.mxu0 %v858
  %v1769 = vpop.f32.mrf.mxu0
  %v1770 = vadd.f32 %v1595, %v1769
  %v1771 = vpop.f32.mrf.mxu0
  %v1772 = vadd.f32 %v1597, %v1771
  %1773 = vmatmul.bf16.gmra.mxu0 %v861
  %v1774 = vpop.f32.mrf.mxu0
  %v1775 = vadd.f32 %v1600, %v1774
  %v1776 = vpop.f32.mrf.mxu0
  %v1777 = vadd.f32 %v1602, %v1776
  %1778 = vmatmul.bf16.gmra.mxu0 %v864
  %v1779 = vpop.f32.mrf.mxu0
  %v1780 = vadd.f32 %v1605, %v1779
  %v1781 = vpop.f32.mrf.mxu0
  %v1782 = vadd.f32 %v1607, %v1781
  %1783 = vmatmul.bf16.gmra.mxu0 %v867
  %v1784 = vpop.f32.mrf.mxu0
  %v1785 = vadd.f32 %v1610, %v1784
  %v1786 = vpop.f32.mrf.mxu0
  %v1787 = vadd.f32 %v1612, %v1786
  %1788 = vdwg.mxu0
  %v1789 = vld [vmem:[%s14] sm:$0xf]
  %v1791 = vsel %vm403, %v1789, 0
  %1793 = vmatpush.bf16.msra.mxu0 0
  %1794 = vmatpush.bf16.msra.mxu0 0
  %1795 = vmatpush.bf16.msra.mxu0 0
  %1796 = vmatpush.bf16.msra.mxu0 0
  %1797 = vmatpush.bf16.msra.mxu0 0
  %1798 = vmatpush.bf16.msra.mxu0 0
  %1799 = vmatpush.bf16.msra.mxu0 0
  %1800 = vmatpush.bf16.msra.mxu0 %v1791
  %1801 = vmatmul.bf16.gmra.mxu0 %v1040
  %v1802 = vpop.f32.mrf.mxu0
  %v1803 = vadd.f32 0.0, %v1802
  %v1804 = vpop.f32.mrf.mxu0
  %v1805 = vadd.f32 0.0, %v1804
  %1806 = vmatmul.bf16.gmra.mxu0 %v1043
  %v1807 = vpop.f32.mrf.mxu0
  %v1808 = vadd.f32 0.0, %v1807
  %v1809 = vpop.f32.mrf.mxu0
  %v1810 = vadd.f32 0.0, %v1809
  %1811 = vmatmul.bf16.gmra.mxu0 %v1046
  %v1812 = vpop.f32.mrf.mxu0
  %v1813 = vadd.f32 0.0, %v1812
  %v1814 = vpop.f32.mrf.mxu0
  %v1815 = vadd.f32 0.0, %v1814
  %1816 = vmatmul.bf16.gmra.mxu0 %v1049
  %v1817 = vpop.f32.mrf.mxu0
  %v1818 = vadd.f32 0.0, %v1817
  %v1819 = vpop.f32.mrf.mxu0
  %v1820 = vadd.f32 0.0, %v1819
  %1821 = vmatmul.bf16.gmra.mxu0 %v1052
  %v1822 = vpop.f32.mrf.mxu0
  %v1823 = vadd.f32 0.0, %v1822
  %v1824 = vpop.f32.mrf.mxu0
  %v1825 = vadd.f32 0.0, %v1824
  %1826 = vmatmul.bf16.gmra.mxu0 %v1055
  %v1827 = vpop.f32.mrf.mxu0
  %v1828 = vadd.f32 0.0, %v1827
  %v1829 = vpop.f32.mrf.mxu0
  %v1830 = vadd.f32 0.0, %v1829
  %1831 = vmatmul.bf16.gmra.mxu0 %v1058
  %v1832 = vpop.f32.mrf.mxu0
  %v1833 = vadd.f32 0.0, %v1832
  %v1834 = vpop.f32.mrf.mxu0
  %v1835 = vadd.f32 0.0, %v1834
  %1836 = vmatmul.bf16.gmra.mxu0 %v1061
  %v1837 = vpop.f32.mrf.mxu0
  %v1838 = vadd.f32 0.0, %v1837
  %v1839 = vpop.f32.mrf.mxu0
  %v1840 = vadd.f32 0.0, %v1839
  %1841 = vmatmul.bf16.gmra.mxu0 %v1064
  %v1842 = vpop.f32.mrf.mxu0
  %v1843 = vadd.f32 0.0, %v1842
  %v1844 = vpop.f32.mrf.mxu0
  %v1845 = vadd.f32 0.0, %v1844
  %1846 = vmatmul.bf16.gmra.mxu0 %v1067
  %v1847 = vpop.f32.mrf.mxu0
  %v1848 = vadd.f32 0.0, %v1847
  %v1849 = vpop.f32.mrf.mxu0
  %v1850 = vadd.f32 0.0, %v1849
  %1851 = vmatmul.bf16.gmra.mxu0 %v1070
  %v1852 = vpop.f32.mrf.mxu0
  %v1853 = vadd.f32 0.0, %v1852
  %v1854 = vpop.f32.mrf.mxu0
  %v1855 = vadd.f32 0.0, %v1854
  %1856 = vmatmul.bf16.gmra.mxu0 %v1073
  %v1857 = vpop.f32.mrf.mxu0
  %v1858 = vadd.f32 0.0, %v1857
  %v1859 = vpop.f32.mrf.mxu0
  %v1860 = vadd.f32 0.0, %v1859
  %1861 = vmatmul.bf16.gmra.mxu0 %v1076
  %v1862 = vpop.f32.mrf.mxu0
  %v1863 = vadd.f32 0.0, %v1862
  %v1864 = vpop.f32.mrf.mxu0
  %v1865 = vadd.f32 0.0, %v1864
  %1866 = vmatmul.bf16.gmra.mxu0 %v1079
  %v1867 = vpop.f32.mrf.mxu0
  %v1868 = vadd.f32 0.0, %v1867
  %v1869 = vpop.f32.mrf.mxu0
  %v1870 = vadd.f32 0.0, %v1869
  %1871 = vmatmul.bf16.gmra.mxu0 %v1082
  %v1872 = vpop.f32.mrf.mxu0
  %v1873 = vadd.f32 0.0, %v1872
  %v1874 = vpop.f32.mrf.mxu0
  %v1875 = vadd.f32 0.0, %v1874
  %1876 = vmatmul.bf16.gmra.mxu0 %v1085
  %v1877 = vpop.f32.mrf.mxu0
  %v1878 = vadd.f32 0.0, %v1877
  %v1879 = vpop.f32.mrf.mxu0
  %v1880 = vadd.f32 0.0, %v1879
  %1881 = vmatmul.bf16.gmra.mxu0 %v1088
  %v1882 = vpop.f32.mrf.mxu0
  %v1883 = vadd.f32 0.0, %v1882
  %v1884 = vpop.f32.mrf.mxu0
  %v1885 = vadd.f32 0.0, %v1884
  %1886 = vmatmul.bf16.gmra.mxu0 %v1091
  %v1887 = vpop.f32.mrf.mxu0
  %v1888 = vadd.f32 0.0, %v1887
  %v1889 = vpop.f32.mrf.mxu0
  %v1890 = vadd.f32 0.0, %v1889
  %1891 = vmatmul.bf16.gmra.mxu0 %v1094
  %v1892 = vpop.f32.mrf.mxu0
  %v1893 = vadd.f32 0.0, %v1892
  %v1894 = vpop.f32.mrf.mxu0
  %v1895 = vadd.f32 0.0, %v1894
  %1896 = vmatmul.bf16.gmra.mxu0 %v1097
  %v1897 = vpop.f32.mrf.mxu0
  %v1898 = vadd.f32 0.0, %v1897
  %v1899 = vpop.f32.mrf.mxu0
  %v1900 = vadd.f32 0.0, %v1899
  %1901 = vmatmul.bf16.gmra.mxu0 %v1100
  %v1902 = vpop.f32.mrf.mxu0
  %v1903 = vadd.f32 0.0, %v1902
  %v1904 = vpop.f32.mrf.mxu0
  %v1905 = vadd.f32 0.0, %v1904
  %1906 = vmatmul.bf16.gmra.mxu0 %v1103
  %v1907 = vpop.f32.mrf.mxu0
  %v1908 = vadd.f32 0.0, %v1907
  %v1909 = vpop.f32.mrf.mxu0
  %v1910 = vadd.f32 0.0, %v1909
  %1911 = vmatmul.bf16.gmra.mxu0 %v1106
  %v1912 = vpop.f32.mrf.mxu0
  %v1913 = vadd.f32 0.0, %v1912
  %v1914 = vpop.f32.mrf.mxu0
  %v1915 = vadd.f32 0.0, %v1914
  %1916 = vmatmul.bf16.gmra.mxu0 %v1109
  %v1917 = vpop.f32.mrf.mxu0
  %v1918 = vadd.f32 0.0, %v1917
  %v1919 = vpop.f32.mrf.mxu0
  %v1920 = vadd.f32 0.0, %v1919
  %1921 = vmatmul.bf16.gmra.mxu0 %v1112
  %v1922 = vpop.f32.mrf.mxu0
  %v1923 = vadd.f32 0.0, %v1922
  %v1924 = vpop.f32.mrf.mxu0
  %v1925 = vadd.f32 0.0, %v1924
  %1926 = vmatmul.bf16.gmra.mxu0 %v1115
  %v1927 = vpop.f32.mrf.mxu0
  %v1928 = vadd.f32 0.0, %v1927
  %v1929 = vpop.f32.mrf.mxu0
  %v1930 = vadd.f32 0.0, %v1929
  %1931 = vmatmul.bf16.gmra.mxu0 %v1118
  %v1932 = vpop.f32.mrf.mxu0
  %v1933 = vadd.f32 0.0, %v1932
  %v1934 = vpop.f32.mrf.mxu0
  %v1935 = vadd.f32 0.0, %v1934
  %1936 = vmatmul.bf16.gmra.mxu0 %v1121
  %v1937 = vpop.f32.mrf.mxu0
  %v1938 = vadd.f32 0.0, %v1937
  %v1939 = vpop.f32.mrf.mxu0
  %v1940 = vadd.f32 0.0, %v1939
  %1941 = vmatmul.bf16.gmra.mxu0 %v1124
  %v1942 = vpop.f32.mrf.mxu0
  %v1943 = vadd.f32 0.0, %v1942
  %v1944 = vpop.f32.mrf.mxu0
  %v1945 = vadd.f32 0.0, %v1944
  %1946 = vmatmul.bf16.gmra.mxu0 %v1127
  %v1947 = vpop.f32.mrf.mxu0
  %v1948 = vadd.f32 0.0, %v1947
  %v1949 = vpop.f32.mrf.mxu0
  %v1950 = vadd.f32 0.0, %v1949
  %1951 = vmatmul.bf16.gmra.mxu0 %v1130
  %v1952 = vpop.f32.mrf.mxu0
  %v1953 = vadd.f32 0.0, %v1952
  %v1954 = vpop.f32.mrf.mxu0
  %v1955 = vadd.f32 0.0, %v1954
  %1956 = vmatmul.bf16.gmra.mxu0 %v1133
  %v1957 = vpop.f32.mrf.mxu0
  %v1958 = vadd.f32 0.0, %v1957
  %v1959 = vpop.f32.mrf.mxu0
  %v1960 = vadd.f32 0.0, %v1959
  %1961 = vdwg.mxu0
  %v1962 = vadd.f32 %v1630, %v1803
  %v1963 = vadd.f32 %v1632, %v1805
  %v1964 = vadd.f32 %v1635, %v1808
  %v1965 = vadd.f32 %v1637, %v1810
  %v1966 = vadd.f32 %v1640, %v1813
  %v1967 = vadd.f32 %v1642, %v1815
  %v1968 = vadd.f32 %v1645, %v1818
  %v1969 = vadd.f32 %v1647, %v1820
  %v1970 = vadd.f32 %v1650, %v1823
  %v1971 = vadd.f32 %v1652, %v1825
  %v1972 = vadd.f32 %v1655, %v1828
  %v1973 = vadd.f32 %v1657, %v1830
  %v1974 = vadd.f32 %v1660, %v1833
  %v1975 = vadd.f32 %v1662, %v1835
  %v1976 = vadd.f32 %v1665, %v1838
  %v1977 = vadd.f32 %v1667, %v1840
  %v1978 = vadd.f32 %v1670, %v1843
  %v1979 = vadd.f32 %v1672, %v1845
  %v1980 = vadd.f32 %v1675, %v1848
  %v1981 = vadd.f32 %v1677, %v1850
  %v1982 = vadd.f32 %v1680, %v1853
  %v1983 = vadd.f32 %v1682, %v1855
  %v1984 = vadd.f32 %v1685, %v1858
  %v1985 = vadd.f32 %v1687, %v1860
  %v1986 = vadd.f32 %v1690, %v1863
  %v1987 = vadd.f32 %v1692, %v1865
  %v1988 = vadd.f32 %v1695, %v1868
  %v1989 = vadd.f32 %v1697, %v1870
  %v1990 = vadd.f32 %v1700, %v1873
  %v1991 = vadd.f32 %v1702, %v1875
  %v1992 = vadd.f32 %v1705, %v1878
  %v1993 = vadd.f32 %v1707, %v1880
  %v1994 = vadd.f32 %v1710, %v1883
  %v1995 = vadd.f32 %v1712, %v1885
  %v1996 = vadd.f32 %v1715, %v1888
  %v1997 = vadd.f32 %v1717, %v1890
  %v1998 = vadd.f32 %v1720, %v1893
  %v1999 = vadd.f32 %v1722, %v1895
  %v2000 = vadd.f32 %v1725, %v1898
  %v2001 = vadd.f32 %v1727, %v1900
  %v2002 = vadd.f32 %v1730, %v1903
  %v2003 = vadd.f32 %v1732, %v1905
  %v2004 = vadd.f32 %v1735, %v1908
  %v2005 = vadd.f32 %v1737, %v1910
  %v2006 = vadd.f32 %v1740, %v1913
  %v2007 = vadd.f32 %v1742, %v1915
  %v2008 = vadd.f32 %v1745, %v1918
  %v2009 = vadd.f32 %v1747, %v1920
  %v2010 = vadd.f32 %v1750, %v1923
  %v2011 = vadd.f32 %v1752, %v1925
  %v2012 = vadd.f32 %v1755, %v1928
  %v2013 = vadd.f32 %v1757, %v1930
  %v2014 = vadd.f32 %v1760, %v1933
  %v2015 = vadd.f32 %v1762, %v1935
  %v2016 = vadd.f32 %v1765, %v1938
  %v2017 = vadd.f32 %v1767, %v1940
  %v2018 = vadd.f32 %v1770, %v1943
  %v2019 = vadd.f32 %v1772, %v1945
  %v2020 = vadd.f32 %v1775, %v1948
  %v2021 = vadd.f32 %v1777, %v1950
  %v2022 = vadd.f32 %v1780, %v1953
  %v2023 = vadd.f32 %v1782, %v1955
  %v2024 = vadd.f32 %v1785, %v1958
  %v2025 = vadd.f32 %v1787, %v1960
  %v2026 = vld [vmem:[%s15] sm:$0x1]
  %v2028 = vperm.slane %v2026, 0
  %v2030 = vadd.f32 %v1962, %v2028
  %v2031 = vadd.f32 %v1963, %v2028
  %v2032 = vadd.f32 %v1964, %v2028
  %v2033 = vadd.f32 %v1965, %v2028
  %v2034 = vadd.f32 %v1966, %v2028
  %v2035 = vadd.f32 %v1967, %v2028
  %v2036 = vadd.f32 %v1968, %v2028
  %v2037 = vadd.f32 %v1969, %v2028
  %v2038 = vadd.f32 %v1970, %v2028
  %v2039 = vadd.f32 %v1971, %v2028
  %v2040 = vadd.f32 %v1972, %v2028
  %v2041 = vadd.f32 %v1973, %v2028
  %v2042 = vadd.f32 %v1974, %v2028
  %v2043 = vadd.f32 %v1975, %v2028
  %v2044 = vadd.f32 %v1976, %v2028
  %v2045 = vadd.f32 %v1977, %v2028
  %v2046 = vadd.f32 %v1978, %v2028
  %v2047 = vadd.f32 %v1979, %v2028
  %v2048 = vadd.f32 %v1980, %v2028
  %v2049 = vadd.f32 %v1981, %v2028
  %v2050 = vadd.f32 %v1982, %v2028
  %v2051 = vadd.f32 %v1983, %v2028
  %v2052 = vadd.f32 %v1984, %v2028
  %v2053 = vadd.f32 %v1985, %v2028
  %v2054 = vadd.f32 %v1986, %v2028
  %v2055 = vadd.f32 %v1987, %v2028
  %v2056 = vadd.f32 %v1988, %v2028
  %v2057 = vadd.f32 %v1989, %v2028
  %v2058 = vadd.f32 %v1990, %v2028
  %v2059 = vadd.f32 %v1991, %v2028
  %v2060 = vadd.f32 %v1992, %v2028
  %v2061 = vadd.f32 %v1993, %v2028
  %v2062 = vadd.f32 %v1994, %v2028
  %v2063 = vadd.f32 %v1995, %v2028
  %v2064 = vadd.f32 %v1996, %v2028
  %v2065 = vadd.f32 %v1997, %v2028
  %v2066 = vadd.f32 %v1998, %v2028
  %v2067 = vadd.f32 %v1999, %v2028
  %v2068 = vadd.f32 %v2000, %v2028
  %v2069 = vadd.f32 %v2001, %v2028
  %v2070 = vadd.f32 %v2002, %v2028
  %v2071 = vadd.f32 %v2003, %v2028
  %v2072 = vadd.f32 %v2004, %v2028
  %v2073 = vadd.f32 %v2005, %v2028
  %v2074 = vadd.f32 %v2006, %v2028
  %v2075 = vadd.f32 %v2007, %v2028
  %v2076 = vadd.f32 %v2008, %v2028
  %v2077 = vadd.f32 %v2009, %v2028
  %v2078 = vadd.f32 %v2010, %v2028
  %v2079 = vadd.f32 %v2011, %v2028
  %v2080 = vadd.f32 %v2012, %v2028
  %v2081 = vadd.f32 %v2013, %v2028
  %v2082 = vadd.f32 %v2014, %v2028
  %v2083 = vadd.f32 %v2015, %v2028
  %v2084 = vadd.f32 %v2016, %v2028
  %v2085 = vadd.f32 %v2017, %v2028
  %v2086 = vadd.f32 %v2018, %v2028
  %v2087 = vadd.f32 %v2019, %v2028
  %v2088 = vadd.f32 %v2020, %v2028
  %v2089 = vadd.f32 %v2021, %v2028
  %v2090 = vadd.f32 %v2022, %v2028
  %v2091 = vadd.f32 %v2023, %v2028
  %v2092 = vadd.f32 %v2024, %v2028
  %v2093 = vadd.f32 %v2025, %v2028
  %v2102 = vrot.slane %v488, 1
  %v2103 = vrot.slane %v488, 2
  %v2104 = vrot.slane %v488, 3
  %v2105 = vrot.slane %v488, 4
  %v2106 = vrot.slane %v488, 5
  %v2107 = vrot.slane %v488, 6
  %v2108 = vrot.slane %v488, 7
  %v2109 = vrot.slane %v489, 1
  %v2110 = vrot.slane %v489, 2
  %v2111 = vrot.slane %v489, 3
  %v2112 = vrot.slane %v489, 4
  %v2113 = vrot.slane %v489, 5
  %v2114 = vrot.slane %v489, 6
  %v2115 = vrot.slane %v489, 7
  %v2116 = vrot.slane %v490, 1
  %v2117 = vrot.slane %v490, 2
  %v2118 = vrot.slane %v490, 3
  %v2119 = vrot.slane %v490, 4
  %v2120 = vrot.slane %v490, 5
  %v2121 = vrot.slane %v490, 6
  %v2122 = vrot.slane %v490, 7
  %v2123 = vrot.slane %v491, 1
  %v2124 = vrot.slane %v491, 2
  %v2125 = vrot.slane %v491, 3
  %v2126 = vrot.slane %v491, 4
  %v2127 = vrot.slane %v491, 5
  %v2128 = vrot.slane %v491, 6
  %v2129 = vrot.slane %v491, 7
  %v2130 = vrot.slane %v492, 1
  %v2131 = vrot.slane %v492, 2
  %v2132 = vrot.slane %v492, 3
  %v2133 = vrot.slane %v492, 4
  %v2134 = vrot.slane %v492, 5
  %v2135 = vrot.slane %v492, 6
  %v2136 = vrot.slane %v492, 7
  %v2137 = vrot.slane %v493, 1
  %v2138 = vrot.slane %v493, 2
  %v2139 = vrot.slane %v493, 3
  %v2140 = vrot.slane %v493, 4
  %v2141 = vrot.slane %v493, 5
  %v2142 = vrot.slane %v493, 6
  %v2143 = vrot.slane %v493, 7
  %v2144 = vrot.slane %v494, 1
  %v2145 = vrot.slane %v494, 2
  %v2146 = vrot.slane %v494, 3
  %v2147 = vrot.slane %v494, 4
  %v2148 = vrot.slane %v494, 5
  %v2149 = vrot.slane %v494, 6
  %v2150 = vrot.slane %v494, 7
  %v2151 = vrot.slane %v495, 1
  %v2152 = vrot.slane %v495, 2
  %v2153 = vrot.slane %v495, 3
  %v2154 = vrot.slane %v495, 4
  %v2155 = vrot.slane %v495, 5
  %v2156 = vrot.slane %v495, 6
  %v2157 = vrot.slane %v495, 7
  %v2158 = vperm.slane %v488, 0
  %v2159 = vperm.slane %v2102, 0
  %v2160 = vperm.slane %v2103, 0
  %v2161 = vperm.slane %v2104, 0
  %v2162 = vperm.slane %v2105, 0
  %v2163 = vperm.slane %v2106, 0
  %v2164 = vperm.slane %v2107, 0
  %v2165 = vperm.slane %v2108, 0
  %v2166 = vperm.slane %v489, 0
  %v2167 = vperm.slane %v2109, 0
  %v2168 = vperm.slane %v2110, 0
  %v2169 = vperm.slane %v2111, 0
  %v2170 = vperm.slane %v2112, 0
  %v2171 = vperm.slane %v2113, 0
  %v2172 = vperm.slane %v2114, 0
  %v2173 = vperm.slane %v2115, 0
  %v2174 = vperm.slane %v490, 0
  %v2175 = vperm.slane %v2116, 0
  %v2176 = vperm.slane %v2117, 0
  %v2177 = vperm.slane %v2118, 0
  %v2178 = vperm.slane %v2119, 0
  %v2179 = vperm.slane %v2120, 0
  %v2180 = vperm.slane %v2121, 0
  %v2181 = vperm.slane %v2122, 0
  %v2182 = vperm.slane %v491, 0
  %v2183 = vperm.slane %v2123, 0
  %v2184 = vperm.slane %v2124, 0
  %v2185 = vperm.slane %v2125, 0
  %v2186 = vperm.slane %v2126, 0
  %v2187 = vperm.slane %v2127, 0
  %v2188 = vperm.slane %v2128, 0
  %v2189 = vperm.slane %v2129, 0
  %v2190 = vperm.slane %v492, 0
  %v2191 = vperm.slane %v2130, 0
  %v2192 = vperm.slane %v2131, 0
  %v2193 = vperm.slane %v2132, 0
  %v2194 = vperm.slane %v2133, 0
  %v2195 = vperm.slane %v2134, 0
  %v2196 = vperm.slane %v2135, 0
  %v2197 = vperm.slane %v2136, 0
  %v2198 = vperm.slane %v493, 0
  %v2199 = vperm.slane %v2137, 0
  %v2200 = vperm.slane %v2138, 0
  %v2201 = vperm.slane %v2139, 0
  %v2202 = vperm.slane %v2140, 0
  %v2203 = vperm.slane %v2141, 0
  %v2204 = vperm.slane %v2142, 0
  %v2205 = vperm.slane %v2143, 0
  %v2206 = vperm.slane %v494, 0
  %v2207 = vperm.slane %v2144, 0
  %v2208 = vperm.slane %v2145, 0
  %v2209 = vperm.slane %v2146, 0
  %v2210 = vperm.slane %v2147, 0
  %v2211 = vperm.slane %v2148, 0
  %v2212 = vperm.slane %v2149, 0
  %v2213 = vperm.slane %v2150, 0
  %v2214 = vperm.slane %v495, 0
  %v2215 = vperm.slane %v2151, 0
  %v2216 = vperm.slane %v2152, 0
  %v2217 = vperm.slane %v2153, 0
  %v2218 = vperm.slane %v2154, 0
  %v2219 = vperm.slane %v2155, 0
  %v2220 = vperm.slane %v2156, 0
  %v2221 = vperm.slane %v2157, 0
  %v2286 = vmul.f32 %v2158, %v1375
  %v2287 = vmul.f32 %v2159, %v1376
  %v2288 = vmul.f32 %v2160, %v1377
  %v2289 = vmul.f32 %v2161, %v1378
  %v2290 = vmul.f32 %v2162, %v1379
  %v2291 = vmul.f32 %v2163, %v1380
  %v2292 = vmul.f32 %v2164, %v1381
  %v2293 = vmul.f32 %v2165, %v1382
  %v2294 = vmul.f32 %v2166, %v1383
  %v2295 = vmul.f32 %v2167, %v1384
  %v2296 = vmul.f32 %v2168, %v1385
  %v2297 = vmul.f32 %v2169, %v1386
  %v2298 = vmul.f32 %v2170, %v1387
  %v2299 = vmul.f32 %v2171, %v1388
  %v2300 = vmul.f32 %v2172, %v1389
  %v2301 = vmul.f32 %v2173, %v1390
  %v2302 = vmul.f32 %v2174, %v1391
  %v2303 = vmul.f32 %v2175, %v1392
  %v2304 = vmul.f32 %v2176, %v1393
  %v2305 = vmul.f32 %v2177, %v1394
  %v2306 = vmul.f32 %v2178, %v1395
  %v2307 = vmul.f32 %v2179, %v1396
  %v2308 = vmul.f32 %v2180, %v1397
  %v2309 = vmul.f32 %v2181, %v1398
  %v2310 = vmul.f32 %v2182, %v1399
  %v2311 = vmul.f32 %v2183, %v1400
  %v2312 = vmul.f32 %v2184, %v1401
  %v2313 = vmul.f32 %v2185, %v1402
  %v2314 = vmul.f32 %v2186, %v1403
  %v2315 = vmul.f32 %v2187, %v1404
  %v2316 = vmul.f32 %v2188, %v1405
  %v2317 = vmul.f32 %v2189, %v1406
  %v2318 = vmul.f32 %v2190, %v1407
  %v2319 = vmul.f32 %v2191, %v1408
  %v2320 = vmul.f32 %v2192, %v1409
  %v2321 = vmul.f32 %v2193, %v1410
  %v2322 = vmul.f32 %v2194, %v1411
  %v2323 = vmul.f32 %v2195, %v1412
  %v2324 = vmul.f32 %v2196, %v1413
  %v2325 = vmul.f32 %v2197, %v1414
  %v2326 = vmul.f32 %v2198, %v1415
  %v2327 = vmul.f32 %v2199, %v1416
  %v2328 = vmul.f32 %v2200, %v1417
  %v2329 = vmul.f32 %v2201, %v1418
  %v2330 = vmul.f32 %v2202, %v1419
  %v2331 = vmul.f32 %v2203, %v1420
  %v2332 = vmul.f32 %v2204, %v1421
  %v2333 = vmul.f32 %v2205, %v1422
  %v2334 = vmul.f32 %v2206, %v1423
  %v2335 = vmul.f32 %v2207, %v1424
  %v2336 = vmul.f32 %v2208, %v1425
  %v2337 = vmul.f32 %v2209, %v1426
  %v2338 = vmul.f32 %v2210, %v1427
  %v2339 = vmul.f32 %v2211, %v1428
  %v2340 = vmul.f32 %v2212, %v1429
  %v2341 = vmul.f32 %v2213, %v1430
  %v2342 = vmul.f32 %v2214, %v1431
  %v2343 = vmul.f32 %v2215, %v1432
  %v2344 = vmul.f32 %v2216, %v1433
  %v2345 = vmul.f32 %v2217, %v1434
  %v2346 = vmul.f32 %v2218, %v1435
  %v2347 = vmul.f32 %v2219, %v1436
  %v2348 = vmul.f32 %v2220, %v1437
  %v2349 = vmul.f32 %v2221, %v1438
  %v2350 = vpack.c.bf16 %v2287, %v2286
  %v2351 = vpack.c.bf16 %v2289, %v2288
  %v2352 = vpack.c.bf16 %v2291, %v2290
  %v2353 = vpack.c.bf16 %v2293, %v2292
  %v2354 = vpack.c.bf16 %v2295, %v2294
  %v2355 = vpack.c.bf16 %v2297, %v2296
  %v2356 = vpack.c.bf16 %v2299, %v2298
  %v2357 = vpack.c.bf16 %v2301, %v2300
  %v2358 = vpack.c.bf16 %v2303, %v2302
  %v2359 = vpack.c.bf16 %v2305, %v2304
  %v2360 = vpack.c.bf16 %v2307, %v2306
  %v2361 = vpack.c.bf16 %v2309, %v2308
  %v2362 = vpack.c.bf16 %v2311, %v2310
  %v2363 = vpack.c.bf16 %v2313, %v2312
  %v2364 = vpack.c.bf16 %v2315, %v2314
  %v2365 = vpack.c.bf16 %v2317, %v2316
  %v2366 = vpack.c.bf16 %v2319, %v2318
  %v2367 = vpack.c.bf16 %v2321, %v2320
  %v2368 = vpack.c.bf16 %v2323, %v2322
  %v2369 = vpack.c.bf16 %v2325, %v2324
  %v2370 = vpack.c.bf16 %v2327, %v2326
  %v2371 = vpack.c.bf16 %v2329, %v2328
  %v2372 = vpack.c.bf16 %v2331, %v2330
  %v2373 = vpack.c.bf16 %v2333, %v2332
  %v2374 = vpack.c.bf16 %v2335, %v2334
  %v2375 = vpack.c.bf16 %v2337, %v2336
  %v2376 = vpack.c.bf16 %v2339, %v2338
  %v2377 = vpack.c.bf16 %v2341, %v2340
  %v2378 = vpack.c.bf16 %v2343, %v2342
  %v2379 = vpack.c.bf16 %v2345, %v2344
  %v2380 = vpack.c.bf16 %v2347, %v2346
  %v2381 = vpack.c.bf16 %v2349, %v2348
  %v2382 = vld [vmem:[%s21] sm:$0xf]
  %v2383 = vld [vmem:[%s21 + $0x4] sm:$0xf]
  %v2384 = vld [vmem:[%s21 + $0x8] sm:$0xf]
  %v2385 = vld [vmem:[%s21 + $0xc] sm:$0xf]
  %v2390 = vunpack.c.l.b16 %v2382
  %v2391 = vunpack.c.l.b16 %v2383
  %v2392 = vunpack.c.l.b16 %v2384
  %v2393 = vunpack.c.l.b16 %v2385
  %v2394 = vpack.c.b16 %v2391, %v2390
  %v2395 = vpack.c.b16 %v2393, %v2392
  %vm2398 = vcmask 261120
  %v2400 = vsel %vm2398, %v2350, 0
  %v2403 = vsel %vm2398, %v2351, 0
  %v2406 = vsel %vm2398, %v2352, 0
  %v2409 = vsel %vm2398, %v2353, 0
  %v2412 = vsel %vm2398, %v2354, 0
  %v2415 = vsel %vm2398, %v2355, 0
  %v2418 = vsel %vm2398, %v2356, 0
  %v2421 = vsel %vm2398, %v2357, 0
  %v2424 = vsel %vm2398, %v2358, 0
  %v2427 = vsel %vm2398, %v2359, 0
  %v2430 = vsel %vm2398, %v2360, 0
  %v2433 = vsel %vm2398, %v2361, 0
  %v2436 = vsel %vm2398, %v2362, 0
  %v2439 = vsel %vm2398, %v2363, 0
  %v2442 = vsel %vm2398, %v2364, 0
  %v2445 = vsel %vm2398, %v2365, 0
  %v2448 = vsel %vm2398, %v2366, 0
  %v2451 = vsel %vm2398, %v2367, 0
  %v2454 = vsel %vm2398, %v2368, 0
  %v2457 = vsel %vm2398, %v2369, 0
  %v2460 = vsel %vm2398, %v2370, 0
  %v2463 = vsel %vm2398, %v2371, 0
  %v2466 = vsel %vm2398, %v2372, 0
  %v2469 = vsel %vm2398, %v2373, 0
  %v2472 = vsel %vm2398, %v2374, 0
  %v2475 = vsel %vm2398, %v2375, 0
  %v2478 = vsel %vm2398, %v2376, 0
  %v2481 = vsel %vm2398, %v2377, 0
  %v2484 = vsel %vm2398, %v2378, 0
  %v2487 = vsel %vm2398, %v2379, 0
  %v2490 = vsel %vm2398, %v2380, 0
  %v2493 = vsel %vm2398, %v2381, 0
  %2495 = vmatpush.bf16.msra.mxu0 0
  %2496 = vmatpush.bf16.msra.mxu0 0
  %2497 = vmatpush.bf16.msra.mxu0 0
  %2498 = vmatpush.bf16.msra.mxu0 0
  %2499 = vmatpush.bf16.msra.mxu0 0
  %2500 = vmatpush.bf16.msra.mxu0 0
  %2501 = vmatpush.bf16.msra.mxu0 %v2395
  %2502 = vmatpush.bf16.msra.mxu0 %v2394
  %2503 = vmatmul.bf16.gmra.mxu0 %v2400
  %v2504 = vpop.f32.mrf.mxu0
  %v2505 = vadd.f32 0.0, %v2504
  %v2506 = vpop.f32.mrf.mxu0
  %v2507 = vadd.f32 0.0, %v2506
  %2508 = vmatmul.bf16.gmra.mxu0 %v2403
  %v2509 = vpop.f32.mrf.mxu0
  %v2510 = vadd.f32 0.0, %v2509
  %v2511 = vpop.f32.mrf.mxu0
  %v2512 = vadd.f32 0.0, %v2511
  %2513 = vmatmul.bf16.gmra.mxu0 %v2406
  %v2514 = vpop.f32.mrf.mxu0
  %v2515 = vadd.f32 0.0, %v2514
  %v2516 = vpop.f32.mrf.mxu0
  %v2517 = vadd.f32 0.0, %v2516
  %2518 = vmatmul.bf16.gmra.mxu0 %v2409
  %v2519 = vpop.f32.mrf.mxu0
  %v2520 = vadd.f32 0.0, %v2519
  %v2521 = vpop.f32.mrf.mxu0
  %v2522 = vadd.f32 0.0, %v2521
  %2523 = vmatmul.bf16.gmra.mxu0 %v2412
  %v2524 = vpop.f32.mrf.mxu0
  %v2525 = vadd.f32 0.0, %v2524
  %v2526 = vpop.f32.mrf.mxu0
  %v2527 = vadd.f32 0.0, %v2526
  %2528 = vmatmul.bf16.gmra.mxu0 %v2415
  %v2529 = vpop.f32.mrf.mxu0
  %v2530 = vadd.f32 0.0, %v2529
  %v2531 = vpop.f32.mrf.mxu0
  %v2532 = vadd.f32 0.0, %v2531
  %2533 = vmatmul.bf16.gmra.mxu0 %v2418
  %v2534 = vpop.f32.mrf.mxu0
  %v2535 = vadd.f32 0.0, %v2534
  %v2536 = vpop.f32.mrf.mxu0
  %v2537 = vadd.f32 0.0, %v2536
  %2538 = vmatmul.bf16.gmra.mxu0 %v2421
  %v2539 = vpop.f32.mrf.mxu0
  %v2540 = vadd.f32 0.0, %v2539
  %v2541 = vpop.f32.mrf.mxu0
  %v2542 = vadd.f32 0.0, %v2541
  %2543 = vmatmul.bf16.gmra.mxu0 %v2424
  %v2544 = vpop.f32.mrf.mxu0
  %v2545 = vadd.f32 0.0, %v2544
  %v2546 = vpop.f32.mrf.mxu0
  %v2547 = vadd.f32 0.0, %v2546
  %2548 = vmatmul.bf16.gmra.mxu0 %v2427
  %v2549 = vpop.f32.mrf.mxu0
  %v2550 = vadd.f32 0.0, %v2549
  %v2551 = vpop.f32.mrf.mxu0
  %v2552 = vadd.f32 0.0, %v2551
  %2553 = vmatmul.bf16.gmra.mxu0 %v2430
  %v2554 = vpop.f32.mrf.mxu0
  %v2555 = vadd.f32 0.0, %v2554
  %v2556 = vpop.f32.mrf.mxu0
  %v2557 = vadd.f32 0.0, %v2556
  %2558 = vmatmul.bf16.gmra.mxu0 %v2433
  %v2559 = vpop.f32.mrf.mxu0
  %v2560 = vadd.f32 0.0, %v2559
  %v2561 = vpop.f32.mrf.mxu0
  %v2562 = vadd.f32 0.0, %v2561
  %2563 = vmatmul.bf16.gmra.mxu0 %v2436
  %v2564 = vpop.f32.mrf.mxu0
  %v2565 = vadd.f32 0.0, %v2564
  %v2566 = vpop.f32.mrf.mxu0
  %v2567 = vadd.f32 0.0, %v2566
  %2568 = vmatmul.bf16.gmra.mxu0 %v2439
  %v2569 = vpop.f32.mrf.mxu0
  %v2570 = vadd.f32 0.0, %v2569
  %v2571 = vpop.f32.mrf.mxu0
  %v2572 = vadd.f32 0.0, %v2571
  %2573 = vmatmul.bf16.gmra.mxu0 %v2442
  %v2574 = vpop.f32.mrf.mxu0
  %v2575 = vadd.f32 0.0, %v2574
  %v2576 = vpop.f32.mrf.mxu0
  %v2577 = vadd.f32 0.0, %v2576
  %2578 = vmatmul.bf16.gmra.mxu0 %v2445
  %v2579 = vpop.f32.mrf.mxu0
  %v2580 = vadd.f32 0.0, %v2579
  %v2581 = vpop.f32.mrf.mxu0
  %v2582 = vadd.f32 0.0, %v2581
  %2583 = vmatmul.bf16.gmra.mxu0 %v2448
  %v2584 = vpop.f32.mrf.mxu0
  %v2585 = vadd.f32 0.0, %v2584
  %v2586 = vpop.f32.mrf.mxu0
  %v2587 = vadd.f32 0.0, %v2586
  %2588 = vmatmul.bf16.gmra.mxu0 %v2451
  %v2589 = vpop.f32.mrf.mxu0
  %v2590 = vadd.f32 0.0, %v2589
  %v2591 = vpop.f32.mrf.mxu0
  %v2592 = vadd.f32 0.0, %v2591
  %2593 = vmatmul.bf16.gmra.mxu0 %v2454
  %v2594 = vpop.f32.mrf.mxu0
  %v2595 = vadd.f32 0.0, %v2594
  %v2596 = vpop.f32.mrf.mxu0
  %v2597 = vadd.f32 0.0, %v2596
  %2598 = vmatmul.bf16.gmra.mxu0 %v2457
  %v2599 = vpop.f32.mrf.mxu0
  %v2600 = vadd.f32 0.0, %v2599
  %v2601 = vpop.f32.mrf.mxu0
  %v2602 = vadd.f32 0.0, %v2601
  %2603 = vmatmul.bf16.gmra.mxu0 %v2460
  %v2604 = vpop.f32.mrf.mxu0
  %v2605 = vadd.f32 0.0, %v2604
  %v2606 = vpop.f32.mrf.mxu0
  %v2607 = vadd.f32 0.0, %v2606
  %2608 = vmatmul.bf16.gmra.mxu0 %v2463
  %v2609 = vpop.f32.mrf.mxu0
  %v2610 = vadd.f32 0.0, %v2609
  %v2611 = vpop.f32.mrf.mxu0
  %v2612 = vadd.f32 0.0, %v2611
  %2613 = vmatmul.bf16.gmra.mxu0 %v2466
  %v2614 = vpop.f32.mrf.mxu0
  %v2615 = vadd.f32 0.0, %v2614
  %v2616 = vpop.f32.mrf.mxu0
  %v2617 = vadd.f32 0.0, %v2616
  %2618 = vmatmul.bf16.gmra.mxu0 %v2469
  %v2619 = vpop.f32.mrf.mxu0
  %v2620 = vadd.f32 0.0, %v2619
  %v2621 = vpop.f32.mrf.mxu0
  %v2622 = vadd.f32 0.0, %v2621
  %2623 = vmatmul.bf16.gmra.mxu0 %v2472
  %v2624 = vpop.f32.mrf.mxu0
  %v2625 = vadd.f32 0.0, %v2624
  %v2626 = vpop.f32.mrf.mxu0
  %v2627 = vadd.f32 0.0, %v2626
  %2628 = vmatmul.bf16.gmra.mxu0 %v2475
  %v2629 = vpop.f32.mrf.mxu0
  %v2630 = vadd.f32 0.0, %v2629
  %v2631 = vpop.f32.mrf.mxu0
  %v2632 = vadd.f32 0.0, %v2631
  %2633 = vmatmul.bf16.gmra.mxu0 %v2478
  %v2634 = vpop.f32.mrf.mxu0
  %v2635 = vadd.f32 0.0, %v2634
  %v2636 = vpop.f32.mrf.mxu0
  %v2637 = vadd.f32 0.0, %v2636
  %2638 = vmatmul.bf16.gmra.mxu0 %v2481
  %v2639 = vpop.f32.mrf.mxu0
  %v2640 = vadd.f32 0.0, %v2639
  %v2641 = vpop.f32.mrf.mxu0
  %v2642 = vadd.f32 0.0, %v2641
  %2643 = vmatmul.bf16.gmra.mxu0 %v2484
  %v2644 = vpop.f32.mrf.mxu0
  %v2645 = vadd.f32 0.0, %v2644
  %v2646 = vpop.f32.mrf.mxu0
  %v2647 = vadd.f32 0.0, %v2646
  %2648 = vmatmul.bf16.gmra.mxu0 %v2487
  %v2649 = vpop.f32.mrf.mxu0
  %v2650 = vadd.f32 0.0, %v2649
  %v2651 = vpop.f32.mrf.mxu0
  %v2652 = vadd.f32 0.0, %v2651
  %2653 = vmatmul.bf16.gmra.mxu0 %v2490
  %v2654 = vpop.f32.mrf.mxu0
  %v2655 = vadd.f32 0.0, %v2654
  %v2656 = vpop.f32.mrf.mxu0
  %v2657 = vadd.f32 0.0, %v2656
  %2658 = vmatmul.bf16.gmra.mxu0 %v2493
  %v2659 = vpop.f32.mrf.mxu0
  %v2660 = vadd.f32 0.0, %v2659
  %v2661 = vpop.f32.mrf.mxu0
  %v2662 = vadd.f32 0.0, %v2661
  %2663 = vdwg.mxu0
  %vm2664 = vcmp.gt.f32.partialorder %v2505, 0.0
  %vm2665 = vcmp.gt.f32.partialorder %v2507, 0.0
  %vm2666 = vcmp.gt.f32.partialorder %v2510, 0.0
  %vm2667 = vcmp.gt.f32.partialorder %v2512, 0.0
  %vm2668 = vcmp.gt.f32.partialorder %v2515, 0.0
  %vm2669 = vcmp.gt.f32.partialorder %v2517, 0.0
  %vm2670 = vcmp.gt.f32.partialorder %v2520, 0.0
  %vm2671 = vcmp.gt.f32.partialorder %v2522, 0.0
  %vm2672 = vcmp.gt.f32.partialorder %v2525, 0.0
  %vm2673 = vcmp.gt.f32.partialorder %v2527, 0.0
  %vm2674 = vcmp.gt.f32.partialorder %v2530, 0.0
  %vm2675 = vcmp.gt.f32.partialorder %v2532, 0.0
  %vm2676 = vcmp.gt.f32.partialorder %v2535, 0.0
  %vm2677 = vcmp.gt.f32.partialorder %v2537, 0.0
  %vm2678 = vcmp.gt.f32.partialorder %v2540, 0.0
  %vm2679 = vcmp.gt.f32.partialorder %v2542, 0.0
  %vm2680 = vcmp.gt.f32.partialorder %v2545, 0.0
  %vm2681 = vcmp.gt.f32.partialorder %v2547, 0.0
  %vm2682 = vcmp.gt.f32.partialorder %v2550, 0.0
  %vm2683 = vcmp.gt.f32.partialorder %v2552, 0.0
  %vm2684 = vcmp.gt.f32.partialorder %v2555, 0.0
  %vm2685 = vcmp.gt.f32.partialorder %v2557, 0.0
  %vm2686 = vcmp.gt.f32.partialorder %v2560, 0.0
  %vm2687 = vcmp.gt.f32.partialorder %v2562, 0.0
  %vm2688 = vcmp.gt.f32.partialorder %v2565, 0.0
  %vm2689 = vcmp.gt.f32.partialorder %v2567, 0.0
  %vm2690 = vcmp.gt.f32.partialorder %v2570, 0.0
  %vm2691 = vcmp.gt.f32.partialorder %v2572, 0.0
  %vm2692 = vcmp.gt.f32.partialorder %v2575, 0.0
  %vm2693 = vcmp.gt.f32.partialorder %v2577, 0.0
  %vm2694 = vcmp.gt.f32.partialorder %v2580, 0.0
  %vm2695 = vcmp.gt.f32.partialorder %v2582, 0.0
  %vm2696 = vcmp.gt.f32.partialorder %v2585, 0.0
  %vm2697 = vcmp.gt.f32.partialorder %v2587, 0.0
  %vm2698 = vcmp.gt.f32.partialorder %v2590, 0.0
  %vm2699 = vcmp.gt.f32.partialorder %v2592, 0.0
  %vm2700 = vcmp.gt.f32.partialorder %v2595, 0.0
  %vm2701 = vcmp.gt.f32.partialorder %v2597, 0.0
  %vm2702 = vcmp.gt.f32.partialorder %v2600, 0.0
  %vm2703 = vcmp.gt.f32.partialorder %v2602, 0.0
  %vm2704 = vcmp.gt.f32.partialorder %v2605, 0.0
  %vm2705 = vcmp.gt.f32.partialorder %v2607, 0.0
  %vm2706 = vcmp.gt.f32.partialorder %v2610, 0.0
  %vm2707 = vcmp.gt.f32.partialorder %v2612, 0.0
  %vm2708 = vcmp.gt.f32.partialorder %v2615, 0.0
  %vm2709 = vcmp.gt.f32.partialorder %v2617, 0.0
  %vm2710 = vcmp.gt.f32.partialorder %v2620, 0.0
  %vm2711 = vcmp.gt.f32.partialorder %v2622, 0.0
  %vm2712 = vcmp.gt.f32.partialorder %v2625, 0.0
  %vm2713 = vcmp.gt.f32.partialorder %v2627, 0.0
  %vm2714 = vcmp.gt.f32.partialorder %v2630, 0.0
  %vm2715 = vcmp.gt.f32.partialorder %v2632, 0.0
  %vm2716 = vcmp.gt.f32.partialorder %v2635, 0.0
  %vm2717 = vcmp.gt.f32.partialorder %v2637, 0.0
  %vm2718 = vcmp.gt.f32.partialorder %v2640, 0.0
  %vm2719 = vcmp.gt.f32.partialorder %v2642, 0.0
  %vm2720 = vcmp.gt.f32.partialorder %v2645, 0.0
  %vm2721 = vcmp.gt.f32.partialorder %v2647, 0.0
  %vm2722 = vcmp.gt.f32.partialorder %v2650, 0.0
  %vm2723 = vcmp.gt.f32.partialorder %v2652, 0.0
  %vm2724 = vcmp.gt.f32.partialorder %v2655, 0.0
  %vm2725 = vcmp.gt.f32.partialorder %v2657, 0.0
  %vm2726 = vcmp.gt.f32.partialorder %v2660, 0.0
  %vm2727 = vcmp.gt.f32.partialorder %v2662, 0.0
  %v2728 = vmul.f32 %v2505, 0.2
  %v2729 = vmul.f32 %v2507, 0.2
  %v2730 = vmul.f32 %v2510, 0.2
  %v2731 = vmul.f32 %v2512, 0.2
  %v2732 = vmul.f32 %v2515, 0.2
  %v2733 = vmul.f32 %v2517, 0.2
  %v2734 = vmul.f32 %v2520, 0.2
  %v2735 = vmul.f32 %v2522, 0.2
  %v2736 = vmul.f32 %v2525, 0.2
  %v2737 = vmul.f32 %v2527, 0.2
  %v2738 = vmul.f32 %v2530, 0.2
  %v2739 = vmul.f32 %v2532, 0.2
  %v2740 = vmul.f32 %v2535, 0.2
  %v2741 = vmul.f32 %v2537, 0.2
  %v2742 = vmul.f32 %v2540, 0.2
  %v2743 = vmul.f32 %v2542, 0.2
  %v2744 = vmul.f32 %v2545, 0.2
  %v2745 = vmul.f32 %v2547, 0.2
  %v2746 = vmul.f32 %v2550, 0.2
  %v2747 = vmul.f32 %v2552, 0.2
  %v2748 = vmul.f32 %v2555, 0.2
  %v2749 = vmul.f32 %v2557, 0.2
  %v2750 = vmul.f32 %v2560, 0.2
  %v2751 = vmul.f32 %v2562, 0.2
  %v2752 = vmul.f32 %v2565, 0.2
  %v2753 = vmul.f32 %v2567, 0.2
  %v2754 = vmul.f32 %v2570, 0.2
  %v2755 = vmul.f32 %v2572, 0.2
  %v2756 = vmul.f32 %v2575, 0.2
  %v2757 = vmul.f32 %v2577, 0.2
  %v2758 = vmul.f32 %v2580, 0.2
  %v2759 = vmul.f32 %v2582, 0.2
  %v2760 = vmul.f32 %v2585, 0.2
  %v2761 = vmul.f32 %v2587, 0.2
  %v2762 = vmul.f32 %v2590, 0.2
  %v2763 = vmul.f32 %v2592, 0.2
  %v2764 = vmul.f32 %v2595, 0.2
  %v2765 = vmul.f32 %v2597, 0.2
  %v2766 = vmul.f32 %v2600, 0.2
  %v2767 = vmul.f32 %v2602, 0.2
  %v2768 = vmul.f32 %v2605, 0.2
  %v2769 = vmul.f32 %v2607, 0.2
  %v2770 = vmul.f32 %v2610, 0.2
  %v2771 = vmul.f32 %v2612, 0.2
  %v2772 = vmul.f32 %v2615, 0.2
  %v2773 = vmul.f32 %v2617, 0.2
  %v2774 = vmul.f32 %v2620, 0.2
  %v2775 = vmul.f32 %v2622, 0.2
  %v2776 = vmul.f32 %v2625, 0.2
  %v2777 = vmul.f32 %v2627, 0.2
  %v2778 = vmul.f32 %v2630, 0.2
  %v2779 = vmul.f32 %v2632, 0.2
  %v2780 = vmul.f32 %v2635, 0.2
  %v2781 = vmul.f32 %v2637, 0.2
  %v2782 = vmul.f32 %v2640, 0.2
  %v2783 = vmul.f32 %v2642, 0.2
  %v2784 = vmul.f32 %v2645, 0.2
  %v2785 = vmul.f32 %v2647, 0.2
  %v2786 = vmul.f32 %v2650, 0.2
  %v2787 = vmul.f32 %v2652, 0.2
  %v2788 = vmul.f32 %v2655, 0.2
  %v2789 = vmul.f32 %v2657, 0.2
  %v2790 = vmul.f32 %v2660, 0.2
  %v2791 = vmul.f32 %v2662, 0.2
  %v2792 = vsel %vm2664, %v2505, %v2728
  %v2793 = vsel %vm2665, %v2507, %v2729
  %v2794 = vsel %vm2666, %v2510, %v2730
  %v2795 = vsel %vm2667, %v2512, %v2731
  %v2796 = vsel %vm2668, %v2515, %v2732
  %v2797 = vsel %vm2669, %v2517, %v2733
  %v2798 = vsel %vm2670, %v2520, %v2734
  %v2799 = vsel %vm2671, %v2522, %v2735
  %v2800 = vsel %vm2672, %v2525, %v2736
  %v2801 = vsel %vm2673, %v2527, %v2737
  %v2802 = vsel %vm2674, %v2530, %v2738
  %v2803 = vsel %vm2675, %v2532, %v2739
  %v2804 = vsel %vm2676, %v2535, %v2740
  %v2805 = vsel %vm2677, %v2537, %v2741
  %v2806 = vsel %vm2678, %v2540, %v2742
  %v2807 = vsel %vm2679, %v2542, %v2743
  %v2808 = vsel %vm2680, %v2545, %v2744
  %v2809 = vsel %vm2681, %v2547, %v2745
  %v2810 = vsel %vm2682, %v2550, %v2746
  %v2811 = vsel %vm2683, %v2552, %v2747
  %v2812 = vsel %vm2684, %v2555, %v2748
  %v2813 = vsel %vm2685, %v2557, %v2749
  %v2814 = vsel %vm2686, %v2560, %v2750
  %v2815 = vsel %vm2687, %v2562, %v2751
  %v2816 = vsel %vm2688, %v2565, %v2752
  %v2817 = vsel %vm2689, %v2567, %v2753
  %v2818 = vsel %vm2690, %v2570, %v2754
  %v2819 = vsel %vm2691, %v2572, %v2755
  %v2820 = vsel %vm2692, %v2575, %v2756
  %v2821 = vsel %vm2693, %v2577, %v2757
  %v2822 = vsel %vm2694, %v2580, %v2758
  %v2823 = vsel %vm2695, %v2582, %v2759
  %v2824 = vsel %vm2696, %v2585, %v2760
  %v2825 = vsel %vm2697, %v2587, %v2761
  %v2826 = vsel %vm2698, %v2590, %v2762
  %v2827 = vsel %vm2699, %v2592, %v2763
  %v2828 = vsel %vm2700, %v2595, %v2764
  %v2829 = vsel %vm2701, %v2597, %v2765
  %v2830 = vsel %vm2702, %v2600, %v2766
  %v2831 = vsel %vm2703, %v2602, %v2767
  %v2832 = vsel %vm2704, %v2605, %v2768
  %v2833 = vsel %vm2705, %v2607, %v2769
  %v2834 = vsel %vm2706, %v2610, %v2770
  %v2835 = vsel %vm2707, %v2612, %v2771
  %v2836 = vsel %vm2708, %v2615, %v2772
  %v2837 = vsel %vm2709, %v2617, %v2773
  %v2838 = vsel %vm2710, %v2620, %v2774
  %v2839 = vsel %vm2711, %v2622, %v2775
  %v2840 = vsel %vm2712, %v2625, %v2776
  %v2841 = vsel %vm2713, %v2627, %v2777
  %v2842 = vsel %vm2714, %v2630, %v2778
  %v2843 = vsel %vm2715, %v2632, %v2779
  %v2844 = vsel %vm2716, %v2635, %v2780
  %v2845 = vsel %vm2717, %v2637, %v2781
  %v2846 = vsel %vm2718, %v2640, %v2782
  %v2847 = vsel %vm2719, %v2642, %v2783
  %v2848 = vsel %vm2720, %v2645, %v2784
  %v2849 = vsel %vm2721, %v2647, %v2785
  %v2850 = vsel %vm2722, %v2650, %v2786
  %v2851 = vsel %vm2723, %v2652, %v2787
  %v2852 = vsel %vm2724, %v2655, %v2788
  %v2853 = vsel %vm2725, %v2657, %v2789
  %v2854 = vsel %vm2726, %v2660, %v2790
  %v2855 = vsel %vm2727, %v2662, %v2791
  %vm2856 = vcmask 31744
  %v2857 = vsel %vm2856, %v2792, -inf
  %v2858 = vrot.slane %v2857, 4
  %v2859 = vmax.f32 %v2857, %v2858
  %v2860 = vrot.slane %v2859, 2
  %v2861 = vmax.f32 %v2859, %v2860
  %v2862 = vrot.slane %v2861, 1
  %v2863 = vmax.f32 %v2861, %v2862
  %v2864 = vsel %vm2856, %v2793, -inf
  %v2865 = vrot.slane %v2864, 4
  %v2866 = vmax.f32 %v2864, %v2865
  %v2867 = vrot.slane %v2866, 2
  %v2868 = vmax.f32 %v2866, %v2867
  %v2869 = vrot.slane %v2868, 1
  %v2870 = vmax.f32 %v2868, %v2869
  %v2871 = vsel %vm2856, %v2794, -inf
  %v2872 = vrot.slane %v2871, 4
  %v2873 = vmax.f32 %v2871, %v2872
  %v2874 = vrot.slane %v2873, 2
  %v2875 = vmax.f32 %v2873, %v2874
  %v2876 = vrot.slane %v2875, 1
  %v2877 = vmax.f32 %v2875, %v2876
  %v2878 = vsel %vm2856, %v2795, -inf
  %v2879 = vrot.slane %v2878, 4
  %v2880 = vmax.f32 %v2878, %v2879
  %v2881 = vrot.slane %v2880, 2
  %v2882 = vmax.f32 %v2880, %v2881
  %v2883 = vrot.slane %v2882, 1
  %v2884 = vmax.f32 %v2882, %v2883
  %v2885 = vsel %vm2856, %v2796, -inf
  %v2886 = vrot.slane %v2885, 4
  %v2887 = vmax.f32 %v2885, %v2886
  %v2888 = vrot.slane %v2887, 2
  %v2889 = vmax.f32 %v2887, %v2888
  %v2890 = vrot.slane %v2889, 1
  %v2891 = vmax.f32 %v2889, %v2890
  %v2892 = vsel %vm2856, %v2797, -inf
  %v2893 = vrot.slane %v2892, 4
  %v2894 = vmax.f32 %v2892, %v2893
  %v2895 = vrot.slane %v2894, 2
  %v2896 = vmax.f32 %v2894, %v2895
  %v2897 = vrot.slane %v2896, 1
  %v2898 = vmax.f32 %v2896, %v2897
  %v2899 = vsel %vm2856, %v2798, -inf
  %v2900 = vrot.slane %v2899, 4
  %v2901 = vmax.f32 %v2899, %v2900
  %v2902 = vrot.slane %v2901, 2
  %v2903 = vmax.f32 %v2901, %v2902
  %v2904 = vrot.slane %v2903, 1
  %v2905 = vmax.f32 %v2903, %v2904
  %v2906 = vsel %vm2856, %v2799, -inf
  %v2907 = vrot.slane %v2906, 4
  %v2908 = vmax.f32 %v2906, %v2907
  %v2909 = vrot.slane %v2908, 2
  %v2910 = vmax.f32 %v2908, %v2909
  %v2911 = vrot.slane %v2910, 1
  %v2912 = vmax.f32 %v2910, %v2911
  %v2913 = vsel %vm2856, %v2800, -inf
  %v2914 = vrot.slane %v2913, 4
  %v2915 = vmax.f32 %v2913, %v2914
  %v2916 = vrot.slane %v2915, 2
  %v2917 = vmax.f32 %v2915, %v2916
  %v2918 = vrot.slane %v2917, 1
  %v2919 = vmax.f32 %v2917, %v2918
  %v2920 = vsel %vm2856, %v2801, -inf
  %v2921 = vrot.slane %v2920, 4
  %v2922 = vmax.f32 %v2920, %v2921
  %v2923 = vrot.slane %v2922, 2
  %v2924 = vmax.f32 %v2922, %v2923
  %v2925 = vrot.slane %v2924, 1
  %v2926 = vmax.f32 %v2924, %v2925
  %v2927 = vsel %vm2856, %v2802, -inf
  %v2928 = vrot.slane %v2927, 4
  %v2929 = vmax.f32 %v2927, %v2928
  %v2930 = vrot.slane %v2929, 2
  %v2931 = vmax.f32 %v2929, %v2930
  %v2932 = vrot.slane %v2931, 1
  %v2933 = vmax.f32 %v2931, %v2932
  %v2934 = vsel %vm2856, %v2803, -inf
  %v2935 = vrot.slane %v2934, 4
  %v2936 = vmax.f32 %v2934, %v2935
  %v2937 = vrot.slane %v2936, 2
  %v2938 = vmax.f32 %v2936, %v2937
  %v2939 = vrot.slane %v2938, 1
  %v2940 = vmax.f32 %v2938, %v2939
  %v2941 = vsel %vm2856, %v2804, -inf
  %v2942 = vrot.slane %v2941, 4
  %v2943 = vmax.f32 %v2941, %v2942
  %v2944 = vrot.slane %v2943, 2
  %v2945 = vmax.f32 %v2943, %v2944
  %v2946 = vrot.slane %v2945, 1
  %v2947 = vmax.f32 %v2945, %v2946
  %v2948 = vsel %vm2856, %v2805, -inf
  %v2949 = vrot.slane %v2948, 4
  %v2950 = vmax.f32 %v2948, %v2949
  %v2951 = vrot.slane %v2950, 2
  %v2952 = vmax.f32 %v2950, %v2951
  %v2953 = vrot.slane %v2952, 1
  %v2954 = vmax.f32 %v2952, %v2953
  %v2955 = vsel %vm2856, %v2806, -inf
  %v2956 = vrot.slane %v2955, 4
  %v2957 = vmax.f32 %v2955, %v2956
  %v2958 = vrot.slane %v2957, 2
  %v2959 = vmax.f32 %v2957, %v2958
  %v2960 = vrot.slane %v2959, 1
  %v2961 = vmax.f32 %v2959, %v2960
  %v2962 = vsel %vm2856, %v2807, -inf
  %v2963 = vrot.slane %v2962, 4
  %v2964 = vmax.f32 %v2962, %v2963
  %v2965 = vrot.slane %v2964, 2
  %v2966 = vmax.f32 %v2964, %v2965
  %v2967 = vrot.slane %v2966, 1
  %v2968 = vmax.f32 %v2966, %v2967
  %v2969 = vsel %vm2856, %v2808, -inf
  %v2970 = vrot.slane %v2969, 4
  %v2971 = vmax.f32 %v2969, %v2970
  %v2972 = vrot.slane %v2971, 2
  %v2973 = vmax.f32 %v2971, %v2972
  %v2974 = vrot.slane %v2973, 1
  %v2975 = vmax.f32 %v2973, %v2974
  %v2976 = vsel %vm2856, %v2809, -inf
  %v2977 = vrot.slane %v2976, 4
  %v2978 = vmax.f32 %v2976, %v2977
  %v2979 = vrot.slane %v2978, 2
  %v2980 = vmax.f32 %v2978, %v2979
  %v2981 = vrot.slane %v2980, 1
  %v2982 = vmax.f32 %v2980, %v2981
  %v2983 = vsel %vm2856, %v2810, -inf
  %v2984 = vrot.slane %v2983, 4
  %v2985 = vmax.f32 %v2983, %v2984
  %v2986 = vrot.slane %v2985, 2
  %v2987 = vmax.f32 %v2985, %v2986
  %v2988 = vrot.slane %v2987, 1
  %v2989 = vmax.f32 %v2987, %v2988
  %v2990 = vsel %vm2856, %v2811, -inf
  %v2991 = vrot.slane %v2990, 4
  %v2992 = vmax.f32 %v2990, %v2991
  %v2993 = vrot.slane %v2992, 2
  %v2994 = vmax.f32 %v2992, %v2993
  %v2995 = vrot.slane %v2994, 1
  %v2996 = vmax.f32 %v2994, %v2995
  %v2997 = vsel %vm2856, %v2812, -inf
  %v2998 = vrot.slane %v2997, 4
  %v2999 = vmax.f32 %v2997, %v2998
  %v3000 = vrot.slane %v2999, 2
  %v3001 = vmax.f32 %v2999, %v3000
  %v3002 = vrot.slane %v3001, 1
  %v3003 = vmax.f32 %v3001, %v3002
  %v3004 = vsel %vm2856, %v2813, -inf
  %v3005 = vrot.slane %v3004, 4
  %v3006 = vmax.f32 %v3004, %v3005
  %v3007 = vrot.slane %v3006, 2
  %v3008 = vmax.f32 %v3006, %v3007
  %v3009 = vrot.slane %v3008, 1
  %v3010 = vmax.f32 %v3008, %v3009
  %v3011 = vsel %vm2856, %v2814, -inf
  %v3012 = vrot.slane %v3011, 4
  %v3013 = vmax.f32 %v3011, %v3012
  %v3014 = vrot.slane %v3013, 2
  %v3015 = vmax.f32 %v3013, %v3014
  %v3016 = vrot.slane %v3015, 1
  %v3017 = vmax.f32 %v3015, %v3016
  %v3018 = vsel %vm2856, %v2815, -inf
  %v3019 = vrot.slane %v3018, 4
  %v3020 = vmax.f32 %v3018, %v3019
  %v3021 = vrot.slane %v3020, 2
  %v3022 = vmax.f32 %v3020, %v3021
  %v3023 = vrot.slane %v3022, 1
  %v3024 = vmax.f32 %v3022, %v3023
  %v3025 = vsel %vm2856, %v2816, -inf
  %v3026 = vrot.slane %v3025, 4
  %v3027 = vmax.f32 %v3025, %v3026
  %v3028 = vrot.slane %v3027, 2
  %v3029 = vmax.f32 %v3027, %v3028
  %v3030 = vrot.slane %v3029, 1
  %v3031 = vmax.f32 %v3029, %v3030
  %v3032 = vsel %vm2856, %v2817, -inf
  %v3033 = vrot.slane %v3032, 4
  %v3034 = vmax.f32 %v3032, %v3033
  %v3035 = vrot.slane %v3034, 2
  %v3036 = vmax.f32 %v3034, %v3035
  %v3037 = vrot.slane %v3036, 1
  %v3038 = vmax.f32 %v3036, %v3037
  %v3039 = vsel %vm2856, %v2818, -inf
  %v3040 = vrot.slane %v3039, 4
  %v3041 = vmax.f32 %v3039, %v3040
  %v3042 = vrot.slane %v3041, 2
  %v3043 = vmax.f32 %v3041, %v3042
  %v3044 = vrot.slane %v3043, 1
  %v3045 = vmax.f32 %v3043, %v3044
  %v3046 = vsel %vm2856, %v2819, -inf
  %v3047 = vrot.slane %v3046, 4
  %v3048 = vmax.f32 %v3046, %v3047
  %v3049 = vrot.slane %v3048, 2
  %v3050 = vmax.f32 %v3048, %v3049
  %v3051 = vrot.slane %v3050, 1
  %v3052 = vmax.f32 %v3050, %v3051
  %v3053 = vsel %vm2856, %v2820, -inf
  %v3054 = vrot.slane %v3053, 4
  %v3055 = vmax.f32 %v3053, %v3054
  %v3056 = vrot.slane %v3055, 2
  %v3057 = vmax.f32 %v3055, %v3056
  %v3058 = vrot.slane %v3057, 1
  %v3059 = vmax.f32 %v3057, %v3058
  %v3060 = vsel %vm2856, %v2821, -inf
  %v3061 = vrot.slane %v3060, 4
  %v3062 = vmax.f32 %v3060, %v3061
  %v3063 = vrot.slane %v3062, 2
  %v3064 = vmax.f32 %v3062, %v3063
  %v3065 = vrot.slane %v3064, 1
  %v3066 = vmax.f32 %v3064, %v3065
  %v3067 = vsel %vm2856, %v2822, -inf
  %v3068 = vrot.slane %v3067, 4
  %v3069 = vmax.f32 %v3067, %v3068
  %v3070 = vrot.slane %v3069, 2
  %v3071 = vmax.f32 %v3069, %v3070
  %v3072 = vrot.slane %v3071, 1
  %v3073 = vmax.f32 %v3071, %v3072
  %v3074 = vsel %vm2856, %v2823, -inf
  %v3075 = vrot.slane %v3074, 4
  %v3076 = vmax.f32 %v3074, %v3075
  %v3077 = vrot.slane %v3076, 2
  %v3078 = vmax.f32 %v3076, %v3077
  %v3079 = vrot.slane %v3078, 1
  %v3080 = vmax.f32 %v3078, %v3079
  %v3081 = vsel %vm2856, %v2824, -inf
  %v3082 = vrot.slane %v3081, 4
  %v3083 = vmax.f32 %v3081, %v3082
  %v3084 = vrot.slane %v3083, 2
  %v3085 = vmax.f32 %v3083, %v3084
  %v3086 = vrot.slane %v3085, 1
  %v3087 = vmax.f32 %v3085, %v3086
  %v3088 = vsel %vm2856, %v2825, -inf
  %v3089 = vrot.slane %v3088, 4
  %v3090 = vmax.f32 %v3088, %v3089
  %v3091 = vrot.slane %v3090, 2
  %v3092 = vmax.f32 %v3090, %v3091
  %v3093 = vrot.slane %v3092, 1
  %v3094 = vmax.f32 %v3092, %v3093
  %v3095 = vsel %vm2856, %v2826, -inf
  %v3096 = vrot.slane %v3095, 4
  %v3097 = vmax.f32 %v3095, %v3096
  %v3098 = vrot.slane %v3097, 2
  %v3099 = vmax.f32 %v3097, %v3098
  %v3100 = vrot.slane %v3099, 1
  %v3101 = vmax.f32 %v3099, %v3100
  %v3102 = vsel %vm2856, %v2827, -inf
  %v3103 = vrot.slane %v3102, 4
  %v3104 = vmax.f32 %v3102, %v3103
  %v3105 = vrot.slane %v3104, 2
  %v3106 = vmax.f32 %v3104, %v3105
  %v3107 = vrot.slane %v3106, 1
  %v3108 = vmax.f32 %v3106, %v3107
  %v3109 = vsel %vm2856, %v2828, -inf
  %v3110 = vrot.slane %v3109, 4
  %v3111 = vmax.f32 %v3109, %v3110
  %v3112 = vrot.slane %v3111, 2
  %v3113 = vmax.f32 %v3111, %v3112
  %v3114 = vrot.slane %v3113, 1
  %v3115 = vmax.f32 %v3113, %v3114
  %v3116 = vsel %vm2856, %v2829, -inf
  %v3117 = vrot.slane %v3116, 4
  %v3118 = vmax.f32 %v3116, %v3117
  %v3119 = vrot.slane %v3118, 2
  %v3120 = vmax.f32 %v3118, %v3119
  %v3121 = vrot.slane %v3120, 1
  %v3122 = vmax.f32 %v3120, %v3121
  %v3123 = vsel %vm2856, %v2830, -inf
  %v3124 = vrot.slane %v3123, 4
  %v3125 = vmax.f32 %v3123, %v3124
  %v3126 = vrot.slane %v3125, 2
  %v3127 = vmax.f32 %v3125, %v3126
  %v3128 = vrot.slane %v3127, 1
  %v3129 = vmax.f32 %v3127, %v3128
  %v3130 = vsel %vm2856, %v2831, -inf
  %v3131 = vrot.slane %v3130, 4
  %v3132 = vmax.f32 %v3130, %v3131
  %v3133 = vrot.slane %v3132, 2
  %v3134 = vmax.f32 %v3132, %v3133
  %v3135 = vrot.slane %v3134, 1
  %v3136 = vmax.f32 %v3134, %v3135
  %v3137 = vsel %vm2856, %v2832, -inf
  %v3138 = vrot.slane %v3137, 4
  %v3139 = vmax.f32 %v3137, %v3138
  %v3140 = vrot.slane %v3139, 2
  %v3141 = vmax.f32 %v3139, %v3140
  %v3142 = vrot.slane %v3141, 1
  %v3143 = vmax.f32 %v3141, %v3142
  %v3144 = vsel %vm2856, %v2833, -inf
  %v3145 = vrot.slane %v3144, 4
  %v3146 = vmax.f32 %v3144, %v3145
  %v3147 = vrot.slane %v3146, 2
  %v3148 = vmax.f32 %v3146, %v3147
  %v3149 = vrot.slane %v3148, 1
  %v3150 = vmax.f32 %v3148, %v3149
  %v3151 = vsel %vm2856, %v2834, -inf
  %v3152 = vrot.slane %v3151, 4
  %v3153 = vmax.f32 %v3151, %v3152
  %v3154 = vrot.slane %v3153, 2
  %v3155 = vmax.f32 %v3153, %v3154
  %v3156 = vrot.slane %v3155, 1
  %v3157 = vmax.f32 %v3155, %v3156
  %v3158 = vsel %vm2856, %v2835, -inf
  %v3159 = vrot.slane %v3158, 4
  %v3160 = vmax.f32 %v3158, %v3159
  %v3161 = vrot.slane %v3160, 2
  %v3162 = vmax.f32 %v3160, %v3161
  %v3163 = vrot.slane %v3162, 1
  %v3164 = vmax.f32 %v3162, %v3163
  %v3165 = vsel %vm2856, %v2836, -inf
  %v3166 = vrot.slane %v3165, 4
  %v3167 = vmax.f32 %v3165, %v3166
  %v3168 = vrot.slane %v3167, 2
  %v3169 = vmax.f32 %v3167, %v3168
  %v3170 = vrot.slane %v3169, 1
  %v3171 = vmax.f32 %v3169, %v3170
  %v3172 = vsel %vm2856, %v2837, -inf
  %v3173 = vrot.slane %v3172, 4
  %v3174 = vmax.f32 %v3172, %v3173
  %v3175 = vrot.slane %v3174, 2
  %v3176 = vmax.f32 %v3174, %v3175
  %v3177 = vrot.slane %v3176, 1
  %v3178 = vmax.f32 %v3176, %v3177
  %v3179 = vsel %vm2856, %v2838, -inf
  %v3180 = vrot.slane %v3179, 4
  %v3181 = vmax.f32 %v3179, %v3180
  %v3182 = vrot.slane %v3181, 2
  %v3183 = vmax.f32 %v3181, %v3182
  %v3184 = vrot.slane %v3183, 1
  %v3185 = vmax.f32 %v3183, %v3184
  %v3186 = vsel %vm2856, %v2839, -inf
  %v3187 = vrot.slane %v3186, 4
  %v3188 = vmax.f32 %v3186, %v3187
  %v3189 = vrot.slane %v3188, 2
  %v3190 = vmax.f32 %v3188, %v3189
  %v3191 = vrot.slane %v3190, 1
  %v3192 = vmax.f32 %v3190, %v3191
  %v3193 = vsel %vm2856, %v2840, -inf
  %v3194 = vrot.slane %v3193, 4
  %v3195 = vmax.f32 %v3193, %v3194
  %v3196 = vrot.slane %v3195, 2
  %v3197 = vmax.f32 %v3195, %v3196
  %v3198 = vrot.slane %v3197, 1
  %v3199 = vmax.f32 %v3197, %v3198
  %v3200 = vsel %vm2856, %v2841, -inf
  %v3201 = vrot.slane %v3200, 4
  %v3202 = vmax.f32 %v3200, %v3201
  %v3203 = vrot.slane %v3202, 2
  %v3204 = vmax.f32 %v3202, %v3203
  %v3205 = vrot.slane %v3204, 1
  %v3206 = vmax.f32 %v3204, %v3205
  %v3207 = vsel %vm2856, %v2842, -inf
  %v3208 = vrot.slane %v3207, 4
  %v3209 = vmax.f32 %v3207, %v3208
  %v3210 = vrot.slane %v3209, 2
  %v3211 = vmax.f32 %v3209, %v3210
  %v3212 = vrot.slane %v3211, 1
  %v3213 = vmax.f32 %v3211, %v3212
  %v3214 = vsel %vm2856, %v2843, -inf
  %v3215 = vrot.slane %v3214, 4
  %v3216 = vmax.f32 %v3214, %v3215
  %v3217 = vrot.slane %v3216, 2
  %v3218 = vmax.f32 %v3216, %v3217
  %v3219 = vrot.slane %v3218, 1
  %v3220 = vmax.f32 %v3218, %v3219
  %v3221 = vsel %vm2856, %v2844, -inf
  %v3222 = vrot.slane %v3221, 4
  %v3223 = vmax.f32 %v3221, %v3222
  %v3224 = vrot.slane %v3223, 2
  %v3225 = vmax.f32 %v3223, %v3224
  %v3226 = vrot.slane %v3225, 1
  %v3227 = vmax.f32 %v3225, %v3226
  %v3228 = vsel %vm2856, %v2845, -inf
  %v3229 = vrot.slane %v3228, 4
  %v3230 = vmax.f32 %v3228, %v3229
  %v3231 = vrot.slane %v3230, 2
  %v3232 = vmax.f32 %v3230, %v3231
  %v3233 = vrot.slane %v3232, 1
  %v3234 = vmax.f32 %v3232, %v3233
  %v3235 = vsel %vm2856, %v2846, -inf
  %v3236 = vrot.slane %v3235, 4
  %v3237 = vmax.f32 %v3235, %v3236
  %v3238 = vrot.slane %v3237, 2
  %v3239 = vmax.f32 %v3237, %v3238
  %v3240 = vrot.slane %v3239, 1
  %v3241 = vmax.f32 %v3239, %v3240
  %v3242 = vsel %vm2856, %v2847, -inf
  %v3243 = vrot.slane %v3242, 4
  %v3244 = vmax.f32 %v3242, %v3243
  %v3245 = vrot.slane %v3244, 2
  %v3246 = vmax.f32 %v3244, %v3245
  %v3247 = vrot.slane %v3246, 1
  %v3248 = vmax.f32 %v3246, %v3247
  %v3249 = vsel %vm2856, %v2848, -inf
  %v3250 = vrot.slane %v3249, 4
  %v3251 = vmax.f32 %v3249, %v3250
  %v3252 = vrot.slane %v3251, 2
  %v3253 = vmax.f32 %v3251, %v3252
  %v3254 = vrot.slane %v3253, 1
  %v3255 = vmax.f32 %v3253, %v3254
  %v3256 = vsel %vm2856, %v2849, -inf
  %v3257 = vrot.slane %v3256, 4
  %v3258 = vmax.f32 %v3256, %v3257
  %v3259 = vrot.slane %v3258, 2
  %v3260 = vmax.f32 %v3258, %v3259
  %v3261 = vrot.slane %v3260, 1
  %v3262 = vmax.f32 %v3260, %v3261
  %v3263 = vsel %vm2856, %v2850, -inf
  %v3264 = vrot.slane %v3263, 4
  %v3265 = vmax.f32 %v3263, %v3264
  %v3266 = vrot.slane %v3265, 2
  %v3267 = vmax.f32 %v3265, %v3266
  %v3268 = vrot.slane %v3267, 1
  %v3269 = vmax.f32 %v3267, %v3268
  %v3270 = vsel %vm2856, %v2851, -inf
  %v3271 = vrot.slane %v3270, 4
  %v3272 = vmax.f32 %v3270, %v3271
  %v3273 = vrot.slane %v3272, 2
  %v3274 = vmax.f32 %v3272, %v3273
  %v3275 = vrot.slane %v3274, 1
  %v3276 = vmax.f32 %v3274, %v3275
  %v3277 = vsel %vm2856, %v2852, -inf
  %v3278 = vrot.slane %v3277, 4
  %v3279 = vmax.f32 %v3277, %v3278
  %v3280 = vrot.slane %v3279, 2
  %v3281 = vmax.f32 %v3279, %v3280
  %v3282 = vrot.slane %v3281, 1
  %v3283 = vmax.f32 %v3281, %v3282
  %v3284 = vsel %vm2856, %v2853, -inf
  %v3285 = vrot.slane %v3284, 4
  %v3286 = vmax.f32 %v3284, %v3285
  %v3287 = vrot.slane %v3286, 2
  %v3288 = vmax.f32 %v3286, %v3287
  %v3289 = vrot.slane %v3288, 1
  %v3290 = vmax.f32 %v3288, %v3289
  %v3291 = vsel %vm2856, %v2854, -inf
  %v3292 = vrot.slane %v3291, 4
  %v3293 = vmax.f32 %v3291, %v3292
  %v3294 = vrot.slane %v3293, 2
  %v3295 = vmax.f32 %v3293, %v3294
  %v3296 = vrot.slane %v3295, 1
  %v3297 = vmax.f32 %v3295, %v3296
  %v3298 = vsel %vm2856, %v2855, -inf
  %v3299 = vrot.slane %v3298, 4
  %v3300 = vmax.f32 %v3298, %v3299
  %v3301 = vrot.slane %v3300, 2
  %v3302 = vmax.f32 %v3300, %v3301
  %v3303 = vrot.slane %v3302, 1
  %v3304 = vmax.f32 %v3302, %v3303
  %v3305 = vsub.f32 %v2792, %v2863
  %v3306 = vsub.f32 %v2793, %v2870
  %v3307 = vsub.f32 %v2794, %v2877
  %v3308 = vsub.f32 %v2795, %v2884
  %v3309 = vsub.f32 %v2796, %v2891
  %v3310 = vsub.f32 %v2797, %v2898
  %v3311 = vsub.f32 %v2798, %v2905
  %v3312 = vsub.f32 %v2799, %v2912
  %v3313 = vsub.f32 %v2800, %v2919
  %v3314 = vsub.f32 %v2801, %v2926
  %v3315 = vsub.f32 %v2802, %v2933
  %v3316 = vsub.f32 %v2803, %v2940
  %v3317 = vsub.f32 %v2804, %v2947
  %v3318 = vsub.f32 %v2805, %v2954
  %v3319 = vsub.f32 %v2806, %v2961
  %v3320 = vsub.f32 %v2807, %v2968
  %v3321 = vsub.f32 %v2808, %v2975
  %v3322 = vsub.f32 %v2809, %v2982
  %v3323 = vsub.f32 %v2810, %v2989
  %v3324 = vsub.f32 %v2811, %v2996
  %v3325 = vsub.f32 %v2812, %v3003
  %v3326 = vsub.f32 %v2813, %v3010
  %v3327 = vsub.f32 %v2814, %v3017
  %v3328 = vsub.f32 %v2815, %v3024
  %v3329 = vsub.f32 %v2816, %v3031
  %v3330 = vsub.f32 %v2817, %v3038
  %v3331 = vsub.f32 %v2818, %v3045
  %v3332 = vsub.f32 %v2819, %v3052
  %v3333 = vsub.f32 %v2820, %v3059
  %v3334 = vsub.f32 %v2821, %v3066
  %v3335 = vsub.f32 %v2822, %v3073
  %v3336 = vsub.f32 %v2823, %v3080
  %v3337 = vsub.f32 %v2824, %v3087
  %v3338 = vsub.f32 %v2825, %v3094
  %v3339 = vsub.f32 %v2826, %v3101
  %v3340 = vsub.f32 %v2827, %v3108
  %v3341 = vsub.f32 %v2828, %v3115
  %v3342 = vsub.f32 %v2829, %v3122
  %v3343 = vsub.f32 %v2830, %v3129
  %v3344 = vsub.f32 %v2831, %v3136
  %v3345 = vsub.f32 %v2832, %v3143
  %v3346 = vsub.f32 %v2833, %v3150
  %v3347 = vsub.f32 %v2834, %v3157
  %v3348 = vsub.f32 %v2835, %v3164
  %v3349 = vsub.f32 %v2836, %v3171
  %v3350 = vsub.f32 %v2837, %v3178
  %v3351 = vsub.f32 %v2838, %v3185
  %v3352 = vsub.f32 %v2839, %v3192
  %v3353 = vsub.f32 %v2840, %v3199
  %v3354 = vsub.f32 %v2841, %v3206
  %v3355 = vsub.f32 %v2842, %v3213
  %v3356 = vsub.f32 %v2843, %v3220
  %v3357 = vsub.f32 %v2844, %v3227
  %v3358 = vsub.f32 %v2845, %v3234
  %v3359 = vsub.f32 %v2846, %v3241
  %v3360 = vsub.f32 %v2847, %v3248
  %v3361 = vsub.f32 %v2848, %v3255
  %v3362 = vsub.f32 %v2849, %v3262
  %v3363 = vsub.f32 %v2850, %v3269
  %v3364 = vsub.f32 %v2851, %v3276
  %v3365 = vsub.f32 %v2852, %v3283
  %v3366 = vsub.f32 %v2853, %v3290
  %v3367 = vsub.f32 %v2854, %v3297
  %v3368 = vsub.f32 %v2855, %v3304
  %v3369 = vmul.f32 %v3305, 1.442695
  %v3370 = vpow.pop %v3369
  %v3371 = vmul.f32 %v3306, 1.442695
  %v3372 = vpow.pop %v3371
  %v3373 = vmul.f32 %v3307, 1.442695
  %v3374 = vpow.pop %v3373
  %v3375 = vmul.f32 %v3308, 1.442695
  %v3376 = vpow.pop %v3375
  %v3377 = vmul.f32 %v3309, 1.442695
  %v3378 = vpow.pop %v3377
  %v3379 = vmul.f32 %v3310, 1.442695
  %v3380 = vpow.pop %v3379
  %v3381 = vmul.f32 %v3311, 1.442695
  %v3382 = vpow.pop %v3381
  %v3383 = vmul.f32 %v3312, 1.442695
  %v3384 = vpow.pop %v3383
  %v3385 = vmul.f32 %v3313, 1.442695
  %v3386 = vpow.pop %v3385
  %v3387 = vmul.f32 %v3314, 1.442695
  %v3388 = vpow.pop %v3387
  %v3389 = vmul.f32 %v3315, 1.442695
  %v3390 = vpow.pop %v3389
  %v3391 = vmul.f32 %v3316, 1.442695
  %v3392 = vpow.pop %v3391
  %v3393 = vmul.f32 %v3317, 1.442695
  %v3394 = vpow.pop %v3393
  %v3395 = vmul.f32 %v3318, 1.442695
  %v3396 = vpow.pop %v3395
  %v3397 = vmul.f32 %v3319, 1.442695
  %v3398 = vpow.pop %v3397
  %v3399 = vmul.f32 %v3320, 1.442695
  %v3400 = vpow.pop %v3399
  %v3401 = vmul.f32 %v3321, 1.442695
  %v3402 = vpow.pop %v3401
  %v3403 = vmul.f32 %v3322, 1.442695
  %v3404 = vpow.pop %v3403
  %v3405 = vmul.f32 %v3323, 1.442695
  %v3406 = vpow.pop %v3405
  %v3407 = vmul.f32 %v3324, 1.442695
  %v3408 = vpow.pop %v3407
  %v3409 = vmul.f32 %v3325, 1.442695
  %v3410 = vpow.pop %v3409
  %v3411 = vmul.f32 %v3326, 1.442695
  %v3412 = vpow.pop %v3411
  %v3413 = vmul.f32 %v3327, 1.442695
  %v3414 = vpow.pop %v3413
  %v3415 = vmul.f32 %v3328, 1.442695
  %v3416 = vpow.pop %v3415
  %v3417 = vmul.f32 %v3329, 1.442695
  %v3418 = vpow.pop %v3417
  %v3419 = vmul.f32 %v3330, 1.442695
  %v3420 = vpow.pop %v3419
  %v3421 = vmul.f32 %v3331, 1.442695
  %v3422 = vpow.pop %v3421
  %v3423 = vmul.f32 %v3332, 1.442695
  %v3424 = vpow.pop %v3423
  %v3425 = vmul.f32 %v3333, 1.442695
  %v3426 = vpow.pop %v3425
  %v3427 = vmul.f32 %v3334, 1.442695
  %v3428 = vpow.pop %v3427
  %v3429 = vmul.f32 %v3335, 1.442695
  %v3430 = vpow.pop %v3429
  %v3431 = vmul.f32 %v3336, 1.442695
  %v3432 = vpow.pop %v3431
  %v3433 = vmul.f32 %v3337, 1.442695
  %v3434 = vpow.pop %v3433
  %v3435 = vmul.f32 %v3338, 1.442695
  %v3436 = vpow.pop %v3435
  %v3437 = vmul.f32 %v3339, 1.442695
  %v3438 = vpow.pop %v3437
  %v3439 = vmul.f32 %v3340, 1.442695
  %v3440 = vpow.pop %v3439
  %v3441 = vmul.f32 %v3341, 1.442695
  %v3442 = vpow.pop %v3441
  %v3443 = vmul.f32 %v3342, 1.442695
  %v3444 = vpow.pop %v3443
  %v3445 = vmul.f32 %v3343, 1.442695
  %v3446 = vpow.pop %v3445
  %v3447 = vmul.f32 %v3344, 1.442695
  %v3448 = vpow.pop %v3447
  %v3449 = vmul.f32 %v3345, 1.442695
  %v3450 = vpow.pop %v3449
  %v3451 = vmul.f32 %v3346, 1.442695
  %v3452 = vpow.pop %v3451
  %v3453 = vmul.f32 %v3347, 1.442695
  %v3454 = vpow.pop %v3453
  %v3455 = vmul.f32 %v3348, 1.442695
  %v3456 = vpow.pop %v3455
  %v3457 = vmul.f32 %v3349, 1.442695
  %v3458 = vpow.pop %v3457
  %v3459 = vmul.f32 %v3350, 1.442695
  %v3460 = vpow.pop %v3459
  %v3461 = vmul.f32 %v3351, 1.442695
  %v3462 = vpow.pop %v3461
  %v3463 = vmul.f32 %v3352, 1.442695
  %v3464 = vpow.pop %v3463
  %v3465 = vmul.f32 %v3353, 1.442695
  %v3466 = vpow.pop %v3465
  %v3467 = vmul.f32 %v3354, 1.442695
  %v3468 = vpow.pop %v3467
  %v3469 = vmul.f32 %v3355, 1.442695
  %v3470 = vpow.pop %v3469
  %v3471 = vmul.f32 %v3356, 1.442695
  %v3472 = vpow.pop %v3471
  %v3473 = vmul.f32 %v3357, 1.442695
  %v3474 = vpow.pop %v3473
  %v3475 = vmul.f32 %v3358, 1.442695
  %v3476 = vpow.pop %v3475
  %v3477 = vmul.f32 %v3359, 1.442695
  %v3478 = vpow.pop %v3477
  %v3479 = vmul.f32 %v3360, 1.442695
  %v3480 = vpow.pop %v3479
  %v3481 = vmul.f32 %v3361, 1.442695
  %v3482 = vpow.pop %v3481
  %v3483 = vmul.f32 %v3362, 1.442695
  %v3484 = vpow.pop %v3483
  %v3485 = vmul.f32 %v3363, 1.442695
  %v3486 = vpow.pop %v3485
  %v3487 = vmul.f32 %v3364, 1.442695
  %v3488 = vpow.pop %v3487
  %v3489 = vmul.f32 %v3365, 1.442695
  %v3490 = vpow.pop %v3489
  %v3491 = vmul.f32 %v3366, 1.442695
  %v3492 = vpow.pop %v3491
  %v3493 = vmul.f32 %v3367, 1.442695
  %v3494 = vpow.pop %v3493
  %v3495 = vmul.f32 %v3368, 1.442695
  %v3496 = vpow.pop %v3495
  %v3497 = vsel %vm2856, %v3370, 0.0
  %v3498 = vrot.slane %v3497, 4
  %v3499 = vadd.f32 %v3497, %v3498
  %v3500 = vrot.slane %v3499, 2
  %v3501 = vadd.f32 %v3499, %v3500
  %v3502 = vrot.slane %v3501, 1
  %v3503 = vadd.f32 %v3501, %v3502
  %v3504 = vsel %vm2856, %v3372, 0.0
  %v3505 = vrot.slane %v3504, 4
  %v3506 = vadd.f32 %v3504, %v3505
  %v3507 = vrot.slane %v3506, 2
  %v3508 = vadd.f32 %v3506, %v3507
  %v3509 = vrot.slane %v3508, 1
  %v3510 = vadd.f32 %v3508, %v3509
  %v3511 = vsel %vm2856, %v3374, 0.0
  %v3512 = vrot.slane %v3511, 4
  %v3513 = vadd.f32 %v3511, %v3512
  %v3514 = vrot.slane %v3513, 2
  %v3515 = vadd.f32 %v3513, %v3514
  %v3516 = vrot.slane %v3515, 1
  %v3517 = vadd.f32 %v3515, %v3516
  %v3518 = vsel %vm2856, %v3376, 0.0
  %v3519 = vrot.slane %v3518, 4
  %v3520 = vadd.f32 %v3518, %v3519
  %v3521 = vrot.slane %v3520, 2
  %v3522 = vadd.f32 %v3520, %v3521
  %v3523 = vrot.slane %v3522, 1
  %v3524 = vadd.f32 %v3522, %v3523
  %v3525 = vsel %vm2856, %v3378, 0.0
  %v3526 = vrot.slane %v3525, 4
  %v3527 = vadd.f32 %v3525, %v3526
  %v3528 = vrot.slane %v3527, 2
  %v3529 = vadd.f32 %v3527, %v3528
  %v3530 = vrot.slane %v3529, 1
  %v3531 = vadd.f32 %v3529, %v3530
  %v3532 = vsel %vm2856, %v3380, 0.0
  %v3533 = vrot.slane %v3532, 4
  %v3534 = vadd.f32 %v3532, %v3533
  %v3535 = vrot.slane %v3534, 2
  %v3536 = vadd.f32 %v3534, %v3535
  %v3537 = vrot.slane %v3536, 1
  %v3538 = vadd.f32 %v3536, %v3537
  %v3539 = vsel %vm2856, %v3382, 0.0
  %v3540 = vrot.slane %v3539, 4
  %v3541 = vadd.f32 %v3539, %v3540
  %v3542 = vrot.slane %v3541, 2
  %v3543 = vadd.f32 %v3541, %v3542
  %v3544 = vrot.slane %v3543, 1
  %v3545 = vadd.f32 %v3543, %v3544
  %v3546 = vsel %vm2856, %v3384, 0.0
  %v3547 = vrot.slane %v3546, 4
  %v3548 = vadd.f32 %v3546, %v3547
  %v3549 = vrot.slane %v3548, 2
  %v3550 = vadd.f32 %v3548, %v3549
  %v3551 = vrot.slane %v3550, 1
  %v3552 = vadd.f32 %v3550, %v3551
  %v3553 = vsel %vm2856, %v3386, 0.0
  %v3554 = vrot.slane %v3553, 4
  %v3555 = vadd.f32 %v3553, %v3554
  %v3556 = vrot.slane %v3555, 2
  %v3557 = vadd.f32 %v3555, %v3556
  %v3558 = vrot.slane %v3557, 1
  %v3559 = vadd.f32 %v3557, %v3558
  %v3560 = vsel %vm2856, %v3388, 0.0
  %v3561 = vrot.slane %v3560, 4
  %v3562 = vadd.f32 %v3560, %v3561
  %v3563 = vrot.slane %v3562, 2
  %v3564 = vadd.f32 %v3562, %v3563
  %v3565 = vrot.slane %v3564, 1
  %v3566 = vadd.f32 %v3564, %v3565
  %v3567 = vsel %vm2856, %v3390, 0.0
  %v3568 = vrot.slane %v3567, 4
  %v3569 = vadd.f32 %v3567, %v3568
  %v3570 = vrot.slane %v3569, 2
  %v3571 = vadd.f32 %v3569, %v3570
  %v3572 = vrot.slane %v3571, 1
  %v3573 = vadd.f32 %v3571, %v3572
  %v3574 = vsel %vm2856, %v3392, 0.0
  %v3575 = vrot.slane %v3574, 4
  %v3576 = vadd.f32 %v3574, %v3575
  %v3577 = vrot.slane %v3576, 2
  %v3578 = vadd.f32 %v3576, %v3577
  %v3579 = vrot.slane %v3578, 1
  %v3580 = vadd.f32 %v3578, %v3579
  %v3581 = vsel %vm2856, %v3394, 0.0
  %v3582 = vrot.slane %v3581, 4
  %v3583 = vadd.f32 %v3581, %v3582
  %v3584 = vrot.slane %v3583, 2
  %v3585 = vadd.f32 %v3583, %v3584
  %v3586 = vrot.slane %v3585, 1
  %v3587 = vadd.f32 %v3585, %v3586
  %v3588 = vsel %vm2856, %v3396, 0.0
  %v3589 = vrot.slane %v3588, 4
  %v3590 = vadd.f32 %v3588, %v3589
  %v3591 = vrot.slane %v3590, 2
  %v3592 = vadd.f32 %v3590, %v3591
  %v3593 = vrot.slane %v3592, 1
  %v3594 = vadd.f32 %v3592, %v3593
  %v3595 = vsel %vm2856, %v3398, 0.0
  %v3596 = vrot.slane %v3595, 4
  %v3597 = vadd.f32 %v3595, %v3596
  %v3598 = vrot.slane %v3597, 2
  %v3599 = vadd.f32 %v3597, %v3598
  %v3600 = vrot.slane %v3599, 1
  %v3601 = vadd.f32 %v3599, %v3600
  %v3602 = vsel %vm2856, %v3400, 0.0
  %v3603 = vrot.slane %v3602, 4
  %v3604 = vadd.f32 %v3602, %v3603
  %v3605 = vrot.slane %v3604, 2
  %v3606 = vadd.f32 %v3604, %v3605
  %v3607 = vrot.slane %v3606, 1
  %v3608 = vadd.f32 %v3606, %v3607
  %v3609 = vsel %vm2856, %v3402, 0.0
  %v3610 = vrot.slane %v3609, 4
  %v3611 = vadd.f32 %v3609, %v3610
  %v3612 = vrot.slane %v3611, 2
  %v3613 = vadd.f32 %v3611, %v3612
  %v3614 = vrot.slane %v3613, 1
  %v3615 = vadd.f32 %v3613, %v3614
  %v3616 = vsel %vm2856, %v3404, 0.0
  %v3617 = vrot.slane %v3616, 4
  %v3618 = vadd.f32 %v3616, %v3617
  %v3619 = vrot.slane %v3618, 2
  %v3620 = vadd.f32 %v3618, %v3619
  %v3621 = vrot.slane %v3620, 1
  %v3622 = vadd.f32 %v3620, %v3621
  %v3623 = vsel %vm2856, %v3406, 0.0
  %v3624 = vrot.slane %v3623, 4
  %v3625 = vadd.f32 %v3623, %v3624
  %v3626 = vrot.slane %v3625, 2
  %v3627 = vadd.f32 %v3625, %v3626
  %v3628 = vrot.slane %v3627, 1
  %v3629 = vadd.f32 %v3627, %v3628
  %v3630 = vsel %vm2856, %v3408, 0.0
  %v3631 = vrot.slane %v3630, 4
  %v3632 = vadd.f32 %v3630, %v3631
  %v3633 = vrot.slane %v3632, 2
  %v3634 = vadd.f32 %v3632, %v3633
  %v3635 = vrot.slane %v3634, 1
  %v3636 = vadd.f32 %v3634, %v3635
  %v3637 = vsel %vm2856, %v3410, 0.0
  %v3638 = vrot.slane %v3637, 4
  %v3639 = vadd.f32 %v3637, %v3638
  %v3640 = vrot.slane %v3639, 2
  %v3641 = vadd.f32 %v3639, %v3640
  %v3642 = vrot.slane %v3641, 1
  %v3643 = vadd.f32 %v3641, %v3642
  %v3644 = vsel %vm2856, %v3412, 0.0
  %v3645 = vrot.slane %v3644, 4
  %v3646 = vadd.f32 %v3644, %v3645
  %v3647 = vrot.slane %v3646, 2
  %v3648 = vadd.f32 %v3646, %v3647
  %v3649 = vrot.slane %v3648, 1
  %v3650 = vadd.f32 %v3648, %v3649
  %v3651 = vsel %vm2856, %v3414, 0.0
  %v3652 = vrot.slane %v3651, 4
  %v3653 = vadd.f32 %v3651, %v3652
  %v3654 = vrot.slane %v3653, 2
  %v3655 = vadd.f32 %v3653, %v3654
  %v3656 = vrot.slane %v3655, 1
  %v3657 = vadd.f32 %v3655, %v3656
  %v3658 = vsel %vm2856, %v3416, 0.0
  %v3659 = vrot.slane %v3658, 4
  %v3660 = vadd.f32 %v3658, %v3659
  %v3661 = vrot.slane %v3660, 2
  %v3662 = vadd.f32 %v3660, %v3661
  %v3663 = vrot.slane %v3662, 1
  %v3664 = vadd.f32 %v3662, %v3663
  %v3665 = vsel %vm2856, %v3418, 0.0
  %v3666 = vrot.slane %v3665, 4
  %v3667 = vadd.f32 %v3665, %v3666
  %v3668 = vrot.slane %v3667, 2
  %v3669 = vadd.f32 %v3667, %v3668
  %v3670 = vrot.slane %v3669, 1
  %v3671 = vadd.f32 %v3669, %v3670
  %v3672 = vsel %vm2856, %v3420, 0.0
  %v3673 = vrot.slane %v3672, 4
  %v3674 = vadd.f32 %v3672, %v3673
  %v3675 = vrot.slane %v3674, 2
  %v3676 = vadd.f32 %v3674, %v3675
  %v3677 = vrot.slane %v3676, 1
  %v3678 = vadd.f32 %v3676, %v3677
  %v3679 = vsel %vm2856, %v3422, 0.0
  %v3680 = vrot.slane %v3679, 4
  %v3681 = vadd.f32 %v3679, %v3680
  %v3682 = vrot.slane %v3681, 2
  %v3683 = vadd.f32 %v3681, %v3682
  %v3684 = vrot.slane %v3683, 1
  %v3685 = vadd.f32 %v3683, %v3684
  %v3686 = vsel %vm2856, %v3424, 0.0
  %v3687 = vrot.slane %v3686, 4
  %v3688 = vadd.f32 %v3686, %v3687
  %v3689 = vrot.slane %v3688, 2
  %v3690 = vadd.f32 %v3688, %v3689
  %v3691 = vrot.slane %v3690, 1
  %v3692 = vadd.f32 %v3690, %v3691
  %v3693 = vsel %vm2856, %v3426, 0.0
  %v3694 = vrot.slane %v3693, 4
  %v3695 = vadd.f32 %v3693, %v3694
  %v3696 = vrot.slane %v3695, 2
  %v3697 = vadd.f32 %v3695, %v3696
  %v3698 = vrot.slane %v3697, 1
  %v3699 = vadd.f32 %v3697, %v3698
  %v3700 = vsel %vm2856, %v3428, 0.0
  %v3701 = vrot.slane %v3700, 4
  %v3702 = vadd.f32 %v3700, %v3701
  %v3703 = vrot.slane %v3702, 2
  %v3704 = vadd.f32 %v3702, %v3703
  %v3705 = vrot.slane %v3704, 1
  %v3706 = vadd.f32 %v3704, %v3705
  %v3707 = vsel %vm2856, %v3430, 0.0
  %v3708 = vrot.slane %v3707, 4
  %v3709 = vadd.f32 %v3707, %v3708
  %v3710 = vrot.slane %v3709, 2
  %v3711 = vadd.f32 %v3709, %v3710
  %v3712 = vrot.slane %v3711, 1
  %v3713 = vadd.f32 %v3711, %v3712
  %v3714 = vsel %vm2856, %v3432, 0.0
  %v3715 = vrot.slane %v3714, 4
  %v3716 = vadd.f32 %v3714, %v3715
  %v3717 = vrot.slane %v3716, 2
  %v3718 = vadd.f32 %v3716, %v3717
  %v3719 = vrot.slane %v3718, 1
  %v3720 = vadd.f32 %v3718, %v3719
  %v3721 = vsel %vm2856, %v3434, 0.0
  %v3722 = vrot.slane %v3721, 4
  %v3723 = vadd.f32 %v3721, %v3722
  %v3724 = vrot.slane %v3723, 2
  %v3725 = vadd.f32 %v3723, %v3724
  %v3726 = vrot.slane %v3725, 1
  %v3727 = vadd.f32 %v3725, %v3726
  %v3728 = vsel %vm2856, %v3436, 0.0
  %v3729 = vrot.slane %v3728, 4
  %v3730 = vadd.f32 %v3728, %v3729
  %v3731 = vrot.slane %v3730, 2
  %v3732 = vadd.f32 %v3730, %v3731
  %v3733 = vrot.slane %v3732, 1
  %v3734 = vadd.f32 %v3732, %v3733
  %v3735 = vsel %vm2856, %v3438, 0.0
  %v3736 = vrot.slane %v3735, 4
  %v3737 = vadd.f32 %v3735, %v3736
  %v3738 = vrot.slane %v3737, 2
  %v3739 = vadd.f32 %v3737, %v3738
  %v3740 = vrot.slane %v3739, 1
  %v3741 = vadd.f32 %v3739, %v3740
  %v3742 = vsel %vm2856, %v3440, 0.0
  %v3743 = vrot.slane %v3742, 4
  %v3744 = vadd.f32 %v3742, %v3743
  %v3745 = vrot.slane %v3744, 2
  %v3746 = vadd.f32 %v3744, %v3745
  %v3747 = vrot.slane %v3746, 1
  %v3748 = vadd.f32 %v3746, %v3747
  %v3749 = vsel %vm2856, %v3442, 0.0
  %v3750 = vrot.slane %v3749, 4
  %v3751 = vadd.f32 %v3749, %v3750
  %v3752 = vrot.slane %v3751, 2
  %v3753 = vadd.f32 %v3751, %v3752
  %v3754 = vrot.slane %v3753, 1
  %v3755 = vadd.f32 %v3753, %v3754
  %v3756 = vsel %vm2856, %v3444, 0.0
  %v3757 = vrot.slane %v3756, 4
  %v3758 = vadd.f32 %v3756, %v3757
  %v3759 = vrot.slane %v3758, 2
  %v3760 = vadd.f32 %v3758, %v3759
  %v3761 = vrot.slane %v3760, 1
  %v3762 = vadd.f32 %v3760, %v3761
  %v3763 = vsel %vm2856, %v3446, 0.0
  %v3764 = vrot.slane %v3763, 4
  %v3765 = vadd.f32 %v3763, %v3764
  %v3766 = vrot.slane %v3765, 2
  %v3767 = vadd.f32 %v3765, %v3766
  %v3768 = vrot.slane %v3767, 1
  %v3769 = vadd.f32 %v3767, %v3768
  %v3770 = vsel %vm2856, %v3448, 0.0
  %v3771 = vrot.slane %v3770, 4
  %v3772 = vadd.f32 %v3770, %v3771
  %v3773 = vrot.slane %v3772, 2
  %v3774 = vadd.f32 %v3772, %v3773
  %v3775 = vrot.slane %v3774, 1
  %v3776 = vadd.f32 %v3774, %v3775
  %v3777 = vsel %vm2856, %v3450, 0.0
  %v3778 = vrot.slane %v3777, 4
  %v3779 = vadd.f32 %v3777, %v3778
  %v3780 = vrot.slane %v3779, 2
  %v3781 = vadd.f32 %v3779, %v3780
  %v3782 = vrot.slane %v3781, 1
  %v3783 = vadd.f32 %v3781, %v3782
  %v3784 = vsel %vm2856, %v3452, 0.0
  %v3785 = vrot.slane %v3784, 4
  %v3786 = vadd.f32 %v3784, %v3785
  %v3787 = vrot.slane %v3786, 2
  %v3788 = vadd.f32 %v3786, %v3787
  %v3789 = vrot.slane %v3788, 1
  %v3790 = vadd.f32 %v3788, %v3789
  %v3791 = vsel %vm2856, %v3454, 0.0
  %v3792 = vrot.slane %v3791, 4
  %v3793 = vadd.f32 %v3791, %v3792
  %v3794 = vrot.slane %v3793, 2
  %v3795 = vadd.f32 %v3793, %v3794
  %v3796 = vrot.slane %v3795, 1
  %v3797 = vadd.f32 %v3795, %v3796
  %v3798 = vsel %vm2856, %v3456, 0.0
  %v3799 = vrot.slane %v3798, 4
  %v3800 = vadd.f32 %v3798, %v3799
  %v3801 = vrot.slane %v3800, 2
  %v3802 = vadd.f32 %v3800, %v3801
  %v3803 = vrot.slane %v3802, 1
  %v3804 = vadd.f32 %v3802, %v3803
  %v3805 = vsel %vm2856, %v3458, 0.0
  %v3806 = vrot.slane %v3805, 4
  %v3807 = vadd.f32 %v3805, %v3806
  %v3808 = vrot.slane %v3807, 2
  %v3809 = vadd.f32 %v3807, %v3808
  %v3810 = vrot.slane %v3809, 1
  %v3811 = vadd.f32 %v3809, %v3810
  %v3812 = vsel %vm2856, %v3460, 0.0
  %v3813 = vrot.slane %v3812, 4
  %v3814 = vadd.f32 %v3812, %v3813
  %v3815 = vrot.slane %v3814, 2
  %v3816 = vadd.f32 %v3814, %v3815
  %v3817 = vrot.slane %v3816, 1
  %v3818 = vadd.f32 %v3816, %v3817
  %v3819 = vsel %vm2856, %v3462, 0.0
  %v3820 = vrot.slane %v3819, 4
  %v3821 = vadd.f32 %v3819, %v3820
  %v3822 = vrot.slane %v3821, 2
  %v3823 = vadd.f32 %v3821, %v3822
  %v3824 = vrot.slane %v3823, 1
  %v3825 = vadd.f32 %v3823, %v3824
  %v3826 = vsel %vm2856, %v3464, 0.0
  %v3827 = vrot.slane %v3826, 4
  %v3828 = vadd.f32 %v3826, %v3827
  %v3829 = vrot.slane %v3828, 2
  %v3830 = vadd.f32 %v3828, %v3829
  %v3831 = vrot.slane %v3830, 1
  %v3832 = vadd.f32 %v3830, %v3831
  %v3833 = vsel %vm2856, %v3466, 0.0
  %v3834 = vrot.slane %v3833, 4
  %v3835 = vadd.f32 %v3833, %v3834
  %v3836 = vrot.slane %v3835, 2
  %v3837 = vadd.f32 %v3835, %v3836
  %v3838 = vrot.slane %v3837, 1
  %v3839 = vadd.f32 %v3837, %v3838
  %v3840 = vsel %vm2856, %v3468, 0.0
  %v3841 = vrot.slane %v3840, 4
  %v3842 = vadd.f32 %v3840, %v3841
  %v3843 = vrot.slane %v3842, 2
  %v3844 = vadd.f32 %v3842, %v3843
  %v3845 = vrot.slane %v3844, 1
  %v3846 = vadd.f32 %v3844, %v3845
  %v3847 = vsel %vm2856, %v3470, 0.0
  %v3848 = vrot.slane %v3847, 4
  %v3849 = vadd.f32 %v3847, %v3848
  %v3850 = vrot.slane %v3849, 2
  %v3851 = vadd.f32 %v3849, %v3850
  %v3852 = vrot.slane %v3851, 1
  %v3853 = vadd.f32 %v3851, %v3852
  %v3854 = vsel %vm2856, %v3472, 0.0
  %v3855 = vrot.slane %v3854, 4
  %v3856 = vadd.f32 %v3854, %v3855
  %v3857 = vrot.slane %v3856, 2
  %v3858 = vadd.f32 %v3856, %v3857
  %v3859 = vrot.slane %v3858, 1
  %v3860 = vadd.f32 %v3858, %v3859
  %v3861 = vsel %vm2856, %v3474, 0.0
  %v3862 = vrot.slane %v3861, 4
  %v3863 = vadd.f32 %v3861, %v3862
  %v3864 = vrot.slane %v3863, 2
  %v3865 = vadd.f32 %v3863, %v3864
  %v3866 = vrot.slane %v3865, 1
  %v3867 = vadd.f32 %v3865, %v3866
  %v3868 = vsel %vm2856, %v3476, 0.0
  %v3869 = vrot.slane %v3868, 4
  %v3870 = vadd.f32 %v3868, %v3869
  %v3871 = vrot.slane %v3870, 2
  %v3872 = vadd.f32 %v3870, %v3871
  %v3873 = vrot.slane %v3872, 1
  %v3874 = vadd.f32 %v3872, %v3873
  %v3875 = vsel %vm2856, %v3478, 0.0
  %v3876 = vrot.slane %v3875, 4
  %v3877 = vadd.f32 %v3875, %v3876
  %v3878 = vrot.slane %v3877, 2
  %v3879 = vadd.f32 %v3877, %v3878
  %v3880 = vrot.slane %v3879, 1
  %v3881 = vadd.f32 %v3879, %v3880
  %v3882 = vsel %vm2856, %v3480, 0.0
  %v3883 = vrot.slane %v3882, 4
  %v3884 = vadd.f32 %v3882, %v3883
  %v3885 = vrot.slane %v3884, 2
  %v3886 = vadd.f32 %v3884, %v3885
  %v3887 = vrot.slane %v3886, 1
  %v3888 = vadd.f32 %v3886, %v3887
  %v3889 = vsel %vm2856, %v3482, 0.0
  %v3890 = vrot.slane %v3889, 4
  %v3891 = vadd.f32 %v3889, %v3890
  %v3892 = vrot.slane %v3891, 2
  %v3893 = vadd.f32 %v3891, %v3892
  %v3894 = vrot.slane %v3893, 1
  %v3895 = vadd.f32 %v3893, %v3894
  %v3896 = vsel %vm2856, %v3484, 0.0
  %v3897 = vrot.slane %v3896, 4
  %v3898 = vadd.f32 %v3896, %v3897
  %v3899 = vrot.slane %v3898, 2
  %v3900 = vadd.f32 %v3898, %v3899
  %v3901 = vrot.slane %v3900, 1
  %v3902 = vadd.f32 %v3900, %v3901
  %v3903 = vsel %vm2856, %v3486, 0.0
  %v3904 = vrot.slane %v3903, 4
  %v3905 = vadd.f32 %v3903, %v3904
  %v3906 = vrot.slane %v3905, 2
  %v3907 = vadd.f32 %v3905, %v3906
  %v3908 = vrot.slane %v3907, 1
  %v3909 = vadd.f32 %v3907, %v3908
  %v3910 = vsel %vm2856, %v3488, 0.0
  %v3911 = vrot.slane %v3910, 4
  %v3912 = vadd.f32 %v3910, %v3911
  %v3913 = vrot.slane %v3912, 2
  %v3914 = vadd.f32 %v3912, %v3913
  %v3915 = vrot.slane %v3914, 1
  %v3916 = vadd.f32 %v3914, %v3915
  %v3917 = vsel %vm2856, %v3490, 0.0
  %v3918 = vrot.slane %v3917, 4
  %v3919 = vadd.f32 %v3917, %v3918
  %v3920 = vrot.slane %v3919, 2
  %v3921 = vadd.f32 %v3919, %v3920
  %v3922 = vrot.slane %v3921, 1
  %v3923 = vadd.f32 %v3921, %v3922
  %v3924 = vsel %vm2856, %v3492, 0.0
  %v3925 = vrot.slane %v3924, 4
  %v3926 = vadd.f32 %v3924, %v3925
  %v3927 = vrot.slane %v3926, 2
  %v3928 = vadd.f32 %v3926, %v3927
  %v3929 = vrot.slane %v3928, 1
  %v3930 = vadd.f32 %v3928, %v3929
  %v3931 = vsel %vm2856, %v3494, 0.0
  %v3932 = vrot.slane %v3931, 4
  %v3933 = vadd.f32 %v3931, %v3932
  %v3934 = vrot.slane %v3933, 2
  %v3935 = vadd.f32 %v3933, %v3934
  %v3936 = vrot.slane %v3935, 1
  %v3937 = vadd.f32 %v3935, %v3936
  %v3938 = vsel %vm2856, %v3496, 0.0
  %v3939 = vrot.slane %v3938, 4
  %v3940 = vadd.f32 %v3938, %v3939
  %v3941 = vrot.slane %v3940, 2
  %v3942 = vadd.f32 %v3940, %v3941
  %v3943 = vrot.slane %v3942, 1
  %v3944 = vadd.f32 %v3942, %v3943
  %v3945 = vrcp.pop %v3503
  %v3946 = vrcp.pop %v3510
  %v3947 = vrcp.pop %v3517
  %v3948 = vrcp.pop %v3524
  %v3949 = vrcp.pop %v3531
  %v3950 = vrcp.pop %v3538
  %v3951 = vrcp.pop %v3545
  %v3952 = vrcp.pop %v3552
  %v3953 = vrcp.pop %v3559
  %v3954 = vrcp.pop %v3566
  %v3955 = vrcp.pop %v3573
  %v3956 = vrcp.pop %v3580
  %v3957 = vrcp.pop %v3587
  %v3958 = vrcp.pop %v3594
  %v3959 = vrcp.pop %v3601
  %v3960 = vrcp.pop %v3608
  %v3961 = vrcp.pop %v3615
  %v3962 = vrcp.pop %v3622
  %v3963 = vrcp.pop %v3629
  %v3964 = vrcp.pop %v3636
  %v3965 = vrcp.pop %v3643
  %v3966 = vrcp.pop %v3650
  %v3967 = vrcp.pop %v3657
  %v3968 = vrcp.pop %v3664
  %v3969 = vrcp.pop %v3671
  %v3970 = vrcp.pop %v3678
  %v3971 = vrcp.pop %v3685
  %v3972 = vrcp.pop %v3692
  %v3973 = vrcp.pop %v3699
  %v3974 = vrcp.pop %v3706
  %v3975 = vrcp.pop %v3713
  %v3976 = vrcp.pop %v3720
  %v3977 = vrcp.pop %v3727
  %v3978 = vrcp.pop %v3734
  %v3979 = vrcp.pop %v3741
  %v3980 = vrcp.pop %v3748
  %v3981 = vrcp.pop %v3755
  %v3982 = vrcp.pop %v3762
  %v3983 = vrcp.pop %v3769
  %v3984 = vrcp.pop %v3776
  %v3985 = vrcp.pop %v3783
  %v3986 = vrcp.pop %v3790
  %v3987 = vrcp.pop %v3797
  %v3988 = vrcp.pop %v3804
  %v3989 = vrcp.pop %v3811
  %v3990 = vrcp.pop %v3818
  %v3991 = vrcp.pop %v3825
  %v3992 = vrcp.pop %v3832
  %v3993 = vrcp.pop %v3839
  %v3994 = vrcp.pop %v3846
  %v3995 = vrcp.pop %v3853
  %v3996 = vrcp.pop %v3860
  %v3997 = vrcp.pop %v3867
  %v3998 = vrcp.pop %v3874
  %v3999 = vrcp.pop %v3881
  %v4000 = vrcp.pop %v3888
  %v4001 = vrcp.pop %v3895
  %v4002 = vrcp.pop %v3902
  %v4003 = vrcp.pop %v3909
  %v4004 = vrcp.pop %v3916
  %v4005 = vrcp.pop %v3923
  %v4006 = vrcp.pop %v3930
  %v4007 = vrcp.pop %v3937
  %v4008 = vrcp.pop %v3944
  %v4009 = vmul.f32 %v3370, %v3945
  %v4010 = vmul.f32 %v3372, %v3946
  %v4011 = vmul.f32 %v3374, %v3947
  %v4012 = vmul.f32 %v3376, %v3948
  %v4013 = vmul.f32 %v3378, %v3949
  %v4014 = vmul.f32 %v3380, %v3950
  %v4015 = vmul.f32 %v3382, %v3951
  %v4016 = vmul.f32 %v3384, %v3952
  %v4017 = vmul.f32 %v3386, %v3953
  %v4018 = vmul.f32 %v3388, %v3954
  %v4019 = vmul.f32 %v3390, %v3955
  %v4020 = vmul.f32 %v3392, %v3956
  %v4021 = vmul.f32 %v3394, %v3957
  %v4022 = vmul.f32 %v3396, %v3958
  %v4023 = vmul.f32 %v3398, %v3959
  %v4024 = vmul.f32 %v3400, %v3960
  %v4025 = vmul.f32 %v3402, %v3961
  %v4026 = vmul.f32 %v3404, %v3962
  %v4027 = vmul.f32 %v3406, %v3963
  %v4028 = vmul.f32 %v3408, %v3964
  %v4029 = vmul.f32 %v3410, %v3965
  %v4030 = vmul.f32 %v3412, %v3966
  %v4031 = vmul.f32 %v3414, %v3967
  %v4032 = vmul.f32 %v3416, %v3968
  %v4033 = vmul.f32 %v3418, %v3969
  %v4034 = vmul.f32 %v3420, %v3970
  %v4035 = vmul.f32 %v3422, %v3971
  %v4036 = vmul.f32 %v3424, %v3972
  %v4037 = vmul.f32 %v3426, %v3973
  %v4038 = vmul.f32 %v3428, %v3974
  %v4039 = vmul.f32 %v3430, %v3975
  %v4040 = vmul.f32 %v3432, %v3976
  %v4041 = vmul.f32 %v3434, %v3977
  %v4042 = vmul.f32 %v3436, %v3978
  %v4043 = vmul.f32 %v3438, %v3979
  %v4044 = vmul.f32 %v3440, %v3980
  %v4045 = vmul.f32 %v3442, %v3981
  %v4046 = vmul.f32 %v3444, %v3982
  %v4047 = vmul.f32 %v3446, %v3983
  %v4048 = vmul.f32 %v3448, %v3984
  %v4049 = vmul.f32 %v3450, %v3985
  %v4050 = vmul.f32 %v3452, %v3986
  %v4051 = vmul.f32 %v3454, %v3987
  %v4052 = vmul.f32 %v3456, %v3988
  %v4053 = vmul.f32 %v3458, %v3989
  %v4054 = vmul.f32 %v3460, %v3990
  %v4055 = vmul.f32 %v3462, %v3991
  %v4056 = vmul.f32 %v3464, %v3992
  %v4057 = vmul.f32 %v3466, %v3993
  %v4058 = vmul.f32 %v3468, %v3994
  %v4059 = vmul.f32 %v3470, %v3995
  %v4060 = vmul.f32 %v3472, %v3996
  %v4061 = vmul.f32 %v3474, %v3997
  %v4062 = vmul.f32 %v3476, %v3998
  %v4063 = vmul.f32 %v3478, %v3999
  %v4064 = vmul.f32 %v3480, %v4000
  %v4065 = vmul.f32 %v3482, %v4001
  %v4066 = vmul.f32 %v3484, %v4002
  %v4067 = vmul.f32 %v3486, %v4003
  %v4068 = vmul.f32 %v3488, %v4004
  %v4069 = vmul.f32 %v3490, %v4005
  %v4070 = vmul.f32 %v3492, %v4006
  %v4071 = vmul.f32 %v3494, %v4007
  %v4072 = vmul.f32 %v3496, %v4008
  %v4073 = vpack.c.bf16 %v4010, %v4009
  %v4074 = vpack.c.bf16 %v4012, %v4011
  %v4075 = vpack.c.bf16 %v4014, %v4013
  %v4076 = vpack.c.bf16 %v4016, %v4015
  %v4077 = vpack.c.bf16 %v4018, %v4017
  %v4078 = vpack.c.bf16 %v4020, %v4019
  %v4079 = vpack.c.bf16 %v4022, %v4021
  %v4080 = vpack.c.bf16 %v4024, %v4023
  %v4081 = vpack.c.bf16 %v4026, %v4025
  %v4082 = vpack.c.bf16 %v4028, %v4027
  %v4083 = vpack.c.bf16 %v4030, %v4029
  %v4084 = vpack.c.bf16 %v4032, %v4031
  %v4085 = vpack.c.bf16 %v4034, %v4033
  %v4086 = vpack.c.bf16 %v4036, %v4035
  %v4087 = vpack.c.bf16 %v4038, %v4037
  %v4088 = vpack.c.bf16 %v4040, %v4039
  %v4089 = vpack.c.bf16 %v4042, %v4041
  %v4090 = vpack.c.bf16 %v4044, %v4043
  %v4091 = vpack.c.bf16 %v4046, %v4045
  %v4092 = vpack.c.bf16 %v4048, %v4047
  %v4093 = vpack.c.bf16 %v4050, %v4049
  %v4094 = vpack.c.bf16 %v4052, %v4051
  %v4095 = vpack.c.bf16 %v4054, %v4053
  %v4096 = vpack.c.bf16 %v4056, %v4055
  %v4097 = vpack.c.bf16 %v4058, %v4057
  %v4098 = vpack.c.bf16 %v4060, %v4059
  %v4099 = vpack.c.bf16 %v4062, %v4061
  %v4100 = vpack.c.bf16 %v4064, %v4063
  %v4101 = vpack.c.bf16 %v4066, %v4065
  %v4102 = vpack.c.bf16 %v4068, %v4067
  %v4103 = vpack.c.bf16 %v4070, %v4069
  %v4104 = vpack.c.bf16 %v4072, %v4071
  %v4105 = vld [vmem:[%s22] sm:$0x3]
  %v4107 = vsel %vm2856, %v4073, 0
  %v4110 = vsel %vm2856, %v4074, 0
  %v4113 = vsel %vm2856, %v4075, 0
  %v4116 = vsel %vm2856, %v4076, 0
  %v4119 = vsel %vm2856, %v4077, 0
  %v4122 = vsel %vm2856, %v4078, 0
  %v4125 = vsel %vm2856, %v4079, 0
  %v4128 = vsel %vm2856, %v4080, 0
  %v4131 = vsel %vm2856, %v4081, 0
  %v4134 = vsel %vm2856, %v4082, 0
  %v4137 = vsel %vm2856, %v4083, 0
  %v4140 = vsel %vm2856, %v4084, 0
  %v4143 = vsel %vm2856, %v4085, 0
  %v4146 = vsel %vm2856, %v4086, 0
  %v4149 = vsel %vm2856, %v4087, 0
  %v4152 = vsel %vm2856, %v4088, 0
  %v4155 = vsel %vm2856, %v4089, 0
  %v4158 = vsel %vm2856, %v4090, 0
  %v4161 = vsel %vm2856, %v4091, 0
  %v4164 = vsel %vm2856, %v4092, 0
  %v4167 = vsel %vm2856, %v4093, 0
  %v4170 = vsel %vm2856, %v4094, 0
  %v4173 = vsel %vm2856, %v4095, 0
  %v4176 = vsel %vm2856, %v4096, 0
  %v4179 = vsel %vm2856, %v4097, 0
  %v4182 = vsel %vm2856, %v4098, 0
  %v4185 = vsel %vm2856, %v4099, 0
  %v4188 = vsel %vm2856, %v4100, 0
  %v4191 = vsel %vm2856, %v4101, 0
  %v4194 = vsel %vm2856, %v4102, 0
  %v4197 = vsel %vm2856, %v4103, 0
  %v4200 = vsel %vm2856, %v4104, 0
  %vm4202 = vcmask 1041408
  %v4204 = vsel %vm4202, %v4105, 0
  %4206 = vmatpush.bf16.msra.mxu0 0
  %4207 = vmatpush.bf16.msra.mxu0 0
  %4208 = vmatpush.bf16.msra.mxu0 0
  %4209 = vmatpush.bf16.msra.mxu0 0
  %4210 = vmatpush.bf16.msra.mxu0 0
  %4211 = vmatpush.bf16.msra.mxu0 0
  %4212 = vmatpush.bf16.msra.mxu0 0
  %4213 = vmatpush.bf16.msra.mxu0 %v4204
  %4214 = vmatmul.bf16.gmra.mxu0 %v4107
  %v4215 = vpop.f32.mrf.mxu0
  %v4216 = vadd.f32 0.0, %v4215
  %v4217 = vpop.f32.mrf.mxu0
  %v4218 = vadd.f32 0.0, %v4217
  %4219 = vmatmul.bf16.gmra.mxu0 %v4110
  %v4220 = vpop.f32.mrf.mxu0
  %v4221 = vadd.f32 0.0, %v4220
  %v4222 = vpop.f32.mrf.mxu0
  %v4223 = vadd.f32 0.0, %v4222
  %4224 = vmatmul.bf16.gmra.mxu0 %v4113
  %v4225 = vpop.f32.mrf.mxu0
  %v4226 = vadd.f32 0.0, %v4225
  %v4227 = vpop.f32.mrf.mxu0
  %v4228 = vadd.f32 0.0, %v4227
  %4229 = vmatmul.bf16.gmra.mxu0 %v4116
  %v4230 = vpop.f32.mrf.mxu0
  %v4231 = vadd.f32 0.0, %v4230
  %v4232 = vpop.f32.mrf.mxu0
  %v4233 = vadd.f32 0.0, %v4232
  %4234 = vmatmul.bf16.gmra.mxu0 %v4119
  %v4235 = vpop.f32.mrf.mxu0
  %v4236 = vadd.f32 0.0, %v4235
  %v4237 = vpop.f32.mrf.mxu0
  %v4238 = vadd.f32 0.0, %v4237
  %4239 = vmatmul.bf16.gmra.mxu0 %v4122
  %v4240 = vpop.f32.mrf.mxu0
  %v4241 = vadd.f32 0.0, %v4240
  %v4242 = vpop.f32.mrf.mxu0
  %v4243 = vadd.f32 0.0, %v4242
  %4244 = vmatmul.bf16.gmra.mxu0 %v4125
  %v4245 = vpop.f32.mrf.mxu0
  %v4246 = vadd.f32 0.0, %v4245
  %v4247 = vpop.f32.mrf.mxu0
  %v4248 = vadd.f32 0.0, %v4247
  %4249 = vmatmul.bf16.gmra.mxu0 %v4128
  %v4250 = vpop.f32.mrf.mxu0
  %v4251 = vadd.f32 0.0, %v4250
  %v4252 = vpop.f32.mrf.mxu0
  %v4253 = vadd.f32 0.0, %v4252
  %4254 = vmatmul.bf16.gmra.mxu0 %v4131
  %v4255 = vpop.f32.mrf.mxu0
  %v4256 = vadd.f32 0.0, %v4255
  %v4257 = vpop.f32.mrf.mxu0
  %v4258 = vadd.f32 0.0, %v4257
  %4259 = vmatmul.bf16.gmra.mxu0 %v4134
  %v4260 = vpop.f32.mrf.mxu0
  %v4261 = vadd.f32 0.0, %v4260
  %v4262 = vpop.f32.mrf.mxu0
  %v4263 = vadd.f32 0.0, %v4262
  %4264 = vmatmul.bf16.gmra.mxu0 %v4137
  %v4265 = vpop.f32.mrf.mxu0
  %v4266 = vadd.f32 0.0, %v4265
  %v4267 = vpop.f32.mrf.mxu0
  %v4268 = vadd.f32 0.0, %v4267
  %4269 = vmatmul.bf16.gmra.mxu0 %v4140
  %v4270 = vpop.f32.mrf.mxu0
  %v4271 = vadd.f32 0.0, %v4270
  %v4272 = vpop.f32.mrf.mxu0
  %v4273 = vadd.f32 0.0, %v4272
  %4274 = vmatmul.bf16.gmra.mxu0 %v4143
  %v4275 = vpop.f32.mrf.mxu0
  %v4276 = vadd.f32 0.0, %v4275
  %v4277 = vpop.f32.mrf.mxu0
  %v4278 = vadd.f32 0.0, %v4277
  %4279 = vmatmul.bf16.gmra.mxu0 %v4146
  %v4280 = vpop.f32.mrf.mxu0
  %v4281 = vadd.f32 0.0, %v4280
  %v4282 = vpop.f32.mrf.mxu0
  %v4283 = vadd.f32 0.0, %v4282
  %4284 = vmatmul.bf16.gmra.mxu0 %v4149
  %v4285 = vpop.f32.mrf.mxu0
  %v4286 = vadd.f32 0.0, %v4285
  %v4287 = vpop.f32.mrf.mxu0
  %v4288 = vadd.f32 0.0, %v4287
  %4289 = vmatmul.bf16.gmra.mxu0 %v4152
  %v4290 = vpop.f32.mrf.mxu0
  %v4291 = vadd.f32 0.0, %v4290
  %v4292 = vpop.f32.mrf.mxu0
  %v4293 = vadd.f32 0.0, %v4292
  %4294 = vmatmul.bf16.gmra.mxu0 %v4155
  %v4295 = vpop.f32.mrf.mxu0
  %v4296 = vadd.f32 0.0, %v4295
  %v4297 = vpop.f32.mrf.mxu0
  %v4298 = vadd.f32 0.0, %v4297
  %4299 = vmatmul.bf16.gmra.mxu0 %v4158
  %v4300 = vpop.f32.mrf.mxu0
  %v4301 = vadd.f32 0.0, %v4300
  %v4302 = vpop.f32.mrf.mxu0
  %v4303 = vadd.f32 0.0, %v4302
  %4304 = vmatmul.bf16.gmra.mxu0 %v4161
  %v4305 = vpop.f32.mrf.mxu0
  %v4306 = vadd.f32 0.0, %v4305
  %v4307 = vpop.f32.mrf.mxu0
  %v4308 = vadd.f32 0.0, %v4307
  %4309 = vmatmul.bf16.gmra.mxu0 %v4164
  %v4310 = vpop.f32.mrf.mxu0
  %v4311 = vadd.f32 0.0, %v4310
  %v4312 = vpop.f32.mrf.mxu0
  %v4313 = vadd.f32 0.0, %v4312
  %4314 = vmatmul.bf16.gmra.mxu0 %v4167
  %v4315 = vpop.f32.mrf.mxu0
  %v4316 = vadd.f32 0.0, %v4315
  %v4317 = vpop.f32.mrf.mxu0
  %v4318 = vadd.f32 0.0, %v4317
  %4319 = vmatmul.bf16.gmra.mxu0 %v4170
  %v4320 = vpop.f32.mrf.mxu0
  %v4321 = vadd.f32 0.0, %v4320
  %v4322 = vpop.f32.mrf.mxu0
  %v4323 = vadd.f32 0.0, %v4322
  %4324 = vmatmul.bf16.gmra.mxu0 %v4173
  %v4325 = vpop.f32.mrf.mxu0
  %v4326 = vadd.f32 0.0, %v4325
  %v4327 = vpop.f32.mrf.mxu0
  %v4328 = vadd.f32 0.0, %v4327
  %4329 = vmatmul.bf16.gmra.mxu0 %v4176
  %v4330 = vpop.f32.mrf.mxu0
  %v4331 = vadd.f32 0.0, %v4330
  %v4332 = vpop.f32.mrf.mxu0
  %v4333 = vadd.f32 0.0, %v4332
  %4334 = vmatmul.bf16.gmra.mxu0 %v4179
  %v4335 = vpop.f32.mrf.mxu0
  %v4336 = vadd.f32 0.0, %v4335
  %v4337 = vpop.f32.mrf.mxu0
  %v4338 = vadd.f32 0.0, %v4337
  %4339 = vmatmul.bf16.gmra.mxu0 %v4182
  %v4340 = vpop.f32.mrf.mxu0
  %v4341 = vadd.f32 0.0, %v4340
  %v4342 = vpop.f32.mrf.mxu0
  %v4343 = vadd.f32 0.0, %v4342
  %4344 = vmatmul.bf16.gmra.mxu0 %v4185
  %v4345 = vpop.f32.mrf.mxu0
  %v4346 = vadd.f32 0.0, %v4345
  %v4347 = vpop.f32.mrf.mxu0
  %v4348 = vadd.f32 0.0, %v4347
  %4349 = vmatmul.bf16.gmra.mxu0 %v4188
  %v4350 = vpop.f32.mrf.mxu0
  %v4351 = vadd.f32 0.0, %v4350
  %v4352 = vpop.f32.mrf.mxu0
  %v4353 = vadd.f32 0.0, %v4352
  %4354 = vmatmul.bf16.gmra.mxu0 %v4191
  %v4355 = vpop.f32.mrf.mxu0
  %v4356 = vadd.f32 0.0, %v4355
  %v4357 = vpop.f32.mrf.mxu0
  %v4358 = vadd.f32 0.0, %v4357
  %4359 = vmatmul.bf16.gmra.mxu0 %v4194
  %v4360 = vpop.f32.mrf.mxu0
  %v4361 = vadd.f32 0.0, %v4360
  %v4362 = vpop.f32.mrf.mxu0
  %v4363 = vadd.f32 0.0, %v4362
  %4364 = vmatmul.bf16.gmra.mxu0 %v4197
  %v4365 = vpop.f32.mrf.mxu0
  %v4366 = vadd.f32 0.0, %v4365
  %v4367 = vpop.f32.mrf.mxu0
  %v4368 = vadd.f32 0.0, %v4367
  %4369 = vmatmul.bf16.gmra.mxu0 %v4200
  %v4370 = vpop.f32.mrf.mxu0
  %v4371 = vadd.f32 0.0, %v4370
  %v4372 = vpop.f32.mrf.mxu0
  %v4373 = vadd.f32 0.0, %v4372
  %4374 = vdwg.mxu0
  %v4375 = vmul.f32 %v2030, %v4216
  %v4376 = vmul.f32 %v2031, %v4218
  %v4377 = vmul.f32 %v2032, %v4221
  %v4378 = vmul.f32 %v2033, %v4223
  %v4379 = vmul.f32 %v2034, %v4226
  %v4380 = vmul.f32 %v2035, %v4228
  %v4381 = vmul.f32 %v2036, %v4231
  %v4382 = vmul.f32 %v2037, %v4233
  %v4383 = vmul.f32 %v2038, %v4236
  %v4384 = vmul.f32 %v2039, %v4238
  %v4385 = vmul.f32 %v2040, %v4241
  %v4386 = vmul.f32 %v2041, %v4243
  %v4387 = vmul.f32 %v2042, %v4246
  %v4388 = vmul.f32 %v2043, %v4248
  %v4389 = vmul.f32 %v2044, %v4251
  %v4390 = vmul.f32 %v2045, %v4253
  %v4391 = vmul.f32 %v2046, %v4256
  %v4392 = vmul.f32 %v2047, %v4258
  %v4393 = vmul.f32 %v2048, %v4261
  %v4394 = vmul.f32 %v2049, %v4263
  %v4395 = vmul.f32 %v2050, %v4266
  %v4396 = vmul.f32 %v2051, %v4268
  %v4397 = vmul.f32 %v2052, %v4271
  %v4398 = vmul.f32 %v2053, %v4273
  %v4399 = vmul.f32 %v2054, %v4276
  %v4400 = vmul.f32 %v2055, %v4278
  %v4401 = vmul.f32 %v2056, %v4281
  %v4402 = vmul.f32 %v2057, %v4283
  %v4403 = vmul.f32 %v2058, %v4286
  %v4404 = vmul.f32 %v2059, %v4288
  %v4405 = vmul.f32 %v2060, %v4291
  %v4406 = vmul.f32 %v2061, %v4293
  %v4407 = vmul.f32 %v2062, %v4296
  %v4408 = vmul.f32 %v2063, %v4298
  %v4409 = vmul.f32 %v2064, %v4301
  %v4410 = vmul.f32 %v2065, %v4303
  %v4411 = vmul.f32 %v2066, %v4306
  %v4412 = vmul.f32 %v2067, %v4308
  %v4413 = vmul.f32 %v2068, %v4311
  %v4414 = vmul.f32 %v2069, %v4313
  %v4415 = vmul.f32 %v2070, %v4316
  %v4416 = vmul.f32 %v2071, %v4318
  %v4417 = vmul.f32 %v2072, %v4321
  %v4418 = vmul.f32 %v2073, %v4323
  %v4419 = vmul.f32 %v2074, %v4326
  %v4420 = vmul.f32 %v2075, %v4328
  %v4421 = vmul.f32 %v2076, %v4331
  %v4422 = vmul.f32 %v2077, %v4333
  %v4423 = vmul.f32 %v2078, %v4336
  %v4424 = vmul.f32 %v2079, %v4338
  %v4425 = vmul.f32 %v2080, %v4341
  %v4426 = vmul.f32 %v2081, %v4343
  %v4427 = vmul.f32 %v2082, %v4346
  %v4428 = vmul.f32 %v2083, %v4348
  %v4429 = vmul.f32 %v2084, %v4351
  %v4430 = vmul.f32 %v2085, %v4353
  %v4431 = vmul.f32 %v2086, %v4356
  %v4432 = vmul.f32 %v2087, %v4358
  %v4433 = vmul.f32 %v2088, %v4361
  %v4434 = vmul.f32 %v2089, %v4363
  %v4435 = vmul.f32 %v2090, %v4366
  %v4436 = vmul.f32 %v2091, %v4368
  %v4437 = vmul.f32 %v2092, %v4371
  %v4438 = vmul.f32 %v2093, %v4373
  %v4439 = vsel %vm2398, %v4375, 0.0
  %v4440 = vrot.slane %v4439, 4
  %v4441 = vadd.f32 %v4439, %v4440
  %v4442 = vrot.slane %v4441, 2
  %v4443 = vadd.f32 %v4441, %v4442
  %v4444 = vrot.slane %v4443, 1
  %v4445 = vadd.f32 %v4443, %v4444
  %v4446 = vsel %vm2398, %v4376, 0.0
  %v4447 = vrot.slane %v4446, 4
  %v4448 = vadd.f32 %v4446, %v4447
  %v4449 = vrot.slane %v4448, 2
  %v4450 = vadd.f32 %v4448, %v4449
  %v4451 = vrot.slane %v4450, 1
  %v4452 = vadd.f32 %v4450, %v4451
  %v4453 = vsel %vm2398, %v4377, 0.0
  %v4454 = vrot.slane %v4453, 4
  %v4455 = vadd.f32 %v4453, %v4454
  %v4456 = vrot.slane %v4455, 2
  %v4457 = vadd.f32 %v4455, %v4456
  %v4458 = vrot.slane %v4457, 1
  %v4459 = vadd.f32 %v4457, %v4458
  %v4460 = vsel %vm2398, %v4378, 0.0
  %v4461 = vrot.slane %v4460, 4
  %v4462 = vadd.f32 %v4460, %v4461
  %v4463 = vrot.slane %v4462, 2
  %v4464 = vadd.f32 %v4462, %v4463
  %v4465 = vrot.slane %v4464, 1
  %v4466 = vadd.f32 %v4464, %v4465
  %v4467 = vsel %vm2398, %v4379, 0.0
  %v4468 = vrot.slane %v4467, 4
  %v4469 = vadd.f32 %v4467, %v4468
  %v4470 = vrot.slane %v4469, 2
  %v4471 = vadd.f32 %v4469, %v4470
  %v4472 = vrot.slane %v4471, 1
  %v4473 = vadd.f32 %v4471, %v4472
  %v4474 = vsel %vm2398, %v4380, 0.0
  %v4475 = vrot.slane %v4474, 4
  %v4476 = vadd.f32 %v4474, %v4475
  %v4477 = vrot.slane %v4476, 2
  %v4478 = vadd.f32 %v4476, %v4477
  %v4479 = vrot.slane %v4478, 1
  %v4480 = vadd.f32 %v4478, %v4479
  %v4481 = vsel %vm2398, %v4381, 0.0
  %v4482 = vrot.slane %v4481, 4
  %v4483 = vadd.f32 %v4481, %v4482
  %v4484 = vrot.slane %v4483, 2
  %v4485 = vadd.f32 %v4483, %v4484
  %v4486 = vrot.slane %v4485, 1
  %v4487 = vadd.f32 %v4485, %v4486
  %v4488 = vsel %vm2398, %v4382, 0.0
  %v4489 = vrot.slane %v4488, 4
  %v4490 = vadd.f32 %v4488, %v4489
  %v4491 = vrot.slane %v4490, 2
  %v4492 = vadd.f32 %v4490, %v4491
  %v4493 = vrot.slane %v4492, 1
  %v4494 = vadd.f32 %v4492, %v4493
  %v4495 = vsel %vm2398, %v4383, 0.0
  %v4496 = vrot.slane %v4495, 4
  %v4497 = vadd.f32 %v4495, %v4496
  %v4498 = vrot.slane %v4497, 2
  %v4499 = vadd.f32 %v4497, %v4498
  %v4500 = vrot.slane %v4499, 1
  %v4501 = vadd.f32 %v4499, %v4500
  %v4502 = vsel %vm2398, %v4384, 0.0
  %v4503 = vrot.slane %v4502, 4
  %v4504 = vadd.f32 %v4502, %v4503
  %v4505 = vrot.slane %v4504, 2
  %v4506 = vadd.f32 %v4504, %v4505
  %v4507 = vrot.slane %v4506, 1
  %v4508 = vadd.f32 %v4506, %v4507
  %v4509 = vsel %vm2398, %v4385, 0.0
  %v4510 = vrot.slane %v4509, 4
  %v4511 = vadd.f32 %v4509, %v4510
  %v4512 = vrot.slane %v4511, 2
  %v4513 = vadd.f32 %v4511, %v4512
  %v4514 = vrot.slane %v4513, 1
  %v4515 = vadd.f32 %v4513, %v4514
  %v4516 = vsel %vm2398, %v4386, 0.0
  %v4517 = vrot.slane %v4516, 4
  %v4518 = vadd.f32 %v4516, %v4517
  %v4519 = vrot.slane %v4518, 2
  %v4520 = vadd.f32 %v4518, %v4519
  %v4521 = vrot.slane %v4520, 1
  %v4522 = vadd.f32 %v4520, %v4521
  %v4523 = vsel %vm2398, %v4387, 0.0
  %v4524 = vrot.slane %v4523, 4
  %v4525 = vadd.f32 %v4523, %v4524
  %v4526 = vrot.slane %v4525, 2
  %v4527 = vadd.f32 %v4525, %v4526
  %v4528 = vrot.slane %v4527, 1
  %v4529 = vadd.f32 %v4527, %v4528
  %v4530 = vsel %vm2398, %v4388, 0.0
  %v4531 = vrot.slane %v4530, 4
  %v4532 = vadd.f32 %v4530, %v4531
  %v4533 = vrot.slane %v4532, 2
  %v4534 = vadd.f32 %v4532, %v4533
  %v4535 = vrot.slane %v4534, 1
  %v4536 = vadd.f32 %v4534, %v4535
  %v4537 = vsel %vm2398, %v4389, 0.0
  %v4538 = vrot.slane %v4537, 4
  %v4539 = vadd.f32 %v4537, %v4538
  %v4540 = vrot.slane %v4539, 2
  %v4541 = vadd.f32 %v4539, %v4540
  %v4542 = vrot.slane %v4541, 1
  %v4543 = vadd.f32 %v4541, %v4542
  %v4544 = vsel %vm2398, %v4390, 0.0
  %v4545 = vrot.slane %v4544, 4
  %v4546 = vadd.f32 %v4544, %v4545
  %v4547 = vrot.slane %v4546, 2
  %v4548 = vadd.f32 %v4546, %v4547
  %v4549 = vrot.slane %v4548, 1
  %v4550 = vadd.f32 %v4548, %v4549
  %v4551 = vsel %vm2398, %v4391, 0.0
  %v4552 = vrot.slane %v4551, 4
  %v4553 = vadd.f32 %v4551, %v4552
  %v4554 = vrot.slane %v4553, 2
  %v4555 = vadd.f32 %v4553, %v4554
  %v4556 = vrot.slane %v4555, 1
  %v4557 = vadd.f32 %v4555, %v4556
  %v4558 = vsel %vm2398, %v4392, 0.0
  %v4559 = vrot.slane %v4558, 4
  %v4560 = vadd.f32 %v4558, %v4559
  %v4561 = vrot.slane %v4560, 2
  %v4562 = vadd.f32 %v4560, %v4561
  %v4563 = vrot.slane %v4562, 1
  %v4564 = vadd.f32 %v4562, %v4563
  %v4565 = vsel %vm2398, %v4393, 0.0
  %v4566 = vrot.slane %v4565, 4
  %v4567 = vadd.f32 %v4565, %v4566
  %v4568 = vrot.slane %v4567, 2
  %v4569 = vadd.f32 %v4567, %v4568
  %v4570 = vrot.slane %v4569, 1
  %v4571 = vadd.f32 %v4569, %v4570
  %v4572 = vsel %vm2398, %v4394, 0.0
  %v4573 = vrot.slane %v4572, 4
  %v4574 = vadd.f32 %v4572, %v4573
  %v4575 = vrot.slane %v4574, 2
  %v4576 = vadd.f32 %v4574, %v4575
  %v4577 = vrot.slane %v4576, 1
  %v4578 = vadd.f32 %v4576, %v4577
  %v4579 = vsel %vm2398, %v4395, 0.0
  %v4580 = vrot.slane %v4579, 4
  %v4581 = vadd.f32 %v4579, %v4580
  %v4582 = vrot.slane %v4581, 2
  %v4583 = vadd.f32 %v4581, %v4582
  %v4584 = vrot.slane %v4583, 1
  %v4585 = vadd.f32 %v4583, %v4584
  %v4586 = vsel %vm2398, %v4396, 0.0
  %v4587 = vrot.slane %v4586, 4
  %v4588 = vadd.f32 %v4586, %v4587
  %v4589 = vrot.slane %v4588, 2
  %v4590 = vadd.f32 %v4588, %v4589
  %v4591 = vrot.slane %v4590, 1
  %v4592 = vadd.f32 %v4590, %v4591
  %v4593 = vsel %vm2398, %v4397, 0.0
  %v4594 = vrot.slane %v4593, 4
  %v4595 = vadd.f32 %v4593, %v4594
  %v4596 = vrot.slane %v4595, 2
  %v4597 = vadd.f32 %v4595, %v4596
  %v4598 = vrot.slane %v4597, 1
  %v4599 = vadd.f32 %v4597, %v4598
  %v4600 = vsel %vm2398, %v4398, 0.0
  %v4601 = vrot.slane %v4600, 4
  %v4602 = vadd.f32 %v4600, %v4601
  %v4603 = vrot.slane %v4602, 2
  %v4604 = vadd.f32 %v4602, %v4603
  %v4605 = vrot.slane %v4604, 1
  %v4606 = vadd.f32 %v4604, %v4605
  %v4607 = vsel %vm2398, %v4399, 0.0
  %v4608 = vrot.slane %v4607, 4
  %v4609 = vadd.f32 %v4607, %v4608
  %v4610 = vrot.slane %v4609, 2
  %v4611 = vadd.f32 %v4609, %v4610
  %v4612 = vrot.slane %v4611, 1
  %v4613 = vadd.f32 %v4611, %v4612
  %v4614 = vsel %vm2398, %v4400, 0.0
  %v4615 = vrot.slane %v4614, 4
  %v4616 = vadd.f32 %v4614, %v4615
  %v4617 = vrot.slane %v4616, 2
  %v4618 = vadd.f32 %v4616, %v4617
  %v4619 = vrot.slane %v4618, 1
  %v4620 = vadd.f32 %v4618, %v4619
  %v4621 = vsel %vm2398, %v4401, 0.0
  %v4622 = vrot.slane %v4621, 4
  %v4623 = vadd.f32 %v4621, %v4622
  %v4624 = vrot.slane %v4623, 2
  %v4625 = vadd.f32 %v4623, %v4624
  %v4626 = vrot.slane %v4625, 1
  %v4627 = vadd.f32 %v4625, %v4626
  %v4628 = vsel %vm2398, %v4402, 0.0
  %v4629 = vrot.slane %v4628, 4
  %v4630 = vadd.f32 %v4628, %v4629
  %v4631 = vrot.slane %v4630, 2
  %v4632 = vadd.f32 %v4630, %v4631
  %v4633 = vrot.slane %v4632, 1
  %v4634 = vadd.f32 %v4632, %v4633
  %v4635 = vsel %vm2398, %v4403, 0.0
  %v4636 = vrot.slane %v4635, 4
  %v4637 = vadd.f32 %v4635, %v4636
  %v4638 = vrot.slane %v4637, 2
  %v4639 = vadd.f32 %v4637, %v4638
  %v4640 = vrot.slane %v4639, 1
  %v4641 = vadd.f32 %v4639, %v4640
  %v4642 = vsel %vm2398, %v4404, 0.0
  %v4643 = vrot.slane %v4642, 4
  %v4644 = vadd.f32 %v4642, %v4643
  %v4645 = vrot.slane %v4644, 2
  %v4646 = vadd.f32 %v4644, %v4645
  %v4647 = vrot.slane %v4646, 1
  %v4648 = vadd.f32 %v4646, %v4647
  %v4649 = vsel %vm2398, %v4405, 0.0
  %v4650 = vrot.slane %v4649, 4
  %v4651 = vadd.f32 %v4649, %v4650
  %v4652 = vrot.slane %v4651, 2
  %v4653 = vadd.f32 %v4651, %v4652
  %v4654 = vrot.slane %v4653, 1
  %v4655 = vadd.f32 %v4653, %v4654
  %v4656 = vsel %vm2398, %v4406, 0.0
  %v4657 = vrot.slane %v4656, 4
  %v4658 = vadd.f32 %v4656, %v4657
  %v4659 = vrot.slane %v4658, 2
  %v4660 = vadd.f32 %v4658, %v4659
  %v4661 = vrot.slane %v4660, 1
  %v4662 = vadd.f32 %v4660, %v4661
  %v4663 = vsel %vm2398, %v4407, 0.0
  %v4664 = vrot.slane %v4663, 4
  %v4665 = vadd.f32 %v4663, %v4664
  %v4666 = vrot.slane %v4665, 2
  %v4667 = vadd.f32 %v4665, %v4666
  %v4668 = vrot.slane %v4667, 1
  %v4669 = vadd.f32 %v4667, %v4668
  %v4670 = vsel %vm2398, %v4408, 0.0
  %v4671 = vrot.slane %v4670, 4
  %v4672 = vadd.f32 %v4670, %v4671
  %v4673 = vrot.slane %v4672, 2
  %v4674 = vadd.f32 %v4672, %v4673
  %v4675 = vrot.slane %v4674, 1
  %v4676 = vadd.f32 %v4674, %v4675
  %v4677 = vsel %vm2398, %v4409, 0.0
  %v4678 = vrot.slane %v4677, 4
  %v4679 = vadd.f32 %v4677, %v4678
  %v4680 = vrot.slane %v4679, 2
  %v4681 = vadd.f32 %v4679, %v4680
  %v4682 = vrot.slane %v4681, 1
  %v4683 = vadd.f32 %v4681, %v4682
  %v4684 = vsel %vm2398, %v4410, 0.0
  %v4685 = vrot.slane %v4684, 4
  %v4686 = vadd.f32 %v4684, %v4685
  %v4687 = vrot.slane %v4686, 2
  %v4688 = vadd.f32 %v4686, %v4687
  %v4689 = vrot.slane %v4688, 1
  %v4690 = vadd.f32 %v4688, %v4689
  %v4691 = vsel %vm2398, %v4411, 0.0
  %v4692 = vrot.slane %v4691, 4
  %v4693 = vadd.f32 %v4691, %v4692
  %v4694 = vrot.slane %v4693, 2
  %v4695 = vadd.f32 %v4693, %v4694
  %v4696 = vrot.slane %v4695, 1
  %v4697 = vadd.f32 %v4695, %v4696
  %v4698 = vsel %vm2398, %v4412, 0.0
  %v4699 = vrot.slane %v4698, 4
  %v4700 = vadd.f32 %v4698, %v4699
  %v4701 = vrot.slane %v4700, 2
  %v4702 = vadd.f32 %v4700, %v4701
  %v4703 = vrot.slane %v4702, 1
  %v4704 = vadd.f32 %v4702, %v4703
  %v4705 = vsel %vm2398, %v4413, 0.0
  %v4706 = vrot.slane %v4705, 4
  %v4707 = vadd.f32 %v4705, %v4706
  %v4708 = vrot.slane %v4707, 2
  %v4709 = vadd.f32 %v4707, %v4708
  %v4710 = vrot.slane %v4709, 1
  %v4711 = vadd.f32 %v4709, %v4710
  %v4712 = vsel %vm2398, %v4414, 0.0
  %v4713 = vrot.slane %v4712, 4
  %v4714 = vadd.f32 %v4712, %v4713
  %v4715 = vrot.slane %v4714, 2
  %v4716 = vadd.f32 %v4714, %v4715
  %v4717 = vrot.slane %v4716, 1
  %v4718 = vadd.f32 %v4716, %v4717
  %v4719 = vsel %vm2398, %v4415, 0.0
  %v4720 = vrot.slane %v4719, 4
  %v4721 = vadd.f32 %v4719, %v4720
  %v4722 = vrot.slane %v4721, 2
  %v4723 = vadd.f32 %v4721, %v4722
  %v4724 = vrot.slane %v4723, 1
  %v4725 = vadd.f32 %v4723, %v4724
  %v4726 = vsel %vm2398, %v4416, 0.0
  %v4727 = vrot.slane %v4726, 4
  %v4728 = vadd.f32 %v4726, %v4727
  %v4729 = vrot.slane %v4728, 2
  %v4730 = vadd.f32 %v4728, %v4729
  %v4731 = vrot.slane %v4730, 1
  %v4732 = vadd.f32 %v4730, %v4731
  %v4733 = vsel %vm2398, %v4417, 0.0
  %v4734 = vrot.slane %v4733, 4
  %v4735 = vadd.f32 %v4733, %v4734
  %v4736 = vrot.slane %v4735, 2
  %v4737 = vadd.f32 %v4735, %v4736
  %v4738 = vrot.slane %v4737, 1
  %v4739 = vadd.f32 %v4737, %v4738
  %v4740 = vsel %vm2398, %v4418, 0.0
  %v4741 = vrot.slane %v4740, 4
  %v4742 = vadd.f32 %v4740, %v4741
  %v4743 = vrot.slane %v4742, 2
  %v4744 = vadd.f32 %v4742, %v4743
  %v4745 = vrot.slane %v4744, 1
  %v4746 = vadd.f32 %v4744, %v4745
  %v4747 = vsel %vm2398, %v4419, 0.0
  %v4748 = vrot.slane %v4747, 4
  %v4749 = vadd.f32 %v4747, %v4748
  %v4750 = vrot.slane %v4749, 2
  %v4751 = vadd.f32 %v4749, %v4750
  %v4752 = vrot.slane %v4751, 1
  %v4753 = vadd.f32 %v4751, %v4752
  %v4754 = vsel %vm2398, %v4420, 0.0
  %v4755 = vrot.slane %v4754, 4
  %v4756 = vadd.f32 %v4754, %v4755
  %v4757 = vrot.slane %v4756, 2
  %v4758 = vadd.f32 %v4756, %v4757
  %v4759 = vrot.slane %v4758, 1
  %v4760 = vadd.f32 %v4758, %v4759
  %v4761 = vsel %vm2398, %v4421, 0.0
  %v4762 = vrot.slane %v4761, 4
  %v4763 = vadd.f32 %v4761, %v4762
  %v4764 = vrot.slane %v4763, 2
  %v4765 = vadd.f32 %v4763, %v4764
  %v4766 = vrot.slane %v4765, 1
  %v4767 = vadd.f32 %v4765, %v4766
  %v4768 = vsel %vm2398, %v4422, 0.0
  %v4769 = vrot.slane %v4768, 4
  %v4770 = vadd.f32 %v4768, %v4769
  %v4771 = vrot.slane %v4770, 2
  %v4772 = vadd.f32 %v4770, %v4771
  %v4773 = vrot.slane %v4772, 1
  %v4774 = vadd.f32 %v4772, %v4773
  %v4775 = vsel %vm2398, %v4423, 0.0
  %v4776 = vrot.slane %v4775, 4
  %v4777 = vadd.f32 %v4775, %v4776
  %v4778 = vrot.slane %v4777, 2
  %v4779 = vadd.f32 %v4777, %v4778
  %v4780 = vrot.slane %v4779, 1
  %v4781 = vadd.f32 %v4779, %v4780
  %v4782 = vsel %vm2398, %v4424, 0.0
  %v4783 = vrot.slane %v4782, 4
  %v4784 = vadd.f32 %v4782, %v4783
  %v4785 = vrot.slane %v4784, 2
  %v4786 = vadd.f32 %v4784, %v4785
  %v4787 = vrot.slane %v4786, 1
  %v4788 = vadd.f32 %v4786, %v4787
  %v4789 = vsel %vm2398, %v4425, 0.0
  %v4790 = vrot.slane %v4789, 4
  %v4791 = vadd.f32 %v4789, %v4790
  %v4792 = vrot.slane %v4791, 2
  %v4793 = vadd.f32 %v4791, %v4792
  %v4794 = vrot.slane %v4793, 1
  %v4795 = vadd.f32 %v4793, %v4794
  %v4796 = vsel %vm2398, %v4426, 0.0
  %v4797 = vrot.slane %v4796, 4
  %v4798 = vadd.f32 %v4796, %v4797
  %v4799 = vrot.slane %v4798, 2
  %v4800 = vadd.f32 %v4798, %v4799
  %v4801 = vrot.slane %v4800, 1
  %v4802 = vadd.f32 %v4800, %v4801
  %v4803 = vsel %vm2398, %v4427, 0.0
  %v4804 = vrot.slane %v4803, 4
  %v4805 = vadd.f32 %v4803, %v4804
  %v4806 = vrot.slane %v4805, 2
  %v4807 = vadd.f32 %v4805, %v4806
  %v4808 = vrot.slane %v4807, 1
  %v4809 = vadd.f32 %v4807, %v4808
  %v4810 = vsel %vm2398, %v4428, 0.0
  %v4811 = vrot.slane %v4810, 4
  %v4812 = vadd.f32 %v4810, %v4811
  %v4813 = vrot.slane %v4812, 2
  %v4814 = vadd.f32 %v4812, %v4813
  %v4815 = vrot.slane %v4814, 1
  %v4816 = vadd.f32 %v4814, %v4815
  %v4817 = vsel %vm2398, %v4429, 0.0
  %v4818 = vrot.slane %v4817, 4
  %v4819 = vadd.f32 %v4817, %v4818
  %v4820 = vrot.slane %v4819, 2
  %v4821 = vadd.f32 %v4819, %v4820
  %v4822 = vrot.slane %v4821, 1
  %v4823 = vadd.f32 %v4821, %v4822
  %v4824 = vsel %vm2398, %v4430, 0.0
  %v4825 = vrot.slane %v4824, 4
  %v4826 = vadd.f32 %v4824, %v4825
  %v4827 = vrot.slane %v4826, 2
  %v4828 = vadd.f32 %v4826, %v4827
  %v4829 = vrot.slane %v4828, 1
  %v4830 = vadd.f32 %v4828, %v4829
  %v4831 = vsel %vm2398, %v4431, 0.0
  %v4832 = vrot.slane %v4831, 4
  %v4833 = vadd.f32 %v4831, %v4832
  %v4834 = vrot.slane %v4833, 2
  %v4835 = vadd.f32 %v4833, %v4834
  %v4836 = vrot.slane %v4835, 1
  %v4837 = vadd.f32 %v4835, %v4836
  %v4838 = vsel %vm2398, %v4432, 0.0
  %v4839 = vrot.slane %v4838, 4
  %v4840 = vadd.f32 %v4838, %v4839
  %v4841 = vrot.slane %v4840, 2
  %v4842 = vadd.f32 %v4840, %v4841
  %v4843 = vrot.slane %v4842, 1
  %v4844 = vadd.f32 %v4842, %v4843
  %v4845 = vsel %vm2398, %v4433, 0.0
  %v4846 = vrot.slane %v4845, 4
  %v4847 = vadd.f32 %v4845, %v4846
  %v4848 = vrot.slane %v4847, 2
  %v4849 = vadd.f32 %v4847, %v4848
  %v4850 = vrot.slane %v4849, 1
  %v4851 = vadd.f32 %v4849, %v4850
  %v4852 = vsel %vm2398, %v4434, 0.0
  %v4853 = vrot.slane %v4852, 4
  %v4854 = vadd.f32 %v4852, %v4853
  %v4855 = vrot.slane %v4854, 2
  %v4856 = vadd.f32 %v4854, %v4855
  %v4857 = vrot.slane %v4856, 1
  %v4858 = vadd.f32 %v4856, %v4857
  %v4859 = vsel %vm2398, %v4435, 0.0
  %v4860 = vrot.slane %v4859, 4
  %v4861 = vadd.f32 %v4859, %v4860
  %v4862 = vrot.slane %v4861, 2
  %v4863 = vadd.f32 %v4861, %v4862
  %v4864 = vrot.slane %v4863, 1
  %v4865 = vadd.f32 %v4863, %v4864
  %v4866 = vsel %vm2398, %v4436, 0.0
  %v4867 = vrot.slane %v4866, 4
  %v4868 = vadd.f32 %v4866, %v4867
  %v4869 = vrot.slane %v4868, 2
  %v4870 = vadd.f32 %v4868, %v4869
  %v4871 = vrot.slane %v4870, 1
  %v4872 = vadd.f32 %v4870, %v4871
  %v4873 = vsel %vm2398, %v4437, 0.0
  %v4874 = vrot.slane %v4873, 4
  %v4875 = vadd.f32 %v4873, %v4874
  %v4876 = vrot.slane %v4875, 2
  %v4877 = vadd.f32 %v4875, %v4876
  %v4878 = vrot.slane %v4877, 1
  %v4879 = vadd.f32 %v4877, %v4878
  %v4880 = vsel %vm2398, %v4438, 0.0
  %v4881 = vrot.slane %v4880, 4
  %v4882 = vadd.f32 %v4880, %v4881
  %v4883 = vrot.slane %v4882, 2
  %v4884 = vadd.f32 %v4882, %v4883
  %v4885 = vrot.slane %v4884, 1
  %v4886 = vadd.f32 %v4884, %v4885
  %v4887 = vpack.c.bf16 %v4445, %v4445
  %v4888 = vpack.c.bf16 %v4452, %v4452
  %v4889 = vpack.c.bf16 %v4459, %v4459
  %v4890 = vpack.c.bf16 %v4466, %v4466
  %v4891 = vpack.c.bf16 %v4473, %v4473
  %v4892 = vpack.c.bf16 %v4480, %v4480
  %v4893 = vpack.c.bf16 %v4487, %v4487
  %v4894 = vpack.c.bf16 %v4494, %v4494
  %v4895 = vpack.c.bf16 %v4501, %v4501
  %v4896 = vpack.c.bf16 %v4508, %v4508
  %v4897 = vpack.c.bf16 %v4515, %v4515
  %v4898 = vpack.c.bf16 %v4522, %v4522
  %v4899 = vpack.c.bf16 %v4529, %v4529
  %v4900 = vpack.c.bf16 %v4536, %v4536
  %v4901 = vpack.c.bf16 %v4543, %v4543
  %v4902 = vpack.c.bf16 %v4550, %v4550
  %v4903 = vpack.c.bf16 %v4557, %v4557
  %v4904 = vpack.c.bf16 %v4564, %v4564
  %v4905 = vpack.c.bf16 %v4571, %v4571
  %v4906 = vpack.c.bf16 %v4578, %v4578
  %v4907 = vpack.c.bf16 %v4585, %v4585
  %v4908 = vpack.c.bf16 %v4592, %v4592
  %v4909 = vpack.c.bf16 %v4599, %v4599
  %v4910 = vpack.c.bf16 %v4606, %v4606
  %v4911 = vpack.c.bf16 %v4613, %v4613
  %v4912 = vpack.c.bf16 %v4620, %v4620
  %v4913 = vpack.c.bf16 %v4627, %v4627
  %v4914 = vpack.c.bf16 %v4634, %v4634
  %v4915 = vpack.c.bf16 %v4641, %v4641
  %v4916 = vpack.c.bf16 %v4648, %v4648
  %v4917 = vpack.c.bf16 %v4655, %v4655
  %v4918 = vpack.c.bf16 %v4662, %v4662
  %v4919 = vpack.c.bf16 %v4669, %v4669
  %v4920 = vpack.c.bf16 %v4676, %v4676
  %v4921 = vpack.c.bf16 %v4683, %v4683
  %v4922 = vpack.c.bf16 %v4690, %v4690
  %v4923 = vpack.c.bf16 %v4697, %v4697
  %v4924 = vpack.c.bf16 %v4704, %v4704
  %v4925 = vpack.c.bf16 %v4711, %v4711
  %v4926 = vpack.c.bf16 %v4718, %v4718
  %v4927 = vpack.c.bf16 %v4725, %v4725
  %v4928 = vpack.c.bf16 %v4732, %v4732
  %v4929 = vpack.c.bf16 %v4739, %v4739
  %v4930 = vpack.c.bf16 %v4746, %v4746
  %v4931 = vpack.c.bf16 %v4753, %v4753
  %v4932 = vpack.c.bf16 %v4760, %v4760
  %v4933 = vpack.c.bf16 %v4767, %v4767
  %v4934 = vpack.c.bf16 %v4774, %v4774
  %v4935 = vpack.c.bf16 %v4781, %v4781
  %v4936 = vpack.c.bf16 %v4788, %v4788
  %v4937 = vpack.c.bf16 %v4795, %v4795
  %v4938 = vpack.c.bf16 %v4802, %v4802
  %v4939 = vpack.c.bf16 %v4809, %v4809
  %v4940 = vpack.c.bf16 %v4816, %v4816
  %v4941 = vpack.c.bf16 %v4823, %v4823
  %v4942 = vpack.c.bf16 %v4830, %v4830
  %v4943 = vpack.c.bf16 %v4837, %v4837
  %v4944 = vpack.c.bf16 %v4844, %v4844
  %v4945 = vpack.c.bf16 %v4851, %v4851
  %v4946 = vpack.c.bf16 %v4858, %v4858
  %v4947 = vpack.c.bf16 %v4865, %v4865
  %v4948 = vpack.c.bf16 %v4872, %v4872
  %v4949 = vpack.c.bf16 %v4879, %v4879
  %v4950 = vpack.c.bf16 %v4886, %v4886
  %v4951 = vld [vmem:[%s16] sm:$0xf]
  %v4952 = vld [vmem:[%s16 + $0x4] sm:$0xf]
  %v4953 = vld [vmem:[%s16 + $0x8] sm:$0xf]
  %v4954 = vld [vmem:[%s16 + $0xc] sm:$0xf]
  %v4955 = vld [vmem:[%s17] sm:$0xf]
  %v4956 = vld [vmem:[%s17 + $0x4] sm:$0xf]
  %v4959 = vunpack.c.l.b16 %v4955
  %v4960 = vunpack.c.l.b16 %v4956
  %v4961 = vpack.c.b16 %v4960, %v4959
  %4963 = vmatpush.bf16.msra.mxu0 0
  %4964 = vmatpush.bf16.msra.mxu0 0
  %4965 = vmatpush.bf16.msra.mxu0 0
  %4966 = vmatpush.bf16.msra.mxu0 0
  %4967 = vmatpush.bf16.msra.mxu0 0
  %4968 = vmatpush.bf16.msra.mxu0 0
  %4969 = vmatpush.bf16.msra.mxu0 0
  %4970 = vmatpush.bf16.msra.mxu0 %v4961
  %4971 = vmatmul.bf16.gmra.mxu0 %v444
  %v4972 = vpop.f32.mrf.mxu0
  %v4973 = vadd.f32 0.0, %v4972
  %v4974 = vpop.f32.mrf.mxu0
  %v4975 = vadd.f32 0.0, %v4974
  %4976 = vmatmul.bf16.gmra.mxu0 %v447
  %v4977 = vpop.f32.mrf.mxu0
  %v4978 = vadd.f32 0.0, %v4977
  %v4979 = vpop.f32.mrf.mxu0
  %v4980 = vadd.f32 0.0, %v4979
  %4981 = vmatmul.bf16.gmra.mxu0 %v450
  %v4982 = vpop.f32.mrf.mxu0
  %v4983 = vadd.f32 0.0, %v4982
  %v4984 = vpop.f32.mrf.mxu0
  %v4985 = vadd.f32 0.0, %v4984
  %4986 = vmatmul.bf16.gmra.mxu0 %v453
  %v4987 = vpop.f32.mrf.mxu0
  %v4988 = vadd.f32 0.0, %v4987
  %v4989 = vpop.f32.mrf.mxu0
  %v4990 = vadd.f32 0.0, %v4989
  %4991 = vdwg.mxu0
  %v5056 = vunpack.c.l.b16 %v4887
  %v5057 = vunpack.c.l.b16 %v4888
  %v5058 = vunpack.c.l.b16 %v4889
  %v5059 = vunpack.c.l.b16 %v4890
  %v5060 = vunpack.c.l.b16 %v4891
  %v5061 = vunpack.c.l.b16 %v4892
  %v5062 = vunpack.c.l.b16 %v4893
  %v5063 = vunpack.c.l.b16 %v4894
  %v5064 = vunpack.c.l.b16 %v4895
  %v5065 = vunpack.c.l.b16 %v4896
  %v5066 = vunpack.c.l.b16 %v4897
  %v5067 = vunpack.c.l.b16 %v4898
  %v5068 = vunpack.c.l.b16 %v4899
  %v5069 = vunpack.c.l.b16 %v4900
  %v5070 = vunpack.c.l.b16 %v4901
  %v5071 = vunpack.c.l.b16 %v4902
  %v5072 = vunpack.c.l.b16 %v4903
  %v5073 = vunpack.c.l.b16 %v4904
  %v5074 = vunpack.c.l.b16 %v4905
  %v5075 = vunpack.c.l.b16 %v4906
  %v5076 = vunpack.c.l.b16 %v4907
  %v5077 = vunpack.c.l.b16 %v4908
  %v5078 = vunpack.c.l.b16 %v4909
  %v5079 = vunpack.c.l.b16 %v4910
  %v5080 = vunpack.c.l.b16 %v4911
  %v5081 = vunpack.c.l.b16 %v4912
  %v5082 = vunpack.c.l.b16 %v4913
  %v5083 = vunpack.c.l.b16 %v4914
  %v5084 = vunpack.c.l.b16 %v4915
  %v5085 = vunpack.c.l.b16 %v4916
  %v5086 = vunpack.c.l.b16 %v4917
  %v5087 = vunpack.c.l.b16 %v4918
  %v5088 = vunpack.c.l.b16 %v4919
  %v5089 = vunpack.c.l.b16 %v4920
  %v5090 = vunpack.c.l.b16 %v4921
  %v5091 = vunpack.c.l.b16 %v4922
  %v5092 = vunpack.c.l.b16 %v4923
  %v5093 = vunpack.c.l.b16 %v4924
  %v5094 = vunpack.c.l.b16 %v4925
  %v5095 = vunpack.c.l.b16 %v4926
  %v5096 = vunpack.c.l.b16 %v4927
  %v5097 = vunpack.c.l.b16 %v4928
  %v5098 = vunpack.c.l.b16 %v4929
  %v5099 = vunpack.c.l.b16 %v4930
  %v5100 = vunpack.c.l.b16 %v4931
  %v5101 = vunpack.c.l.b16 %v4932
  %v5102 = vunpack.c.l.b16 %v4933
  %v5103 = vunpack.c.l.b16 %v4934
  %v5104 = vunpack.c.l.b16 %v4935
  %v5105 = vunpack.c.l.b16 %v4936
  %v5106 = vunpack.c.l.b16 %v4937
  %v5107 = vunpack.c.l.b16 %v4938
  %v5108 = vunpack.c.l.b16 %v4939
  %v5109 = vunpack.c.l.b16 %v4940
  %v5110 = vunpack.c.l.b16 %v4941
  %v5111 = vunpack.c.l.b16 %v4942
  %v5112 = vunpack.c.l.b16 %v4943
  %v5113 = vunpack.c.l.b16 %v4944
  %v5114 = vunpack.c.l.b16 %v4945
  %v5115 = vunpack.c.l.b16 %v4946
  %v5116 = vunpack.c.l.b16 %v4947
  %v5117 = vunpack.c.l.b16 %v4948
  %v5118 = vunpack.c.l.b16 %v4949
  %v5119 = vunpack.c.l.b16 %v4950
  %vm5120 = vcmask 1041409
  %v5121 = vsel %vm5120, %v5057, %v5056
  %vm5122 = vcmask 1042434
  %v5123 = vsel %vm5122, %v5058, %v5121
  %vm5124 = vcmask 1043459
  %v5125 = vsel %vm5124, %v5059, %v5123
  %vm5126 = vcmask 1044484
  %v5127 = vsel %vm5126, %v5060, %v5125
  %vm5128 = vcmask 1045509
  %v5129 = vsel %vm5128, %v5061, %v5127
  %vm5130 = vcmask 1046534
  %v5131 = vsel %vm5130, %v5062, %v5129
  %vm5132 = vcmask 1047559
  %v5133 = vsel %vm5132, %v5063, %v5131
  %v5134 = vsel %vm5120, %v5065, %v5064
  %v5135 = vsel %vm5122, %v5066, %v5134
  %v5136 = vsel %vm5124, %v5067, %v5135
  %v5137 = vsel %vm5126, %v5068, %v5136
  %v5138 = vsel %vm5128, %v5069, %v5137
  %v5139 = vsel %vm5130, %v5070, %v5138
  %v5140 = vsel %vm5132, %v5071, %v5139
  %v5141 = vsel %vm5120, %v5073, %v5072
  %v5142 = vsel %vm5122, %v5074, %v5141
  %v5143 = vsel %vm5124, %v5075, %v5142
  %v5144 = vsel %vm5126, %v5076, %v5143
  %v5145 = vsel %vm5128, %v5077, %v5144
  %v5146 = vsel %vm5130, %v5078, %v5145
  %v5147 = vsel %vm5132, %v5079, %v5146
  %v5148 = vsel %vm5120, %v5081, %v5080
  %v5149 = vsel %vm5122, %v5082, %v5148
  %v5150 = vsel %vm5124, %v5083, %v5149
  %v5151 = vsel %vm5126, %v5084, %v5150
  %v5152 = vsel %vm5128, %v5085, %v5151
  %v5153 = vsel %vm5130, %v5086, %v5152
  %v5154 = vsel %vm5132, %v5087, %v5153
  %v5155 = vsel %vm5120, %v5089, %v5088
  %v5156 = vsel %vm5122, %v5090, %v5155
  %v5157 = vsel %vm5124, %v5091, %v5156
  %v5158 = vsel %vm5126, %v5092, %v5157
  %v5159 = vsel %vm5128, %v5093, %v5158
  %v5160 = vsel %vm5130, %v5094, %v5159
  %v5161 = vsel %vm5132, %v5095, %v5160
  %v5162 = vsel %vm5120, %v5097, %v5096
  %v5163 = vsel %vm5122, %v5098, %v5162
  %v5164 = vsel %vm5124, %v5099, %v5163
  %v5165 = vsel %vm5126, %v5100, %v5164
  %v5166 = vsel %vm5128, %v5101, %v5165
  %v5167 = vsel %vm5130, %v5102, %v5166
  %v5168 = vsel %vm5132, %v5103, %v5167
  %v5169 = vsel %vm5120, %v5105, %v5104
  %v5170 = vsel %vm5122, %v5106, %v5169
  %v5171 = vsel %vm5124, %v5107, %v5170
  %v5172 = vsel %vm5126, %v5108, %v5171
  %v5173 = vsel %vm5128, %v5109, %v5172
  %v5174 = vsel %vm5130, %v5110, %v5173
  %v5175 = vsel %vm5132, %v5111, %v5174
  %v5176 = vsel %vm5120, %v5113, %v5112
  %v5177 = vsel %vm5122, %v5114, %v5176
  %v5178 = vsel %vm5124, %v5115, %v5177
  %v5179 = vsel %vm5126, %v5116, %v5178
  %v5180 = vsel %vm5128, %v5117, %v5179
  %v5181 = vsel %vm5130, %v5118, %v5180
  %v5182 = vsel %vm5132, %v5119, %v5181
  %v5183 = vpack.c.b16 %v5140, %v5133
  %v5184 = vpack.c.b16 %v5154, %v5147
  %v5185 = vpack.c.b16 %v5168, %v5161
  %v5186 = vpack.c.b16 %v5182, %v5175
  %v5191 = vunpack.c.l.b16 %v4951
  %v5192 = vunpack.c.l.b16 %v4952
  %v5193 = vunpack.c.l.b16 %v4953
  %v5194 = vunpack.c.l.b16 %v4954
  %v5195 = vpack.c.b16 %v5192, %v5191
  %v5196 = vpack.c.b16 %v5194, %v5193
  %v5200 = vsel %vm2398, %v5183, 0
  %v5203 = vsel %vm2398, %v5184, 0
  %v5206 = vsel %vm2398, %v5185, 0
  %v5209 = vsel %vm2398, %v5186, 0
  %5211 = vmatpush.bf16.msra.mxu0 0
  %5212 = vmatpush.bf16.msra.mxu0 0
  %5213 = vmatpush.bf16.msra.mxu0 0
  %5214 = vmatpush.bf16.msra.mxu0 0
  %5215 = vmatpush.bf16.msra.mxu0 0
  %5216 = vmatpush.bf16.msra.mxu0 0
  %5217 = vmatpush.bf16.msra.mxu0 %v5196
  %5218 = vmatpush.bf16.msra.mxu0 %v5195
  %5219 = vmatmul.bf16.gmra.mxu0 %v5200
  %v5220 = vpop.f32.mrf.mxu0
  %v5221 = vadd.f32 %v4973, %v5220
  %v5222 = vpop.f32.mrf.mxu0
  %v5223 = vadd.f32 %v4975, %v5222
  %5224 = vmatmul.bf16.gmra.mxu0 %v5203
  %v5225 = vpop.f32.mrf.mxu0
  %v5226 = vadd.f32 %v4978, %v5225
  %v5227 = vpop.f32.mrf.mxu0
  %v5228 = vadd.f32 %v4980, %v5227
  %5229 = vmatmul.bf16.gmra.mxu0 %v5206
  %v5230 = vpop.f32.mrf.mxu0
  %v5231 = vadd.f32 %v4983, %v5230
  %v5232 = vpop.f32.mrf.mxu0
  %v5233 = vadd.f32 %v4985, %v5232
  %5234 = vmatmul.bf16.gmra.mxu0 %v5209
  %v5235 = vpop.f32.mrf.mxu0
  %v5236 = vadd.f32 %v4988, %v5235
  %v5237 = vpop.f32.mrf.mxu0
  %v5238 = vadd.f32 %v4990, %v5237
  %5239 = vdwg.mxu0
  %v5240 = vld [vmem:[%s18] sm:$0x1]
  %v5242 = vperm.slane %v5240, 0
  %v5244 = vadd.f32 %v5221, %v5242
  %v5245 = vadd.f32 %v5223, %v5242
  %v5246 = vadd.f32 %v5226, %v5242
  %v5247 = vadd.f32 %v5228, %v5242
  %v5248 = vadd.f32 %v5231, %v5242
  %v5249 = vadd.f32 %v5233, %v5242
  %v5250 = vadd.f32 %v5236, %v5242
  %v5251 = vadd.f32 %v5238, %v5242
  %v5252 = vmax.f32 %v5244, 0.0
  %v5253 = vmax.f32 %v5245, 0.0
  %v5254 = vmax.f32 %v5246, 0.0
  %v5255 = vmax.f32 %v5247, 0.0
  %v5256 = vmax.f32 %v5248, 0.0
  %v5257 = vmax.f32 %v5249, 0.0
  %v5258 = vmax.f32 %v5250, 0.0
  %v5259 = vmax.f32 %v5251, 0.0
  %v5260 = vsel %vm2398, %v5252, 0.0
  %5261 = vadd.xlane.f32.xlu0 %v5260
  %v5262 = vpop.xlane.xlu0 %5261
  %v5263 = vsel %vm2398, %v5253, 0.0
  %5264 = vadd.xlane.f32.xlu0 %v5263
  %v5265 = vpop.xlane.xlu0 %5264
  %v5266 = vsel %vm2398, %v5254, 0.0
  %5267 = vadd.xlane.f32.xlu0 %v5266
  %v5268 = vpop.xlane.xlu0 %5267
  %v5269 = vsel %vm2398, %v5255, 0.0
  %5270 = vadd.xlane.f32.xlu0 %v5269
  %v5271 = vpop.xlane.xlu0 %5270
  %v5272 = vsel %vm2398, %v5256, 0.0
  %5273 = vadd.xlane.f32.xlu0 %v5272
  %v5274 = vpop.xlane.xlu0 %5273
  %v5275 = vsel %vm2398, %v5257, 0.0
  %5276 = vadd.xlane.f32.xlu0 %v5275
  %v5277 = vpop.xlane.xlu0 %5276
  %v5278 = vsel %vm2398, %v5258, 0.0
  %5279 = vadd.xlane.f32.xlu0 %v5278
  %v5280 = vpop.xlane.xlu0 %5279
  %v5281 = vsel %vm2398, %v5259, 0.0
  %5282 = vadd.xlane.f32.xlu0 %v5281
  %v5283 = vpop.xlane.xlu0 %5282
  %v5284 = vrcp.pop 32.0
  %v5285 = vmul.f32 32.0, %v5284
  %v5286 = vsub.f32 1.0, %v5285
  %v5287 = vmul.f32 %v5284, %v5286
  %v5288 = vadd.f32 %v5284, %v5287
  %vm5289 = vweird.f32 %v5284
  %v5290 = vsel %vm5289, %v5284, %v5288
  %v5291 = vmul.f32 %v5262, %v5290
  %v5292 = vmul.f32 %v5265, %v5290
  %v5293 = vmul.f32 %v5268, %v5290
  %v5294 = vmul.f32 %v5271, %v5290
  %v5295 = vmul.f32 %v5274, %v5290
  %v5296 = vmul.f32 %v5277, %v5290
  %v5297 = vmul.f32 %v5280, %v5290
  %v5298 = vmul.f32 %v5283, %v5290
  %v5299 = vsub.f32 %v5252, %v5291
  %v5300 = vsub.f32 %v5253, %v5292
  %v5301 = vsub.f32 %v5254, %v5293
  %v5302 = vsub.f32 %v5255, %v5294
  %v5303 = vsub.f32 %v5256, %v5295
  %v5304 = vsub.f32 %v5257, %v5296
  %v5305 = vsub.f32 %v5258, %v5297
  %v5306 = vsub.f32 %v5259, %v5298
  %v5307 = vmul.f32 %v5299, %v5299
  %v5308 = vmul.f32 %v5300, %v5300
  %v5309 = vmul.f32 %v5301, %v5301
  %v5310 = vmul.f32 %v5302, %v5302
  %v5311 = vmul.f32 %v5303, %v5303
  %v5312 = vmul.f32 %v5304, %v5304
  %v5313 = vmul.f32 %v5305, %v5305
  %v5314 = vmul.f32 %v5306, %v5306
  %v5315 = vsel %vm2398, %v5307, 0.0
  %5316 = vadd.xlane.f32.xlu0 %v5315
  %v5317 = vpop.xlane.xlu0 %5316
  %v5318 = vsel %vm2398, %v5308, 0.0
  %5319 = vadd.xlane.f32.xlu0 %v5318
  %v5320 = vpop.xlane.xlu0 %5319
  %v5321 = vsel %vm2398, %v5309, 0.0
  %5322 = vadd.xlane.f32.xlu0 %v5321
  %v5323 = vpop.xlane.xlu0 %5322
  %v5324 = vsel %vm2398, %v5310, 0.0
  %5325 = vadd.xlane.f32.xlu0 %v5324
  %v5326 = vpop.xlane.xlu0 %5325
  %v5327 = vsel %vm2398, %v5311, 0.0
  %5328 = vadd.xlane.f32.xlu0 %v5327
  %v5329 = vpop.xlane.xlu0 %5328
  %v5330 = vsel %vm2398, %v5312, 0.0
  %5331 = vadd.xlane.f32.xlu0 %v5330
  %v5332 = vpop.xlane.xlu0 %5331
  %v5333 = vsel %vm2398, %v5313, 0.0
  %5334 = vadd.xlane.f32.xlu0 %v5333
  %v5335 = vpop.xlane.xlu0 %5334
  %v5336 = vsel %vm2398, %v5314, 0.0
  %5337 = vadd.xlane.f32.xlu0 %v5336
  %v5338 = vpop.xlane.xlu0 %5337
  %v5339 = vmul.f32 %v5317, %v5290
  %v5340 = vmul.f32 %v5320, %v5290
  %v5341 = vmul.f32 %v5323, %v5290
  %v5342 = vmul.f32 %v5326, %v5290
  %v5343 = vmul.f32 %v5329, %v5290
  %v5344 = vmul.f32 %v5332, %v5290
  %v5345 = vmul.f32 %v5335, %v5290
  %v5346 = vmul.f32 %v5338, %v5290
  %v5347 = vadd.f32 %v5339, 1e-05
  %v5348 = vadd.f32 %v5340, 1e-05
  %v5349 = vadd.f32 %v5341, 1e-05
  %v5350 = vadd.f32 %v5342, 1e-05
  %v5351 = vadd.f32 %v5343, 1e-05
  %v5352 = vadd.f32 %v5344, 1e-05
  %v5353 = vadd.f32 %v5345, 1e-05
  %v5354 = vadd.f32 %v5346, 1e-05
  %v5355 = vrsqrt.pop %v5347
  %v5356 = vmul.f32 %v5355, %v5347
  %v5357 = vmul.f32 %v5356, %v5355
  %v5358 = vmul.f32 0.5, %v5357
  %v5359 = vsub.f32 1.5, %v5358
  %v5360 = vmul.f32 %v5355, %v5359
  %vm5361 = vweird.f32 %v5347
  %vm5362 = vweird.f32 %v5355
  %vm5363 = vmor %vm5361, %vm5362
  %v5364 = vsel %vm5363, %v5355, %v5360
  %v5365 = vrsqrt.pop %v5348
  %v5366 = vmul.f32 %v5365, %v5348
  %v5367 = vmul.f32 %v5366, %v5365
  %v5368 = vmul.f32 0.5, %v5367
  %v5369 = vsub.f32 1.5, %v5368
  %v5370 = vmul.f32 %v5365, %v5369
  %vm5371 = vweird.f32 %v5348
  %vm5372 = vweird.f32 %v5365
  %vm5373 = vmor %vm5371, %vm5372
  %v5374 = vsel %vm5373, %v5365, %v5370
  %v5375 = vrsqrt.pop %v5349
  %v5376 = vmul.f32 %v5375, %v5349
  %v5377 = vmul.f32 %v5376, %v5375
  %v5378 = vmul.f32 0.5, %v5377
  %v5379 = vsub.f32 1.5, %v5378
  %v5380 = vmul.f32 %v5375, %v5379
  %vm5381 = vweird.f32 %v5349
  %vm5382 = vweird.f32 %v5375
  %vm5383 = vmor %vm5381, %vm5382
  %v5384 = vsel %vm5383, %v5375, %v5380
  %v5385 = vrsqrt.pop %v5350
  %v5386 = vmul.f32 %v5385, %v5350
  %v5387 = vmul.f32 %v5386, %v5385
  %v5388 = vmul.f32 0.5, %v5387
  %v5389 = vsub.f32 1.5, %v5388
  %v5390 = vmul.f32 %v5385, %v5389
  %vm5391 = vweird.f32 %v5350
  %vm5392 = vweird.f32 %v5385
  %vm5393 = vmor %vm5391, %vm5392
  %v5394 = vsel %vm5393, %v5385, %v5390
  %v5395 = vrsqrt.pop %v5351
  %v5396 = vmul.f32 %v5395, %v5351
  %v5397 = vmul.f32 %v5396, %v5395
  %v5398 = vmul.f32 0.5, %v5397
  %v5399 = vsub.f32 1.5, %v5398
  %v5400 = vmul.f32 %v5395, %v5399
  %vm5401 = vweird.f32 %v5351
  %vm5402 = vweird.f32 %v5395
  %vm5403 = vmor %vm5401, %vm5402
  %v5404 = vsel %vm5403, %v5395, %v5400
  %v5405 = vrsqrt.pop %v5352
  %v5406 = vmul.f32 %v5405, %v5352
  %v5407 = vmul.f32 %v5406, %v5405
  %v5408 = vmul.f32 0.5, %v5407
  %v5409 = vsub.f32 1.5, %v5408
  %v5410 = vmul.f32 %v5405, %v5409
  %vm5411 = vweird.f32 %v5352
  %vm5412 = vweird.f32 %v5405
  %vm5413 = vmor %vm5411, %vm5412
  %v5414 = vsel %vm5413, %v5405, %v5410
  %v5415 = vrsqrt.pop %v5353
  %v5416 = vmul.f32 %v5415, %v5353
  %v5417 = vmul.f32 %v5416, %v5415
  %v5418 = vmul.f32 0.5, %v5417
  %v5419 = vsub.f32 1.5, %v5418
  %v5420 = vmul.f32 %v5415, %v5419
  %vm5421 = vweird.f32 %v5353
  %vm5422 = vweird.f32 %v5415
  %vm5423 = vmor %vm5421, %vm5422
  %v5424 = vsel %vm5423, %v5415, %v5420
  %v5425 = vrsqrt.pop %v5354
  %v5426 = vmul.f32 %v5425, %v5354
  %v5427 = vmul.f32 %v5426, %v5425
  %v5428 = vmul.f32 0.5, %v5427
  %v5429 = vsub.f32 1.5, %v5428
  %v5430 = vmul.f32 %v5425, %v5429
  %vm5431 = vweird.f32 %v5354
  %vm5432 = vweird.f32 %v5425
  %vm5433 = vmor %vm5431, %vm5432
  %v5434 = vsel %vm5433, %v5425, %v5430
  %v5435 = vmul.f32 %v5299, %v5364
  %v5436 = vmul.f32 %v5300, %v5374
  %v5437 = vmul.f32 %v5301, %v5384
  %v5438 = vmul.f32 %v5302, %v5394
  %v5439 = vmul.f32 %v5303, %v5404
  %v5440 = vmul.f32 %v5304, %v5414
  %v5441 = vmul.f32 %v5305, %v5424
  %v5442 = vmul.f32 %v5306, %v5434
  %v5443 = vld [vmem:[%s19] sm:$0x1]
  %v5445 = vperm.slane %v5443, 0
  %v5447 = vmul.f32 %v5435, %v5445
  %v5448 = vmul.f32 %v5436, %v5445
  %v5449 = vmul.f32 %v5437, %v5445
  %v5450 = vmul.f32 %v5438, %v5445
  %v5451 = vmul.f32 %v5439, %v5445
  %v5452 = vmul.f32 %v5440, %v5445
  %v5453 = vmul.f32 %v5441, %v5445
  %v5454 = vmul.f32 %v5442, %v5445
  %v5455 = vld [vmem:[%s20] sm:$0x1]
  %v5457 = vperm.slane %v5455, 0
  %v5459 = vadd.f32 %v5447, %v5457
  %v5460 = vadd.f32 %v5448, %v5457
  %v5461 = vadd.f32 %v5449, %v5457
  %v5462 = vadd.f32 %v5450, %v5457
  %v5463 = vadd.f32 %v5451, %v5457
  %v5464 = vadd.f32 %v5452, %v5457
  %v5465 = vadd.f32 %v5453, %v5457
  %v5466 = vadd.f32 %v5454, %v5457
  %5467 = vst.msk [vmem:[%s23] sm:$0xff] %vm2398, %v5459
  %5468 = vst.msk [vmem:[%s23 + $0x8] sm:$0xff] %vm2398, %v5460
  %5469 = vst.msk [vmem:[%s23 + $0x10] sm:$0xff] %vm2398, %v5461
  %5470 = vst.msk [vmem:[%s23 + $0x18] sm:$0xff] %vm2398, %v5462
  %5471 = vst.msk [vmem:[%s23 + $0x20] sm:$0xff] %vm2398, %v5463
  %5472 = vst.msk [vmem:[%s23 + $0x28] sm:$0xff] %vm2398, %v5464
  %5473 = vst.msk [vmem:[%s23 + $0x30] sm:$0xff] %vm2398, %v5465
  %5474 = vst.msk [vmem:[%s23 + $0x38] sm:$0xff] %vm2398, %v5466
  // Predicated region
  $region94: #{tpu_custom_call.1} parent=0 // pred_check
    _
  $region95: #{tpu_custom_call.1} parent=0 // pred_check_branch
    %5476 = sbr.rel (0) target = $region97
  $region96: #{tpu_custom_call.1} parent=0 // pred_region
    _
  $region97: #{tpu_custom_call.1} parent=0 // pred_fallthru
    _
  // Predicated region
  $region98: #{tpu_custom_call.1} parent=0 // pred_check
    _
  $region99: #{tpu_custom_call.1} parent=0 // pred_check_branch
    %5478 = sbr.rel (0) target = $region101
  $region100: #{tpu_custom_call.1} parent=0 // pred_region
    _
  $region101: #{tpu_custom_call.1} parent=0 // pred_fallthru
    _

// kernel: tpu_custom_call.1
$region0: #{tpu_custom_call.1}
  #allocation0 [shape = 'u32[]', space=smem, size = 0x4, offset = 0x4, fixed_abs, tag = 'smem constant byte address 0x4 - core index']
  #allocation1 [shape = 'u32[72,128]{1,0:T(1,128)}', space=vmem, size = 0x9000, scoped, tag = 'internal scratch']
  %s0 = inlined_call_operand.vmem [shape: f32[64,16], index: 0, kind: input, shape index: {}]
  %s1 = inlined_call_operand.vmem [shape: f32[64,8], index: 1, kind: input, shape index: {}]
  %s2 = inlined_call_operand.vmem [shape: f32[512,16], index: 2, kind: input, shape index: {}]
  %s3 = inlined_call_operand.vmem [shape: f32[512,8], index: 3, kind: input, shape index: {}]
  %s4 = inlined_call_operand.vmem [shape: f32[512,8], index: 4, kind: input, shape index: {}]
  %s5 = inlined_call_operand.vmem [shape: bf16[16,32], index: 5, kind: input, shape index: {}]
  %s6 = inlined_call_operand.vmem [shape: bf16[8,32], index: 6, kind: input, shape index: {}]
  %s7 = inlined_call_operand.vmem [shape: f32[1,32], index: 7, kind: input, shape index: {}]
  %s8 = inlined_call_operand.vmem [shape: bf16[16,32], index: 8, kind: input, shape index: {}]
  %s9 = inlined_call_operand.vmem [shape: bf16[8,32], index: 9, kind: input, shape index: {}]
  %s10 = inlined_call_operand.vmem [shape: bf16[8,32], index: 10, kind: input, shape index: {}]
  %s11 = inlined_call_operand.vmem [shape: f32[1,32], index: 11, kind: input, shape index: {}]
  %s12 = inlined_call_operand.vmem [shape: bf16[16,32], index: 12, kind: input, shape index: {}]
  %s13 = inlined_call_operand.vmem [shape: bf16[8,32], index: 13, kind: input, shape index: {}]
  %s14 = inlined_call_operand.vmem [shape: bf16[8,32], index: 14, kind: input, shape index: {}]
  %s15 = inlined_call_operand.vmem [shape: f32[1,32], index: 15, kind: input, shape index: {}]
  %s16 = inlined_call_operand.vmem [shape: bf16[32,32], index: 16, kind: input, shape index: {}]
  %s17 = inlined_call_operand.vmem [shape: bf16[16,32], index: 17, kind: input, shape index: {}]
  %s18 = inlined_call_operand.vmem [shape: f32[1,32], index: 18, kind: input, shape index: {}]
  %s19 = inlined_call_operand.vmem [shape: f32[1,32], index: 19, kind: input, shape index: {}]
  %s20 = inlined_call_operand.vmem [shape: f32[1,32], index: 20, kind: input, shape index: {}]
  %s21 = inlined_call_operand.vmem [shape: bf16[32,4], index: 21, kind: input, shape index: {}]
  %s22 = inlined_call_operand.vmem [shape: bf16[4,32], index: 22, kind: input, shape index: {}]
  %s23 = inlined_call_operand.vmem [shape: f32[64,32], index: 23, kind: output, shape index: {}]
  %s24 = sld [smem:[#allocation0]]
  $region102: #{tpu_custom_call.1} parent=0
    _
  %s26 = ssub.s32 1, %s24
  %s27 = scalar_select 0, %s26, %s24
  // Predicated region
  $region2: #{tpu_custom_call.1} parent=0 // pred_check
    _
  $region3: #{tpu_custom_call.1} parent=0 // pred_check_branch
    %29 = sbr.rel (0) target = $region5
  $region4: #{tpu_custom_call.1} parent=0 // pred_region
    _
  $region5: #{tpu_custom_call.1} parent=0 // pred_fallthru
    _
  // Predicated region
  $region6: #{tpu_custom_call.1} parent=0 // pred_check
    _
  $region7: #{tpu_custom_call.1} parent=0 // pred_check_branch
    %31 = sbr.rel (0) target = $region9
  $region8: #{tpu_custom_call.1} parent=0 // pred_region
    _
  $region9: #{tpu_custom_call.1} parent=0 // pred_fallthru
    _
  // Predicated region
  $region10: #{tpu_custom_call.1} parent=0 // pred_check
    _
  $region11: #{tpu_custom_call.1} parent=0 // pred_check_branch
    %33 = sbr.rel (0) target = $region13
  $region12: #{tpu_custom_call.1} parent=0 // pred_region
    _
  $region13: #{tpu_custom_call.1} parent=0 // pred_fallthru
    _
  // Predicated region
  $region14: #{tpu_custom_call.1} parent=0 // pred_check
    _
  $region15: #{tpu_custom_call.1} parent=0 // pred_check_branch
    %35 = sbr.rel (0) target = $region17
  $region16: #{tpu_custom_call.1} parent=0 // pred_region
    _
  $region17: #{tpu_custom_call.1} parent=0 // pred_fallthru
    _
  // Predicated region
  $region18: #{tpu_custom_call.1} parent=0 // pred_check
    _
  $region19: #{tpu_custom_call.1} parent=0 // pred_check_branch
    %37 = sbr.rel (0) target = $region21
  $region20: #{tpu_custom_call.1} parent=0 // pred_region
    _
  $region21: #{tpu_custom_call.1} parent=0 // pred_fallthru
    _
  // Predicated region
  $region22: #{tpu_custom_call.1} parent=0 // pred_check
    _
  $region23: #{tpu_custom_call.1} parent=0 // pred_check_branch
    %39 = sbr.rel (0) target = $region25
  $region24: #{tpu_custom_call.1} parent=0 // pred_region
    _
  $region25: #{tpu_custom_call.1} parent=0 // pred_fallthru
    _
  // Predicated region
  $region26: #{tpu_custom_call.1} parent=0 // pred_check
    _
  $region27: #{tpu_custom_call.1} parent=0 // pred_check_branch
    %41 = sbr.rel (0) target = $region29
  $region28: #{tpu_custom_call.1} parent=0 // pred_region
    _
  $region29: #{tpu_custom_call.1} parent=0 // pred_fallthru
    _
  // Predicated region
  $region30: #{tpu_custom_call.1} parent=0 // pred_check
    _
  $region31: #{tpu_custom_call.1} parent=0 // pred_check_branch
    %43 = sbr.rel (0) target = $region33
  $region32: #{tpu_custom_call.1} parent=0 // pred_region
    _
  $region33: #{tpu_custom_call.1} parent=0 // pred_fallthru
    _
  // Predicated region
  $region34: #{tpu_custom_call.1} parent=0 // pred_check
    _
  $region35: #{tpu_custom_call.1} parent=0 // pred_check_branch
    %45 = sbr.rel (0) target = $region37
  $region36: #{tpu_custom_call.1} parent=0 // pred_region
    _
  $region37: #{tpu_custom_call.1} parent=0 // pred_fallthru
    _
  // Predicated region
  $region38: #{tpu_custom_call.1} parent=0 // pred_check
    _
  $region39: #{tpu_custom_call.1} parent=0 // pred_check_branch
    %47 = sbr.rel (0) target = $region41
  $region40: #{tpu_custom_call.1} parent=0 // pred_region
    _
  $region41: #{tpu_custom_call.1} parent=0 // pred_fallthru
    _
  // Predicated region
  $region42: #{tpu_custom_call.1} parent=0 // pred_check
    _
  $region43: #{tpu_custom_call.1} parent=0 // pred_check_branch
    %49 = sbr.rel (0) target = $region45
  $region44: #{tpu_custom_call.1} parent=0 // pred_region
    _
  $region45: #{tpu_custom_call.1} parent=0 // pred_fallthru
    _
  // Predicated region
  $region46: #{tpu_custom_call.1} parent=0 // pred_check
    _
  $region47: #{tpu_custom_call.1} parent=0 // pred_check_branch
    %51 = sbr.rel (0) target = $region49
  $region48: #{tpu_custom_call.1} parent=0 // pred_region
    _
  $region49: #{tpu_custom_call.1} parent=0 // pred_fallthru
    _
  // Predicated region
  $region50: #{tpu_custom_call.1} parent=0 // pred_check
    _
  $region51: #{tpu_custom_call.1} parent=0 // pred_check_branch
    %53 = sbr.rel (0) target = $region53
  $region52: #{tpu_custom_call.1} parent=0 // pred_region
    _
  $region53: #{tpu_custom_call.1} parent=0 // pred_fallthru
    _
  // Predicated region
  $region54: #{tpu_custom_call.1} parent=0 // pred_check
    _
  $region55: #{tpu_custom_call.1} parent=0 // pred_check_branch
    %55 = sbr.rel (0) target = $region57
  $region56: #{tpu_custom_call.1} parent=0 // pred_region
    _
  $region57: #{tpu_custom_call.1} parent=0 // pred_fallthru
    _
  // Predicated region
  $region58: #{tpu_custom_call.1} parent=0 // pred_check
    _
  $region59: #{tpu_custom_call.1} parent=0 // pred_check_branch
    %57 = sbr.rel (0) target = $region61
  $region60: #{tpu_custom_call.1} parent=0 // pred_region
    _
  $region61: #{tpu_custom_call.1} parent=0 // pred_fallthru
    _
  // Predicated region
  $region62: #{tpu_custom_call.1} parent=0 // pred_check
    _
  $region63: #{tpu_custom_call.1} parent=0 // pred_check_branch
    %59 = sbr.rel (0) target = $region65
  $region64: #{tpu_custom_call.1} parent=0 // pred_region
    _
  $region65: #{tpu_custom_call.1} parent=0 // pred_fallthru
    _
  // Predicated region
  $region66: #{tpu_custom_call.1} parent=0 // pred_check
    _
  $region67: #{tpu_custom_call.1} parent=0 // pred_check_branch
    %61 = sbr.rel (0) target = $region69
  $region68: #{tpu_custom_call.1} parent=0 // pred_region
    _
  $region69: #{tpu_custom_call.1} parent=0 // pred_fallthru
    _
  // Predicated region
  $region70: #{tpu_custom_call.1} parent=0 // pred_check
    _
  $region71: #{tpu_custom_call.1} parent=0 // pred_check_branch
    %63 = sbr.rel (0) target = $region73
  $region72: #{tpu_custom_call.1} parent=0 // pred_region
    _
  $region73: #{tpu_custom_call.1} parent=0 // pred_fallthru
    _
  // Predicated region
  $region74: #{tpu_custom_call.1} parent=0 // pred_check
    _
  $region75: #{tpu_custom_call.1} parent=0 // pred_check_branch
    %65 = sbr.rel (0) target = $region77
  $region76: #{tpu_custom_call.1} parent=0 // pred_region
    _
  $region77: #{tpu_custom_call.1} parent=0 // pred_fallthru
    _
  // Predicated region
  $region78: #{tpu_custom_call.1} parent=0 // pred_check
    _
  $region79: #{tpu_custom_call.1} parent=0 // pred_check_branch
    %67 = sbr.rel (0) target = $region81
  $region80: #{tpu_custom_call.1} parent=0 // pred_region
    _
  $region81: #{tpu_custom_call.1} parent=0 // pred_fallthru
    _
  // Predicated region
  $region82: #{tpu_custom_call.1} parent=0 // pred_check
    _
  $region83: #{tpu_custom_call.1} parent=0 // pred_check_branch
    %69 = sbr.rel (0) target = $region85
  $region84: #{tpu_custom_call.1} parent=0 // pred_region
    _
  $region85: #{tpu_custom_call.1} parent=0 // pred_fallthru
    _
  // Predicated region
  $region86: #{tpu_custom_call.1} parent=0 // pred_check
    _
  $region87: #{tpu_custom_call.1} parent=0 // pred_check_branch
    %71 = sbr.rel (0) target = $region89
  $region88: #{tpu_custom_call.1} parent=0 // pred_region
    _
  $region89: #{tpu_custom_call.1} parent=0 // pred_fallthru
    _
  // Predicated region
  $region90: #{tpu_custom_call.1} parent=0 // pred_check
    _
  $region91: #{tpu_custom_call.1} parent=0 // pred_check_branch
    %73 = sbr.rel (0) target = $region93
  $region92: #{tpu_custom_call.1} parent=0 // pred_region
    _
  $region93: #{tpu_custom_call.1} parent=0 // pred_fallthru
    _
  %v75 = vld [vmem:[%s0] sm:$0xff]
  %v76 = vld [vmem:[%s0 + $0x8] sm:$0xff]
  %v77 = vld [vmem:[%s0 + $0x10] sm:$0xff]
  %v78 = vld [vmem:[%s0 + $0x18] sm:$0xff]
  %v79 = vld [vmem:[%s0 + $0x20] sm:$0xff]
  %v80 = vld [vmem:[%s0 + $0x28] sm:$0xff]
  %v81 = vld [vmem:[%s0 + $0x30] sm:$0xff]
  %v82 = vld [vmem:[%s0 + $0x38] sm:$0xff]
  %v83 = vpack.c.bf16 %v76, %v75
  %v84 = vpack.c.bf16 %v78, %v77
  %v85 = vpack.c.bf16 %v80, %v79
  %v86 = vpack.c.bf16 %v82, %v81
  %v87 = vld [vmem:[%s1] sm:$0xff]
  %v88 = vld [vmem:[%s1 + $0x8] sm:$0xff]
  %v89 = vld [vmem:[%s1 + $0x10] sm:$0xff]
  %v90 = vld [vmem:[%s1 + $0x18] sm:$0xff]
  %v91 = vld [vmem:[%s1 + $0x20] sm:$0xff]
  %v92 = vld [vmem:[%s1 + $0x28] sm:$0xff]
  %v93 = vld [vmem:[%s1 + $0x30] sm:$0xff]
  %v94 = vld [vmem:[%s1 + $0x38] sm:$0xff]
  %v95 = vpack.c.bf16 %v88, %v87
  %v96 = vpack.c.bf16 %v90, %v89
  %v97 = vpack.c.bf16 %v92, %v91
  %v98 = vpack.c.bf16 %v94, %v93
  %v99 = vld [vmem:[%s2] sm:$0xff]
  %v100 = vld [vmem:[%s2 + $0x8] sm:$0xff]
  %v101 = vld [vmem:[%s2 + $0x10] sm:$0xff]
  %v102 = vld [vmem:[%s2 + $0x18] sm:$0xff]
  %v103 = vld [vmem:[%s2 + $0x20] sm:$0xff]
  %v104 = vld [vmem:[%s2 + $0x28] sm:$0xff]
  %v105 = vld [vmem:[%s2 + $0x30] sm:$0xff]
  %v106 = vld [vmem:[%s2 + $0x38] sm:$0xff]
  %v107 = vld [vmem:[%s2 + $0x40] sm:$0xff]
  %v108 = vld [vmem:[%s2 + $0x48] sm:$0xff]
  %v109 = vld [vmem:[%s2 + $0x50] sm:$0xff]
  %v110 = vld [vmem:[%s2 + $0x58] sm:$0xff]
  %v111 = vld [vmem:[%s2 + $0x60] sm:$0xff]
  %v112 = vld [vmem:[%s2 + $0x68] sm:$0xff]
  %v113 = vld [vmem:[%s2 + $0x70] sm:$0xff]
  %v114 = vld [vmem:[%s2 + $0x78] sm:$0xff]
  %v115 = vld [vmem:[%s2 + $0x80] sm:$0xff]
  %v116 = vld [vmem:[%s2 + $0x88] sm:$0xff]
  %v117 = vld [vmem:[%s2 + $0x90] sm:$0xff]
  %v118 = vld [vmem:[%s2 + $0x98] sm:$0xff]
  %v119 = vld [vmem:[%s2 + $0xa0] sm:$0xff]
  %v120 = vld [vmem:[%s2 + $0xa8] sm:$0xff]
  %v121 = vld [vmem:[%s2 + $0xb0] sm:$0xff]
  %v122 = vld [vmem:[%s2 + $0xb8] sm:$0xff]
  %v123 = vld [vmem:[%s2 + $0xc0] sm:$0xff]
  %v124 = vld [vmem:[%s2 + $0xc8] sm:$0xff]
  %v125 = vld [vmem:[%s2 + $0xd0] sm:$0xff]
  %v126 = vld [vmem:[%s2 + $0xd8] sm:$0xff]
  %v127 = vld [vmem:[%s2 + $0xe0] sm:$0xff]
  %v128 = vld [vmem:[%s2 + $0xe8] sm:$0xff]
  %v129 = vld [vmem:[%s2 + $0xf0] sm:$0xff]
  %v130 = vld [vmem:[%s2 + $0xf8] sm:$0xff]
  %v131 = vld [vmem:[%s2 + $0x100] sm:$0xff]
  %v132 = vld [vmem:[%s2 + $0x108] sm:$0xff]
  %v133 = vld [vmem:[%s2 + $0x110] sm:$0xff]
  %v134 = vld [vmem:[%s2 + $0x118] sm:$0xff]
  %v135 = vld [vmem:[%s2 + $0x120] sm:$0xff]
  %v136 = vld [vmem:[%s2 + $0x128] sm:$0xff]
  %v137 = vld [vmem:[%s2 + $0x130] sm:$0xff]
  %v138 = vld [vmem:[%s2 + $0x138] sm:$0xff]
  %v139 = vld [vmem:[%s2 + $0x140] sm:$0xff]
  %v140 = vld [vmem:[%s2 + $0x148] sm:$0xff]
  %v141 = vld [vmem:[%s2 + $0x150] sm:$0xff]
  %v142 = vld [vmem:[%s2 + $0x158] sm:$0xff]
  %v143 = vld [vmem:[%s2 + $0x160] sm:$0xff]
  %v144 = vld [vmem:[%s2 + $0x168] sm:$0xff]
  %v145 = vld [vmem:[%s2 + $0x170] sm:$0xff]
  %v146 = vld [vmem:[%s2 + $0x178] sm:$0xff]
  %v147 = vld [vmem:[%s2 + $0x180] sm:$0xff]
  %v148 = vld [vmem:[%s2 + $0x188] sm:$0xff]
  %v149 = vld [vmem:[%s2 + $0x190] sm:$0xff]
  %v150 = vld [vmem:[%s2 + $0x198] sm:$0xff]
  %v151 = vld [vmem:[%s2 + $0x1a0] sm:$0xff]
  %v152 = vld [vmem:[%s2 + $0x1a8] sm:$0xff]
  %v153 = vld [vmem:[%s2 + $0x1b0] sm:$0xff]
  %v154 = vld [vmem:[%s2 + $0x1b8] sm:$0xff]
  %v155 = vld [vmem:[%s2 + $0x1c0] sm:$0xff]
  %v156 = vld [vmem:[%s2 + $0x1c8] sm:$0xff]
  %v157 = vld [vmem:[%s2 + $0x1d0] sm:$0xff]
  %v158 = vld [vmem:[%s2 + $0x1d8] sm:$0xff]
  %v159 = vld [vmem:[%s2 + $0x1e0] sm:$0xff]
  %v160 = vld [vmem:[%s2 + $0x1e8] sm:$0xff]
  %v161 = vld [vmem:[%s2 + $0x1f0] sm:$0xff]
  %v162 = vld [vmem:[%s2 + $0x1f8] sm:$0xff]
  %v163 = vpack.c.bf16 %v100, %v99
  %v164 = vpack.c.bf16 %v102, %v101
  %v165 = vpack.c.bf16 %v104, %v103
  %v166 = vpack.c.bf16 %v106, %v105
  %v167 = vpack.c.bf16 %v108, %v107
  %v168 = vpack.c.bf16 %v110, %v109
  %v169 = vpack.c.bf16 %v112, %v111
  %v170 = vpack.c.bf16 %v114, %v113
  %v171 = vpack.c.bf16 %v116, %v115
  %v172 = vpack.c.bf16 %v118, %v117
  %v173 = vpack.c.bf16 %v120, %v119
  %v174 = vpack.c.bf16 %v122, %v121
  %v175 = vpack.c.bf16 %v124, %v123
  %v176 = vpack.c.bf16 %v126, %v125
  %v177 = vpack.c.bf16 %v128, %v127
  %v178 = vpack.c.bf16 %v130, %v129
  %v179 = vpack.c.bf16 %v132, %v131
  %v180 = vpack.c.bf16 %v134, %v133
  %v181 = vpack.c.bf16 %v136, %v135
  %v182 = vpack.c.bf16 %v138, %v137
  %v183 = vpack.c.bf16 %v140, %v139
  %v184 = vpack.c.bf16 %v142, %v141
  %v185 = vpack.c.bf16 %v144, %v143
  %v186 = vpack.c.bf16 %v146, %v145
  %v187 = vpack.c.bf16 %v148, %v147
  %v188 = vpack.c.bf16 %v150, %v149
  %v189 = vpack.c.bf16 %v152, %v151
  %v190 = vpack.c.bf16 %v154, %v153
  %v191 = vpack.c.bf16 %v156, %v155
  %v192 = vpack.c.bf16 %v158, %v157
  %v193 = vpack.c.bf16 %v160, %v159
  %v194 = vpack.c.bf16 %v162, %v161
  %v195 = vld [vmem:[%s3] sm:$0xff]
  %v196 = vld [vmem:[%s3 + $0x8] sm:$0xff]
  %v197 = vld [vmem:[%s3 + $0x10] sm:$0xff]
  %v198 = vld [vmem:[%s3 + $0x18] sm:$0xff]
  %v199 = vld [vmem:[%s3 + $0x20] sm:$0xff]
  %v200 = vld [vmem:[%s3 + $0x28] sm:$0xff]
  %v201 = vld [vmem:[%s3 + $0x30] sm:$0xff]
  %v202 = vld [vmem:[%s3 + $0x38] sm:$0xff]
  %v203 = vld [vmem:[%s3 + $0x40] sm:$0xff]
  %v204 = vld [vmem:[%s3 + $0x48] sm:$0xff]
  %v205 = vld [vmem:[%s3 + $0x50] sm:$0xff]
  %v206 = vld [vmem:[%s3 + $0x58] sm:$0xff]
  %v207 = vld [vmem:[%s3 + $0x60] sm:$0xff]
  %v208 = vld [vmem:[%s3 + $0x68] sm:$0xff]
  %v209 = vld [vmem:[%s3 + $0x70] sm:$0xff]
  %v210 = vld [vmem:[%s3 + $0x78] sm:$0xff]
  %v211 = vld [vmem:[%s3 + $0x80] sm:$0xff]
  %v212 = vld [vmem:[%s3 + $0x88] sm:$0xff]
  %v213 = vld [vmem:[%s3 + $0x90] sm:$0xff]
  %v214 = vld [vmem:[%s3 + $0x98] sm:$0xff]
  %v215 = vld [vmem:[%s3 + $0xa0] sm:$0xff]
  %v216 = vld [vmem:[%s3 + $0xa8] sm:$0xff]
  %v217 = vld [vmem:[%s3 + $0xb0] sm:$0xff]
  %v218 = vld [vmem:[%s3 + $0xb8] sm:$0xff]
  %v219 = vld [vmem:[%s3 + $0xc0] sm:$0xff]
  %v220 = vld [vmem:[%s3 + $0xc8] sm:$0xff]
  %v221 = vld [vmem:[%s3 + $0xd0] sm:$0xff]
  %v222 = vld [vmem:[%s3 + $0xd8] sm:$0xff]
  %v223 = vld [vmem:[%s3 + $0xe0] sm:$0xff]
  %v224 = vld [vmem:[%s3 + $0xe8] sm:$0xff]
  %v225 = vld [vmem:[%s3 + $0xf0] sm:$0xff]
  %v226 = vld [vmem:[%s3 + $0xf8] sm:$0xff]
  %v227 = vld [vmem:[%s3 + $0x100] sm:$0xff]
  %v228 = vld [vmem:[%s3 + $0x108] sm:$0xff]
  %v229 = vld [vmem:[%s3 + $0x110] sm:$0xff]
  %v230 = vld [vmem:[%s3 + $0x118] sm:$0xff]
  %v231 = vld [vmem:[%s3 + $0x120] sm:$0xff]
  %v232 = vld [vmem:[%s3 + $0x128] sm:$0xff]
  %v233 = vld [vmem:[%s3 + $0x130] sm:$0xff]
  %v234 = vld [vmem:[%s3 + $0x138] sm:$0xff]
  %v235 = vld [vmem:[%s3 + $0x140] sm:$0xff]
  %v236 = vld [vmem:[%s3 + $0x148] sm:$0xff]
  %v237 = vld [vmem:[%s3 + $0x150] sm:$0xff]
  %v238 = vld [vmem:[%s3 + $0x158] sm:$0xff]
  %v239 = vld [vmem:[%s3 + $0x160] sm:$0xff]
  %v240 = vld [vmem:[%s3 + $0x168] sm:$0xff]
  %v241 = vld [vmem:[%s3 + $0x170] sm:$0xff]
  %v242 = vld [vmem:[%s3 + $0x178] sm:$0xff]
  %v243 = vld [vmem:[%s3 + $0x180] sm:$0xff]
  %v244 = vld [vmem:[%s3 + $0x188] sm:$0xff]
  %v245 = vld [vmem:[%s3 + $0x190] sm:$0xff]
  %v246 = vld [vmem:[%s3 + $0x198] sm:$0xff]
  %v247 = vld [vmem:[%s3 + $0x1a0] sm:$0xff]
  %v248 = vld [vmem:[%s3 + $0x1a8] sm:$0xff]
  %v249 = vld [vmem:[%s3 + $0x1b0] sm:$0xff]
  %v250 = vld [vmem:[%s3 + $0x1b8] sm:$0xff]
  %v251 = vld [vmem:[%s3 + $0x1c0] sm:$0xff]
  %v252 = vld [vmem:[%s3 + $0x1c8] sm:$0xff]
  %v253 = vld [vmem:[%s3 + $0x1d0] sm:$0xff]
  %v254 = vld [vmem:[%s3 + $0x1d8] sm:$0xff]
  %v255 = vld [vmem:[%s3 + $0x1e0] sm:$0xff]
  %v256 = vld [vmem:[%s3 + $0x1e8] sm:$0xff]
  %v257 = vld [vmem:[%s3 + $0x1f0] sm:$0xff]
  %v258 = vld [vmem:[%s3 + $0x1f8] sm:$0xff]
  %v259 = vpack.c.bf16 %v196, %v195
  %v260 = vpack.c.bf16 %v198, %v197
  %v261 = vpack.c.bf16 %v200, %v199
  %v262 = vpack.c.bf16 %v202, %v201
  %v263 = vpack.c.bf16 %v204, %v203
  %v264 = vpack.c.bf16 %v206, %v205
  %v265 = vpack.c.bf16 %v208, %v207
  %v266 = vpack.c.bf16 %v210, %v209
  %v267 = vpack.c.bf16 %v212, %v211
  %v268 = vpack.c.bf16 %v214, %v213
  %v269 = vpack.c.bf16 %v216, %v215
  %v270 = vpack.c.bf16 %v218, %v217
  %v271 = vpack.c.bf16 %v220, %v219
  %v272 = vpack.c.bf16 %v222, %v221
  %v273 = vpack.c.bf16 %v224, %v223
  %v274 = vpack.c.bf16 %v226, %v225
  %v275 = vpack.c.bf16 %v228, %v227
  %v276 = vpack.c.bf16 %v230, %v229
  %v277 = vpack.c.bf16 %v232, %v231
  %v278 = vpack.c.bf16 %v234, %v233
  %v279 = vpack.c.bf16 %v236, %v235
  %v280 = vpack.c.bf16 %v238, %v237
  %v281 = vpack.c.bf16 %v240, %v239
  %v282 = vpack.c.bf16 %v242, %v241
  %v283 = vpack.c.bf16 %v244, %v243
  %v284 = vpack.c.bf16 %v246, %v245
  %v285 = vpack.c.bf16 %v248, %v247
  %v286 = vpack.c.bf16 %v250, %v249
  %v287 = vpack.c.bf16 %v252, %v251
  %v288 = vpack.c.bf16 %v254, %v253
  %v289 = vpack.c.bf16 %v256, %v255
  %v290 = vpack.c.bf16 %v258, %v257
  %v291 = vld [vmem:[%s4] sm:$0xff]
  %v292 = vld [vmem:[%s4 + $0x8] sm:$0xff]
  %v293 = vld [vmem:[%s4 + $0x10] sm:$0xff]
  %v294 = vld [vmem:[%s4 + $0x18] sm:$0xff]
  %v295 = vld [vmem:[%s4 + $0x20] sm:$0xff]
  %v296 = vld [vmem:[%s4 + $0x28] sm:$0xff]
  %v297 = vld [vmem:[%s4 + $0x30] sm:$0xff]
  %v298 = vld [vmem:[%s4 + $0x38] sm:$0xff]
  %v299 = vld [vmem:[%s4 + $0x40] sm:$0xff]
  %v300 = vld [vmem:[%s4 + $0x48] sm:$0xff]
  %v301 = vld [vmem:[%s4 + $0x50] sm:$0xff]
  %v302 = vld [vmem:[%s4 + $0x58] sm:$0xff]
  %v303 = vld [vmem:[%s4 + $0x60] sm:$0xff]
  %v304 = vld [vmem:[%s4 + $0x68] sm:$0xff]
  %v305 = vld [vmem:[%s4 + $0x70] sm:$0xff]
  %v306 = vld [vmem:[%s4 + $0x78] sm:$0xff]
  %v307 = vld [vmem:[%s4 + $0x80] sm:$0xff]
  %v308 = vld [vmem:[%s4 + $0x88] sm:$0xff]
  %v309 = vld [vmem:[%s4 + $0x90] sm:$0xff]
  %v310 = vld [vmem:[%s4 + $0x98] sm:$0xff]
  %v311 = vld [vmem:[%s4 + $0xa0] sm:$0xff]
  %v312 = vld [vmem:[%s4 + $0xa8] sm:$0xff]
  %v313 = vld [vmem:[%s4 + $0xb0] sm:$0xff]
  %v314 = vld [vmem:[%s4 + $0xb8] sm:$0xff]
  %v315 = vld [vmem:[%s4 + $0xc0] sm:$0xff]
  %v316 = vld [vmem:[%s4 + $0xc8] sm:$0xff]
  %v317 = vld [vmem:[%s4 + $0xd0] sm:$0xff]
  %v318 = vld [vmem:[%s4 + $0xd8] sm:$0xff]
  %v319 = vld [vmem:[%s4 + $0xe0] sm:$0xff]
  %v320 = vld [vmem:[%s4 + $0xe8] sm:$0xff]
  %v321 = vld [vmem:[%s4 + $0xf0] sm:$0xff]
  %v322 = vld [vmem:[%s4 + $0xf8] sm:$0xff]
  %v323 = vld [vmem:[%s4 + $0x100] sm:$0xff]
  %v324 = vld [vmem:[%s4 + $0x108] sm:$0xff]
  %v325 = vld [vmem:[%s4 + $0x110] sm:$0xff]
  %v326 = vld [vmem:[%s4 + $0x118] sm:$0xff]
  %v327 = vld [vmem:[%s4 + $0x120] sm:$0xff]
  %v328 = vld [vmem:[%s4 + $0x128] sm:$0xff]
  %v329 = vld [vmem:[%s4 + $0x130] sm:$0xff]
  %v330 = vld [vmem:[%s4 + $0x138] sm:$0xff]
  %v331 = vld [vmem:[%s4 + $0x140] sm:$0xff]
  %v332 = vld [vmem:[%s4 + $0x148] sm:$0xff]
  %v333 = vld [vmem:[%s4 + $0x150] sm:$0xff]
  %v334 = vld [vmem:[%s4 + $0x158] sm:$0xff]
  %v335 = vld [vmem:[%s4 + $0x160] sm:$0xff]
  %v336 = vld [vmem:[%s4 + $0x168] sm:$0xff]
  %v337 = vld [vmem:[%s4 + $0x170] sm:$0xff]
  %v338 = vld [vmem:[%s4 + $0x178] sm:$0xff]
  %v339 = vld [vmem:[%s4 + $0x180] sm:$0xff]
  %v340 = vld [vmem:[%s4 + $0x188] sm:$0xff]
  %v341 = vld [vmem:[%s4 + $0x190] sm:$0xff]
  %v342 = vld [vmem:[%s4 + $0x198] sm:$0xff]
  %v343 = vld [vmem:[%s4 + $0x1a0] sm:$0xff]
  %v344 = vld [vmem:[%s4 + $0x1a8] sm:$0xff]
  %v345 = vld [vmem:[%s4 + $0x1b0] sm:$0xff]
  %v346 = vld [vmem:[%s4 + $0x1b8] sm:$0xff]
  %v347 = vld [vmem:[%s4 + $0x1c0] sm:$0xff]
  %v348 = vld [vmem:[%s4 + $0x1c8] sm:$0xff]
  %v349 = vld [vmem:[%s4 + $0x1d0] sm:$0xff]
  %v350 = vld [vmem:[%s4 + $0x1d8] sm:$0xff]
  %v351 = vld [vmem:[%s4 + $0x1e0] sm:$0xff]
  %v352 = vld [vmem:[%s4 + $0x1e8] sm:$0xff]
  %v353 = vld [vmem:[%s4 + $0x1f0] sm:$0xff]
  %v354 = vld [vmem:[%s4 + $0x1f8] sm:$0xff]
  %v355 = vpack.c.bf16 %v292, %v291
  %v356 = vpack.c.bf16 %v294, %v293
  %v357 = vpack.c.bf16 %v296, %v295
  %v358 = vpack.c.bf16 %v298, %v297
  %v359 = vpack.c.bf16 %v300, %v299
  %v360 = vpack.c.bf16 %v302, %v301
  %v361 = vpack.c.bf16 %v304, %v303
  %v362 = vpack.c.bf16 %v306, %v305
  %v363 = vpack.c.bf16 %v308, %v307
  %v364 = vpack.c.bf16 %v310, %v309
  %v365 = vpack.c.bf16 %v312, %v311
  %v366 = vpack.c.bf16 %v314, %v313
  %v367 = vpack.c.bf16 %v316, %v315
  %v368 = vpack.c.bf16 %v318, %v317
  %v369 = vpack.c.bf16 %v320, %v319
  %v370 = vpack.c.bf16 %v322, %v321
  %v371 = vpack.c.bf16 %v324, %v323
  %v372 = vpack.c.bf16 %v326, %v325
  %v373 = vpack.c.bf16 %v328, %v327
  %v374 = vpack.c.bf16 %v330, %v329
  %v375 = vpack.c.bf16 %v332, %v331
  %v376 = vpack.c.bf16 %v334, %v333
  %v377 = vpack.c.bf16 %v336, %v335
  %v378 = vpack.c.bf16 %v338, %v337
  %v379 = vpack.c.bf16 %v340, %v339
  %v380 = vpack.c.bf16 %v342, %v341
  %v381 = vpack.c.bf16 %v344, %v343
  %v382 = vpack.c.bf16 %v346, %v345
  %v383 = vpack.c.bf16 %v348, %v347
  %v384 = vpack.c.bf16 %v350, %v349
  %v385 = vpack.c.bf16 %v352, %v351
  %v386 = vpack.c.bf16 %v354, %v353
  %v387 = vld [vmem:[%s5] sm:$0xf]
  %v388 = vld [vmem:[%s5 + $0x4] sm:$0xf]
  %v389 = vld [vmem:[%s6] sm:$0xf]
  %vm390 = vcmask 64512
  %v392 = vsel %vm390, %v95, 0
  %v395 = vsel %vm390, %v96, 0
  %v398 = vsel %vm390, %v97, 0
  %v401 = vsel %vm390, %v98, 0
  %vm403 = vcmask 1043456
  %v405 = vsel %vm403, %v389, 0
  %407 = vmatpush.bf16.msra.mxu0 0
  %408 = vmatpush.bf16.msra.mxu0 0
  %409 = vmatpush.bf16.msra.mxu0 0
  %410 = vmatpush.bf16.msra.mxu0 0
  %411 = vmatpush.bf16.msra.mxu0 0
  %412 = vmatpush.bf16.msra.mxu0 0
  %413 = vmatpush.bf16.msra.mxu0 0
  %414 = vmatpush.bf16.msra.mxu0 %v405
  %415 = vmatmul.bf16.gmra.mxu0 %v392
  %v416 = vpop.f32.mrf.mxu0
  %v417 = vadd.f32 0.0, %v416
  %v418 = vpop.f32.mrf.mxu0
  %v419 = vadd.f32 0.0, %v418
  %420 = vmatmul.bf16.gmra.mxu0 %v395
  %v421 = vpop.f32.mrf.mxu0
  %v422 = vadd.f32 0.0, %v421
  %v423 = vpop.f32.mrf.mxu0
  %v424 = vadd.f32 0.0, %v423
  %425 = vmatmul.bf16.gmra.mxu0 %v398
  %v426 = vpop.f32.mrf.mxu0
  %v427 = vadd.f32 0.0, %v426
  %v428 = vpop.f32.mrf.mxu0
  %v429 = vadd.f32 0.0, %v428
  %430 = vmatmul.bf16.gmra.mxu0 %v401
  %v431 = vpop.f32.mrf.mxu0
  %v432 = vadd.f32 0.0, %v431
  %v433 = vpop.f32.mrf.mxu0
  %v434 = vadd.f32 0.0, %v433
  %435 = vdwg.mxu0
  %v438 = vunpack.c.l.b16 %v387
  %v439 = vunpack.c.l.b16 %v388
  %v440 = vpack.c.b16 %v439, %v438
  %vm442 = vcmask 130048
  %v444 = vsel %vm442, %v83, 0
  %v447 = vsel %vm442, %v84, 0
  %v450 = vsel %vm442, %v85, 0
  %v453 = vsel %vm442, %v86, 0
  %455 = vmatpush.bf16.msra.mxu0 0
  %456 = vmatpush.bf16.msra.mxu0 0
  %457 = vmatpush.bf16.msra.mxu0 0
  %458 = vmatpush.bf16.msra.mxu0 0
  %459 = vmatpush.bf16.msra.mxu0 0
  %460 = vmatpush.bf16.msra.mxu0 0
  %461 = vmatpush.bf16.msra.mxu0 0
  %462 = vmatpush.bf16.msra.mxu0 %v440
  %463 = vmatmul.bf16.gmra.mxu0 %v444
  %v464 = vpop.f32.mrf.mxu0
  %v465 = vadd.f32 %v417, %v464
  %v466 = vpop.f32.mrf.mxu0
  %v467 = vadd.f32 %v419, %v466
  %468 = vmatmul.bf16.gmra.mxu0 %v447
  %v469 = vpop.f32.mrf.mxu0
  %v470 = vadd.f32 %v422, %v469
  %v471 = vpop.f32.mrf.mxu0
  %v472 = vadd.f32 %v424, %v471
  %473 = vmatmul.bf16.gmra.mxu0 %v450
  %v474 = vpop.f32.mrf.mxu0
  %v475 = vadd.f32 %v427, %v474
  %v476 = vpop.f32.mrf.mxu0
  %v477 = vadd.f32 %v429, %v476
  %478 = vmatmul.bf16.gmra.mxu0 %v453
  %v479 = vpop.f32.mrf.mxu0
  %v480 = vadd.f32 %v432, %v479
  %v481 = vpop.f32.mrf.mxu0
  %v482 = vadd.f32 %v434, %v481
  %483 = vdwg.mxu0
  %v484 = vld [vmem:[%s7] sm:$0x1]
  %v486 = vperm.slane %v484, 0
  %v488 = vadd.f32 %v465, %v486
  %v489 = vadd.f32 %v467, %v486
  %v490 = vadd.f32 %v470, %v486
  %v491 = vadd.f32 %v472, %v486
  %v492 = vadd.f32 %v475, %v486
  %v493 = vadd.f32 %v477, %v486
  %v494 = vadd.f32 %v480, %v486
  %v495 = vadd.f32 %v482, %v486
  %v496 = vld [vmem:[%s8] sm:$0xf]
  %v497 = vld [vmem:[%s8 + $0x4] sm:$0xf]
  %v498 = vld [vmem:[%s9] sm:$0xf]
  %v500 = vsel %vm390, %v259, 0
  %v503 = vsel %vm390, %v260, 0
  %v506 = vsel %vm390, %v261, 0
  %v509 = vsel %vm390, %v262, 0
  %v512 = vsel %vm390, %v263, 0
  %v515 = vsel %vm390, %v264, 0
  %v518 = vsel %vm390, %v265, 0
  %v521 = vsel %vm390, %v266, 0
  %v524 = vsel %vm390, %v267, 0
  %v527 = vsel %vm390, %v268, 0
  %v530 = vsel %vm390, %v269, 0
  %v533 = vsel %vm390, %v270, 0
  %v536 = vsel %vm390, %v271, 0
  %v539 = vsel %vm390, %v272, 0
  %v542 = vsel %vm390, %v273, 0
  %v545 = vsel %vm390, %v274, 0
  %v548 = vsel %vm390, %v275, 0
  %v551 = vsel %vm390, %v276, 0
  %v554 = vsel %vm390, %v277, 0
  %v557 = vsel %vm390, %v278, 0
  %v560 = vsel %vm390, %v279, 0
  %v563 = vsel %vm390, %v280, 0
  %v566 = vsel %vm390, %v281, 0
  %v569 = vsel %vm390, %v282, 0
  %v572 = vsel %vm390, %v283, 0
  %v575 = vsel %vm390, %v284, 0
  %v578 = vsel %vm390, %v285, 0
  %v581 = vsel %vm390, %v286, 0
  %v584 = vsel %vm390, %v287, 0
  %v587 = vsel %vm390, %v288, 0
  %v590 = vsel %vm390, %v289, 0
  %v593 = vsel %vm390, %v290, 0
  %v596 = vsel %vm403, %v498, 0
  %598 = vmatpush.bf16.msra.mxu0 0
  %599 = vmatpush.bf16.msra.mxu0 0
  %600 = vmatpush.bf16.msra.mxu0 0
  %601 = vmatpush.bf16.msra.mxu0 0
  %602 = vmatpush.bf16.msra.mxu0 0
  %603 = vmatpush.bf16.msra.mxu0 0
  %604 = vmatpush.bf16.msra.mxu0 0
  %605 = vmatpush.bf16.msra.mxu0 %v596
  %606 = vmatmul.bf16.gmra.mxu0 %v500
  %v607 = vpop.f32.mrf.mxu0
  %v608 = vadd.f32 0.0, %v607
  %v609 = vpop.f32.mrf.mxu0
  %v610 = vadd.f32 0.0, %v609
  %611 = vmatmul.bf16.gmra.mxu0 %v503
  %v612 = vpop.f32.mrf.mxu0
  %v613 = vadd.f32 0.0, %v612
  %v614 = vpop.f32.mrf.mxu0
  %v615 = vadd.f32 0.0, %v614
  %616 = vmatmul.bf16.gmra.mxu0 %v506
  %v617 = vpop.f32.mrf.mxu0
  %v618 = vadd.f32 0.0, %v617
  %v619 = vpop.f32.mrf.mxu0
  %v620 = vadd.f32 0.0, %v619
  %621 = vmatmul.bf16.gmra.mxu0 %v509
  %v622 = vpop.f32.mrf.mxu0
  %v623 = vadd.f32 0.0, %v622
  %v624 = vpop.f32.mrf.mxu0
  %v625 = vadd.f32 0.0, %v624
  %626 = vmatmul.bf16.gmra.mxu0 %v512
  %v627 = vpop.f32.mrf.mxu0
  %v628 = vadd.f32 0.0, %v627
  %v629 = vpop.f32.mrf.mxu0
  %v630 = vadd.f32 0.0, %v629
  %631 = vmatmul.bf16.gmra.mxu0 %v515
  %v632 = vpop.f32.mrf.mxu0
  %v633 = vadd.f32 0.0, %v632
  %v634 = vpop.f32.mrf.mxu0
  %v635 = vadd.f32 0.0, %v634
  %636 = vmatmul.bf16.gmra.mxu0 %v518
  %v637 = vpop.f32.mrf.mxu0
  %v638 = vadd.f32 0.0, %v637
  %v639 = vpop.f32.mrf.mxu0
  %v640 = vadd.f32 0.0, %v639
  %641 = vmatmul.bf16.gmra.mxu0 %v521
  %v642 = vpop.f32.mrf.mxu0
  %v643 = vadd.f32 0.0, %v642
  %v644 = vpop.f32.mrf.mxu0
  %v645 = vadd.f32 0.0, %v644
  %646 = vmatmul.bf16.gmra.mxu0 %v524
  %v647 = vpop.f32.mrf.mxu0
  %v648 = vadd.f32 0.0, %v647
  %v649 = vpop.f32.mrf.mxu0
  %v650 = vadd.f32 0.0, %v649
  %651 = vmatmul.bf16.gmra.mxu0 %v527
  %v652 = vpop.f32.mrf.mxu0
  %v653 = vadd.f32 0.0, %v652
  %v654 = vpop.f32.mrf.mxu0
  %v655 = vadd.f32 0.0, %v654
  %656 = vmatmul.bf16.gmra.mxu0 %v530
  %v657 = vpop.f32.mrf.mxu0
  %v658 = vadd.f32 0.0, %v657
  %v659 = vpop.f32.mrf.mxu0
  %v660 = vadd.f32 0.0, %v659
  %661 = vmatmul.bf16.gmra.mxu0 %v533
  %v662 = vpop.f32.mrf.mxu0
  %v663 = vadd.f32 0.0, %v662
  %v664 = vpop.f32.mrf.mxu0
  %v665 = vadd.f32 0.0, %v664
  %666 = vmatmul.bf16.gmra.mxu0 %v536
  %v667 = vpop.f32.mrf.mxu0
  %v668 = vadd.f32 0.0, %v667
  %v669 = vpop.f32.mrf.mxu0
  %v670 = vadd.f32 0.0, %v669
  %671 = vmatmul.bf16.gmra.mxu0 %v539
  %v672 = vpop.f32.mrf.mxu0
  %v673 = vadd.f32 0.0, %v672
  %v674 = vpop.f32.mrf.mxu0
  %v675 = vadd.f32 0.0, %v674
  %676 = vmatmul.bf16.gmra.mxu0 %v542
  %v677 = vpop.f32.mrf.mxu0
  %v678 = vadd.f32 0.0, %v677
  %v679 = vpop.f32.mrf.mxu0
  %v680 = vadd.f32 0.0, %v679
  %681 = vmatmul.bf16.gmra.mxu0 %v545
  %v682 = vpop.f32.mrf.mxu0
  %v683 = vadd.f32 0.0, %v682
  %v684 = vpop.f32.mrf.mxu0
  %v685 = vadd.f32 0.0, %v684
  %686 = vmatmul.bf16.gmra.mxu0 %v548
  %v687 = vpop.f32.mrf.mxu0
  %v688 = vadd.f32 0.0, %v687
  %v689 = vpop.f32.mrf.mxu0
  %v690 = vadd.f32 0.0, %v689
  %691 = vmatmul.bf16.gmra.mxu0 %v551
  %v692 = vpop.f32.mrf.mxu0
  %v693 = vadd.f32 0.0, %v692
  %v694 = vpop.f32.mrf.mxu0
  %v695 = vadd.f32 0.0, %v694
  %696 = vmatmul.bf16.gmra.mxu0 %v554
  %v697 = vpop.f32.mrf.mxu0
  %v698 = vadd.f32 0.0, %v697
  %v699 = vpop.f32.mrf.mxu0
  %v700 = vadd.f32 0.0, %v699
  %701 = vmatmul.bf16.gmra.mxu0 %v557
  %v702 = vpop.f32.mrf.mxu0
  %v703 = vadd.f32 0.0, %v702
  %v704 = vpop.f32.mrf.mxu0
  %v705 = vadd.f32 0.0, %v704
  %706 = vmatmul.bf16.gmra.mxu0 %v560
  %v707 = vpop.f32.mrf.mxu0
  %v708 = vadd.f32 0.0, %v707
  %v709 = vpop.f32.mrf.mxu0
  %v710 = vadd.f32 0.0, %v709
  %711 = vmatmul.bf16.gmra.mxu0 %v563
  %v712 = vpop.f32.mrf.mxu0
  %v713 = vadd.f32 0.0, %v712
  %v714 = vpop.f32.mrf.mxu0
  %v715 = vadd.f32 0.0, %v714
  %716 = vmatmul.bf16.gmra.mxu0 %v566
  %v717 = vpop.f32.mrf.mxu0
  %v718 = vadd.f32 0.0, %v717
  %v719 = vpop.f32.mrf.mxu0
  %v720 = vadd.f32 0.0, %v719
  %721 = vmatmul.bf16.gmra.mxu0 %v569
  %v722 = vpop.f32.mrf.mxu0
  %v723 = vadd.f32 0.0, %v722
  %v724 = vpop.f32.mrf.mxu0
  %v725 = vadd.f32 0.0, %v724
  %726 = vmatmul.bf16.gmra.mxu0 %v572
  %v727 = vpop.f32.mrf.mxu0
  %v728 = vadd.f32 0.0, %v727
  %v729 = vpop.f32.mrf.mxu0
  %v730 = vadd.f32 0.0, %v729
  %731 = vmatmul.bf16.gmra.mxu0 %v575
  %v732 = vpop.f32.mrf.mxu0
  %v733 = vadd.f32 0.0, %v732
  %v734 = vpop.f32.mrf.mxu0
  %v735 = vadd.f32 0.0, %v734
  %736 = vmatmul.bf16.gmra.mxu0 %v578
  %v737 = vpop.f32.mrf.mxu0
  %v738 = vadd.f32 0.0, %v737
  %v739 = vpop.f32.mrf.mxu0
  %v740 = vadd.f32 0.0, %v739
  %741 = vmatmul.bf16.gmra.mxu0 %v581
  %v742 = vpop.f32.mrf.mxu0
  %v743 = vadd.f32 0.0, %v742
  %v744 = vpop.f32.mrf.mxu0
  %v745 = vadd.f32 0.0, %v744
  %746 = vmatmul.bf16.gmra.mxu0 %v584
  %v747 = vpop.f32.mrf.mxu0
  %v748 = vadd.f32 0.0, %v747
  %v749 = vpop.f32.mrf.mxu0
  %v750 = vadd.f32 0.0, %v749
  %751 = vmatmul.bf16.gmra.mxu0 %v587
  %v752 = vpop.f32.mrf.mxu0
  %v753 = vadd.f32 0.0, %v752
  %v754 = vpop.f32.mrf.mxu0
  %v755 = vadd.f32 0.0, %v754
  %756 = vmatmul.bf16.gmra.mxu0 %v590
  %v757 = vpop.f32.mrf.mxu0
  %v758 = vadd.f32 0.0, %v757
  %v759 = vpop.f32.mrf.mxu0
  %v760 = vadd.f32 0.0, %v759
  %761 = vmatmul.bf16.gmra.mxu0 %v593
  %v762 = vpop.f32.mrf.mxu0
  %v763 = vadd.f32 0.0, %v762
  %v764 = vpop.f32.mrf.mxu0
  %v765 = vadd.f32 0.0, %v764
  %766 = vdwg.mxu0
  %v769 = vunpack.c.l.b16 %v496
  %v770 = vunpack.c.l.b16 %v497
  %v771 = vpack.c.b16 %v770, %v769
  %v774 = vsel %vm442, %v163, 0
  %v777 = vsel %vm442, %v164, 0
  %v780 = vsel %vm442, %v165, 0
  %v783 = vsel %vm442, %v166, 0
  %v786 = vsel %vm442, %v167, 0
  %v789 = vsel %vm442, %v168, 0
  %v792 = vsel %vm442, %v169, 0
  %v795 = vsel %vm442, %v170, 0
  %v798 = vsel %vm442, %v171, 0
  %v801 = vsel %vm442, %v172, 0
  %v804 = vsel %vm442, %v173, 0
  %v807 = vsel %vm442, %v174, 0
  %v810 = vsel %vm442, %v175, 0
  %v813 = vsel %vm442, %v176, 0
  %v816 = vsel %vm442, %v177, 0
  %v819 = vsel %vm442, %v178, 0
  %v822 = vsel %vm442, %v179, 0
  %v825 = vsel %vm442, %v180, 0
  %v828 = vsel %vm442, %v181, 0
  %v831 = vsel %vm442, %v182, 0
  %v834 = vsel %vm442, %v183, 0
  %v837 = vsel %vm442, %v184, 0
  %v840 = vsel %vm442, %v185, 0
  %v843 = vsel %vm442, %v186, 0
  %v846 = vsel %vm442, %v187, 0
  %v849 = vsel %vm442, %v188, 0
  %v852 = vsel %vm442, %v189, 0
  %v855 = vsel %vm442, %v190, 0
  %v858 = vsel %vm442, %v191, 0
  %v861 = vsel %vm442, %v192, 0
  %v864 = vsel %vm442, %v193, 0
  %v867 = vsel %vm442, %v194, 0
  %869 = vmatpush.bf16.msra.mxu0 0
  %870 = vmatpush.bf16.msra.mxu0 0
  %871 = vmatpush.bf16.msra.mxu0 0
  %872 = vmatpush.bf16.msra.mxu0 0
  %873 = vmatpush.bf16.msra.mxu0 0
  %874 = vmatpush.bf16.msra.mxu0 0
  %875 = vmatpush.bf16.msra.mxu0 0
  %876 = vmatpush.bf16.msra.mxu0 %v771
  %877 = vmatmul.bf16.gmra.mxu0 %v774
  %v878 = vpop.f32.mrf.mxu0
  %v879 = vadd.f32 %v608, %v878
  %v880 = vpop.f32.mrf.mxu0
  %v881 = vadd.f32 %v610, %v880
  %882 = vmatmul.bf16.gmra.mxu0 %v777
  %v883 = vpop.f32.mrf.mxu0
  %v884 = vadd.f32 %v613, %v883
  %v885 = vpop.f32.mrf.mxu0
  %v886 = vadd.f32 %v615, %v885
  %887 = vmatmul.bf16.gmra.mxu0 %v780
  %v888 = vpop.f32.mrf.mxu0
  %v889 = vadd.f32 %v618, %v888
  %v890 = vpop.f32.mrf.mxu0
  %v891 = vadd.f32 %v620, %v890
  %892 = vmatmul.bf16.gmra.mxu0 %v783
  %v893 = vpop.f32.mrf.mxu0
  %v894 = vadd.f32 %v623, %v893
  %v895 = vpop.f32.mrf.mxu0
  %v896 = vadd.f32 %v625, %v895
  %897 = vmatmul.bf16.gmra.mxu0 %v786
  %v898 = vpop.f32.mrf.mxu0
  %v899 = vadd.f32 %v628, %v898
  %v900 = vpop.f32.mrf.mxu0
  %v901 = vadd.f32 %v630, %v900
  %902 = vmatmul.bf16.gmra.mxu0 %v789
  %v903 = vpop.f32.mrf.mxu0
  %v904 = vadd.f32 %v633, %v903
  %v905 = vpop.f32.mrf.mxu0
  %v906 = vadd.f32 %v635, %v905
  %907 = vmatmul.bf16.gmra.mxu0 %v792
  %v908 = vpop.f32.mrf.mxu0
  %v909 = vadd.f32 %v638, %v908
  %v910 = vpop.f32.mrf.mxu0
  %v911 = vadd.f32 %v640, %v910
  %912 = vmatmul.bf16.gmra.mxu0 %v795
  %v913 = vpop.f32.mrf.mxu0
  %v914 = vadd.f32 %v643, %v913
  %v915 = vpop.f32.mrf.mxu0
  %v916 = vadd.f32 %v645, %v915
  %917 = vmatmul.bf16.gmra.mxu0 %v798
  %v918 = vpop.f32.mrf.mxu0
  %v919 = vadd.f32 %v648, %v918
  %v920 = vpop.f32.mrf.mxu0
  %v921 = vadd.f32 %v650, %v920
  %922 = vmatmul.bf16.gmra.mxu0 %v801
  %v923 = vpop.f32.mrf.mxu0
  %v924 = vadd.f32 %v653, %v923
  %v925 = vpop.f32.mrf.mxu0
  %v926 = vadd.f32 %v655, %v925
  %927 = vmatmul.bf16.gmra.mxu0 %v804
  %v928 = vpop.f32.mrf.mxu0
  %v929 = vadd.f32 %v658, %v928
  %v930 = vpop.f32.mrf.mxu0
  %v931 = vadd.f32 %v660, %v930
  %932 = vmatmul.bf16.gmra.mxu0 %v807
  %v933 = vpop.f32.mrf.mxu0
  %v934 = vadd.f32 %v663, %v933
  %v935 = vpop.f32.mrf.mxu0
  %v936 = vadd.f32 %v665, %v935
  %937 = vmatmul.bf16.gmra.mxu0 %v810
  %v938 = vpop.f32.mrf.mxu0
  %v939 = vadd.f32 %v668, %v938
  %v940 = vpop.f32.mrf.mxu0
  %v941 = vadd.f32 %v670, %v940
  %942 = vmatmul.bf16.gmra.mxu0 %v813
  %v943 = vpop.f32.mrf.mxu0
  %v944 = vadd.f32 %v673, %v943
  %v945 = vpop.f32.mrf.mxu0
  %v946 = vadd.f32 %v675, %v945
  %947 = vmatmul.bf16.gmra.mxu0 %v816
  %v948 = vpop.f32.mrf.mxu0
  %v949 = vadd.f32 %v678, %v948
  %v950 = vpop.f32.mrf.mxu0
  %v951 = vadd.f32 %v680, %v950
  %952 = vmatmul.bf16.gmra.mxu0 %v819
  %v953 = vpop.f32.mrf.mxu0
  %v954 = vadd.f32 %v683, %v953
  %v955 = vpop.f32.mrf.mxu0
  %v956 = vadd.f32 %v685, %v955
  %957 = vmatmul.bf16.gmra.mxu0 %v822
  %v958 = vpop.f32.mrf.mxu0
  %v959 = vadd.f32 %v688, %v958
  %v960 = vpop.f32.mrf.mxu0
  %v961 = vadd.f32 %v690, %v960
  %962 = vmatmul.bf16.gmra.mxu0 %v825
  %v963 = vpop.f32.mrf.mxu0
  %v964 = vadd.f32 %v693, %v963
  %v965 = vpop.f32.mrf.mxu0
  %v966 = vadd.f32 %v695, %v965
  %967 = vmatmul.bf16.gmra.mxu0 %v828
  %v968 = vpop.f32.mrf.mxu0
  %v969 = vadd.f32 %v698, %v968
  %v970 = vpop.f32.mrf.mxu0
  %v971 = vadd.f32 %v700, %v970
  %972 = vmatmul.bf16.gmra.mxu0 %v831
  %v973 = vpop.f32.mrf.mxu0
  %v974 = vadd.f32 %v703, %v973
  %v975 = vpop.f32.mrf.mxu0
  %v976 = vadd.f32 %v705, %v975
  %977 = vmatmul.bf16.gmra.mxu0 %v834
  %v978 = vpop.f32.mrf.mxu0
  %v979 = vadd.f32 %v708, %v978
  %v980 = vpop.f32.mrf.mxu0
  %v981 = vadd.f32 %v710, %v980
  %982 = vmatmul.bf16.gmra.mxu0 %v837
  %v983 = vpop.f32.mrf.mxu0
  %v984 = vadd.f32 %v713, %v983
  %v985 = vpop.f32.mrf.mxu0
  %v986 = vadd.f32 %v715, %v985
  %987 = vmatmul.bf16.gmra.mxu0 %v840
  %v988 = vpop.f32.mrf.mxu0
  %v989 = vadd.f32 %v718, %v988
  %v990 = vpop.f32.mrf.mxu0
  %v991 = vadd.f32 %v720, %v990
  %992 = vmatmul.bf16.gmra.mxu0 %v843
  %v993 = vpop.f32.mrf.mxu0
  %v994 = vadd.f32 %v723, %v993
  %v995 = vpop.f32.mrf.mxu0
  %v996 = vadd.f32 %v725, %v995
  %997 = vmatmul.bf16.gmra.mxu0 %v846
  %v998 = vpop.f32.mrf.mxu0
  %v999 = vadd.f32 %v728, %v998
  %v1000 = vpop.f32.mrf.mxu0
  %v1001 = vadd.f32 %v730, %v1000
  %1002 = vmatmul.bf16.gmra.mxu0 %v849
  %v1003 = vpop.f32.mrf.mxu0
  %v1004 = vadd.f32 %v733, %v1003
  %v1005 = vpop.f32.mrf.mxu0
  %v1006 = vadd.f32 %v735, %v1005
  %1007 = vmatmul.bf16.gmra.mxu0 %v852
  %v1008 = vpop.f32.mrf.mxu0
  %v1009 = vadd.f32 %v738, %v1008
  %v1010 = vpop.f32.mrf.mxu0
  %v1011 = vadd.f32 %v740, %v1010
  %1012 = vmatmul.bf16.gmra.mxu0 %v855
  %v1013 = vpop.f32.mrf.mxu0
  %v1014 = vadd.f32 %v743, %v1013
  %v1015 = vpop.f32.mrf.mxu0
  %v1016 = vadd.f32 %v745, %v1015
  %1017 = vmatmul.bf16.gmra.mxu0 %v858
  %v1018 = vpop.f32.mrf.mxu0
  %v1019 = vadd.f32 %v748, %v1018
  %v1020 = vpop.f32.mrf.mxu0
  %v1021 = vadd.f32 %v750, %v1020
  %1022 = vmatmul.bf16.gmra.mxu0 %v861
  %v1023 = vpop.f32.mrf.mxu0
  %v1024 = vadd.f32 %v753, %v1023
  %v1025 = vpop.f32.mrf.mxu0
  %v1026 = vadd.f32 %v755, %v1025
  %1027 = vmatmul.bf16.gmra.mxu0 %v864
  %v1028 = vpop.f32.mrf.mxu0
  %v1029 = vadd.f32 %v758, %v1028
  %v1030 = vpop.f32.mrf.mxu0
  %v1031 = vadd.f32 %v760, %v1030
  %1032 = vmatmul.bf16.gmra.mxu0 %v867
  %v1033 = vpop.f32.mrf.mxu0
  %v1034 = vadd.f32 %v763, %v1033
  %v1035 = vpop.f32.mrf.mxu0
  %v1036 = vadd.f32 %v765, %v1035
  %1037 = vdwg.mxu0
  %v1038 = vld [vmem:[%s10] sm:$0xf]
  %v1040 = vsel %vm390, %v355, 0
  %v1043 = vsel %vm390, %v356, 0
  %v1046 = vsel %vm390, %v357, 0
  %v1049 = vsel %vm390, %v358, 0
  %v1052 = vsel %vm390, %v359, 0
  %v1055 = vsel %vm390, %v360, 0
  %v1058 = vsel %vm390, %v361, 0
  %v1061 = vsel %vm390, %v362, 0
  %v1064 = vsel %vm390, %v363, 0
  %v1067 = vsel %vm390, %v364, 0
  %v1070 = vsel %vm390, %v365, 0
  %v1073 = vsel %vm390, %v366, 0
  %v1076 = vsel %vm390, %v367, 0
  %v1079 = vsel %vm390, %v368, 0
  %v1082 = vsel %vm390, %v369, 0
  %v1085 = vsel %vm390, %v370, 0
  %v1088 = vsel %vm390, %v371, 0
  %v1091 = vsel %vm390, %v372, 0
  %v1094 = vsel %vm390, %v373, 0
  %v1097 = vsel %vm390, %v374, 0
  %v1100 = vsel %vm390, %v375, 0
  %v1103 = vsel %vm390, %v376, 0
  %v1106 = vsel %vm390, %v377, 0
  %v1109 = vsel %vm390, %v378, 0
  %v1112 = vsel %vm390, %v379, 0
  %v1115 = vsel %vm390, %v380, 0
  %v1118 = vsel %vm390, %v381, 0
  %v1121 = vsel %vm390, %v382, 0
  %v1124 = vsel %vm390, %v383, 0
  %v1127 = vsel %vm390, %v384, 0
  %v1130 = vsel %vm390, %v385, 0
  %v1133 = vsel %vm390, %v386, 0
  %v1136 = vsel %vm403, %v1038, 0
  %1138 = vmatpush.bf16.msra.mxu0 0
  %1139 = vmatpush.bf16.msra.mxu0 0
  %1140 = vmatpush.bf16.msra.mxu0 0
  %1141 = vmatpush.bf16.msra.mxu0 0
  %1142 = vmatpush.bf16.msra.mxu0 0
  %1143 = vmatpush.bf16.msra.mxu0 0
  %1144 = vmatpush.bf16.msra.mxu0 0
  %1145 = vmatpush.bf16.msra.mxu0 %v1136
  %1146 = vmatmul.bf16.gmra.mxu0 %v1040
  %v1147 = vpop.f32.mrf.mxu0
  %v1148 = vadd.f32 0.0, %v1147
  %v1149 = vpop.f32.mrf.mxu0
  %v1150 = vadd.f32 0.0, %v1149
  %1151 = vmatmul.bf16.gmra.mxu0 %v1043
  %v1152 = vpop.f32.mrf.mxu0
  %v1153 = vadd.f32 0.0, %v1152
  %v1154 = vpop.f32.mrf.mxu0
  %v1155 = vadd.f32 0.0, %v1154
  %1156 = vmatmul.bf16.gmra.mxu0 %v1046
  %v1157 = vpop.f32.mrf.mxu0
  %v1158 = vadd.f32 0.0, %v1157
  %v1159 = vpop.f32.mrf.mxu0
  %v1160 = vadd.f32 0.0, %v1159
  %1161 = vmatmul.bf16.gmra.mxu0 %v1049
  %v1162 = vpop.f32.mrf.mxu0
  %v1163 = vadd.f32 0.0, %v1162
  %v1164 = vpop.f32.mrf.mxu0
  %v1165 = vadd.f32 0.0, %v1164
  %1166 = vmatmul.bf16.gmra.mxu0 %v1052
  %v1167 = vpop.f32.mrf.mxu0
  %v1168 = vadd.f32 0.0, %v1167
  %v1169 = vpop.f32.mrf.mxu0
  %v1170 = vadd.f32 0.0, %v1169
  %1171 = vmatmul.bf16.gmra.mxu0 %v1055
  %v1172 = vpop.f32.mrf.mxu0
  %v1173 = vadd.f32 0.0, %v1172
  %v1174 = vpop.f32.mrf.mxu0
  %v1175 = vadd.f32 0.0, %v1174
  %1176 = vmatmul.bf16.gmra.mxu0 %v1058
  %v1177 = vpop.f32.mrf.mxu0
  %v1178 = vadd.f32 0.0, %v1177
  %v1179 = vpop.f32.mrf.mxu0
  %v1180 = vadd.f32 0.0, %v1179
  %1181 = vmatmul.bf16.gmra.mxu0 %v1061
  %v1182 = vpop.f32.mrf.mxu0
  %v1183 = vadd.f32 0.0, %v1182
  %v1184 = vpop.f32.mrf.mxu0
  %v1185 = vadd.f32 0.0, %v1184
  %1186 = vmatmul.bf16.gmra.mxu0 %v1064
  %v1187 = vpop.f32.mrf.mxu0
  %v1188 = vadd.f32 0.0, %v1187
  %v1189 = vpop.f32.mrf.mxu0
  %v1190 = vadd.f32 0.0, %v1189
  %1191 = vmatmul.bf16.gmra.mxu0 %v1067
  %v1192 = vpop.f32.mrf.mxu0
  %v1193 = vadd.f32 0.0, %v1192
  %v1194 = vpop.f32.mrf.mxu0
  %v1195 = vadd.f32 0.0, %v1194
  %1196 = vmatmul.bf16.gmra.mxu0 %v1070
  %v1197 = vpop.f32.mrf.mxu0
  %v1198 = vadd.f32 0.0, %v1197
  %v1199 = vpop.f32.mrf.mxu0
  %v1200 = vadd.f32 0.0, %v1199
  %1201 = vmatmul.bf16.gmra.mxu0 %v1073
  %v1202 = vpop.f32.mrf.mxu0
  %v1203 = vadd.f32 0.0, %v1202
  %v1204 = vpop.f32.mrf.mxu0
  %v1205 = vadd.f32 0.0, %v1204
  %1206 = vmatmul.bf16.gmra.mxu0 %v1076
  %v1207 = vpop.f32.mrf.mxu0
  %v1208 = vadd.f32 0.0, %v1207
  %v1209 = vpop.f32.mrf.mxu0
  %v1210 = vadd.f32 0.0, %v1209
  %1211 = vmatmul.bf16.gmra.mxu0 %v1079
  %v1212 = vpop.f32.mrf.mxu0
  %v1213 = vadd.f32 0.0, %v1212
  %v1214 = vpop.f32.mrf.mxu0
  %v1215 = vadd.f32 0.0, %v1214
  %1216 = vmatmul.bf16.gmra.mxu0 %v1082
  %v1217 = vpop.f32.mrf.mxu0
  %v1218 = vadd.f32 0.0, %v1217
  %v1219 = vpop.f32.mrf.mxu0
  %v1220 = vadd.f32 0.0, %v1219
  %1221 = vmatmul.bf16.gmra.mxu0 %v1085
  %v1222 = vpop.f32.mrf.mxu0
  %v1223 = vadd.f32 0.0, %v1222
  %v1224 = vpop.f32.mrf.mxu0
  %v1225 = vadd.f32 0.0, %v1224
  %1226 = vmatmul.bf16.gmra.mxu0 %v1088
  %v1227 = vpop.f32.mrf.mxu0
  %v1228 = vadd.f32 0.0, %v1227
  %v1229 = vpop.f32.mrf.mxu0
  %v1230 = vadd.f32 0.0, %v1229
  %1231 = vmatmul.bf16.gmra.mxu0 %v1091
  %v1232 = vpop.f32.mrf.mxu0
  %v1233 = vadd.f32 0.0, %v1232
  %v1234 = vpop.f32.mrf.mxu0
  %v1235 = vadd.f32 0.0, %v1234
  %1236 = vmatmul.bf16.gmra.mxu0 %v1094
  %v1237 = vpop.f32.mrf.mxu0
  %v1238 = vadd.f32 0.0, %v1237
  %v1239 = vpop.f32.mrf.mxu0
  %v1240 = vadd.f32 0.0, %v1239
  %1241 = vmatmul.bf16.gmra.mxu0 %v1097
  %v1242 = vpop.f32.mrf.mxu0
  %v1243 = vadd.f32 0.0, %v1242
  %v1244 = vpop.f32.mrf.mxu0
  %v1245 = vadd.f32 0.0, %v1244
  %1246 = vmatmul.bf16.gmra.mxu0 %v1100
  %v1247 = vpop.f32.mrf.mxu0
  %v1248 = vadd.f32 0.0, %v1247
  %v1249 = vpop.f32.mrf.mxu0
  %v1250 = vadd.f32 0.0, %v1249
  %1251 = vmatmul.bf16.gmra.mxu0 %v1103
  %v1252 = vpop.f32.mrf.mxu0
  %v1253 = vadd.f32 0.0, %v1252
  %v1254 = vpop.f32.mrf.mxu0
  %v1255 = vadd.f32 0.0, %v1254
  %1256 = vmatmul.bf16.gmra.mxu0 %v1106
  %v1257 = vpop.f32.mrf.mxu0
  %v1258 = vadd.f32 0.0, %v1257
  %v1259 = vpop.f32.mrf.mxu0
  %v1260 = vadd.f32 0.0, %v1259
  %1261 = vmatmul.bf16.gmra.mxu0 %v1109
  %v1262 = vpop.f32.mrf.mxu0
  %v1263 = vadd.f32 0.0, %v1262
  %v1264 = vpop.f32.mrf.mxu0
  %v1265 = vadd.f32 0.0, %v1264
  %1266 = vmatmul.bf16.gmra.mxu0 %v1112
  %v1267 = vpop.f32.mrf.mxu0
  %v1268 = vadd.f32 0.0, %v1267
  %v1269 = vpop.f32.mrf.mxu0
  %v1270 = vadd.f32 0.0, %v1269
  %1271 = vmatmul.bf16.gmra.mxu0 %v1115
  %v1272 = vpop.f32.mrf.mxu0
  %v1273 = vadd.f32 0.0, %v1272
  %v1274 = vpop.f32.mrf.mxu0
  %v1275 = vadd.f32 0.0, %v1274
  %1276 = vmatmul.bf16.gmra.mxu0 %v1118
  %v1277 = vpop.f32.mrf.mxu0
  %v1278 = vadd.f32 0.0, %v1277
  %v1279 = vpop.f32.mrf.mxu0
  %v1280 = vadd.f32 0.0, %v1279
  %1281 = vmatmul.bf16.gmra.mxu0 %v1121
  %v1282 = vpop.f32.mrf.mxu0
  %v1283 = vadd.f32 0.0, %v1282
  %v1284 = vpop.f32.mrf.mxu0
  %v1285 = vadd.f32 0.0, %v1284
  %1286 = vmatmul.bf16.gmra.mxu0 %v1124
  %v1287 = vpop.f32.mrf.mxu0
  %v1288 = vadd.f32 0.0, %v1287
  %v1289 = vpop.f32.mrf.mxu0
  %v1290 = vadd.f32 0.0, %v1289
  %1291 = vmatmul.bf16.gmra.mxu0 %v1127
  %v1292 = vpop.f32.mrf.mxu0
  %v1293 = vadd.f32 0.0, %v1292
  %v1294 = vpop.f32.mrf.mxu0
  %v1295 = vadd.f32 0.0, %v1294
  %1296 = vmatmul.bf16.gmra.mxu0 %v1130
  %v1297 = vpop.f32.mrf.mxu0
  %v1298 = vadd.f32 0.0, %v1297
  %v1299 = vpop.f32.mrf.mxu0
  %v1300 = vadd.f32 0.0, %v1299
  %1301 = vmatmul.bf16.gmra.mxu0 %v1133
  %v1302 = vpop.f32.mrf.mxu0
  %v1303 = vadd.f32 0.0, %v1302
  %v1304 = vpop.f32.mrf.mxu0
  %v1305 = vadd.f32 0.0, %v1304
  %1306 = vdwg.mxu0
  %v1307 = vadd.f32 %v879, %v1148
  %v1308 = vadd.f32 %v881, %v1150
  %v1309 = vadd.f32 %v884, %v1153
  %v1310 = vadd.f32 %v886, %v1155
  %v1311 = vadd.f32 %v889, %v1158
  %v1312 = vadd.f32 %v891, %v1160
  %v1313 = vadd.f32 %v894, %v1163
  %v1314 = vadd.f32 %v896, %v1165
  %v1315 = vadd.f32 %v899, %v1168
  %v1316 = vadd.f32 %v901, %v1170
  %v1317 = vadd.f32 %v904, %v1173
  %v1318 = vadd.f32 %v906, %v1175
  %v1319 = vadd.f32 %v909, %v1178
  %v1320 = vadd.f32 %v911, %v1180
  %v1321 = vadd.f32 %v914, %v1183
  %v1322 = vadd.f32 %v916, %v1185
  %v1323 = vadd.f32 %v919, %v1188
  %v1324 = vadd.f32 %v921, %v1190
  %v1325 = vadd.f32 %v924, %v1193
  %v1326 = vadd.f32 %v926, %v1195
  %v1327 = vadd.f32 %v929, %v1198
  %v1328 = vadd.f32 %v931, %v1200
  %v1329 = vadd.f32 %v934, %v1203
  %v1330 = vadd.f32 %v936, %v1205
  %v1331 = vadd.f32 %v939, %v1208
  %v1332 = vadd.f32 %v941, %v1210
  %v1333 = vadd.f32 %v944, %v1213
  %v1334 = vadd.f32 %v946, %v1215
  %v1335 = vadd.f32 %v949, %v1218
  %v1336 = vadd.f32 %v951, %v1220
  %v1337 = vadd.f32 %v954, %v1223
  %v1338 = vadd.f32 %v956, %v1225
  %v1339 = vadd.f32 %v959, %v1228
  %v1340 = vadd.f32 %v961, %v1230
  %v1341 = vadd.f32 %v964, %v1233
  %v1342 = vadd.f32 %v966, %v1235
  %v1343 = vadd.f32 %v969, %v1238
  %v1344 = vadd.f32 %v971, %v1240
  %v1345 = vadd.f32 %v974, %v1243
  %v1346 = vadd.f32 %v976, %v1245
  %v1347 = vadd.f32 %v979, %v1248
  %v1348 = vadd.f32 %v981, %v1250
  %v1349 = vadd.f32 %v984, %v1253
  %v1350 = vadd.f32 %v986, %v1255
  %v1351 = vadd.f32 %v989, %v1258
  %v1352 = vadd.f32 %v991, %v1260
  %v1353 = vadd.f32 %v994, %v1263
  %v1354 = vadd.f32 %v996, %v1265
  %v1355 = vadd.f32 %v999, %v1268
  %v1356 = vadd.f32 %v1001, %v1270
  %v1357 = vadd.f32 %v1004, %v1273
  %v1358 = vadd.f32 %v1006, %v1275
  %v1359 = vadd.f32 %v1009, %v1278
  %v1360 = vadd.f32 %v1011, %v1280
  %v1361 = vadd.f32 %v1014, %v1283
  %v1362 = vadd.f32 %v1016, %v1285
  %v1363 = vadd.f32 %v1019, %v1288
  %v1364 = vadd.f32 %v1021, %v1290
  %v1365 = vadd.f32 %v1024, %v1293
  %v1366 = vadd.f32 %v1026, %v1295
  %v1367 = vadd.f32 %v1029, %v1298
  %v1368 = vadd.f32 %v1031, %v1300
  %v1369 = vadd.f32 %v1034, %v1303
  %v1370 = vadd.f32 %v1036, %v1305
  %v1371 = vld [vmem:[%s11] sm:$0x1]
  %v1373 = vperm.slane %v1371, 0
  %v1375 = vadd.f32 %v1307, %v1373
  %v1376 = vadd.f32 %v1308, %v1373
  %v1377 = vadd.f32 %v1309, %v1373
  %v1378 = vadd.f32 %v1310, %v1373
  %v1379 = vadd.f32 %v1311, %v1373
  %v1380 = vadd.f32 %v1312, %v1373
  %v1381 = vadd.f32 %v1313, %v1373
  %v1382 = vadd.f32 %v1314, %v1373
  %v1383 = vadd.f32 %v1315, %v1373
  %v1384 = vadd.f32 %v1316, %v1373
  %v1385 = vadd.f32 %v1317, %v1373
  %v1386 = vadd.f32 %v1318, %v1373
  %v1387 = vadd.f32 %v1319, %v1373
  %v1388 = vadd.f32 %v1320, %v1373
  %v1389 = vadd.f32 %v1321, %v1373
  %v1390 = vadd.f32 %v1322, %v1373
  %v1391 = vadd.f32 %v1323, %v1373
  %v1392 = vadd.f32 %v1324, %v1373
  %v1393 = vadd.f32 %v1325, %v1373
  %v1394 = vadd.f32 %v1326, %v1373
  %v1395 = vadd.f32 %v1327, %v1373
  %v1396 = vadd.f32 %v1328, %v1373
  %v1397 = vadd.f32 %v1329, %v1373
  %v1398 = vadd.f32 %v1330, %v1373
  %v1399 = vadd.f32 %v1331, %v1373
  %v1400 = vadd.f32 %v1332, %v1373
  %v1401 = vadd.f32 %v1333, %v1373
  %v1402 = vadd.f32 %v1334, %v1373
  %v1403 = vadd.f32 %v1335, %v1373
  %v1404 = vadd.f32 %v1336, %v1373
  %v1405 = vadd.f32 %v1337, %v1373
  %v1406 = vadd.f32 %v1338, %v1373
  %v1407 = vadd.f32 %v1339, %v1373
  %v1408 = vadd.f32 %v1340, %v1373
  %v1409 = vadd.f32 %v1341, %v1373
  %v1410 = vadd.f32 %v1342, %v1373
  %v1411 = vadd.f32 %v1343, %v1373
  %v1412 = vadd.f32 %v1344, %v1373
  %v1413 = vadd.f32 %v1345, %v1373
  %v1414 = vadd.f32 %v1346, %v1373
  %v1415 = vadd.f32 %v1347, %v1373
  %v1416 = vadd.f32 %v1348, %v1373
  %v1417 = vadd.f32 %v1349, %v1373
  %v1418 = vadd.f32 %v1350, %v1373
  %v1419 = vadd.f32 %v1351, %v1373
  %v1420 = vadd.f32 %v1352, %v1373
  %v1421 = vadd.f32 %v1353, %v1373
  %v1422 = vadd.f32 %v1354, %v1373
  %v1423 = vadd.f32 %v1355, %v1373
  %v1424 = vadd.f32 %v1356, %v1373
  %v1425 = vadd.f32 %v1357, %v1373
  %v1426 = vadd.f32 %v1358, %v1373
  %v1427 = vadd.f32 %v1359, %v1373
  %v1428 = vadd.f32 %v1360, %v1373
  %v1429 = vadd.f32 %v1361, %v1373
  %v1430 = vadd.f32 %v1362, %v1373
  %v1431 = vadd.f32 %v1363, %v1373
  %v1432 = vadd.f32 %v1364, %v1373
  %v1433 = vadd.f32 %v1365, %v1373
  %v1434 = vadd.f32 %v1366, %v1373
  %v1435 = vadd.f32 %v1367, %v1373
  %v1436 = vadd.f32 %v1368, %v1373
  %v1437 = vadd.f32 %v1369, %v1373
  %v1438 = vadd.f32 %v1370, %v1373
  %v1439 = vld [vmem:[%s12] sm:$0xf]
  %v1440 = vld [vmem:[%s12 + $0x4] sm:$0xf]
  %v1441 = vld [vmem:[%s13] sm:$0xf]
  %v1443 = vsel %vm403, %v1441, 0
  %1445 = vmatpush.bf16.msra.mxu0 0
  %1446 = vmatpush.bf16.msra.mxu0 0
  %1447 = vmatpush.bf16.msra.mxu0 0
  %1448 = vmatpush.bf16.msra.mxu0 0
  %1449 = vmatpush.bf16.msra.mxu0 0
  %1450 = vmatpush.bf16.msra.mxu0 0
  %1451 = vmatpush.bf16.msra.mxu0 0
  %1452 = vmatpush.bf16.msra.mxu0 %v1443
  %1453 = vmatmul.bf16.gmra.mxu0 %v500
  %v1454 = vpop.f32.mrf.mxu0
  %v1455 = vadd.f32 0.0, %v1454
  %v1456 = vpop.f32.mrf.mxu0
  %v1457 = vadd.f32 0.0, %v1456
  %1458 = vmatmul.bf16.gmra.mxu0 %v503
  %v1459 = vpop.f32.mrf.mxu0
  %v1460 = vadd.f32 0.0, %v1459
  %v1461 = vpop.f32.mrf.mxu0
  %v1462 = vadd.f32 0.0, %v1461
  %1463 = vmatmul.bf16.gmra.mxu0 %v506
  %v1464 = vpop.f32.mrf.mxu0
  %v1465 = vadd.f32 0.0, %v1464
  %v1466 = vpop.f32.mrf.mxu0
  %v1467 = vadd.f32 0.0, %v1466
  %1468 = vmatmul.bf16.gmra.mxu0 %v509
  %v1469 = vpop.f32.mrf.mxu0
  %v1470 = vadd.f32 0.0, %v1469
  %v1471 = vpop.f32.mrf.mxu0
  %v1472 = vadd.f32 0.0, %v1471
  %1473 = vmatmul.bf16.gmra.mxu0 %v512
  %v1474 = vpop.f32.mrf.mxu0
  %v1475 = vadd.f32 0.0, %v1474
  %v1476 = vpop.f32.mrf.mxu0
  %v1477 = vadd.f32 0.0, %v1476
  %1478 = vmatmul.bf16.gmra.mxu0 %v515
  %v1479 = vpop.f32.mrf.mxu0
  %v1480 = vadd.f32 0.0, %v1479
  %v1481 = vpop.f32.mrf.mxu0
  %v1482 = vadd.f32 0.0, %v1481
  %1483 = vmatmul.bf16.gmra.mxu0 %v518
  %v1484 = vpop.f32.mrf.mxu0
  %v1485 = vadd.f32 0.0, %v1484
  %v1486 = vpop.f32.mrf.mxu0
  %v1487 = vadd.f32 0.0, %v1486
  %1488 = vmatmul.bf16.gmra.mxu0 %v521
  %v1489 = vpop.f32.mrf.mxu0
  %v1490 = vadd.f32 0.0, %v1489
  %v1491 = vpop.f32.mrf.mxu0
  %v1492 = vadd.f32 0.0, %v1491
  %1493 = vmatmul.bf16.gmra.mxu0 %v524
  %v1494 = vpop.f32.mrf.mxu0
  %v1495 = vadd.f32 0.0, %v1494
  %v1496 = vpop.f32.mrf.mxu0
  %v1497 = vadd.f32 0.0, %v1496
  %1498 = vmatmul.bf16.gmra.mxu0 %v527
  %v1499 = vpop.f32.mrf.mxu0
  %v1500 = vadd.f32 0.0, %v1499
  %v1501 = vpop.f32.mrf.mxu0
  %v1502 = vadd.f32 0.0, %v1501
  %1503 = vmatmul.bf16.gmra.mxu0 %v530
  %v1504 = vpop.f32.mrf.mxu0
  %v1505 = vadd.f32 0.0, %v1504
  %v1506 = vpop.f32.mrf.mxu0
  %v1507 = vadd.f32 0.0, %v1506
  %1508 = vmatmul.bf16.gmra.mxu0 %v533
  %v1509 = vpop.f32.mrf.mxu0
  %v1510 = vadd.f32 0.0, %v1509
  %v1511 = vpop.f32.mrf.mxu0
  %v1512 = vadd.f32 0.0, %v1511
  %1513 = vmatmul.bf16.gmra.mxu0 %v536
  %v1514 = vpop.f32.mrf.mxu0
  %v1515 = vadd.f32 0.0, %v1514
  %v1516 = vpop.f32.mrf.mxu0
  %v1517 = vadd.f32 0.0, %v1516
  %1518 = vmatmul.bf16.gmra.mxu0 %v539
  %v1519 = vpop.f32.mrf.mxu0
  %v1520 = vadd.f32 0.0, %v1519
  %v1521 = vpop.f32.mrf.mxu0
  %v1522 = vadd.f32 0.0, %v1521
  %1523 = vmatmul.bf16.gmra.mxu0 %v542
  %v1524 = vpop.f32.mrf.mxu0
  %v1525 = vadd.f32 0.0, %v1524
  %v1526 = vpop.f32.mrf.mxu0
  %v1527 = vadd.f32 0.0, %v1526
  %1528 = vmatmul.bf16.gmra.mxu0 %v545
  %v1529 = vpop.f32.mrf.mxu0
  %v1530 = vadd.f32 0.0, %v1529
  %v1531 = vpop.f32.mrf.mxu0
  %v1532 = vadd.f32 0.0, %v1531
  %1533 = vmatmul.bf16.gmra.mxu0 %v548
  %v1534 = vpop.f32.mrf.mxu0
  %v1535 = vadd.f32 0.0, %v1534
  %v1536 = vpop.f32.mrf.mxu0
  %v1537 = vadd.f32 0.0, %v1536
  %1538 = vmatmul.bf16.gmra.mxu0 %v551
  %v1539 = vpop.f32.mrf.mxu0
  %v1540 = vadd.f32 0.0, %v1539
  %v1541 = vpop.f32.mrf.mxu0
  %v1542 = vadd.f32 0.0, %v1541
  %1543 = vmatmul.bf16.gmra.mxu0 %v554
  %v1544 = vpop.f32.mrf.mxu0
  %v1545 = vadd.f32 0.0, %v1544
  %v1546 = vpop.f32.mrf.mxu0
  %v1547 = vadd.f32 0.0, %v1546
  %1548 = vmatmul.bf16.gmra.mxu0 %v557
  %v1549 = vpop.f32.mrf.mxu0
  %v1550 = vadd.f32 0.0, %v1549
  %v1551 = vpop.f32.mrf.mxu0
  %v1552 = vadd.f32 0.0, %v1551
  %1553 = vmatmul.bf16.gmra.mxu0 %v560
  %v1554 = vpop.f32.mrf.mxu0
  %v1555 = vadd.f32 0.0, %v1554
  %v1556 = vpop.f32.mrf.mxu0
  %v1557 = vadd.f32 0.0, %v1556
  %1558 = vmatmul.bf16.gmra.mxu0 %v563
  %v1559 = vpop.f32.mrf.mxu0
  %v1560 = vadd.f32 0.0, %v1559
  %v1561 = vpop.f32.mrf.mxu0
  %v1562 = vadd.f32 0.0, %v1561
  %1563 = vmatmul.bf16.gmra.mxu0 %v566
  %v1564 = vpop.f32.mrf.mxu0
  %v1565 = vadd.f32 0.0, %v1564
  %v1566 = vpop.f32.mrf.mxu0
  %v1567 = vadd.f32 0.0, %v1566
  %1568 = vmatmul.bf16.gmra.mxu0 %v569
  %v1569 = vpop.f32.mrf.mxu0
  %v1570 = vadd.f32 0.0, %v1569
  %v1571 = vpop.f32.mrf.mxu0
  %v1572 = vadd.f32 0.0, %v1571
  %1573 = vmatmul.bf16.gmra.mxu0 %v572
  %v1574 = vpop.f32.mrf.mxu0
  %v1575 = vadd.f32 0.0, %v1574
  %v1576 = vpop.f32.mrf.mxu0
  %v1577 = vadd.f32 0.0, %v1576
  %1578 = vmatmul.bf16.gmra.mxu0 %v575
  %v1579 = vpop.f32.mrf.mxu0
  %v1580 = vadd.f32 0.0, %v1579
  %v1581 = vpop.f32.mrf.mxu0
  %v1582 = vadd.f32 0.0, %v1581
  %1583 = vmatmul.bf16.gmra.mxu0 %v578
  %v1584 = vpop.f32.mrf.mxu0
  %v1585 = vadd.f32 0.0, %v1584
  %v1586 = vpop.f32.mrf.mxu0
  %v1587 = vadd.f32 0.0, %v1586
  %1588 = vmatmul.bf16.gmra.mxu0 %v581
  %v1589 = vpop.f32.mrf.mxu0
  %v1590 = vadd.f32 0.0, %v1589
  %v1591 = vpop.f32.mrf.mxu0
  %v1592 = vadd.f32 0.0, %v1591
  %1593 = vmatmul.bf16.gmra.mxu0 %v584
  %v1594 = vpop.f32.mrf.mxu0
  %v1595 = vadd.f32 0.0, %v1594
  %v1596 = vpop.f32.mrf.mxu0
  %v1597 = vadd.f32 0.0, %v1596
  %1598 = vmatmul.bf16.gmra.mxu0 %v587
  %v1599 = vpop.f32.mrf.mxu0
  %v1600 = vadd.f32 0.0, %v1599
  %v1601 = vpop.f32.mrf.mxu0
  %v1602 = vadd.f32 0.0, %v1601
  %1603 = vmatmul.bf16.gmra.mxu0 %v590
  %v1604 = vpop.f32.mrf.mxu0
  %v1605 = vadd.f32 0.0, %v1604
  %v1606 = vpop.f32.mrf.mxu0
  %v1607 = vadd.f32 0.0, %v1606
  %1608 = vmatmul.bf16.gmra.mxu0 %v593
  %v1609 = vpop.f32.mrf.mxu0
  %v1610 = vadd.f32 0.0, %v1609
  %v1611 = vpop.f32.mrf.mxu0
  %v1612 = vadd.f32 0.0, %v1611
  %1613 = vdwg.mxu0
  %v1616 = vunpack.c.l.b16 %v1439
  %v1617 = vunpack.c.l.b16 %v1440
  %v1618 = vpack.c.b16 %v1617, %v1616
  %1620 = vmatpush.bf16.msra.mxu0 0
  %1621 = vmatpush.bf16.msra.mxu0 0
  %1622 = vmatpush.bf16.msra.mxu0 0
  %1623 = vmatpush.bf16.msra.mxu0 0
  %1624 = vmatpush.bf16.msra.mxu0 0
  %1625 = vmatpush.bf16.msra.mxu0 0
  %1626 = vmatpush.bf16.msra.mxu0 0
  %1627 = vmatpush.bf16.msra.mxu0 %v1618
  %1628 = vmatmul.bf16.gmra.mxu0 %v774
  %v1629 = vpop.f32.mrf.mxu0
  %v1630 = vadd.f32 %v1455, %v1629
  %v1631 = vpop.f32.mrf.mxu0
  %v1632 = vadd.f32 %v1457, %v1631
  %1633 = vmatmul.bf16.gmra.mxu0 %v777
  %v1634 = vpop.f32.mrf.mxu0
  %v1635 = vadd.f32 %v1460, %v1634
  %v1636 = vpop.f32.mrf.mxu0
  %v1637 = vadd.f32 %v1462, %v1636
  %1638 = vmatmul.bf16.gmra.mxu0 %v780
  %v1639 = vpop.f32.mrf.mxu0
  %v1640 = vadd.f32 %v1465, %v1639
  %v1641 = vpop.f32.mrf.mxu0
  %v1642 = vadd.f32 %v1467, %v1641
  %1643 = vmatmul.bf16.gmra.mxu0 %v783
  %v1644 = vpop.f32.mrf.mxu0
  %v1645 = vadd.f32 %v1470, %v1644
  %v1646 = vpop.f32.mrf.mxu0
  %v1647 = vadd.f32 %v1472, %v1646
  %1648 = vmatmul.bf16.gmra.mxu0 %v786
  %v1649 = vpop.f32.mrf.mxu0
  %v1650 = vadd.f32 %v1475, %v1649
  %v1651 = vpop.f32.mrf.mxu0
  %v1652 = vadd.f32 %v1477, %v1651
  %1653 = vmatmul.bf16.gmra.mxu0 %v789
  %v1654 = vpop.f32.mrf.mxu0
  %v1655 = vadd.f32 %v1480, %v1654
  %v1656 = vpop.f32.mrf.mxu0
  %v1657 = vadd.f32 %v1482, %v1656
  %1658 = vmatmul.bf16.gmra.mxu0 %v792
  %v1659 = vpop.f32.mrf.mxu0
  %v1660 = vadd.f32 %v1485, %v1659
  %v1661 = vpop.f32.mrf.mxu0
  %v1662 = vadd.f32 %v1487, %v1661
  %1663 = vmatmul.bf16.gmra.mxu0 %v795
  %v1664 = vpop.f32.mrf.mxu0
  %v1665 = vadd.f32 %v1490, %v1664
  %v1666 = vpop.f32.mrf.mxu0
  %v1667 = vadd.f32 %v1492, %v1666
  %1668 = vmatmul.bf16.gmra.mxu0 %v798
  %v1669 = vpop.f32.mrf.mxu0
  %v1670 = vadd.f32 %v1495, %v1669
  %v1671 = vpop.f32.mrf.mxu0
  %v1672 = vadd.f32 %v1497, %v1671
  %1673 = vmatmul.bf16.gmra.mxu0 %v801
  %v1674 = vpop.f32.mrf.mxu0
  %v1675 = vadd.f32 %v1500, %v1674
  %v1676 = vpop.f32.mrf.mxu0
  %v1677 = vadd.f32 %v1502, %v1676
  %1678 = vmatmul.bf16.gmra.mxu0 %v804
  %v1679 = vpop.f32.mrf.mxu0
  %v1680 = vadd.f32 %v1505, %v1679
  %v1681 = vpop.f32.mrf.mxu0
  %v1682 = vadd.f32 %v1507, %v1681
  %1683 = vmatmul.bf16.gmra.mxu0 %v807
  %v1684 = vpop.f32.mrf.mxu0
  %v1685 = vadd.f32 %v1510, %v1684
  %v1686 = vpop.f32.mrf.mxu0
  %v1687 = vadd.f32 %v1512, %v1686
  %1688 = vmatmul.bf16.gmra.mxu0 %v810
  %v1689 = vpop.f32.mrf.mxu0
  %v1690 = vadd.f32 %v1515, %v1689
  %v1691 = vpop.f32.mrf.mxu0
  %v1692 = vadd.f32 %v1517, %v1691
  %1693 = vmatmul.bf16.gmra.mxu0 %v813
  %v1694 = vpop.f32.mrf.mxu0
  %v1695 = vadd.f32 %v1520, %v1694
  %v1696 = vpop.f32.mrf.mxu0
  %v1697 = vadd.f32 %v1522, %v1696
  %1698 = vmatmul.bf16.gmra.mxu0 %v816
  %v1699 = vpop.f32.mrf.mxu0
  %v1700 = vadd.f32 %v1525, %v1699
  %v1701 = vpop.f32.mrf.mxu0
  %v1702 = vadd.f32 %v1527, %v1701
  %1703 = vmatmul.bf16.gmra.mxu0 %v819
  %v1704 = vpop.f32.mrf.mxu0
  %v1705 = vadd.f32 %v1530, %v1704
  %v1706 = vpop.f32.mrf.mxu0
  %v1707 = vadd.f32 %v1532, %v1706
  %1708 = vmatmul.bf16.gmra.mxu0 %v822
  %v1709 = vpop.f32.mrf.mxu0
  %v1710 = vadd.f32 %v1535, %v1709
  %v1711 = vpop.f32.mrf.mxu0
  %v1712 = vadd.f32 %v1537, %v1711
  %1713 = vmatmul.bf16.gmra.mxu0 %v825
  %v1714 = vpop.f32.mrf.mxu0
  %v1715 = vadd.f32 %v1540, %v1714
  %v1716 = vpop.f32.mrf.mxu0
  %v1717 = vadd.f32 %v1542, %v1716
  %1718 = vmatmul.bf16.gmra.mxu0 %v828
  %v1719 = vpop.f32.mrf.mxu0
  %v1720 = vadd.f32 %v1545, %v1719
  %v1721 = vpop.f32.mrf.mxu0
  %v1722 = vadd.f32 %v1547, %v1721
  %1723 = vmatmul.bf16.gmra.mxu0 %v831
  %v1724 = vpop.f32.mrf.mxu0
  %v1725 = vadd.f32 %v1550, %v1724
  %v1726 = vpop.f32.mrf.mxu0
  %v1727 = vadd.f32 %v1552, %v1726
  %1728 = vmatmul.bf16.gmra.mxu0 %v834
  %v1729 = vpop.f32.mrf.mxu0
  %v1730 = vadd.f32 %v1555, %v1729
  %v1731 = vpop.f32.mrf.mxu0
  %v1732 = vadd.f32 %v1557, %v1731
  %1733 = vmatmul.bf16.gmra.mxu0 %v837
  %v1734 = vpop.f32.mrf.mxu0
  %v1735 = vadd.f32 %v1560, %v1734
  %v1736 = vpop.f32.mrf.mxu0
  %v1737 = vadd.f32 %v1562, %v1736
  %1738 = vmatmul.bf16.gmra.mxu0 %v840
  %v1739 = vpop.f32.mrf.mxu0
  %v1740 = vadd.f32 %v1565, %v1739
  %v1741 = vpop.f32.mrf.mxu0
  %v1742 = vadd.f32 %v1567, %v1741
  %1743 = vmatmul.bf16.gmra.mxu0 %v843
  %v1744 = vpop.f32.mrf.mxu0
  %v1745 = vadd.f32 %v1570, %v1744
  %v1746 = vpop.f32.mrf.mxu0
  %v1747 = vadd.f32 %v1572, %v1746
  %1748 = vmatmul.bf16.gmra.mxu0 %v846
  %v1749 = vpop.f32.mrf.mxu0
  %v1750 = vadd.f32 %v1575, %v1749
  %v1751 = vpop.f32.mrf.mxu0
  %v1752 = vadd.f32 %v1577, %v1751
  %1753 = vmatmul.bf16.gmra.mxu0 %v849
  %v1754 = vpop.f32.mrf.mxu0
  %v1755 = vadd.f32 %v1580, %v1754
  %v1756 = vpop.f32.mrf.mxu0
  %v1757 = vadd.f32 %v1582, %v1756
  %1758 = vmatmul.bf16.gmra.mxu0 %v852
  %v1759 = vpop.f32.mrf.mxu0
  %v1760 = vadd.f32 %v1585, %v1759
  %v1761 = vpop.f32.mrf.mxu0
  %v1762 = vadd.f32 %v1587, %v1761
  %1763 = vmatmul.bf16.gmra.mxu0 %v855
  %v1764 = vpop.f32.mrf.mxu0
  %v1765 = vadd.f32 %v1590, %v1764
  %v1766 = vpop.f32.mrf.mxu0
  %v1767 = vadd.f32 %v1592, %v1766
  %1768 = vmatmul.bf16.gmra.mxu0 %v858
  %v1769 = vpop.f32.mrf.mxu0
  %v1770 = vadd.f32 %v1595, %v1769
  %v1771 = vpop.f32.mrf.mxu0
  %v1772 = vadd.f32 %v1597, %v1771
  %1773 = vmatmul.bf16.gmra.mxu0 %v861
  %v1774 = vpop.f32.mrf.mxu0
  %v1775 = vadd.f32 %v1600, %v1774
  %v1776 = vpop.f32.mrf.mxu0
  %v1777 = vadd.f32 %v1602, %v1776
  %1778 = vmatmul.bf16.gmra.mxu0 %v864
  %v1779 = vpop.f32.mrf.mxu0
  %v1780 = vadd.f32 %v1605, %v1779
  %v1781 = vpop.f32.mrf.mxu0
  %v1782 = vadd.f32 %v1607, %v1781
  %1783 = vmatmul.bf16.gmra.mxu0 %v867
  %v1784 = vpop.f32.mrf.mxu0
  %v1785 = vadd.f32 %v1610, %v1784
  %v1786 = vpop.f32.mrf.mxu0
  %v1787 = vadd.f32 %v1612, %v1786
  %1788 = vdwg.mxu0
  %v1789 = vld [vmem:[%s14] sm:$0xf]
  %v1791 = vsel %vm403, %v1789, 0
  %1793 = vmatpush.bf16.msra.mxu0 0
  %1794 = vmatpush.bf16.msra.mxu0 0
  %1795 = vmatpush.bf16.msra.mxu0 0
  %1796 = vmatpush.bf16.msra.mxu0 0
  %1797 = vmatpush.bf16.msra.mxu0 0
  %1798 = vmatpush.bf16.msra.mxu0 0
  %1799 = vmatpush.bf16.msra.mxu0 0
  %1800 = vmatpush.bf16.msra.mxu0 %v1791
  %1801 = vmatmul.bf16.gmra.mxu0 %v1040
  %v1802 = vpop.f32.mrf.mxu0
  %v1803 = vadd.f32 0.0, %v1802
  %v1804 = vpop.f32.mrf.mxu0
  %v1805 = vadd.f32 0.0, %v1804
  %1806 = vmatmul.bf16.gmra.mxu0 %v1043
  %v1807 = vpop.f32.mrf.mxu0
  %v1808 = vadd.f32 0.0, %v1807
  %v1809 = vpop.f32.mrf.mxu0
  %v1810 = vadd.f32 0.0, %v1809
  %1811 = vmatmul.bf16.gmra.mxu0 %v1046
  %v1812 = vpop.f32.mrf.mxu0
  %v1813 = vadd.f32 0.0, %v1812
  %v1814 = vpop.f32.mrf.mxu0
  %v1815 = vadd.f32 0.0, %v1814
  %1816 = vmatmul.bf16.gmra.mxu0 %v1049
  %v1817 = vpop.f32.mrf.mxu0
  %v1818 = vadd.f32 0.0, %v1817
  %v1819 = vpop.f32.mrf.mxu0
  %v1820 = vadd.f32 0.0, %v1819
  %1821 = vmatmul.bf16.gmra.mxu0 %v1052
  %v1822 = vpop.f32.mrf.mxu0
  %v1823 = vadd.f32 0.0, %v1822
  %v1824 = vpop.f32.mrf.mxu0
  %v1825 = vadd.f32 0.0, %v1824
  %1826 = vmatmul.bf16.gmra.mxu0 %v1055
  %v1827 = vpop.f32.mrf.mxu0
  %v1828 = vadd.f32 0.0, %v1827
  %v1829 = vpop.f32.mrf.mxu0
  %v1830 = vadd.f32 0.0, %v1829
  %1831 = vmatmul.bf16.gmra.mxu0 %v1058
  %v1832 = vpop.f32.mrf.mxu0
  %v1833 = vadd.f32 0.0, %v1832
  %v1834 = vpop.f32.mrf.mxu0
  %v1835 = vadd.f32 0.0, %v1834
  %1836 = vmatmul.bf16.gmra.mxu0 %v1061
  %v1837 = vpop.f32.mrf.mxu0
  %v1838 = vadd.f32 0.0, %v1837
  %v1839 = vpop.f32.mrf.mxu0
  %v1840 = vadd.f32 0.0, %v1839
  %1841 = vmatmul.bf16.gmra.mxu0 %v1064
  %v1842 = vpop.f32.mrf.mxu0
  %v1843 = vadd.f32 0.0, %v1842
  %v1844 = vpop.f32.mrf.mxu0
  %v1845 = vadd.f32 0.0, %v1844
  %1846 = vmatmul.bf16.gmra.mxu0 %v1067
  %v1847 = vpop.f32.mrf.mxu0
  %v1848 = vadd.f32 0.0, %v1847
  %v1849 = vpop.f32.mrf.mxu0
  %v1850 = vadd.f32 0.0, %v1849
  %1851 = vmatmul.bf16.gmra.mxu0 %v1070
  %v1852 = vpop.f32.mrf.mxu0
  %v1853 = vadd.f32 0.0, %v1852
  %v1854 = vpop.f32.mrf.mxu0
  %v1855 = vadd.f32 0.0, %v1854
  %1856 = vmatmul.bf16.gmra.mxu0 %v1073
  %v1857 = vpop.f32.mrf.mxu0
  %v1858 = vadd.f32 0.0, %v1857
  %v1859 = vpop.f32.mrf.mxu0
  %v1860 = vadd.f32 0.0, %v1859
  %1861 = vmatmul.bf16.gmra.mxu0 %v1076
  %v1862 = vpop.f32.mrf.mxu0
  %v1863 = vadd.f32 0.0, %v1862
  %v1864 = vpop.f32.mrf.mxu0
  %v1865 = vadd.f32 0.0, %v1864
  %1866 = vmatmul.bf16.gmra.mxu0 %v1079
  %v1867 = vpop.f32.mrf.mxu0
  %v1868 = vadd.f32 0.0, %v1867
  %v1869 = vpop.f32.mrf.mxu0
  %v1870 = vadd.f32 0.0, %v1869
  %1871 = vmatmul.bf16.gmra.mxu0 %v1082
  %v1872 = vpop.f32.mrf.mxu0
  %v1873 = vadd.f32 0.0, %v1872
  %v1874 = vpop.f32.mrf.mxu0
  %v1875 = vadd.f32 0.0, %v1874
  %1876 = vmatmul.bf16.gmra.mxu0 %v1085
  %v1877 = vpop.f32.mrf.mxu0
  %v1878 = vadd.f32 0.0, %v1877
  %v1879 = vpop.f32.mrf.mxu0
  %v1880 = vadd.f32 0.0, %v1879
  %1881 = vmatmul.bf16.gmra.mxu0 %v1088
  %v1882 = vpop.f32.mrf.mxu0
  %v1883 = vadd.f32 0.0, %v1882
  %v1884 = vpop.f32.mrf.mxu0
  %v1885 = vadd.f32 0.0, %v1884
  %1886 = vmatmul.bf16.gmra.mxu0 %v1091
  %v1887 = vpop.f32.mrf.mxu0
  %v1888 = vadd.f32 0.0, %v1887
  %v1889 = vpop.f32.mrf.mxu0
  %v1890 = vadd.f32 0.0, %v1889
  %1891 = vmatmul.bf16.gmra.mxu0 %v1094
  %v1892 = vpop.f32.mrf.mxu0
  %v1893 = vadd.f32 0.0, %v1892
  %v1894 = vpop.f32.mrf.mxu0
  %v1895 = vadd.f32 0.0, %v1894
  %1896 = vmatmul.bf16.gmra.mxu0 %v1097
  %v1897 = vpop.f32.mrf.mxu0
  %v1898 = vadd.f32 0.0, %v1897
  %v1899 = vpop.f32.mrf.mxu0
  %v1900 = vadd.f32 0.0, %v1899
  %1901 = vmatmul.bf16.gmra.mxu0 %v1100
  %v1902 = vpop.f32.mrf.mxu0
  %v1903 = vadd.f32 0.0, %v1902
  %v1904 = vpop.f32.mrf.mxu0
  %v1905 = vadd.f32 0.0, %v1904
  %1906 = vmatmul.bf16.gmra.mxu0 %v1103
  %v1907 = vpop.f32.mrf.mxu0
  %v1908 = vadd.f32 0.0, %v1907
  %v1909 = vpop.f32.mrf.mxu0
  %v1910 = vadd.f32 0.0, %v1909
  %1911 = vmatmul.bf16.gmra.mxu0 %v1106
  %v1912 = vpop.f32.mrf.mxu0
  %v1913 = vadd.f32 0.0, %v1912
  %v1914 = vpop.f32.mrf.mxu0
  %v1915 = vadd.f32 0.0, %v1914
  %1916 = vmatmul.bf16.gmra.mxu0 %v1109
  %v1917 = vpop.f32.mrf.mxu0
  %v1918 = vadd.f32 0.0, %v1917
  %v1919 = vpop.f32.mrf.mxu0
  %v1920 = vadd.f32 0.0, %v1919
  %1921 = vmatmul.bf16.gmra.mxu0 %v1112
  %v1922 = vpop.f32.mrf.mxu0
  %v1923 = vadd.f32 0.0, %v1922
  %v1924 = vpop.f32.mrf.mxu0
  %v1925 = vadd.f32 0.0, %v1924
  %1926 = vmatmul.bf16.gmra.mxu0 %v1115
  %v1927 = vpop.f32.mrf.mxu0
  %v1928 = vadd.f32 0.0, %v1927
  %v1929 = vpop.f32.mrf.mxu0
  %v1930 = vadd.f32 0.0, %v1929
  %1931 = vmatmul.bf16.gmra.mxu0 %v1118
  %v1932 = vpop.f32.mrf.mxu0
  %v1933 = vadd.f32 0.0, %v1932
  %v1934 = vpop.f32.mrf.mxu0
  %v1935 = vadd.f32 0.0, %v1934
  %1936 = vmatmul.bf16.gmra.mxu0 %v1121
  %v1937 = vpop.f32.mrf.mxu0
  %v1938 = vadd.f32 0.0, %v1937
  %v1939 = vpop.f32.mrf.mxu0
  %v1940 = vadd.f32 0.0, %v1939
  %1941 = vmatmul.bf16.gmra.mxu0 %v1124
  %v1942 = vpop.f32.mrf.mxu0
  %v1943 = vadd.f32 0.0, %v1942
  %v1944 = vpop.f32.mrf.mxu0
  %v1945 = vadd.f32 0.0, %v1944
  %1946 = vmatmul.bf16.gmra.mxu0 %v1127
  %v1947 = vpop.f32.mrf.mxu0
  %v1948 = vadd.f32 0.0, %v1947
  %v1949 = vpop.f32.mrf.mxu0
  %v1950 = vadd.f32 0.0, %v1949
  %1951 = vmatmul.bf16.gmra.mxu0 %v1130
  %v1952 = vpop.f32.mrf.mxu0
  %v1953 = vadd.f32 0.0, %v1952
  %v1954 = vpop.f32.mrf.mxu0
  %v1955 = vadd.f32 0.0, %v1954
  %1956 = vmatmul.bf16.gmra.mxu0 %v1133
  %v1957 = vpop.f32.mrf.mxu0
  %v1958 = vadd.f32 0.0, %v1957
  %v1959 = vpop.f32.mrf.mxu0
  %v1960 = vadd.f32 0.0, %v1959
  %1961 = vdwg.mxu0
  %v1962 = vadd.f32 %v1630, %v1803
  %v1963 = vadd.f32 %v1632, %v1805
  %v1964 = vadd.f32 %v1635, %v1808
  %v1965 = vadd.f32 %v1637, %v1810
  %v1966 = vadd.f32 %v1640, %v1813
  %v1967 = vadd.f32 %v1642, %v1815
  %v1968 = vadd.f32 %v1645, %v1818
  %v1969 = vadd.f32 %v1647, %v1820
  %v1970 = vadd.f32 %v1650, %v1823
  %v1971 = vadd.f32 %v1652, %v1825
  %v1972 = vadd.f32 %v1655, %v1828
  %v1973 = vadd.f32 %v1657, %v1830
  %v1974 = vadd.f32 %v1660, %v1833
  %v1975 = vadd.f32 %v1662, %v1835
  %v1976 = vadd.f32 %v1665, %v1838
  %v1977 = vadd.f32 %v1667, %v1840
  %v1978 = vadd.f32 %v1670, %v1843
  %v1979 = vadd.f32 %v1672, %v1845
  %v1980 = vadd.f32 %v1675, %v1848
  %v1981 = vadd.f32 %v1677, %v1850
  %v1982 = vadd.f32 %v1680, %v1853
  %v1983 = vadd.f32 %v1682, %v1855
  %v1984 = vadd.f32 %v1685, %v1858
  %v1985 = vadd.f32 %v1687, %v1860
  %v1986 = vadd.f32 %v1690, %v1863
  %v1987 = vadd.f32 %v1692, %v1865
  %v1988 = vadd.f32 %v1695, %v1868
  %v1989 = vadd.f32 %v1697, %v1870
  %v1990 = vadd.f32 %v1700, %v1873
  %v1991 = vadd.f32 %v1702, %v1875
  %v1992 = vadd.f32 %v1705, %v1878
  %v1993 = vadd.f32 %v1707, %v1880
  %v1994 = vadd.f32 %v1710, %v1883
  %v1995 = vadd.f32 %v1712, %v1885
  %v1996 = vadd.f32 %v1715, %v1888
  %v1997 = vadd.f32 %v1717, %v1890
  %v1998 = vadd.f32 %v1720, %v1893
  %v1999 = vadd.f32 %v1722, %v1895
  %v2000 = vadd.f32 %v1725, %v1898
  %v2001 = vadd.f32 %v1727, %v1900
  %v2002 = vadd.f32 %v1730, %v1903
  %v2003 = vadd.f32 %v1732, %v1905
  %v2004 = vadd.f32 %v1735, %v1908
  %v2005 = vadd.f32 %v1737, %v1910
  %v2006 = vadd.f32 %v1740, %v1913
  %v2007 = vadd.f32 %v1742, %v1915
  %v2008 = vadd.f32 %v1745, %v1918
  %v2009 = vadd.f32 %v1747, %v1920
  %v2010 = vadd.f32 %v1750, %v1923
  %v2011 = vadd.f32 %v1752, %v1925
  %v2012 = vadd.f32 %v1755, %v1928
  %v2013 = vadd.f32 %v1757, %v1930
  %v2014 = vadd.f32 %v1760, %v1933
  %v2015 = vadd.f32 %v1762, %v1935
  %v2016 = vadd.f32 %v1765, %v1938
  %v2017 = vadd.f32 %v1767, %v1940
  %v2018 = vadd.f32 %v1770, %v1943
  %v2019 = vadd.f32 %v1772, %v1945
  %v2020 = vadd.f32 %v1775, %v1948
  %v2021 = vadd.f32 %v1777, %v1950
  %v2022 = vadd.f32 %v1780, %v1953
  %v2023 = vadd.f32 %v1782, %v1955
  %v2024 = vadd.f32 %v1785, %v1958
  %v2025 = vadd.f32 %v1787, %v1960
  %v2026 = vld [vmem:[%s15] sm:$0x1]
  %v2028 = vperm.slane %v2026, 0
  %v2030 = vadd.f32 %v1962, %v2028
  %v2031 = vadd.f32 %v1963, %v2028
  %v2032 = vadd.f32 %v1964, %v2028
  %v2033 = vadd.f32 %v1965, %v2028
  %v2034 = vadd.f32 %v1966, %v2028
  %v2035 = vadd.f32 %v1967, %v2028
  %v2036 = vadd.f32 %v1968, %v2028
  %v2037 = vadd.f32 %v1969, %v2028
  %v2038 = vadd.f32 %v1970, %v2028
  %v2039 = vadd.f32 %v1971, %v2028
  %v2040 = vadd.f32 %v1972, %v2028
  %v2041 = vadd.f32 %v1973, %v2028
  %v2042 = vadd.f32 %v1974, %v2028
  %v2043 = vadd.f32 %v1975, %v2028
  %v2044 = vadd.f32 %v1976, %v2028
  %v2045 = vadd.f32 %v1977, %v2028
  %v2046 = vadd.f32 %v1978, %v2028
  %v2047 = vadd.f32 %v1979, %v2028
  %v2048 = vadd.f32 %v1980, %v2028
  %v2049 = vadd.f32 %v1981, %v2028
  %v2050 = vadd.f32 %v1982, %v2028
  %v2051 = vadd.f32 %v1983, %v2028
  %v2052 = vadd.f32 %v1984, %v2028
  %v2053 = vadd.f32 %v1985, %v2028
  %v2054 = vadd.f32 %v1986, %v2028
  %v2055 = vadd.f32 %v1987, %v2028
  %v2056 = vadd.f32 %v1988, %v2028
  %v2057 = vadd.f32 %v1989, %v2028
  %v2058 = vadd.f32 %v1990, %v2028
  %v2059 = vadd.f32 %v1991, %v2028
  %v2060 = vadd.f32 %v1992, %v2028
  %v2061 = vadd.f32 %v1993, %v2028
  %v2062 = vadd.f32 %v1994, %v2028
  %v2063 = vadd.f32 %v1995, %v2028
  %v2064 = vadd.f32 %v1996, %v2028
  %v2065 = vadd.f32 %v1997, %v2028
  %v2066 = vadd.f32 %v1998, %v2028
  %v2067 = vadd.f32 %v1999, %v2028
  %v2068 = vadd.f32 %v2000, %v2028
  %v2069 = vadd.f32 %v2001, %v2028
  %v2070 = vadd.f32 %v2002, %v2028
  %v2071 = vadd.f32 %v2003, %v2028
  %v2072 = vadd.f32 %v2004, %v2028
  %v2073 = vadd.f32 %v2005, %v2028
  %v2074 = vadd.f32 %v2006, %v2028
  %v2075 = vadd.f32 %v2007, %v2028
  %v2076 = vadd.f32 %v2008, %v2028
  %v2077 = vadd.f32 %v2009, %v2028
  %v2078 = vadd.f32 %v2010, %v2028
  %v2079 = vadd.f32 %v2011, %v2028
  %v2080 = vadd.f32 %v2012, %v2028
  %v2081 = vadd.f32 %v2013, %v2028
  %v2082 = vadd.f32 %v2014, %v2028
  %v2083 = vadd.f32 %v2015, %v2028
  %v2084 = vadd.f32 %v2016, %v2028
  %v2085 = vadd.f32 %v2017, %v2028
  %v2086 = vadd.f32 %v2018, %v2028
  %v2087 = vadd.f32 %v2019, %v2028
  %v2088 = vadd.f32 %v2020, %v2028
  %v2089 = vadd.f32 %v2021, %v2028
  %v2090 = vadd.f32 %v2022, %v2028
  %v2091 = vadd.f32 %v2023, %v2028
  %v2092 = vadd.f32 %v2024, %v2028
  %v2093 = vadd.f32 %v2025, %v2028
  %v2102 = vrot.slane %v488, 1
  %v2103 = vrot.slane %v488, 2
  %v2104 = vrot.slane %v488, 3
  %v2105 = vrot.slane %v488, 4
  %v2106 = vrot.slane %v488, 5
  %v2107 = vrot.slane %v488, 6
  %v2108 = vrot.slane %v488, 7
  %v2109 = vrot.slane %v489, 1
  %v2110 = vrot.slane %v489, 2
  %v2111 = vrot.slane %v489, 3
  %v2112 = vrot.slane %v489, 4
  %v2113 = vrot.slane %v489, 5
  %v2114 = vrot.slane %v489, 6
  %v2115 = vrot.slane %v489, 7
  %v2116 = vrot.slane %v490, 1
  %v2117 = vrot.slane %v490, 2
  %v2118 = vrot.slane %v490, 3
  %v2119 = vrot.slane %v490, 4
  %v2120 = vrot.slane %v490, 5
  %v2121 = vrot.slane %v490, 6
  %v2122 = vrot.slane %v490, 7
  %v2123 = vrot.slane %v491, 1
  %v2124 = vrot.slane %v491, 2
  %v2125 = vrot.slane %v491, 3
  %v2126 = vrot.slane %v491, 4
  %v2127 = vrot.slane %v491, 5
  %v2128 = vrot.slane %v491, 6
  %v2129 = vrot.slane %v491, 7
  %v2130 = vrot.slane %v492, 1
  %v2131 = vrot.slane %v492, 2
  %v2132 = vrot.slane %v492, 3
  %v2133 = vrot.slane %v492, 4
  %v2134 = vrot.slane %v492, 5
  %v2135 = vrot.slane %v492, 6
  %v2136 = vrot.slane %v492, 7
  %v2137 = vrot.slane %v493, 1
  %v2138 = vrot.slane %v493, 2
  %v2139 = vrot.slane %v493, 3
  %v2140 = vrot.slane %v493, 4
  %v2141 = vrot.slane %v493, 5
  %v2142 = vrot.slane %v493, 6
  %v2143 = vrot.slane %v493, 7
  %v2144 = vrot.slane %v494, 1
  %v2145 = vrot.slane %v494, 2
  %v2146 = vrot.slane %v494, 3
  %v2147 = vrot.slane %v494, 4
  %v2148 = vrot.slane %v494, 5
  %v2149 = vrot.slane %v494, 6
  %v2150 = vrot.slane %v494, 7
  %v2151 = vrot.slane %v495, 1
  %v2152 = vrot.slane %v495, 2
  %v2153 = vrot.slane %v495, 3
  %v2154 = vrot.slane %v495, 4
  %v2155 = vrot.slane %v495, 5
  %v2156 = vrot.slane %v495, 6
  %v2157 = vrot.slane %v495, 7
  %v2158 = vperm.slane %v488, 0
  %v2159 = vperm.slane %v2102, 0
  %v2160 = vperm.slane %v2103, 0
  %v2161 = vperm.slane %v2104, 0
  %v2162 = vperm.slane %v2105, 0
  %v2163 = vperm.slane %v2106, 0
  %v2164 = vperm.slane %v2107, 0
  %v2165 = vperm.slane %v2108, 0
  %v2166 = vperm.slane %v489, 0
  %v2167 = vperm.slane %v2109, 0
  %v2168 = vperm.slane %v2110, 0
  %v2169 = vperm.slane %v2111, 0
  %v2170 = vperm.slane %v2112, 0
  %v2171 = vperm.slane %v2113, 0
  %v2172 = vperm.slane %v2114, 0
  %v2173 = vperm.slane %v2115, 0
  %v2174 = vperm.slane %v490, 0
  %v2175 = vperm.slane %v2116, 0
  %v2176 = vperm.slane %v2117, 0
  %v2177 = vperm.slane %v2118, 0
  %v2178 = vperm.slane %v2119, 0
  %v2179 = vperm.slane %v2120, 0
  %v2180 = vperm.slane %v2121, 0
  %v2181 = vperm.slane %v2122, 0
  %v2182 = vperm.slane %v491, 0
  %v2183 = vperm.slane %v2123, 0
  %v2184 = vperm.slane %v2124, 0
  %v2185 = vperm.slane %v2125, 0
  %v2186 = vperm.slane %v2126, 0
  %v2187 = vperm.slane %v2127, 0
  %v2188 = vperm.slane %v2128, 0
  %v2189 = vperm.slane %v2129, 0
  %v2190 = vperm.slane %v492, 0
  %v2191 = vperm.slane %v2130, 0
  %v2192 = vperm.slane %v2131, 0
  %v2193 = vperm.slane %v2132, 0
  %v2194 = vperm.slane %v2133, 0
  %v2195 = vperm.slane %v2134, 0
  %v2196 = vperm.slane %v2135, 0
  %v2197 = vperm.slane %v2136, 0
  %v2198 = vperm.slane %v493, 0
  %v2199 = vperm.slane %v2137, 0
  %v2200 = vperm.slane %v2138, 0
  %v2201 = vperm.slane %v2139, 0
  %v2202 = vperm.slane %v2140, 0
  %v2203 = vperm.slane %v2141, 0
  %v2204 = vperm.slane %v2142, 0
  %v2205 = vperm.slane %v2143, 0
  %v2206 = vperm.slane %v494, 0
  %v2207 = vperm.slane %v2144, 0
  %v2208 = vperm.slane %v2145, 0
  %v2209 = vperm.slane %v2146, 0
  %v2210 = vperm.slane %v2147, 0
  %v2211 = vperm.slane %v2148, 0
  %v2212 = vperm.slane %v2149, 0
  %v2213 = vperm.slane %v2150, 0
  %v2214 = vperm.slane %v495, 0
  %v2215 = vperm.slane %v2151, 0
  %v2216 = vperm.slane %v2152, 0
  %v2217 = vperm.slane %v2153, 0
  %v2218 = vperm.slane %v2154, 0
  %v2219 = vperm.slane %v2155, 0
  %v2220 = vperm.slane %v2156, 0
  %v2221 = vperm.slane %v2157, 0
  %v2286 = vmul.f32 %v2158, %v1375
  %v2287 = vmul.f32 %v2159, %v1376
  %v2288 = vmul.f32 %v2160, %v1377
  %v2289 = vmul.f32 %v2161, %v1378
  %v2290 = vmul.f32 %v2162, %v1379
  %v2291 = vmul.f32 %v2163, %v1380
  %v2292 = vmul.f32 %v2164, %v1381
  %v2293 = vmul.f32 %v2165, %v1382
  %v2294 = vmul.f32 %v2166, %v1383
  %v2295 = vmul.f32 %v2167, %v1384
  %v2296 = vmul.f32 %v2168, %v1385
  %v2297 = vmul.f32 %v2169, %v1386
  %v2298 = vmul.f32 %v2170, %v1387
  %v2299 = vmul.f32 %v2171, %v1388
  %v2300 = vmul.f32 %v2172, %v1389
  %v2301 = vmul.f32 %v2173, %v1390
  %v2302 = vmul.f32 %v2174, %v1391
  %v2303 = vmul.f32 %v2175, %v1392
  %v2304 = vmul.f32 %v2176, %v1393
  %v2305 = vmul.f32 %v2177, %v1394
  %v2306 = vmul.f32 %v2178, %v1395
  %v2307 = vmul.f32 %v2179, %v1396
  %v2308 = vmul.f32 %v2180, %v1397
  %v2309 = vmul.f32 %v2181, %v1398
  %v2310 = vmul.f32 %v2182, %v1399
  %v2311 = vmul.f32 %v2183, %v1400
  %v2312 = vmul.f32 %v2184, %v1401
  %v2313 = vmul.f32 %v2185, %v1402
  %v2314 = vmul.f32 %v2186, %v1403
  %v2315 = vmul.f32 %v2187, %v1404
  %v2316 = vmul.f32 %v2188, %v1405
  %v2317 = vmul.f32 %v2189, %v1406
  %v2318 = vmul.f32 %v2190, %v1407
  %v2319 = vmul.f32 %v2191, %v1408
  %v2320 = vmul.f32 %v2192, %v1409
  %v2321 = vmul.f32 %v2193, %v1410
  %v2322 = vmul.f32 %v2194, %v1411
  %v2323 = vmul.f32 %v2195, %v1412
  %v2324 = vmul.f32 %v2196, %v1413
  %v2325 = vmul.f32 %v2197, %v1414
  %v2326 = vmul.f32 %v2198, %v1415
  %v2327 = vmul.f32 %v2199, %v1416
  %v2328 = vmul.f32 %v2200, %v1417
  %v2329 = vmul.f32 %v2201, %v1418
  %v2330 = vmul.f32 %v2202, %v1419
  %v2331 = vmul.f32 %v2203, %v1420
  %v2332 = vmul.f32 %v2204, %v1421
  %v2333 = vmul.f32 %v2205, %v1422
  %v2334 = vmul.f32 %v2206, %v1423
  %v2335 = vmul.f32 %v2207, %v1424
  %v2336 = vmul.f32 %v2208, %v1425
  %v2337 = vmul.f32 %v2209, %v1426
  %v2338 = vmul.f32 %v2210, %v1427
  %v2339 = vmul.f32 %v2211, %v1428
  %v2340 = vmul.f32 %v2212, %v1429
  %v2341 = vmul.f32 %v2213, %v1430
  %v2342 = vmul.f32 %v2214, %v1431
  %v2343 = vmul.f32 %v2215, %v1432
  %v2344 = vmul.f32 %v2216, %v1433
  %v2345 = vmul.f32 %v2217, %v1434
  %v2346 = vmul.f32 %v2218, %v1435
  %v2347 = vmul.f32 %v2219, %v1436
  %v2348 = vmul.f32 %v2220, %v1437
  %v2349 = vmul.f32 %v2221, %v1438
  %v2350 = vpack.c.bf16 %v2287, %v2286
  %v2351 = vpack.c.bf16 %v2289, %v2288
  %v2352 = vpack.c.bf16 %v2291, %v2290
  %v2353 = vpack.c.bf16 %v2293, %v2292
  %v2354 = vpack.c.bf16 %v2295, %v2294
  %v2355 = vpack.c.bf16 %v2297, %v2296
  %v2356 = vpack.c.bf16 %v2299, %v2298
  %v2357 = vpack.c.bf16 %v2301, %v2300
  %v2358 = vpack.c.bf16 %v2303, %v2302
  %v2359 = vpack.c.bf16 %v2305, %v2304
  %v2360 = vpack.c.bf16 %v2307, %v2306
  %v2361 = vpack.c.bf16 %v2309, %v2308
  %v2362 = vpack.c.bf16 %v2311, %v2310
  %v2363 = vpack.c.bf16 %v2313, %v2312
  %v2364 = vpack.c.bf16 %v2315, %v2314
  %v2365 = vpack.c.bf16 %v2317, %v2316
  %v2366 = vpack.c.bf16 %v2319, %v2318
  %v2367 = vpack.c.bf16 %v2321, %v2320
  %v2368 = vpack.c.bf16 %v2323, %v2322
  %v2369 = vpack.c.bf16 %v2325, %v2324
  %v2370 = vpack.c.bf16 %v2327, %v2326
  %v2371 = vpack.c.bf16 %v2329, %v2328
  %v2372 = vpack.c.bf16 %v2331, %v2330
  %v2373 = vpack.c.bf16 %v2333, %v2332
  %v2374 = vpack.c.bf16 %v2335, %v2334
  %v2375 = vpack.c.bf16 %v2337, %v2336
  %v2376 = vpack.c.bf16 %v2339, %v2338
  %v2377 = vpack.c.bf16 %v2341, %v2340
  %v2378 = vpack.c.bf16 %v2343, %v2342
  %v2379 = vpack.c.bf16 %v2345, %v2344
  %v2380 = vpack.c.bf16 %v2347, %v2346
  %v2381 = vpack.c.bf16 %v2349, %v2348
  %v2382 = vld [vmem:[%s21] sm:$0xf]
  %v2383 = vld [vmem:[%s21 + $0x4] sm:$0xf]
  %v2384 = vld [vmem:[%s21 + $0x8] sm:$0xf]
  %v2385 = vld [vmem:[%s21 + $0xc] sm:$0xf]
  %v2390 = vunpack.c.l.b16 %v2382
  %v2391 = vunpack.c.l.b16 %v2383
  %v2392 = vunpack.c.l.b16 %v2384
  %v2393 = vunpack.c.l.b16 %v2385
  %v2394 = vpack.c.b16 %v2391, %v2390
  %v2395 = vpack.c.b16 %v2393, %v2392
  %vm2398 = vcmask 261120
  %v2400 = vsel %vm2398, %v2350, 0
  %v2403 = vsel %vm2398, %v2351, 0
  %v2406 = vsel %vm2398, %v2352, 0
  %v2409 = vsel %vm2398, %v2353, 0
  %v2412 = vsel %vm2398, %v2354, 0
  %v2415 = vsel %vm2398, %v2355, 0
  %v2418 = vsel %vm2398, %v2356, 0
  %v2421 = vsel %vm2398, %v2357, 0
  %v2424 = vsel %vm2398, %v2358, 0
  %v2427 = vsel %vm2398, %v2359, 0
  %v2430 = vsel %vm2398, %v2360, 0
  %v2433 = vsel %vm2398, %v2361, 0
  %v2436 = vsel %vm2398, %v2362, 0
  %v2439 = vsel %vm2398, %v2363, 0
  %v2442 = vsel %vm2398, %v2364, 0
  %v2445 = vsel %vm2398, %v2365, 0
  %v2448 = vsel %vm2398, %v2366, 0
  %v2451 = vsel %vm2398, %v2367, 0
  %v2454 = vsel %vm2398, %v2368, 0
  %v2457 = vsel %vm2398, %v2369, 0
  %v2460 = vsel %vm2398, %v2370, 0
  %v2463 = vsel %vm2398, %v2371, 0
  %v2466 = vsel %vm2398, %v2372, 0
  %v2469 = vsel %vm2398, %v2373, 0
  %v2472 = vsel %vm2398, %v2374, 0
  %v2475 = vsel %vm2398, %v2375, 0
  %v2478 = vsel %vm2398, %v2376, 0
  %v2481 = vsel %vm2398, %v2377, 0
  %v2484 = vsel %vm2398, %v2378, 0
  %v2487 = vsel %vm2398, %v2379, 0
  %v2490 = vsel %vm2398, %v2380, 0
  %v2493 = vsel %vm2398, %v2381, 0
  %2495 = vmatpush.bf16.msra.mxu0 0
  %2496 = vmatpush.bf16.msra.mxu0 0
  %2497 = vmatpush.bf16.msra.mxu0 0
  %2498 = vmatpush.bf16.msra.mxu0 0
  %2499 = vmatpush.bf16.msra.mxu0 0
  %2500 = vmatpush.bf16.msra.mxu0 0
  %2501 = vmatpush.bf16.msra.mxu0 %v2395
  %2502 = vmatpush.bf16.msra.mxu0 %v2394
  %2503 = vmatmul.bf16.gmra.mxu0 %v2400
  %v2504 = vpop.f32.mrf.mxu0
  %v2505 = vadd.f32 0.0, %v2504
  %v2506 = vpop.f32.mrf.mxu0
  %v2507 = vadd.f32 0.0, %v2506
  %2508 = vmatmul.bf16.gmra.mxu0 %v2403
  %v2509 = vpop.f32.mrf.mxu0
  %v2510 = vadd.f32 0.0, %v2509
  %v2511 = vpop.f32.mrf.mxu0
  %v2512 = vadd.f32 0.0, %v2511
  %2513 = vmatmul.bf16.gmra.mxu0 %v2406
  %v2514 = vpop.f32.mrf.mxu0
  %v2515 = vadd.f32 0.0, %v2514
  %v2516 = vpop.f32.mrf.mxu0
  %v2517 = vadd.f32 0.0, %v2516
  %2518 = vmatmul.bf16.gmra.mxu0 %v2409
  %v2519 = vpop.f32.mrf.mxu0
  %v2520 = vadd.f32 0.0, %v2519
  %v2521 = vpop.f32.mrf.mxu0
  %v2522 = vadd.f32 0.0, %v2521
  %2523 = vmatmul.bf16.gmra.mxu0 %v2412
  %v2524 = vpop.f32.mrf.mxu0
  %v2525 = vadd.f32 0.0, %v2524
  %v2526 = vpop.f32.mrf.mxu0
  %v2527 = vadd.f32 0.0, %v2526
  %2528 = vmatmul.bf16.gmra.mxu0 %v2415
  %v2529 = vpop.f32.mrf.mxu0
  %v2530 = vadd.f32 0.0, %v2529
  %v2531 = vpop.f32.mrf.mxu0
  %v2532 = vadd.f32 0.0, %v2531
  %2533 = vmatmul.bf16.gmra.mxu0 %v2418
  %v2534 = vpop.f32.mrf.mxu0
  %v2535 = vadd.f32 0.0, %v2534
  %v2536 = vpop.f32.mrf.mxu0
  %v2537 = vadd.f32 0.0, %v2536
  %2538 = vmatmul.bf16.gmra.mxu0 %v2421
  %v2539 = vpop.f32.mrf.mxu0
  %v2540 = vadd.f32 0.0, %v2539
  %v2541 = vpop.f32.mrf.mxu0
  %v2542 = vadd.f32 0.0, %v2541
  %2543 = vmatmul.bf16.gmra.mxu0 %v2424
  %v2544 = vpop.f32.mrf.mxu0
  %v2545 = vadd.f32 0.0, %v2544
  %v2546 = vpop.f32.mrf.mxu0
  %v2547 = vadd.f32 0.0, %v2546
  %2548 = vmatmul.bf16.gmra.mxu0 %v2427
  %v2549 = vpop.f32.mrf.mxu0
  %v2550 = vadd.f32 0.0, %v2549
  %v2551 = vpop.f32.mrf.mxu0
  %v2552 = vadd.f32 0.0, %v2551
  %2553 = vmatmul.bf16.gmra.mxu0 %v2430
  %v2554 = vpop.f32.mrf.mxu0
  %v2555 = vadd.f32 0.0, %v2554
  %v2556 = vpop.f32.mrf.mxu0
  %v2557 = vadd.f32 0.0, %v2556
  %2558 = vmatmul.bf16.gmra.mxu0 %v2433
  %v2559 = vpop.f32.mrf.mxu0
  %v2560 = vadd.f32 0.0, %v2559
  %v2561 = vpop.f32.mrf.mxu0
  %v2562 = vadd.f32 0.0, %v2561
  %2563 = vmatmul.bf16.gmra.mxu0 %v2436
  %v2564 = vpop.f32.mrf.mxu0
  %v2565 = vadd.f32 0.0, %v2564
  %v2566 = vpop.f32.mrf.mxu0
  %v2567 = vadd.f32 0.0, %v2566
  %2568 = vmatmul.bf16.gmra.mxu0 %v2439
  %v2569 = vpop.f32.mrf.mxu0
  %v2570 = vadd.f32 0.0, %v2569
  %v2571 = vpop.f32.mrf.mxu0
  %v2572 = vadd.f32 0.0, %v2571
  %2573 = vmatmul.bf16.gmra.mxu0 %v2442
  %v2574 = vpop.f32.mrf.mxu0
  %v2575 = vadd.f32 0.0, %v2574
  %v2576 = vpop.f32.mrf.mxu0
  %v2577 = vadd.f32 0.0, %v2576
  %2578 = vmatmul.bf16.gmra.mxu0 %v2445
  %v2579 = vpop.f32.mrf.mxu0
  %v2580 = vadd.f32 0.0, %v2579
  %v2581 = vpop.f32.mrf.mxu0
  %v2582 = vadd.f32 0.0, %v2581
  %2583 = vmatmul.bf16.gmra.mxu0 %v2448
  %v2584 = vpop.f32.mrf.mxu0
  %v2585 = vadd.f32 0.0, %v2584
  %v2586 = vpop.f32.mrf.mxu0
  %v2587 = vadd.f32 0.0, %v2586
  %2588 = vmatmul.bf16.gmra.mxu0 %v2451
  %v2589 = vpop.f32.mrf.mxu0
  %v2590 = vadd.f32 0.0, %v2589
  %v2591 = vpop.f32.mrf.mxu0
  %v2592 = vadd.f32 0.0, %v2591
  %2593 = vmatmul.bf16.gmra.mxu0 %v2454
  %v2594 = vpop.f32.mrf.mxu0
  %v2595 = vadd.f32 0.0, %v2594
  %v2596 = vpop.f32.mrf.mxu0
  %v2597 = vadd.f32 0.0, %v2596
  %2598 = vmatmul.bf16.gmra.mxu0 %v2457
  %v2599 = vpop.f32.mrf.mxu0
  %v2600 = vadd.f32 0.0, %v2599
  %v2601 = vpop.f32.mrf.mxu0
  %v2602 = vadd.f32 0.0, %v2601
  %2603 = vmatmul.bf16.gmra.mxu0 %v2460
  %v2604 = vpop.f32.mrf.mxu0
  %v2605 = vadd.f32 0.0, %v2604
  %v2606 = vpop.f32.mrf.mxu0
  %v2607 = vadd.f32 0.0, %v2606
  %2608 = vmatmul.bf16.gmra.mxu0 %v2463
  %v2609 = vpop.f32.mrf.mxu0
  %v2610 = vadd.f32 0.0, %v2609
  %v2611 = vpop.f32.mrf.mxu0
  %v2612 = vadd.f32 0.0, %v2611
  %2613 = vmatmul.bf16.gmra.mxu0 %v2466
  %v2614 = vpop.f32.mrf.mxu0
  %v2615 = vadd.f32 0.0, %v2614
  %v2616 = vpop.f32.mrf.mxu0
  %v2617 = vadd.f32 0.0, %v2616
  %2618 = vmatmul.bf16.gmra.mxu0 %v2469
  %v2619 = vpop.f32.mrf.mxu0
  %v2620 = vadd.f32 0.0, %v2619
  %v2621 = vpop.f32.mrf.mxu0
  %v2622 = vadd.f32 0.0, %v2621
  %2623 = vmatmul.bf16.gmra.mxu0 %v2472
  %v2624 = vpop.f32.mrf.mxu0
  %v2625 = vadd.f32 0.0, %v2624
  %v2626 = vpop.f32.mrf.mxu0
  %v2627 = vadd.f32 0.0, %v2626
  %2628 = vmatmul.bf16.gmra.mxu0 %v2475
  %v2629 = vpop.f32.mrf.mxu0
  %v2630 = vadd.f32 0.0, %v2629
  %v2631 = vpop.f32.mrf.mxu0
  %v2632 = vadd.f32 0.0, %v2631
  %2633 = vmatmul.bf16.gmra.mxu0 %v2478
  %v2634 = vpop.f32.mrf.mxu0
  %v2635 = vadd.f32 0.0, %v2634
  %v2636 = vpop.f32.mrf.mxu0
  %v2637 = vadd.f32 0.0, %v2636
  %2638 = vmatmul.bf16.gmra.mxu0 %v2481
  %v2639 = vpop.f32.mrf.mxu0
  %v2640 = vadd.f32 0.0, %v2639
  %v2641 = vpop.f32.mrf.mxu0
  %v2642 = vadd.f32 0.0, %v2641
  %2643 = vmatmul.bf16.gmra.mxu0 %v2484
  %v2644 = vpop.f32.mrf.mxu0
  %v2645 = vadd.f32 0.0, %v2644
  %v2646 = vpop.f32.mrf.mxu0
  %v2647 = vadd.f32 0.0, %v2646
  %2648 = vmatmul.bf16.gmra.mxu0 %v2487
  %v2649 = vpop.f32.mrf.mxu0
  %v2650 = vadd.f32 0.0, %v2649
  %v2651 = vpop.f32.mrf.mxu0
  %v2652 = vadd.f32 0.0, %v2651
  %2653 = vmatmul.bf16.gmra.mxu0 %v2490
  %v2654 = vpop.f32.mrf.mxu0
  %v2655 = vadd.f32 0.0, %v2654
  %v2656 = vpop.f32.mrf.mxu0
  %v2657 = vadd.f32 0.0, %v2656
  %2658 = vmatmul.bf16.gmra.mxu0 %v2493
  %v2659 = vpop.f32.mrf.mxu0
  %v2660 = vadd.f32 0.0, %v2659
  %v2661 = vpop.f32.mrf.mxu0
  %v2662 = vadd.f32 0.0, %v2661
  %2663 = vdwg.mxu0
  %vm2664 = vcmp.gt.f32.partialorder %v2505, 0.0
  %vm2665 = vcmp.gt.f32.partialorder %v2507, 0.0
  %vm2666 = vcmp.gt.f32.partialorder %v2510, 0.0
  %vm2667 = vcmp.gt.f32.partialorder %v2512, 0.0
  %vm2668 = vcmp.gt.f32.partialorder %v2515, 0.0
  %vm2669 = vcmp.gt.f32.partialorder %v2517, 0.0
  %vm2670 = vcmp.gt.f32.partialorder %v2520, 0.0
  %vm2671 = vcmp.gt.f32.partialorder %v2522, 0.0
  %vm2672 = vcmp.gt.f32.partialorder %v2525, 0.0
  %vm2673 = vcmp.gt.f32.partialorder %v2527, 0.0
  %vm2674 = vcmp.gt.f32.partialorder %v2530, 0.0
  %vm2675 = vcmp.gt.f32.partialorder %v2532, 0.0
  %vm2676 = vcmp.gt.f32.partialorder %v2535, 0.0
  %vm2677 = vcmp.gt.f32.partialorder %v2537, 0.0
  %vm2678 = vcmp.gt.f32.partialorder %v2540, 0.0
  %vm2679 = vcmp.gt.f32.partialorder %v2542, 0.0
  %vm2680 = vcmp.gt.f32.partialorder %v2545, 0.0
  %vm2681 = vcmp.gt.f32.partialorder %v2547, 0.0
  %vm2682 = vcmp.gt.f32.partialorder %v2550, 0.0
  %vm2683 = vcmp.gt.f32.partialorder %v2552, 0.0
  %vm2684 = vcmp.gt.f32.partialorder %v2555, 0.0
  %vm2685 = vcmp.gt.f32.partialorder %v2557, 0.0
  %vm2686 = vcmp.gt.f32.partialorder %v2560, 0.0
  %vm2687 = vcmp.gt.f32.partialorder %v2562, 0.0
  %vm2688 = vcmp.gt.f32.partialorder %v2565, 0.0
  %vm2689 = vcmp.gt.f32.partialorder %v2567, 0.0
  %vm2690 = vcmp.gt.f32.partialorder %v2570, 0.0
  %vm2691 = vcmp.gt.f32.partialorder %v2572, 0.0
  %vm2692 = vcmp.gt.f32.partialorder %v2575, 0.0
  %vm2693 = vcmp.gt.f32.partialorder %v2577, 0.0
  %vm2694 = vcmp.gt.f32.partialorder %v2580, 0.0
  %vm2695 = vcmp.gt.f32.partialorder %v2582, 0.0
  %vm2696 = vcmp.gt.f32.partialorder %v2585, 0.0
  %vm2697 = vcmp.gt.f32.partialorder %v2587, 0.0
  %vm2698 = vcmp.gt.f32.partialorder %v2590, 0.0
  %vm2699 = vcmp.gt.f32.partialorder %v2592, 0.0
  %vm2700 = vcmp.gt.f32.partialorder %v2595, 0.0
  %vm2701 = vcmp.gt.f32.partialorder %v2597, 0.0
  %vm2702 = vcmp.gt.f32.partialorder %v2600, 0.0
  %vm2703 = vcmp.gt.f32.partialorder %v2602, 0.0
  %vm2704 = vcmp.gt.f32.partialorder %v2605, 0.0
  %vm2705 = vcmp.gt.f32.partialorder %v2607, 0.0
  %vm2706 = vcmp.gt.f32.partialorder %v2610, 0.0
  %vm2707 = vcmp.gt.f32.partialorder %v2612, 0.0
  %vm2708 = vcmp.gt.f32.partialorder %v2615, 0.0
  %vm2709 = vcmp.gt.f32.partialorder %v2617, 0.0
  %vm2710 = vcmp.gt.f32.partialorder %v2620, 0.0
  %vm2711 = vcmp.gt.f32.partialorder %v2622, 0.0
  %vm2712 = vcmp.gt.f32.partialorder %v2625, 0.0
  %vm2713 = vcmp.gt.f32.partialorder %v2627, 0.0
  %vm2714 = vcmp.gt.f32.partialorder %v2630, 0.0
  %vm2715 = vcmp.gt.f32.partialorder %v2632, 0.0
  %vm2716 = vcmp.gt.f32.partialorder %v2635, 0.0
  %vm2717 = vcmp.gt.f32.partialorder %v2637, 0.0
  %vm2718 = vcmp.gt.f32.partialorder %v2640, 0.0
  %vm2719 = vcmp.gt.f32.partialorder %v2642, 0.0
  %vm2720 = vcmp.gt.f32.partialorder %v2645, 0.0
  %vm2721 = vcmp.gt.f32.partialorder %v2647, 0.0
  %vm2722 = vcmp.gt.f32.partialorder %v2650, 0.0
  %vm2723 = vcmp.gt.f32.partialorder %v2652, 0.0
  %vm2724 = vcmp.gt.f32.partialorder %v2655, 0.0
  %vm2725 = vcmp.gt.f32.partialorder %v2657, 0.0
  %vm2726 = vcmp.gt.f32.partialorder %v2660, 0.0
  %vm2727 = vcmp.gt.f32.partialorder %v2662, 0.0
  %v2728 = vmul.f32 %v2505, 0.2
  %v2729 = vmul.f32 %v2507, 0.2
  %v2730 = vmul.f32 %v2510, 0.2
  %v2731 = vmul.f32 %v2512, 0.2
  %v2732 = vmul.f32 %v2515, 0.2
  %v2733 = vmul.f32 %v2517, 0.2
  %v2734 = vmul.f32 %v2520, 0.2
  %v2735 = vmul.f32 %v2522, 0.2
  %v2736 = vmul.f32 %v2525, 0.2
  %v2737 = vmul.f32 %v2527, 0.2
  %v2738 = vmul.f32 %v2530, 0.2
  %v2739 = vmul.f32 %v2532, 0.2
  %v2740 = vmul.f32 %v2535, 0.2
  %v2741 = vmul.f32 %v2537, 0.2
  %v2742 = vmul.f32 %v2540, 0.2
  %v2743 = vmul.f32 %v2542, 0.2
  %v2744 = vmul.f32 %v2545, 0.2
  %v2745 = vmul.f32 %v2547, 0.2
  %v2746 = vmul.f32 %v2550, 0.2
  %v2747 = vmul.f32 %v2552, 0.2
  %v2748 = vmul.f32 %v2555, 0.2
  %v2749 = vmul.f32 %v2557, 0.2
  %v2750 = vmul.f32 %v2560, 0.2
  %v2751 = vmul.f32 %v2562, 0.2
  %v2752 = vmul.f32 %v2565, 0.2
  %v2753 = vmul.f32 %v2567, 0.2
  %v2754 = vmul.f32 %v2570, 0.2
  %v2755 = vmul.f32 %v2572, 0.2
  %v2756 = vmul.f32 %v2575, 0.2
  %v2757 = vmul.f32 %v2577, 0.2
  %v2758 = vmul.f32 %v2580, 0.2
  %v2759 = vmul.f32 %v2582, 0.2
  %v2760 = vmul.f32 %v2585, 0.2
  %v2761 = vmul.f32 %v2587, 0.2
  %v2762 = vmul.f32 %v2590, 0.2
  %v2763 = vmul.f32 %v2592, 0.2
  %v2764 = vmul.f32 %v2595, 0.2
  %v2765 = vmul.f32 %v2597, 0.2
  %v2766 = vmul.f32 %v2600, 0.2
  %v2767 = vmul.f32 %v2602, 0.2
  %v2768 = vmul.f32 %v2605, 0.2
  %v2769 = vmul.f32 %v2607, 0.2
  %v2770 = vmul.f32 %v2610, 0.2
  %v2771 = vmul.f32 %v2612, 0.2
  %v2772 = vmul.f32 %v2615, 0.2
  %v2773 = vmul.f32 %v2617, 0.2
  %v2774 = vmul.f32 %v2620, 0.2
  %v2775 = vmul.f32 %v2622, 0.2
  %v2776 = vmul.f32 %v2625, 0.2
  %v2777 = vmul.f32 %v2627, 0.2
  %v2778 = vmul.f32 %v2630, 0.2
  %v2779 = vmul.f32 %v2632, 0.2
  %v2780 = vmul.f32 %v2635, 0.2
  %v2781 = vmul.f32 %v2637, 0.2
  %v2782 = vmul.f32 %v2640, 0.2
  %v2783 = vmul.f32 %v2642, 0.2
  %v2784 = vmul.f32 %v2645, 0.2
  %v2785 = vmul.f32 %v2647, 0.2
  %v2786 = vmul.f32 %v2650, 0.2
  %v2787 = vmul.f32 %v2652, 0.2
  %v2788 = vmul.f32 %v2655, 0.2
  %v2789 = vmul.f32 %v2657, 0.2
  %v2790 = vmul.f32 %v2660, 0.2
  %v2791 = vmul.f32 %v2662, 0.2
  %v2792 = vsel %vm2664, %v2505, %v2728
  %v2793 = vsel %vm2665, %v2507, %v2729
  %v2794 = vsel %vm2666, %v2510, %v2730
  %v2795 = vsel %vm2667, %v2512, %v2731
  %v2796 = vsel %vm2668, %v2515, %v2732
  %v2797 = vsel %vm2669, %v2517, %v2733
  %v2798 = vsel %vm2670, %v2520, %v2734
  %v2799 = vsel %vm2671, %v2522, %v2735
  %v2800 = vsel %vm2672, %v2525, %v2736
  %v2801 = vsel %vm2673, %v2527, %v2737
  %v2802 = vsel %vm2674, %v2530, %v2738
  %v2803 = vsel %vm2675, %v2532, %v2739
  %v2804 = vsel %vm2676, %v2535, %v2740
  %v2805 = vsel %vm2677, %v2537, %v2741
  %v2806 = vsel %vm2678, %v2540, %v2742
  %v2807 = vsel %vm2679, %v2542, %v2743
  %v2808 = vsel %vm2680, %v2545, %v2744
  %v2809 = vsel %vm2681, %v2547, %v2745
  %v2810 = vsel %vm2682, %v2550, %v2746
  %v2811 = vsel %vm2683, %v2552, %v2747
  %v2812 = vsel %vm2684, %v2555, %v2748
  %v2813 = vsel %vm2685, %v2557, %v2749
  %v2814 = vsel %vm2686, %v2560, %v2750
  %v2815 = vsel %vm2687, %v2562, %v2751
  %v2816 = vsel %vm2688, %v2565, %v2752
  %v2817 = vsel %vm2689, %v2567, %v2753
  %v2818 = vsel %vm2690, %v2570, %v2754
  %v2819 = vsel %vm2691, %v2572, %v2755
  %v2820 = vsel %vm2692, %v2575, %v2756
  %v2821 = vsel %vm2693, %v2577, %v2757
  %v2822 = vsel %vm2694, %v2580, %v2758
  %v2823 = vsel %vm2695, %v2582, %v2759
  %v2824 = vsel %vm2696, %v2585, %v2760
  %v2825 = vsel %vm2697, %v2587, %v2761
  %v2826 = vsel %vm2698, %v2590, %v2762
  %v2827 = vsel %vm2699, %v2592, %v2763
  %v2828 = vsel %vm2700, %v2595, %v2764
  %v2829 = vsel %vm2701, %v2597, %v2765
  %v2830 = vsel %vm2702, %v2600, %v2766
  %v2831 = vsel %vm2703, %v2602, %v2767
  %v2832 = vsel %vm2704, %v2605, %v2768
  %v2833 = vsel %vm2705, %v2607, %v2769
  %v2834 = vsel %vm2706, %v2610, %v2770
  %v2835 = vsel %vm2707, %v2612, %v2771
  %v2836 = vsel %vm2708, %v2615, %v2772
  %v2837 = vsel %vm2709, %v2617, %v2773
  %v2838 = vsel %vm2710, %v2620, %v2774
  %v2839 = vsel %vm2711, %v2622, %v2775
  %v2840 = vsel %vm2712, %v2625, %v2776
  %v2841 = vsel %vm2713, %v2627, %v2777
  %v2842 = vsel %vm2714, %v2630, %v2778
  %v2843 = vsel %vm2715, %v2632, %v2779
  %v2844 = vsel %vm2716, %v2635, %v2780
  %v2845 = vsel %vm2717, %v2637, %v2781
  %v2846 = vsel %vm2718, %v2640, %v2782
  %v2847 = vsel %vm2719, %v2642, %v2783
  %v2848 = vsel %vm2720, %v2645, %v2784
  %v2849 = vsel %vm2721, %v2647, %v2785
  %v2850 = vsel %vm2722, %v2650, %v2786
  %v2851 = vsel %vm2723, %v2652, %v2787
  %v2852 = vsel %vm2724, %v2655, %v2788
  %v2853 = vsel %vm2725, %v2657, %v2789
  %v2854 = vsel %vm2726, %v2660, %v2790
  %v2855 = vsel %vm2727, %v2662, %v2791
  %vm2856 = vcmask 31744
  %v2857 = vsel %vm2856, %v2792, -inf
  %v2858 = vrot.slane %v2857, 4
  %v2859 = vmax.f32 %v2857, %v2858
  %v2860 = vrot.slane %v2859, 2
  %v2861 = vmax.f32 %v2859, %v2860
  %v2862 = vrot.slane %v2861, 1
  %v2863 = vmax.f32 %v2861, %v2862
  %v2864 = vsel %vm2856, %v2793, -inf
  %v2865 = vrot.slane %v2864, 4
  %v2866 = vmax.f32 %v2864, %v2865
  %v2867 = vrot.slane %v2866, 2
  %v2868 = vmax.f32 %v2866, %v2867
  %v2869 = vrot.slane %v2868, 1
  %v2870 = vmax.f32 %v2868, %v2869
  %v2871 = vsel %vm2856, %v2794, -inf
  %v2872 = vrot.slane %v2871, 4
  %v2873 = vmax.f32 %v2871, %v2872
  %v2874 = vrot.slane %v2873, 2
  %v2875 = vmax.f32 %v2873, %v2874
  %v2876 = vrot.slane %v2875, 1
  %v2877 = vmax.f32 %v2875, %v2876
  %v2878 = vsel %vm2856, %v2795, -inf
  %v2879 = vrot.slane %v2878, 4
  %v2880 = vmax.f32 %v2878, %v2879
  %v2881 = vrot.slane %v2880, 2
  %v2882 = vmax.f32 %v2880, %v2881
  %v2883 = vrot.slane %v2882, 1
  %v2884 = vmax.f32 %v2882, %v2883
  %v2885 = vsel %vm2856, %v2796, -inf
  %v2886 = vrot.slane %v2885, 4
  %v2887 = vmax.f32 %v2885, %v2886
  %v2888 = vrot.slane %v2887, 2
  %v2889 = vmax.f32 %v2887, %v2888
  %v2890 = vrot.slane %v2889, 1
  %v2891 = vmax.f32 %v2889, %v2890
  %v2892 = vsel %vm2856, %v2797, -inf
  %v2893 = vrot.slane %v2892, 4
  %v2894 = vmax.f32 %v2892, %v2893
  %v2895 = vrot.slane %v2894, 2
  %v2896 = vmax.f32 %v2894, %v2895
  %v2897 = vrot.slane %v2896, 1
  %v2898 = vmax.f32 %v2896, %v2897
  %v2899 = vsel %vm2856, %v2798, -inf
  %v2900 = vrot.slane %v2899, 4
  %v2901 = vmax.f32 %v2899, %v2900
  %v2902 = vrot.slane %v2901, 2
  %v2903 = vmax.f32 %v2901, %v2902
  %v2904 = vrot.slane %v2903, 1
  %v2905 = vmax.f32 %v2903, %v2904
  %v2906 = vsel %vm2856, %v2799, -inf
  %v2907 = vrot.slane %v2906, 4
  %v2908 = vmax.f32 %v2906, %v2907
  %v2909 = vrot.slane %v2908, 2
  %v2910 = vmax.f32 %v2908, %v2909
  %v2911 = vrot.slane %v2910, 1
  %v2912 = vmax.f32 %v2910, %v2911
  %v2913 = vsel %vm2856, %v2800, -inf
  %v2914 = vrot.slane %v2913, 4
  %v2915 = vmax.f32 %v2913, %v2914
  %v2916 = vrot.slane %v2915, 2
  %v2917 = vmax.f32 %v2915, %v2916
  %v2918 = vrot.slane %v2917, 1
  %v2919 = vmax.f32 %v2917, %v2918
  %v2920 = vsel %vm2856, %v2801, -inf
  %v2921 = vrot.slane %v2920, 4
  %v2922 = vmax.f32 %v2920, %v2921
  %v2923 = vrot.slane %v2922, 2
  %v2924 = vmax.f32 %v2922, %v2923
  %v2925 = vrot.slane %v2924, 1
  %v2926 = vmax.f32 %v2924, %v2925
  %v2927 = vsel %vm2856, %v2802, -inf
  %v2928 = vrot.slane %v2927, 4
  %v2929 = vmax.f32 %v2927, %v2928
  %v2930 = vrot.slane %v2929, 2
  %v2931 = vmax.f32 %v2929, %v2930
  %v2932 = vrot.slane %v2931, 1
  %v2933 = vmax.f32 %v2931, %v2932
  %v2934 = vsel %vm2856, %v2803, -inf
  %v2935 = vrot.slane %v2934, 4
  %v2936 = vmax.f32 %v2934, %v2935
  %v2937 = vrot.slane %v2936, 2
  %v2938 = vmax.f32 %v2936, %v2937
  %v2939 = vrot.slane %v2938, 1
  %v2940 = vmax.f32 %v2938, %v2939
  %v2941 = vsel %vm2856, %v2804, -inf
  %v2942 = vrot.slane %v2941, 4
  %v2943 = vmax.f32 %v2941, %v2942
  %v2944 = vrot.slane %v2943, 2
  %v2945 = vmax.f32 %v2943, %v2944
  %v2946 = vrot.slane %v2945, 1
  %v2947 = vmax.f32 %v2945, %v2946
  %v2948 = vsel %vm2856, %v2805, -inf
  %v2949 = vrot.slane %v2948, 4
  %v2950 = vmax.f32 %v2948, %v2949
  %v2951 = vrot.slane %v2950, 2
  %v2952 = vmax.f32 %v2950, %v2951
  %v2953 = vrot.slane %v2952, 1
  %v2954 = vmax.f32 %v2952, %v2953
  %v2955 = vsel %vm2856, %v2806, -inf
  %v2956 = vrot.slane %v2955, 4
  %v2957 = vmax.f32 %v2955, %v2956
  %v2958 = vrot.slane %v2957, 2
  %v2959 = vmax.f32 %v2957, %v2958
  %v2960 = vrot.slane %v2959, 1
  %v2961 = vmax.f32 %v2959, %v2960
  %v2962 = vsel %vm2856, %v2807, -inf
  %v2963 = vrot.slane %v2962, 4
  %v2964 = vmax.f32 %v2962, %v2963
  %v2965 = vrot.slane %v2964, 2
  %v2966 = vmax.f32 %v2964, %v2965
  %v2967 = vrot.slane %v2966, 1
  %v2968 = vmax.f32 %v2966, %v2967
  %v2969 = vsel %vm2856, %v2808, -inf
  %v2970 = vrot.slane %v2969, 4
  %v2971 = vmax.f32 %v2969, %v2970
  %v2972 = vrot.slane %v2971, 2
  %v2973 = vmax.f32 %v2971, %v2972
  %v2974 = vrot.slane %v2973, 1
  %v2975 = vmax.f32 %v2973, %v2974
  %v2976 = vsel %vm2856, %v2809, -inf
  %v2977 = vrot.slane %v2976, 4
  %v2978 = vmax.f32 %v2976, %v2977
  %v2979 = vrot.slane %v2978, 2
  %v2980 = vmax.f32 %v2978, %v2979
  %v2981 = vrot.slane %v2980, 1
  %v2982 = vmax.f32 %v2980, %v2981
  %v2983 = vsel %vm2856, %v2810, -inf
  %v2984 = vrot.slane %v2983, 4
  %v2985 = vmax.f32 %v2983, %v2984
  %v2986 = vrot.slane %v2985, 2
  %v2987 = vmax.f32 %v2985, %v2986
  %v2988 = vrot.slane %v2987, 1
  %v2989 = vmax.f32 %v2987, %v2988
  %v2990 = vsel %vm2856, %v2811, -inf
  %v2991 = vrot.slane %v2990, 4
  %v2992 = vmax.f32 %v2990, %v2991
  %v2993 = vrot.slane %v2992, 2
  %v2994 = vmax.f32 %v2992, %v2993
  %v2995 = vrot.slane %v2994, 1
  %v2996 = vmax.f32 %v2994, %v2995
  %v2997 = vsel %vm2856, %v2812, -inf
  %v2998 = vrot.slane %v2997, 4
  %v2999 = vmax.f32 %v2997, %v2998
  %v3000 = vrot.slane %v2999, 2
  %v3001 = vmax.f32 %v2999, %v3000
  %v3002 = vrot.slane %v3001, 1
  %v3003 = vmax.f32 %v3001, %v3002
  %v3004 = vsel %vm2856, %v2813, -inf
  %v3005 = vrot.slane %v3004, 4
  %v3006 = vmax.f32 %v3004, %v3005
  %v3007 = vrot.slane %v3006, 2
  %v3008 = vmax.f32 %v3006, %v3007
  %v3009 = vrot.slane %v3008, 1
  %v3010 = vmax.f32 %v3008, %v3009
  %v3011 = vsel %vm2856, %v2814, -inf
  %v3012 = vrot.slane %v3011, 4
  %v3013 = vmax.f32 %v3011, %v3012
  %v3014 = vrot.slane %v3013, 2
  %v3015 = vmax.f32 %v3013, %v3014
  %v3016 = vrot.slane %v3015, 1
  %v3017 = vmax.f32 %v3015, %v3016
  %v3018 = vsel %vm2856, %v2815, -inf
  %v3019 = vrot.slane %v3018, 4
  %v3020 = vmax.f32 %v3018, %v3019
  %v3021 = vrot.slane %v3020, 2
  %v3022 = vmax.f32 %v3020, %v3021
  %v3023 = vrot.slane %v3022, 1
  %v3024 = vmax.f32 %v3022, %v3023
  %v3025 = vsel %vm2856, %v2816, -inf
  %v3026 = vrot.slane %v3025, 4
  %v3027 = vmax.f32 %v3025, %v3026
  %v3028 = vrot.slane %v3027, 2
  %v3029 = vmax.f32 %v3027, %v3028
  %v3030 = vrot.slane %v3029, 1
  %v3031 = vmax.f32 %v3029, %v3030
  %v3032 = vsel %vm2856, %v2817, -inf
  %v3033 = vrot.slane %v3032, 4
  %v3034 = vmax.f32 %v3032, %v3033
  %v3035 = vrot.slane %v3034, 2
  %v3036 = vmax.f32 %v3034, %v3035
  %v3037 = vrot.slane %v3036, 1
  %v3038 = vmax.f32 %v3036, %v3037
  %v3039 = vsel %vm2856, %v2818, -inf
  %v3040 = vrot.slane %v3039, 4
  %v3041 = vmax.f32 %v3039, %v3040
  %v3042 = vrot.slane %v3041, 2
  %v3043 = vmax.f32 %v3041, %v3042
  %v3044 = vrot.slane %v3043, 1
  %v3045 = vmax.f32 %v3043, %v3044
  %v3046 = vsel %vm2856, %v2819, -inf
  %v3047 = vrot.slane %v3046, 4
  %v3048 = vmax.f32 %v3046, %v3047
  %v3049 = vrot.slane %v3048, 2
  %v3050 = vmax.f32 %v3048, %v3049
  %v3051 = vrot.slane %v3050, 1
  %v3052 = vmax.f32 %v3050, %v3051
  %v3053 = vsel %vm2856, %v2820, -inf
  %v3054 = vrot.slane %v3053, 4
  %v3055 = vmax.f32 %v3053, %v3054
  %v3056 = vrot.slane %v3055, 2
  %v3057 = vmax.f32 %v3055, %v3056
  %v3058 = vrot.slane %v3057, 1
  %v3059 = vmax.f32 %v3057, %v3058
  %v3060 = vsel %vm2856, %v2821, -inf
  %v3061 = vrot.slane %v3060, 4
  %v3062 = vmax.f32 %v3060, %v3061
  %v3063 = vrot.slane %v3062, 2
  %v3064 = vmax.f32 %v3062, %v3063
  %v3065 = vrot.slane %v3064, 1
  %v3066 = vmax.f32 %v3064, %v3065
  %v3067 = vsel %vm2856, %v2822, -inf
  %v3068 = vrot.slane %v3067, 4
  %v3069 = vmax.f32 %v3067, %v3068
  %v3070 = vrot.slane %v3069, 2
  %v3071 = vmax.f32 %v3069, %v3070
  %v3072 = vrot.slane %v3071, 1
  %v3073 = vmax.f32 %v3071, %v3072
  %v3074 = vsel %vm2856, %v2823, -inf
  %v3075 = vrot.slane %v3074, 4
  %v3076 = vmax.f32 %v3074, %v3075
  %v3077 = vrot.slane %v3076, 2
  %v3078 = vmax.f32 %v3076, %v3077
  %v3079 = vrot.slane %v3078, 1
  %v3080 = vmax.f32 %v3078, %v3079
  %v3081 = vsel %vm2856, %v2824, -inf
  %v3082 = vrot.slane %v3081, 4
  %v3083 = vmax.f32 %v3081, %v3082
  %v3084 = vrot.slane %v3083, 2
  %v3085 = vmax.f32 %v3083, %v3084
  %v3086 = vrot.slane %v3085, 1
  %v3087 = vmax.f32 %v3085, %v3086
  %v3088 = vsel %vm2856, %v2825, -inf
  %v3089 = vrot.slane %v3088, 4
  %v3090 = vmax.f32 %v3088, %v3089
  %v3091 = vrot.slane %v3090, 2
  %v3092 = vmax.f32 %v3090, %v3091
  %v3093 = vrot.slane %v3092, 1
  %v3094 = vmax.f32 %v3092, %v3093
  %v3095 = vsel %vm2856, %v2826, -inf
  %v3096 = vrot.slane %v3095, 4
  %v3097 = vmax.f32 %v3095, %v3096
  %v3098 = vrot.slane %v3097, 2
  %v3099 = vmax.f32 %v3097, %v3098
  %v3100 = vrot.slane %v3099, 1
  %v3101 = vmax.f32 %v3099, %v3100
  %v3102 = vsel %vm2856, %v2827, -inf
  %v3103 = vrot.slane %v3102, 4
  %v3104 = vmax.f32 %v3102, %v3103
  %v3105 = vrot.slane %v3104, 2
  %v3106 = vmax.f32 %v3104, %v3105
  %v3107 = vrot.slane %v3106, 1
  %v3108 = vmax.f32 %v3106, %v3107
  %v3109 = vsel %vm2856, %v2828, -inf
  %v3110 = vrot.slane %v3109, 4
  %v3111 = vmax.f32 %v3109, %v3110
  %v3112 = vrot.slane %v3111, 2
  %v3113 = vmax.f32 %v3111, %v3112
  %v3114 = vrot.slane %v3113, 1
  %v3115 = vmax.f32 %v3113, %v3114
  %v3116 = vsel %vm2856, %v2829, -inf
  %v3117 = vrot.slane %v3116, 4
  %v3118 = vmax.f32 %v3116, %v3117
  %v3119 = vrot.slane %v3118, 2
  %v3120 = vmax.f32 %v3118, %v3119
  %v3121 = vrot.slane %v3120, 1
  %v3122 = vmax.f32 %v3120, %v3121
  %v3123 = vsel %vm2856, %v2830, -inf
  %v3124 = vrot.slane %v3123, 4
  %v3125 = vmax.f32 %v3123, %v3124
  %v3126 = vrot.slane %v3125, 2
  %v3127 = vmax.f32 %v3125, %v3126
  %v3128 = vrot.slane %v3127, 1
  %v3129 = vmax.f32 %v3127, %v3128
  %v3130 = vsel %vm2856, %v2831, -inf
  %v3131 = vrot.slane %v3130, 4
  %v3132 = vmax.f32 %v3130, %v3131
  %v3133 = vrot.slane %v3132, 2
  %v3134 = vmax.f32 %v3132, %v3133
  %v3135 = vrot.slane %v3134, 1
  %v3136 = vmax.f32 %v3134, %v3135
  %v3137 = vsel %vm2856, %v2832, -inf
  %v3138 = vrot.slane %v3137, 4
  %v3139 = vmax.f32 %v3137, %v3138
  %v3140 = vrot.slane %v3139, 2
  %v3141 = vmax.f32 %v3139, %v3140
  %v3142 = vrot.slane %v3141, 1
  %v3143 = vmax.f32 %v3141, %v3142
  %v3144 = vsel %vm2856, %v2833, -inf
  %v3145 = vrot.slane %v3144, 4
  %v3146 = vmax.f32 %v3144, %v3145
  %v3147 = vrot.slane %v3146, 2
  %v3148 = vmax.f32 %v3146, %v3147
  %v3149 = vrot.slane %v3148, 1
  %v3150 = vmax.f32 %v3148, %v3149
  %v3151 = vsel %vm2856, %v2834, -inf
  %v3152 = vrot.slane %v3151, 4
  %v3153 = vmax.f32 %v3151, %v3152
  %v3154 = vrot.slane %v3153, 2
  %v3155 = vmax.f32 %v3153, %v3154
  %v3156 = vrot.slane %v3155, 1
  %v3157 = vmax.f32 %v3155, %v3156
  %v3158 = vsel %vm2856, %v2835, -inf
  %v3159 = vrot.slane %v3158, 4
  %v3160 = vmax.f32 %v3158, %v3159
  %v3161 = vrot.slane %v3160, 2
  %v3162 = vmax.f32 %v3160, %v3161
  %v3163 = vrot.slane %v3162, 1
  %v3164 = vmax.f32 %v3162, %v3163
  %v3165 = vsel %vm2856, %v2836, -inf
  %v3166 = vrot.slane %v3165, 4
  %v3167 = vmax.f32 %v3165, %v3166
  %v3168 = vrot.slane %v3167, 2
  %v3169 = vmax.f32 %v3167, %v3168
  %v3170 = vrot.slane %v3169, 1
  %v3171 = vmax.f32 %v3169, %v3170
  %v3172 = vsel %vm2856, %v2837, -inf
  %v3173 = vrot.slane %v3172, 4
  %v3174 = vmax.f32 %v3172, %v3173
  %v3175 = vrot.slane %v3174, 2
  %v3176 = vmax.f32 %v3174, %v3175
  %v3177 = vrot.slane %v3176, 1
  %v3178 = vmax.f32 %v3176, %v3177
  %v3179 = vsel %vm2856, %v2838, -inf
  %v3180 = vrot.slane %v3179, 4
  %v3181 = vmax.f32 %v3179, %v3180
  %v3182 = vrot.slane %v3181, 2
  %v3183 = vmax.f32 %v3181, %v3182
  %v3184 = vrot.slane %v3183, 1
  %v3185 = vmax.f32 %v3183, %v3184
  %v3186 = vsel %vm2856, %v2839, -inf
  %v3187 = vrot.slane %v3186, 4
  %v3188 = vmax.f32 %v3186, %v3187
  %v3189 = vrot.slane %v3188, 2
  %v3190 = vmax.f32 %v3188, %v3189
  %v3191 = vrot.slane %v3190, 1
  %v3192 = vmax.f32 %v3190, %v3191
  %v3193 = vsel %vm2856, %v2840, -inf
  %v3194 = vrot.slane %v3193, 4
  %v3195 = vmax.f32 %v3193, %v3194
  %v3196 = vrot.slane %v3195, 2
  %v3197 = vmax.f32 %v3195, %v3196
  %v3198 = vrot.slane %v3197, 1
  %v3199 = vmax.f32 %v3197, %v3198
  %v3200 = vsel %vm2856, %v2841, -inf
  %v3201 = vrot.slane %v3200, 4
  %v3202 = vmax.f32 %v3200, %v3201
  %v3203 = vrot.slane %v3202, 2
  %v3204 = vmax.f32 %v3202, %v3203
  %v3205 = vrot.slane %v3204, 1
  %v3206 = vmax.f32 %v3204, %v3205
  %v3207 = vsel %vm2856, %v2842, -inf
  %v3208 = vrot.slane %v3207, 4
  %v3209 = vmax.f32 %v3207, %v3208
  %v3210 = vrot.slane %v3209, 2
  %v3211 = vmax.f32 %v3209, %v3210
  %v3212 = vrot.slane %v3211, 1
  %v3213 = vmax.f32 %v3211, %v3212
  %v3214 = vsel %vm2856, %v2843, -inf
  %v3215 = vrot.slane %v3214, 4
  %v3216 = vmax.f32 %v3214, %v3215
  %v3217 = vrot.slane %v3216, 2
  %v3218 = vmax.f32 %v3216, %v3217
  %v3219 = vrot.slane %v3218, 1
  %v3220 = vmax.f32 %v3218, %v3219
  %v3221 = vsel %vm2856, %v2844, -inf
  %v3222 = vrot.slane %v3221, 4
  %v3223 = vmax.f32 %v3221, %v3222
  %v3224 = vrot.slane %v3223, 2
  %v3225 = vmax.f32 %v3223, %v3224
  %v3226 = vrot.slane %v3225, 1
  %v3227 = vmax.f32 %v3225, %v3226
  %v3228 = vsel %vm2856, %v2845, -inf
  %v3229 = vrot.slane %v3228, 4
  %v3230 = vmax.f32 %v3228, %v3229
  %v3231 = vrot.slane %v3230, 2
  %v3232 = vmax.f32 %v3230, %v3231
  %v3233 = vrot.slane %v3232, 1
  %v3234 = vmax.f32 %v3232, %v3233
  %v3235 = vsel %vm2856, %v2846, -inf
  %v3236 = vrot.slane %v3235, 4
  %v3237 = vmax.f32 %v3235, %v3236
  %v3238 = vrot.slane %v3237, 2
  %v3239 = vmax.f32 %v3237, %v3238
  %v3240 = vrot.slane %v3239, 1
  %v3241 = vmax.f32 %v3239, %v3240
  %v3242 = vsel %vm2856, %v2847, -inf
  %v3243 = vrot.slane %v3242, 4
  %v3244 = vmax.f32 %v3242, %v3243
  %v3245 = vrot.slane %v3244, 2
  %v3246 = vmax.f32 %v3244, %v3245
  %v3247 = vrot.slane %v3246, 1
  %v3248 = vmax.f32 %v3246, %v3247
  %v3249 = vsel %vm2856, %v2848, -inf
  %v3250 = vrot.slane %v3249, 4
  %v3251 = vmax.f32 %v3249, %v3250
  %v3252 = vrot.slane %v3251, 2
  %v3253 = vmax.f32 %v3251, %v3252
  %v3254 = vrot.slane %v3253, 1
  %v3255 = vmax.f32 %v3253, %v3254
  %v3256 = vsel %vm2856, %v2849, -inf
  %v3257 = vrot.slane %v3256, 4
  %v3258 = vmax.f32 %v3256, %v3257
  %v3259 = vrot.slane %v3258, 2
  %v3260 = vmax.f32 %v3258, %v3259
  %v3261 = vrot.slane %v3260, 1
  %v3262 = vmax.f32 %v3260, %v3261
  %v3263 = vsel %vm2856, %v2850, -inf
  %v3264 = vrot.slane %v3263, 4
  %v3265 = vmax.f32 %v3263, %v3264
  %v3266 = vrot.slane %v3265, 2
  %v3267 = vmax.f32 %v3265, %v3266
  %v3268 = vrot.slane %v3267, 1
  %v3269 = vmax.f32 %v3267, %v3268
  %v3270 = vsel %vm2856, %v2851, -inf
  %v3271 = vrot.slane %v3270, 4
  %v3272 = vmax.f32 %v3270, %v3271
  %v3273 = vrot.slane %v3272, 2
  %v3274 = vmax.f32 %v3272, %v3273
  %v3275 = vrot.slane %v3274, 1
  %v3276 = vmax.f32 %v3274, %v3275
  %v3277 = vsel %vm2856, %v2852, -inf
  %v3278 = vrot.slane %v3277, 4
  %v3279 = vmax.f32 %v3277, %v3278
  %v3280 = vrot.slane %v3279, 2
  %v3281 = vmax.f32 %v3279, %v3280
  %v3282 = vrot.slane %v3281, 1
  %v3283 = vmax.f32 %v3281, %v3282
  %v3284 = vsel %vm2856, %v2853, -inf
  %v3285 = vrot.slane %v3284, 4
  %v3286 = vmax.f32 %v3284, %v3285
  %v3287 = vrot.slane %v3286, 2
  %v3288 = vmax.f32 %v3286, %v3287
  %v3289 = vrot.slane %v3288, 1
  %v3290 = vmax.f32 %v3288, %v3289
  %v3291 = vsel %vm2856, %v2854, -inf
  %v3292 = vrot.slane %v3291, 4
  %v3293 = vmax.f32 %v3291, %v3292
  %v3294 = vrot.slane %v3293, 2
  %v3295 = vmax.f32 %v3293, %v3294
  %v3296 = vrot.slane %v3295, 1
  %v3297 = vmax.f32 %v3295, %v3296
  %v3298 = vsel %vm2856, %v2855, -inf
  %v3299 = vrot.slane %v3298, 4
  %v3300 = vmax.f32 %v3298, %v3299
  %v3301 = vrot.slane %v3300, 2
  %v3302 = vmax.f32 %v3300, %v3301
  %v3303 = vrot.slane %v3302, 1
  %v3304 = vmax.f32 %v3302, %v3303
  %v3305 = vsub.f32 %v2792, %v2863
  %v3306 = vsub.f32 %v2793, %v2870
  %v3307 = vsub.f32 %v2794, %v2877
  %v3308 = vsub.f32 %v2795, %v2884
  %v3309 = vsub.f32 %v2796, %v2891
  %v3310 = vsub.f32 %v2797, %v2898
  %v3311 = vsub.f32 %v2798, %v2905
  %v3312 = vsub.f32 %v2799, %v2912
  %v3313 = vsub.f32 %v2800, %v2919
  %v3314 = vsub.f32 %v2801, %v2926
  %v3315 = vsub.f32 %v2802, %v2933
  %v3316 = vsub.f32 %v2803, %v2940
  %v3317 = vsub.f32 %v2804, %v2947
  %v3318 = vsub.f32 %v2805, %v2954
  %v3319 = vsub.f32 %v2806, %v2961
  %v3320 = vsub.f32 %v2807, %v2968
  %v3321 = vsub.f32 %v2808, %v2975
  %v3322 = vsub.f32 %v2809, %v2982
  %v3323 = vsub.f32 %v2810, %v2989
  %v3324 = vsub.f32 %v2811, %v2996
  %v3325 = vsub.f32 %v2812, %v3003
  %v3326 = vsub.f32 %v2813, %v3010
  %v3327 = vsub.f32 %v2814, %v3017
  %v3328 = vsub.f32 %v2815, %v3024
  %v3329 = vsub.f32 %v2816, %v3031
  %v3330 = vsub.f32 %v2817, %v3038
  %v3331 = vsub.f32 %v2818, %v3045
  %v3332 = vsub.f32 %v2819, %v3052
  %v3333 = vsub.f32 %v2820, %v3059
  %v3334 = vsub.f32 %v2821, %v3066
  %v3335 = vsub.f32 %v2822, %v3073
  %v3336 = vsub.f32 %v2823, %v3080
  %v3337 = vsub.f32 %v2824, %v3087
  %v3338 = vsub.f32 %v2825, %v3094
  %v3339 = vsub.f32 %v2826, %v3101
  %v3340 = vsub.f32 %v2827, %v3108
  %v3341 = vsub.f32 %v2828, %v3115
  %v3342 = vsub.f32 %v2829, %v3122
  %v3343 = vsub.f32 %v2830, %v3129
  %v3344 = vsub.f32 %v2831, %v3136
  %v3345 = vsub.f32 %v2832, %v3143
  %v3346 = vsub.f32 %v2833, %v3150
  %v3347 = vsub.f32 %v2834, %v3157
  %v3348 = vsub.f32 %v2835, %v3164
  %v3349 = vsub.f32 %v2836, %v3171
  %v3350 = vsub.f32 %v2837, %v3178
  %v3351 = vsub.f32 %v2838, %v3185
  %v3352 = vsub.f32 %v2839, %v3192
  %v3353 = vsub.f32 %v2840, %v3199
  %v3354 = vsub.f32 %v2841, %v3206
  %v3355 = vsub.f32 %v2842, %v3213
  %v3356 = vsub.f32 %v2843, %v3220
  %v3357 = vsub.f32 %v2844, %v3227
  %v3358 = vsub.f32 %v2845, %v3234
  %v3359 = vsub.f32 %v2846, %v3241
  %v3360 = vsub.f32 %v2847, %v3248
  %v3361 = vsub.f32 %v2848, %v3255
  %v3362 = vsub.f32 %v2849, %v3262
  %v3363 = vsub.f32 %v2850, %v3269
  %v3364 = vsub.f32 %v2851, %v3276
  %v3365 = vsub.f32 %v2852, %v3283
  %v3366 = vsub.f32 %v2853, %v3290
  %v3367 = vsub.f32 %v2854, %v3297
  %v3368 = vsub.f32 %v2855, %v3304
  %v3369 = vmul.f32 %v3305, 1.442695
  %v3370 = vpow.pop %v3369
  %v3371 = vmul.f32 %v3306, 1.442695
  %v3372 = vpow.pop %v3371
  %v3373 = vmul.f32 %v3307, 1.442695
  %v3374 = vpow.pop %v3373
  %v3375 = vmul.f32 %v3308, 1.442695
  %v3376 = vpow.pop %v3375
  %v3377 = vmul.f32 %v3309, 1.442695
  %v3378 = vpow.pop %v3377
  %v3379 = vmul.f32 %v3310, 1.442695
  %v3380 = vpow.pop %v3379
  %v3381 = vmul.f32 %v3311, 1.442695
  %v3382 = vpow.pop %v3381
  %v3383 = vmul.f32 %v3312, 1.442695
  %v3384 = vpow.pop %v3383
  %v3385 = vmul.f32 %v3313, 1.442695
  %v3386 = vpow.pop %v3385
  %v3387 = vmul.f32 %v3314, 1.442695
  %v3388 = vpow.pop %v3387
  %v3389 = vmul.f32 %v3315, 1.442695
  %v3390 = vpow.pop %v3389
  %v3391 = vmul.f32 %v3316, 1.442695
  %v3392 = vpow.pop %v3391
  %v3393 = vmul.f32 %v3317, 1.442695
  %v3394 = vpow.pop %v3393
  %v3395 = vmul.f32 %v3318, 1.442695
  %v3396 = vpow.pop %v3395
  %v3397 = vmul.f32 %v3319, 1.442695
  %v3398 = vpow.pop %v3397
  %v3399 = vmul.f32 %v3320, 1.442695
  %v3400 = vpow.pop %v3399
  %v3401 = vmul.f32 %v3321, 1.442695
  %v3402 = vpow.pop %v3401
  %v3403 = vmul.f32 %v3322, 1.442695
  %v3404 = vpow.pop %v3403
  %v3405 = vmul.f32 %v3323, 1.442695
  %v3406 = vpow.pop %v3405
  %v3407 = vmul.f32 %v3324, 1.442695
  %v3408 = vpow.pop %v3407
  %v3409 = vmul.f32 %v3325, 1.442695
  %v3410 = vpow.pop %v3409
  %v3411 = vmul.f32 %v3326, 1.442695
  %v3412 = vpow.pop %v3411
  %v3413 = vmul.f32 %v3327, 1.442695
  %v3414 = vpow.pop %v3413
  %v3415 = vmul.f32 %v3328, 1.442695
  %v3416 = vpow.pop %v3415
  %v3417 = vmul.f32 %v3329, 1.442695
  %v3418 = vpow.pop %v3417
  %v3419 = vmul.f32 %v3330, 1.442695
  %v3420 = vpow.pop %v3419
  %v3421 = vmul.f32 %v3331, 1.442695
  %v3422 = vpow.pop %v3421
  %v3423 = vmul.f32 %v3332, 1.442695
  %v3424 = vpow.pop %v3423
  %v3425 = vmul.f32 %v3333, 1.442695
  %v3426 = vpow.pop %v3425
  %v3427 = vmul.f32 %v3334, 1.442695
  %v3428 = vpow.pop %v3427
  %v3429 = vmul.f32 %v3335, 1.442695
  %v3430 = vpow.pop %v3429
  %v3431 = vmul.f32 %v3336, 1.442695
  %v3432 = vpow.pop %v3431
  %v3433 = vmul.f32 %v3337, 1.442695
  %v3434 = vpow.pop %v3433
  %v3435 = vmul.f32 %v3338, 1.442695
  %v3436 = vpow.pop %v3435
  %v3437 = vmul.f32 %v3339, 1.442695
  %v3438 = vpow.pop %v3437
  %v3439 = vmul.f32 %v3340, 1.442695
  %v3440 = vpow.pop %v3439
  %v3441 = vmul.f32 %v3341, 1.442695
  %v3442 = vpow.pop %v3441
  %v3443 = vmul.f32 %v3342, 1.442695
  %v3444 = vpow.pop %v3443
  %v3445 = vmul.f32 %v3343, 1.442695
  %v3446 = vpow.pop %v3445
  %v3447 = vmul.f32 %v3344, 1.442695
  %v3448 = vpow.pop %v3447
  %v3449 = vmul.f32 %v3345, 1.442695
  %v3450 = vpow.pop %v3449
  %v3451 = vmul.f32 %v3346, 1.442695
  %v3452 = vpow.pop %v3451
  %v3453 = vmul.f32 %v3347, 1.442695
  %v3454 = vpow.pop %v3453
  %v3455 = vmul.f32 %v3348, 1.442695
  %v3456 = vpow.pop %v3455
  %v3457 = vmul.f32 %v3349, 1.442695
  %v3458 = vpow.pop %v3457
  %v3459 = vmul.f32 %v3350, 1.442695
  %v3460 = vpow.pop %v3459
  %v3461 = vmul.f32 %v3351, 1.442695
  %v3462 = vpow.pop %v3461
  %v3463 = vmul.f32 %v3352, 1.442695
  %v3464 = vpow.pop %v3463
  %v3465 = vmul.f32 %v3353, 1.442695
  %v3466 = vpow.pop %v3465
  %v3467 = vmul.f32 %v3354, 1.442695
  %v3468 = vpow.pop %v3467
  %v3469 = vmul.f32 %v3355, 1.442695
  %v3470 = vpow.pop %v3469
  %v3471 = vmul.f32 %v3356, 1.442695
  %v3472 = vpow.pop %v3471
  %v3473 = vmul.f32 %v3357, 1.442695
  %v3474 = vpow.pop %v3473
  %v3475 = vmul.f32 %v3358, 1.442695
  %v3476 = vpow.pop %v3475
  %v3477 = vmul.f32 %v3359, 1.442695
  %v3478 = vpow.pop %v3477
  %v3479 = vmul.f32 %v3360, 1.442695
  %v3480 = vpow.pop %v3479
  %v3481 = vmul.f32 %v3361, 1.442695
  %v3482 = vpow.pop %v3481
  %v3483 = vmul.f32 %v3362, 1.442695
  %v3484 = vpow.pop %v3483
  %v3485 = vmul.f32 %v3363, 1.442695
  %v3486 = vpow.pop %v3485
  %v3487 = vmul.f32 %v3364, 1.442695
  %v3488 = vpow.pop %v3487
  %v3489 = vmul.f32 %v3365, 1.442695
  %v3490 = vpow.pop %v3489
  %v3491 = vmul.f32 %v3366, 1.442695
  %v3492 = vpow.pop %v3491
  %v3493 = vmul.f32 %v3367, 1.442695
  %v3494 = vpow.pop %v3493
  %v3495 = vmul.f32 %v3368, 1.442695
  %v3496 = vpow.pop %v3495
  %v3497 = vsel %vm2856, %v3370, 0.0
  %v3498 = vrot.slane %v3497, 4
  %v3499 = vadd.f32 %v3497, %v3498
  %v3500 = vrot.slane %v3499, 2
  %v3501 = vadd.f32 %v3499, %v3500
  %v3502 = vrot.slane %v3501, 1
  %v3503 = vadd.f32 %v3501, %v3502
  %v3504 = vsel %vm2856, %v3372, 0.0
  %v3505 = vrot.slane %v3504, 4
  %v3506 = vadd.f32 %v3504, %v3505
  %v3507 = vrot.slane %v3506, 2
  %v3508 = vadd.f32 %v3506, %v3507
  %v3509 = vrot.slane %v3508, 1
  %v3510 = vadd.f32 %v3508, %v3509
  %v3511 = vsel %vm2856, %v3374, 0.0
  %v3512 = vrot.slane %v3511, 4
  %v3513 = vadd.f32 %v3511, %v3512
  %v3514 = vrot.slane %v3513, 2
  %v3515 = vadd.f32 %v3513, %v3514
  %v3516 = vrot.slane %v3515, 1
  %v3517 = vadd.f32 %v3515, %v3516
  %v3518 = vsel %vm2856, %v3376, 0.0
  %v3519 = vrot.slane %v3518, 4
  %v3520 = vadd.f32 %v3518, %v3519
  %v3521 = vrot.slane %v3520, 2
  %v3522 = vadd.f32 %v3520, %v3521
  %v3523 = vrot.slane %v3522, 1
  %v3524 = vadd.f32 %v3522, %v3523
  %v3525 = vsel %vm2856, %v3378, 0.0
  %v3526 = vrot.slane %v3525, 4
  %v3527 = vadd.f32 %v3525, %v3526
  %v3528 = vrot.slane %v3527, 2
  %v3529 = vadd.f32 %v3527, %v3528
  %v3530 = vrot.slane %v3529, 1
  %v3531 = vadd.f32 %v3529, %v3530
  %v3532 = vsel %vm2856, %v3380, 0.0
  %v3533 = vrot.slane %v3532, 4
  %v3534 = vadd.f32 %v3532, %v3533
  %v3535 = vrot.slane %v3534, 2
  %v3536 = vadd.f32 %v3534, %v3535
  %v3537 = vrot.slane %v3536, 1
  %v3538 = vadd.f32 %v3536, %v3537
  %v3539 = vsel %vm2856, %v3382, 0.0
  %v3540 = vrot.slane %v3539, 4
  %v3541 = vadd.f32 %v3539, %v3540
  %v3542 = vrot.slane %v3541, 2
  %v3543 = vadd.f32 %v3541, %v3542
  %v3544 = vrot.slane %v3543, 1
  %v3545 = vadd.f32 %v3543, %v3544
  %v3546 = vsel %vm2856, %v3384, 0.0
  %v3547 = vrot.slane %v3546, 4
  %v3548 = vadd.f32 %v3546, %v3547
  %v3549 = vrot.slane %v3548, 2
  %v3550 = vadd.f32 %v3548, %v3549
  %v3551 = vrot.slane %v3550, 1
  %v3552 = vadd.f32 %v3550, %v3551
  %v3553 = vsel %vm2856, %v3386, 0.0
  %v3554 = vrot.slane %v3553, 4
  %v3555 = vadd.f32 %v3553, %v3554
  %v3556 = vrot.slane %v3555, 2
  %v3557 = vadd.f32 %v3555, %v3556
  %v3558 = vrot.slane %v3557, 1
  %v3559 = vadd.f32 %v3557, %v3558
  %v3560 = vsel %vm2856, %v3388, 0.0
  %v3561 = vrot.slane %v3560, 4
  %v3562 = vadd.f32 %v3560, %v3561
  %v3563 = vrot.slane %v3562, 2
  %v3564 = vadd.f32 %v3562, %v3563
  %v3565 = vrot.slane %v3564, 1
  %v3566 = vadd.f32 %v3564, %v3565
  %v3567 = vsel %vm2856, %v3390, 0.0
  %v3568 = vrot.slane %v3567, 4
  %v3569 = vadd.f32 %v3567, %v3568
  %v3570 = vrot.slane %v3569, 2
  %v3571 = vadd.f32 %v3569, %v3570
  %v3572 = vrot.slane %v3571, 1
  %v3573 = vadd.f32 %v3571, %v3572
  %v3574 = vsel %vm2856, %v3392, 0.0
  %v3575 = vrot.slane %v3574, 4
  %v3576 = vadd.f32 %v3574, %v3575
  %v3577 = vrot.slane %v3576, 2
  %v3578 = vadd.f32 %v3576, %v3577
  %v3579 = vrot.slane %v3578, 1
  %v3580 = vadd.f32 %v3578, %v3579
  %v3581 = vsel %vm2856, %v3394, 0.0
  %v3582 = vrot.slane %v3581, 4
  %v3583 = vadd.f32 %v3581, %v3582
  %v3584 = vrot.slane %v3583, 2
  %v3585 = vadd.f32 %v3583, %v3584
  %v3586 = vrot.slane %v3585, 1
  %v3587 = vadd.f32 %v3585, %v3586
  %v3588 = vsel %vm2856, %v3396, 0.0
  %v3589 = vrot.slane %v3588, 4
  %v3590 = vadd.f32 %v3588, %v3589
  %v3591 = vrot.slane %v3590, 2
  %v3592 = vadd.f32 %v3590, %v3591
  %v3593 = vrot.slane %v3592, 1
  %v3594 = vadd.f32 %v3592, %v3593
  %v3595 = vsel %vm2856, %v3398, 0.0
  %v3596 = vrot.slane %v3595, 4
  %v3597 = vadd.f32 %v3595, %v3596
  %v3598 = vrot.slane %v3597, 2
  %v3599 = vadd.f32 %v3597, %v3598
  %v3600 = vrot.slane %v3599, 1
  %v3601 = vadd.f32 %v3599, %v3600
  %v3602 = vsel %vm2856, %v3400, 0.0
  %v3603 = vrot.slane %v3602, 4
  %v3604 = vadd.f32 %v3602, %v3603
  %v3605 = vrot.slane %v3604, 2
  %v3606 = vadd.f32 %v3604, %v3605
  %v3607 = vrot.slane %v3606, 1
  %v3608 = vadd.f32 %v3606, %v3607
  %v3609 = vsel %vm2856, %v3402, 0.0
  %v3610 = vrot.slane %v3609, 4
  %v3611 = vadd.f32 %v3609, %v3610
  %v3612 = vrot.slane %v3611, 2
  %v3613 = vadd.f32 %v3611, %v3612
  %v3614 = vrot.slane %v3613, 1
  %v3615 = vadd.f32 %v3613, %v3614
  %v3616 = vsel %vm2856, %v3404, 0.0
  %v3617 = vrot.slane %v3616, 4
  %v3618 = vadd.f32 %v3616, %v3617
  %v3619 = vrot.slane %v3618, 2
  %v3620 = vadd.f32 %v3618, %v3619
  %v3621 = vrot.slane %v3620, 1
  %v3622 = vadd.f32 %v3620, %v3621
  %v3623 = vsel %vm2856, %v3406, 0.0
  %v3624 = vrot.slane %v3623, 4
  %v3625 = vadd.f32 %v3623, %v3624
  %v3626 = vrot.slane %v3625, 2
  %v3627 = vadd.f32 %v3625, %v3626
  %v3628 = vrot.slane %v3627, 1
  %v3629 = vadd.f32 %v3627, %v3628
  %v3630 = vsel %vm2856, %v3408, 0.0
  %v3631 = vrot.slane %v3630, 4
  %v3632 = vadd.f32 %v3630, %v3631
  %v3633 = vrot.slane %v3632, 2
  %v3634 = vadd.f32 %v3632, %v3633
  %v3635 = vrot.slane %v3634, 1
  %v3636 = vadd.f32 %v3634, %v3635
  %v3637 = vsel %vm2856, %v3410, 0.0
  %v3638 = vrot.slane %v3637, 4
  %v3639 = vadd.f32 %v3637, %v3638
  %v3640 = vrot.slane %v3639, 2
  %v3641 = vadd.f32 %v3639, %v3640
  %v3642 = vrot.slane %v3641, 1
  %v3643 = vadd.f32 %v3641, %v3642
  %v3644 = vsel %vm2856, %v3412, 0.0
  %v3645 = vrot.slane %v3644, 4
  %v3646 = vadd.f32 %v3644, %v3645
  %v3647 = vrot.slane %v3646, 2
  %v3648 = vadd.f32 %v3646, %v3647
  %v3649 = vrot.slane %v3648, 1
  %v3650 = vadd.f32 %v3648, %v3649
  %v3651 = vsel %vm2856, %v3414, 0.0
  %v3652 = vrot.slane %v3651, 4
  %v3653 = vadd.f32 %v3651, %v3652
  %v3654 = vrot.slane %v3653, 2
  %v3655 = vadd.f32 %v3653, %v3654
  %v3656 = vrot.slane %v3655, 1
  %v3657 = vadd.f32 %v3655, %v3656
  %v3658 = vsel %vm2856, %v3416, 0.0
  %v3659 = vrot.slane %v3658, 4
  %v3660 = vadd.f32 %v3658, %v3659
  %v3661 = vrot.slane %v3660, 2
  %v3662 = vadd.f32 %v3660, %v3661
  %v3663 = vrot.slane %v3662, 1
  %v3664 = vadd.f32 %v3662, %v3663
  %v3665 = vsel %vm2856, %v3418, 0.0
  %v3666 = vrot.slane %v3665, 4
  %v3667 = vadd.f32 %v3665, %v3666
  %v3668 = vrot.slane %v3667, 2
  %v3669 = vadd.f32 %v3667, %v3668
  %v3670 = vrot.slane %v3669, 1
  %v3671 = vadd.f32 %v3669, %v3670
  %v3672 = vsel %vm2856, %v3420, 0.0
  %v3673 = vrot.slane %v3672, 4
  %v3674 = vadd.f32 %v3672, %v3673
  %v3675 = vrot.slane %v3674, 2
  %v3676 = vadd.f32 %v3674, %v3675
  %v3677 = vrot.slane %v3676, 1
  %v3678 = vadd.f32 %v3676, %v3677
  %v3679 = vsel %vm2856, %v3422, 0.0
  %v3680 = vrot.slane %v3679, 4
  %v3681 = vadd.f32 %v3679, %v3680
  %v3682 = vrot.slane %v3681, 2
  %v3683 = vadd.f32 %v3681, %v3682
  %v3684 = vrot.slane %v3683, 1
  %v3685 = vadd.f32 %v3683, %v3684
  %v3686 = vsel %vm2856, %v3424, 0.0
  %v3687 = vrot.slane %v3686, 4
  %v3688 = vadd.f32 %v3686, %v3687
  %v3689 = vrot.slane %v3688, 2
  %v3690 = vadd.f32 %v3688, %v3689
  %v3691 = vrot.slane %v3690, 1
  %v3692 = vadd.f32 %v3690, %v3691
  %v3693 = vsel %vm2856, %v3426, 0.0
  %v3694 = vrot.slane %v3693, 4
  %v3695 = vadd.f32 %v3693, %v3694
  %v3696 = vrot.slane %v3695, 2
  %v3697 = vadd.f32 %v3695, %v3696
  %v3698 = vrot.slane %v3697, 1
  %v3699 = vadd.f32 %v3697, %v3698
  %v3700 = vsel %vm2856, %v3428, 0.0
  %v3701 = vrot.slane %v3700, 4
  %v3702 = vadd.f32 %v3700, %v3701
  %v3703 = vrot.slane %v3702, 2
  %v3704 = vadd.f32 %v3702, %v3703
  %v3705 = vrot.slane %v3704, 1
  %v3706 = vadd.f32 %v3704, %v3705
  %v3707 = vsel %vm2856, %v3430, 0.0
  %v3708 = vrot.slane %v3707, 4
  %v3709 = vadd.f32 %v3707, %v3708
  %v3710 = vrot.slane %v3709, 2
  %v3711 = vadd.f32 %v3709, %v3710
  %v3712 = vrot.slane %v3711, 1
  %v3713 = vadd.f32 %v3711, %v3712
  %v3714 = vsel %vm2856, %v3432, 0.0
  %v3715 = vrot.slane %v3714, 4
  %v3716 = vadd.f32 %v3714, %v3715
  %v3717 = vrot.slane %v3716, 2
  %v3718 = vadd.f32 %v3716, %v3717
  %v3719 = vrot.slane %v3718, 1
  %v3720 = vadd.f32 %v3718, %v3719
  %v3721 = vsel %vm2856, %v3434, 0.0
  %v3722 = vrot.slane %v3721, 4
  %v3723 = vadd.f32 %v3721, %v3722
  %v3724 = vrot.slane %v3723, 2
  %v3725 = vadd.f32 %v3723, %v3724
  %v3726 = vrot.slane %v3725, 1
  %v3727 = vadd.f32 %v3725, %v3726
  %v3728 = vsel %vm2856, %v3436, 0.0
  %v3729 = vrot.slane %v3728, 4
  %v3730 = vadd.f32 %v3728, %v3729
  %v3731 = vrot.slane %v3730, 2
  %v3732 = vadd.f32 %v3730, %v3731
  %v3733 = vrot.slane %v3732, 1
  %v3734 = vadd.f32 %v3732, %v3733
  %v3735 = vsel %vm2856, %v3438, 0.0
  %v3736 = vrot.slane %v3735, 4
  %v3737 = vadd.f32 %v3735, %v3736
  %v3738 = vrot.slane %v3737, 2
  %v3739 = vadd.f32 %v3737, %v3738
  %v3740 = vrot.slane %v3739, 1
  %v3741 = vadd.f32 %v3739, %v3740
  %v3742 = vsel %vm2856, %v3440, 0.0
  %v3743 = vrot.slane %v3742, 4
  %v3744 = vadd.f32 %v3742, %v3743
  %v3745 = vrot.slane %v3744, 2
  %v3746 = vadd.f32 %v3744, %v3745
  %v3747 = vrot.slane %v3746, 1
  %v3748 = vadd.f32 %v3746, %v3747
  %v3749 = vsel %vm2856, %v3442, 0.0
  %v3750 = vrot.slane %v3749, 4
  %v3751 = vadd.f32 %v3749, %v3750
  %v3752 = vrot.slane %v3751, 2
  %v3753 = vadd.f32 %v3751, %v3752
  %v3754 = vrot.slane %v3753, 1
  %v3755 = vadd.f32 %v3753, %v3754
  %v3756 = vsel %vm2856, %v3444, 0.0
  %v3757 = vrot.slane %v3756, 4
  %v3758 = vadd.f32 %v3756, %v3757
  %v3759 = vrot.slane %v3758, 2
  %v3760 = vadd.f32 %v3758, %v3759
  %v3761 = vrot.slane %v3760, 1
  %v3762 = vadd.f32 %v3760, %v3761
  %v3763 = vsel %vm2856, %v3446, 0.0
  %v3764 = vrot.slane %v3763, 4
  %v3765 = vadd.f32 %v3763, %v3764
  %v3766 = vrot.slane %v3765, 2
  %v3767 = vadd.f32 %v3765, %v3766
  %v3768 = vrot.slane %v3767, 1
  %v3769 = vadd.f32 %v3767, %v3768
  %v3770 = vsel %vm2856, %v3448, 0.0
  %v3771 = vrot.slane %v3770, 4
  %v3772 = vadd.f32 %v3770, %v3771
  %v3773 = vrot.slane %v3772, 2
  %v3774 = vadd.f32 %v3772, %v3773
  %v3775 = vrot.slane %v3774, 1
  %v3776 = vadd.f32 %v3774, %v3775
  %v3777 = vsel %vm2856, %v3450, 0.0
  %v3778 = vrot.slane %v3777, 4
  %v3779 = vadd.f32 %v3777, %v3778
  %v3780 = vrot.slane %v3779, 2
  %v3781 = vadd.f32 %v3779, %v3780
  %v3782 = vrot.slane %v3781, 1
  %v3783 = vadd.f32 %v3781, %v3782
  %v3784 = vsel %vm2856, %v3452, 0.0
  %v3785 = vrot.slane %v3784, 4
  %v3786 = vadd.f32 %v3784, %v3785
  %v3787 = vrot.slane %v3786, 2
  %v3788 = vadd.f32 %v3786, %v3787
  %v3789 = vrot.slane %v3788, 1
  %v3790 = vadd.f32 %v3788, %v3789
  %v3791 = vsel %vm2856, %v3454, 0.0
  %v3792 = vrot.slane %v3791, 4
  %v3793 = vadd.f32 %v3791, %v3792
  %v3794 = vrot.slane %v3793, 2
  %v3795 = vadd.f32 %v3793, %v3794
  %v3796 = vrot.slane %v3795, 1
  %v3797 = vadd.f32 %v3795, %v3796
  %v3798 = vsel %vm2856, %v3456, 0.0
  %v3799 = vrot.slane %v3798, 4
  %v3800 = vadd.f32 %v3798, %v3799
  %v3801 = vrot.slane %v3800, 2
  %v3802 = vadd.f32 %v3800, %v3801
  %v3803 = vrot.slane %v3802, 1
  %v3804 = vadd.f32 %v3802, %v3803
  %v3805 = vsel %vm2856, %v3458, 0.0
  %v3806 = vrot.slane %v3805, 4
  %v3807 = vadd.f32 %v3805, %v3806
  %v3808 = vrot.slane %v3807, 2
  %v3809 = vadd.f32 %v3807, %v3808
  %v3810 = vrot.slane %v3809, 1
  %v3811 = vadd.f32 %v3809, %v3810
  %v3812 = vsel %vm2856, %v3460, 0.0
  %v3813 = vrot.slane %v3812, 4
  %v3814 = vadd.f32 %v3812, %v3813
  %v3815 = vrot.slane %v3814, 2
  %v3816 = vadd.f32 %v3814, %v3815
  %v3817 = vrot.slane %v3816, 1
  %v3818 = vadd.f32 %v3816, %v3817
  %v3819 = vsel %vm2856, %v3462, 0.0
  %v3820 = vrot.slane %v3819, 4
  %v3821 = vadd.f32 %v3819, %v3820
  %v3822 = vrot.slane %v3821, 2
  %v3823 = vadd.f32 %v3821, %v3822
  %v3824 = vrot.slane %v3823, 1
  %v3825 = vadd.f32 %v3823, %v3824
  %v3826 = vsel %vm2856, %v3464, 0.0
  %v3827 = vrot.slane %v3826, 4
  %v3828 = vadd.f32 %v3826, %v3827
  %v3829 = vrot.slane %v3828, 2
  %v3830 = vadd.f32 %v3828, %v3829
  %v3831 = vrot.slane %v3830, 1
  %v3832 = vadd.f32 %v3830, %v3831
  %v3833 = vsel %vm2856, %v3466, 0.0
  %v3834 = vrot.slane %v3833, 4
  %v3835 = vadd.f32 %v3833, %v3834
  %v3836 = vrot.slane %v3835, 2
  %v3837 = vadd.f32 %v3835, %v3836
  %v3838 = vrot.slane %v3837, 1
  %v3839 = vadd.f32 %v3837, %v3838
  %v3840 = vsel %vm2856, %v3468, 0.0
  %v3841 = vrot.slane %v3840, 4
  %v3842 = vadd.f32 %v3840, %v3841
  %v3843 = vrot.slane %v3842, 2
  %v3844 = vadd.f32 %v3842, %v3843
  %v3845 = vrot.slane %v3844, 1
  %v3846 = vadd.f32 %v3844, %v3845
  %v3847 = vsel %vm2856, %v3470, 0.0
  %v3848 = vrot.slane %v3847, 4
  %v3849 = vadd.f32 %v3847, %v3848
  %v3850 = vrot.slane %v3849, 2
  %v3851 = vadd.f32 %v3849, %v3850
  %v3852 = vrot.slane %v3851, 1
  %v3853 = vadd.f32 %v3851, %v3852
  %v3854 = vsel %vm2856, %v3472, 0.0
  %v3855 = vrot.slane %v3854, 4
  %v3856 = vadd.f32 %v3854, %v3855
  %v3857 = vrot.slane %v3856, 2
  %v3858 = vadd.f32 %v3856, %v3857
  %v3859 = vrot.slane %v3858, 1
  %v3860 = vadd.f32 %v3858, %v3859
  %v3861 = vsel %vm2856, %v3474, 0.0
  %v3862 = vrot.slane %v3861, 4
  %v3863 = vadd.f32 %v3861, %v3862
  %v3864 = vrot.slane %v3863, 2
  %v3865 = vadd.f32 %v3863, %v3864
  %v3866 = vrot.slane %v3865, 1
  %v3867 = vadd.f32 %v3865, %v3866
  %v3868 = vsel %vm2856, %v3476, 0.0
  %v3869 = vrot.slane %v3868, 4
  %v3870 = vadd.f32 %v3868, %v3869
  %v3871 = vrot.slane %v3870, 2
  %v3872 = vadd.f32 %v3870, %v3871
  %v3873 = vrot.slane %v3872, 1
  %v3874 = vadd.f32 %v3872, %v3873
  %v3875 = vsel %vm2856, %v3478, 0.0
  %v3876 = vrot.slane %v3875, 4
  %v3877 = vadd.f32 %v3875, %v3876
  %v3878 = vrot.slane %v3877, 2
  %v3879 = vadd.f32 %v3877, %v3878
  %v3880 = vrot.slane %v3879, 1
  %v3881 = vadd.f32 %v3879, %v3880
  %v3882 = vsel %vm2856, %v3480, 0.0
  %v3883 = vrot.slane %v3882, 4
  %v3884 = vadd.f32 %v3882, %v3883
  %v3885 = vrot.slane %v3884, 2
  %v3886 = vadd.f32 %v3884, %v3885
  %v3887 = vrot.slane %v3886, 1
  %v3888 = vadd.f32 %v3886, %v3887
  %v3889 = vsel %vm2856, %v3482, 0.0
  %v3890 = vrot.slane %v3889, 4
  %v3891 = vadd.f32 %v3889, %v3890
  %v3892 = vrot.slane %v3891, 2
  %v3893 = vadd.f32 %v3891, %v3892
  %v3894 = vrot.slane %v3893, 1
  %v3895 = vadd.f32 %v3893, %v3894
  %v3896 = vsel %vm2856, %v3484, 0.0
  %v3897 = vrot.slane %v3896, 4
  %v3898 = vadd.f32 %v3896, %v3897
  %v3899 = vrot.slane %v3898, 2
  %v3900 = vadd.f32 %v3898, %v3899
  %v3901 = vrot.slane %v3900, 1
  %v3902 = vadd.f32 %v3900, %v3901
  %v3903 = vsel %vm2856, %v3486, 0.0
  %v3904 = vrot.slane %v3903, 4
  %v3905 = vadd.f32 %v3903, %v3904
  %v3906 = vrot.slane %v3905, 2
  %v3907 = vadd.f32 %v3905, %v3906
  %v3908 = vrot.slane %v3907, 1
  %v3909 = vadd.f32 %v3907, %v3908
  %v3910 = vsel %vm2856, %v3488, 0.0
  %v3911 = vrot.slane %v3910, 4
  %v3912 = vadd.f32 %v3910, %v3911
  %v3913 = vrot.slane %v3912, 2
  %v3914 = vadd.f32 %v3912, %v3913
  %v3915 = vrot.slane %v3914, 1
  %v3916 = vadd.f32 %v3914, %v3915
  %v3917 = vsel %vm2856, %v3490, 0.0
  %v3918 = vrot.slane %v3917, 4
  %v3919 = vadd.f32 %v3917, %v3918
  %v3920 = vrot.slane %v3919, 2
  %v3921 = vadd.f32 %v3919, %v3920
  %v3922 = vrot.slane %v3921, 1
  %v3923 = vadd.f32 %v3921, %v3922
  %v3924 = vsel %vm2856, %v3492, 0.0
  %v3925 = vrot.slane %v3924, 4
  %v3926 = vadd.f32 %v3924, %v3925
  %v3927 = vrot.slane %v3926, 2
  %v3928 = vadd.f32 %v3926, %v3927
  %v3929 = vrot.slane %v3928, 1
  %v3930 = vadd.f32 %v3928, %v3929
  %v3931 = vsel %vm2856, %v3494, 0.0
  %v3932 = vrot.slane %v3931, 4
  %v3933 = vadd.f32 %v3931, %v3932
  %v3934 = vrot.slane %v3933, 2
  %v3935 = vadd.f32 %v3933, %v3934
  %v3936 = vrot.slane %v3935, 1
  %v3937 = vadd.f32 %v3935, %v3936
  %v3938 = vsel %vm2856, %v3496, 0.0
  %v3939 = vrot.slane %v3938, 4
  %v3940 = vadd.f32 %v3938, %v3939
  %v3941 = vrot.slane %v3940, 2
  %v3942 = vadd.f32 %v3940, %v3941
  %v3943 = vrot.slane %v3942, 1
  %v3944 = vadd.f32 %v3942, %v3943
  %v3945 = vrcp.pop %v3503
  %v3946 = vrcp.pop %v3510
  %v3947 = vrcp.pop %v3517
  %v3948 = vrcp.pop %v3524
  %v3949 = vrcp.pop %v3531
  %v3950 = vrcp.pop %v3538
  %v3951 = vrcp.pop %v3545
  %v3952 = vrcp.pop %v3552
  %v3953 = vrcp.pop %v3559
  %v3954 = vrcp.pop %v3566
  %v3955 = vrcp.pop %v3573
  %v3956 = vrcp.pop %v3580
  %v3957 = vrcp.pop %v3587
  %v3958 = vrcp.pop %v3594
  %v3959 = vrcp.pop %v3601
  %v3960 = vrcp.pop %v3608
  %v3961 = vrcp.pop %v3615
  %v3962 = vrcp.pop %v3622
  %v3963 = vrcp.pop %v3629
  %v3964 = vrcp.pop %v3636
  %v3965 = vrcp.pop %v3643
  %v3966 = vrcp.pop %v3650
  %v3967 = vrcp.pop %v3657
  %v3968 = vrcp.pop %v3664
  %v3969 = vrcp.pop %v3671
  %v3970 = vrcp.pop %v3678
  %v3971 = vrcp.pop %v3685
  %v3972 = vrcp.pop %v3692
  %v3973 = vrcp.pop %v3699
  %v3974 = vrcp.pop %v3706
  %v3975 = vrcp.pop %v3713
  %v3976 = vrcp.pop %v3720
  %v3977 = vrcp.pop %v3727
  %v3978 = vrcp.pop %v3734
  %v3979 = vrcp.pop %v3741
  %v3980 = vrcp.pop %v3748
  %v3981 = vrcp.pop %v3755
  %v3982 = vrcp.pop %v3762
  %v3983 = vrcp.pop %v3769
  %v3984 = vrcp.pop %v3776
  %v3985 = vrcp.pop %v3783
  %v3986 = vrcp.pop %v3790
  %v3987 = vrcp.pop %v3797
  %v3988 = vrcp.pop %v3804
  %v3989 = vrcp.pop %v3811
  %v3990 = vrcp.pop %v3818
  %v3991 = vrcp.pop %v3825
  %v3992 = vrcp.pop %v3832
  %v3993 = vrcp.pop %v3839
  %v3994 = vrcp.pop %v3846
  %v3995 = vrcp.pop %v3853
  %v3996 = vrcp.pop %v3860
  %v3997 = vrcp.pop %v3867
  %v3998 = vrcp.pop %v3874
  %v3999 = vrcp.pop %v3881
  %v4000 = vrcp.pop %v3888
  %v4001 = vrcp.pop %v3895
  %v4002 = vrcp.pop %v3902
  %v4003 = vrcp.pop %v3909
  %v4004 = vrcp.pop %v3916
  %v4005 = vrcp.pop %v3923
  %v4006 = vrcp.pop %v3930
  %v4007 = vrcp.pop %v3937
  %v4008 = vrcp.pop %v3944
  %v4009 = vmul.f32 %v3370, %v3945
  %v4010 = vmul.f32 %v3372, %v3946
  %v4011 = vmul.f32 %v3374, %v3947
  %v4012 = vmul.f32 %v3376, %v3948
  %v4013 = vmul.f32 %v3378, %v3949
  %v4014 = vmul.f32 %v3380, %v3950
  %v4015 = vmul.f32 %v3382, %v3951
  %v4016 = vmul.f32 %v3384, %v3952
  %v4017 = vmul.f32 %v3386, %v3953
  %v4018 = vmul.f32 %v3388, %v3954
  %v4019 = vmul.f32 %v3390, %v3955
  %v4020 = vmul.f32 %v3392, %v3956
  %v4021 = vmul.f32 %v3394, %v3957
  %v4022 = vmul.f32 %v3396, %v3958
  %v4023 = vmul.f32 %v3398, %v3959
  %v4024 = vmul.f32 %v3400, %v3960
  %v4025 = vmul.f32 %v3402, %v3961
  %v4026 = vmul.f32 %v3404, %v3962
  %v4027 = vmul.f32 %v3406, %v3963
  %v4028 = vmul.f32 %v3408, %v3964
  %v4029 = vmul.f32 %v3410, %v3965
  %v4030 = vmul.f32 %v3412, %v3966
  %v4031 = vmul.f32 %v3414, %v3967
  %v4032 = vmul.f32 %v3416, %v3968
  %v4033 = vmul.f32 %v3418, %v3969
  %v4034 = vmul.f32 %v3420, %v3970
  %v4035 = vmul.f32 %v3422, %v3971
  %v4036 = vmul.f32 %v3424, %v3972
  %v4037 = vmul.f32 %v3426, %v3973
  %v4038 = vmul.f32 %v3428, %v3974
  %v4039 = vmul.f32 %v3430, %v3975
  %v4040 = vmul.f32 %v3432, %v3976
  %v4041 = vmul.f32 %v3434, %v3977
  %v4042 = vmul.f32 %v3436, %v3978
  %v4043 = vmul.f32 %v3438, %v3979
  %v4044 = vmul.f32 %v3440, %v3980
  %v4045 = vmul.f32 %v3442, %v3981
  %v4046 = vmul.f32 %v3444, %v3982
  %v4047 = vmul.f32 %v3446, %v3983
  %v4048 = vmul.f32 %v3448, %v3984
  %v4049 = vmul.f32 %v3450, %v3985
  %v4050 = vmul.f32 %v3452, %v3986
  %v4051 = vmul.f32 %v3454, %v3987
  %v4052 = vmul.f32 %v3456, %v3988
  %v4053 = vmul.f32 %v3458, %v3989
  %v4054 = vmul.f32 %v3460, %v3990
  %v4055 = vmul.f32 %v3462, %v3991
  %v4056 = vmul.f32 %v3464, %v3992
  %v4057 = vmul.f32 %v3466, %v3993
  %v4058 = vmul.f32 %v3468, %v3994
  %v4059 = vmul.f32 %v3470, %v3995
  %v4060 = vmul.f32 %v3472, %v3996
  %v4061 = vmul.f32 %v3474, %v3997
  %v4062 = vmul.f32 %v3476, %v3998
  %v4063 = vmul.f32 %v3478, %v3999
  %v4064 = vmul.f32 %v3480, %v4000
  %v4065 = vmul.f32 %v3482, %v4001
  %v4066 = vmul.f32 %v3484, %v4002
  %v4067 = vmul.f32 %v3486, %v4003
  %v4068 = vmul.f32 %v3488, %v4004
  %v4069 = vmul.f32 %v3490, %v4005
  %v4070 = vmul.f32 %v3492, %v4006
  %v4071 = vmul.f32 %v3494, %v4007
  %v4072 = vmul.f32 %v3496, %v4008
  %v4073 = vpack.c.bf16 %v4010, %v4009
  %v4074 = vpack.c.bf16 %v4012, %v4011
  %v4075 = vpack.c.bf16 %v4014, %v4013
  %v4076 = vpack.c.bf16 %v4016, %v4015
  %v4077 = vpack.c.bf16 %v4018, %v4017
  %v4078 = vpack.c.bf16 %v4020, %v4019
  %v4079 = vpack.c.bf16 %v4022, %v4021
  %v4080 = vpack.c.bf16 %v4024, %v4023
  %v4081 = vpack.c.bf16 %v4026, %v4025
  %v4082 = vpack.c.bf16 %v4028, %v4027
  %v4083 = vpack.c.bf16 %v4030, %v4029
  %v4084 = vpack.c.bf16 %v4032, %v4031
  %v4085 = vpack.c.bf16 %v4034, %v4033
  %v4086 = vpack.c.bf16 %v4036, %v4035
  %v4087 = vpack.c.bf16 %v4038, %v4037
  %v4088 = vpack.c.bf16 %v4040, %v4039
  %v4089 = vpack.c.bf16 %v4042, %v4041
  %v4090 = vpack.c.bf16 %v4044, %v4043
  %v4091 = vpack.c.bf16 %v4046, %v4045
  %v4092 = vpack.c.bf16 %v4048, %v4047
  %v4093 = vpack.c.bf16 %v4050, %v4049
  %v4094 = vpack.c.bf16 %v4052, %v4051
  %v4095 = vpack.c.bf16 %v4054, %v4053
  %v4096 = vpack.c.bf16 %v4056, %v4055
  %v4097 = vpack.c.bf16 %v4058, %v4057
  %v4098 = vpack.c.bf16 %v4060, %v4059
  %v4099 = vpack.c.bf16 %v4062, %v4061
  %v4100 = vpack.c.bf16 %v4064, %v4063
  %v4101 = vpack.c.bf16 %v4066, %v4065
  %v4102 = vpack.c.bf16 %v4068, %v4067
  %v4103 = vpack.c.bf16 %v4070, %v4069
  %v4104 = vpack.c.bf16 %v4072, %v4071
  %v4105 = vld [vmem:[%s22] sm:$0x3]
  %v4107 = vsel %vm2856, %v4073, 0
  %v4110 = vsel %vm2856, %v4074, 0
  %v4113 = vsel %vm2856, %v4075, 0
  %v4116 = vsel %vm2856, %v4076, 0
  %v4119 = vsel %vm2856, %v4077, 0
  %v4122 = vsel %vm2856, %v4078, 0
  %v4125 = vsel %vm2856, %v4079, 0
  %v4128 = vsel %vm2856, %v4080, 0
  %v4131 = vsel %vm2856, %v4081, 0
  %v4134 = vsel %vm2856, %v4082, 0
  %v4137 = vsel %vm2856, %v4083, 0
  %v4140 = vsel %vm2856, %v4084, 0
  %v4143 = vsel %vm2856, %v4085, 0
  %v4146 = vsel %vm2856, %v4086, 0
  %v4149 = vsel %vm2856, %v4087, 0
  %v4152 = vsel %vm2856, %v4088, 0
  %v4155 = vsel %vm2856, %v4089, 0
  %v4158 = vsel %vm2856, %v4090, 0
  %v4161 = vsel %vm2856, %v4091, 0
  %v4164 = vsel %vm2856, %v4092, 0
  %v4167 = vsel %vm2856, %v4093, 0
  %v4170 = vsel %vm2856, %v4094, 0
  %v4173 = vsel %vm2856, %v4095, 0
  %v4176 = vsel %vm2856, %v4096, 0
  %v4179 = vsel %vm2856, %v4097, 0
  %v4182 = vsel %vm2856, %v4098, 0
  %v4185 = vsel %vm2856, %v4099, 0
  %v4188 = vsel %vm2856, %v4100, 0
  %v4191 = vsel %vm2856, %v4101, 0
  %v4194 = vsel %vm2856, %v4102, 0
  %v4197 = vsel %vm2856, %v4103, 0
  %v4200 = vsel %vm2856, %v4104, 0
  %vm4202 = vcmask 1041408
  %v4204 = vsel %vm4202, %v4105, 0
  %4206 = vmatpush.bf16.msra.mxu0 0
  %4207 = vmatpush.bf16.msra.mxu0 0
  %4208 = vmatpush.bf16.msra.mxu0 0
  %4209 = vmatpush.bf16.msra.mxu0 0
  %4210 = vmatpush.bf16.msra.mxu0 0
  %4211 = vmatpush.bf16.msra.mxu0 0
  %4212 = vmatpush.bf16.msra.mxu0 0
  %4213 = vmatpush.bf16.msra.mxu0 %v4204
  %4214 = vmatmul.bf16.gmra.mxu0 %v4107
  %v4215 = vpop.f32.mrf.mxu0
  %v4216 = vadd.f32 0.0, %v4215
  %v4217 = vpop.f32.mrf.mxu0
  %v4218 = vadd.f32 0.0, %v4217
  %4219 = vmatmul.bf16.gmra.mxu0 %v4110
  %v4220 = vpop.f32.mrf.mxu0
  %v4221 = vadd.f32 0.0, %v4220
  %v4222 = vpop.f32.mrf.mxu0
  %v4223 = vadd.f32 0.0, %v4222
  %4224 = vmatmul.bf16.gmra.mxu0 %v4113
  %v4225 = vpop.f32.mrf.mxu0
  %v4226 = vadd.f32 0.0, %v4225
  %v4227 = vpop.f32.mrf.mxu0
  %v4228 = vadd.f32 0.0, %v4227
  %4229 = vmatmul.bf16.gmra.mxu0 %v4116
  %v4230 = vpop.f32.mrf.mxu0
  %v4231 = vadd.f32 0.0, %v4230
  %v4232 = vpop.f32.mrf.mxu0
  %v4233 = vadd.f32 0.0, %v4232
  %4234 = vmatmul.bf16.gmra.mxu0 %v4119
  %v4235 = vpop.f32.mrf.mxu0
  %v4236 = vadd.f32 0.0, %v4235
  %v4237 = vpop.f32.mrf.mxu0
  %v4238 = vadd.f32 0.0, %v4237
  %4239 = vmatmul.bf16.gmra.mxu0 %v4122
  %v4240 = vpop.f32.mrf.mxu0
  %v4241 = vadd.f32 0.0, %v4240
  %v4242 = vpop.f32.mrf.mxu0
  %v4243 = vadd.f32 0.0, %v4242
  %4244 = vmatmul.bf16.gmra.mxu0 %v4125
  %v4245 = vpop.f32.mrf.mxu0
  %v4246 = vadd.f32 0.0, %v4245
  %v4247 = vpop.f32.mrf.mxu0
  %v4248 = vadd.f32 0.0, %v4247
  %4249 = vmatmul.bf16.gmra.mxu0 %v4128
  %v4250 = vpop.f32.mrf.mxu0
  %v4251 = vadd.f32 0.0, %v4250
  %v4252 = vpop.f32.mrf.mxu0
  %v4253 = vadd.f32 0.0, %v4252
  %4254 = vmatmul.bf16.gmra.mxu0 %v4131
  %v4255 = vpop.f32.mrf.mxu0
  %v4256 = vadd.f32 0.0, %v4255
  %v4257 = vpop.f32.mrf.mxu0
  %v4258 = vadd.f32 0.0, %v4257
  %4259 = vmatmul.bf16.gmra.mxu0 %v4134
  %v4260 = vpop.f32.mrf.mxu0
  %v4261 = vadd.f32 0.0, %v4260
  %v4262 = vpop.f32.mrf.mxu0
  %v4263 = vadd.f32 0.0, %v4262
  %4264 = vmatmul.bf16.gmra.mxu0 %v4137
  %v4265 = vpop.f32.mrf.mxu0
  %v4266 = vadd.f32 0.0, %v4265
  %v4267 = vpop.f32.mrf.mxu0
  %v4268 = vadd.f32 0.0, %v4267
  %4269 = vmatmul.bf16.gmra.mxu0 %v4140
  %v4270 = vpop.f32.mrf.mxu0
  %v4271 = vadd.f32 0.0, %v4270
  %v4272 = vpop.f32.mrf.mxu0
  %v4273 = vadd.f32 0.0, %v4272
  %4274 = vmatmul.bf16.gmra.mxu0 %v4143
  %v4275 = vpop.f32.mrf.mxu0
  %v4276 = vadd.f32 0.0, %v4275
  %v4277 = vpop.f32.mrf.mxu0
  %v4278 = vadd.f32 0.0, %v4277
  %4279 = vmatmul.bf16.gmra.mxu0 %v4146
  %v4280 = vpop.f32.mrf.mxu0
  %v4281 = vadd.f32 0.0, %v4280
  %v4282 = vpop.f32.mrf.mxu0
  %v4283 = vadd.f32 0.0, %v4282
  %4284 = vmatmul.bf16.gmra.mxu0 %v4149
  %v4285 = vpop.f32.mrf.mxu0
  %v4286 = vadd.f32 0.0, %v4285
  %v4287 = vpop.f32.mrf.mxu0
  %v4288 = vadd.f32 0.0, %v4287
  %4289 = vmatmul.bf16.gmra.mxu0 %v4152
  %v4290 = vpop.f32.mrf.mxu0
  %v4291 = vadd.f32 0.0, %v4290
  %v4292 = vpop.f32.mrf.mxu0
  %v4293 = vadd.f32 0.0, %v4292
  %4294 = vmatmul.bf16.gmra.mxu0 %v4155
  %v4295 = vpop.f32.mrf.mxu0
  %v4296 = vadd.f32 0.0, %v4295
  %v4297 = vpop.f32.mrf.mxu0
  %v4298 = vadd.f32 0.0, %v4297
  %4299 = vmatmul.bf16.gmra.mxu0 %v4158
  %v4300 = vpop.f32.mrf.mxu0
  %v4301 = vadd.f32 0.0, %v4300
  %v4302 = vpop.f32.mrf.mxu0
  %v4303 = vadd.f32 0.0, %v4302
  %4304 = vmatmul.bf16.gmra.mxu0 %v4161
  %v4305 = vpop.f32.mrf.mxu0
  %v4306 = vadd.f32 0.0, %v4305
  %v4307 = vpop.f32.mrf.mxu0
  %v4308 = vadd.f32 0.0, %v4307
  %4309 = vmatmul.bf16.gmra.mxu0 %v4164
  %v4310 = vpop.f32.mrf.mxu0
  %v4311 = vadd.f32 0.0, %v4310
  %v4312 = vpop.f32.mrf.mxu0
  %v4313 = vadd.f32 0.0, %v4312
  %4314 = vmatmul.bf16.gmra.mxu0 %v4167
  %v4315 = vpop.f32.mrf.mxu0
  %v4316 = vadd.f32 0.0, %v4315
  %v4317 = vpop.f32.mrf.mxu0
  %v4318 = vadd.f32 0.0, %v4317
  %4319 = vmatmul.bf16.gmra.mxu0 %v4170
  %v4320 = vpop.f32.mrf.mxu0
  %v4321 = vadd.f32 0.0, %v4320
  %v4322 = vpop.f32.mrf.mxu0
  %v4323 = vadd.f32 0.0, %v4322
  %4324 = vmatmul.bf16.gmra.mxu0 %v4173
  %v4325 = vpop.f32.mrf.mxu0
  %v4326 = vadd.f32 0.0, %v4325
  %v4327 = vpop.f32.mrf.mxu0
  %v4328 = vadd.f32 0.0, %v4327
  %4329 = vmatmul.bf16.gmra.mxu0 %v4176
  %v4330 = vpop.f32.mrf.mxu0
  %v4331 = vadd.f32 0.0, %v4330
  %v4332 = vpop.f32.mrf.mxu0
  %v4333 = vadd.f32 0.0, %v4332
  %4334 = vmatmul.bf16.gmra.mxu0 %v4179
  %v4335 = vpop.f32.mrf.mxu0
  %v4336 = vadd.f32 0.0, %v4335
  %v4337 = vpop.f32.mrf.mxu0
  %v4338 = vadd.f32 0.0, %v4337
  %4339 = vmatmul.bf16.gmra.mxu0 %v4182
  %v4340 = vpop.f32.mrf.mxu0
  %v4341 = vadd.f32 0.0, %v4340
  %v4342 = vpop.f32.mrf.mxu0
  %v4343 = vadd.f32 0.0, %v4342
  %4344 = vmatmul.bf16.gmra.mxu0 %v4185
  %v4345 = vpop.f32.mrf.mxu0
  %v4346 = vadd.f32 0.0, %v4345
  %v4347 = vpop.f32.mrf.mxu0
  %v4348 = vadd.f32 0.0, %v4347
  %4349 = vmatmul.bf16.gmra.mxu0 %v4188
  %v4350 = vpop.f32.mrf.mxu0
  %v4351 = vadd.f32 0.0, %v4350
  %v4352 = vpop.f32.mrf.mxu0
  %v4353 = vadd.f32 0.0, %v4352
  %4354 = vmatmul.bf16.gmra.mxu0 %v4191
  %v4355 = vpop.f32.mrf.mxu0
  %v4356 = vadd.f32 0.0, %v4355
  %v4357 = vpop.f32.mrf.mxu0
  %v4358 = vadd.f32 0.0, %v4357
  %4359 = vmatmul.bf16.gmra.mxu0 %v4194
  %v4360 = vpop.f32.mrf.mxu0
  %v4361 = vadd.f32 0.0, %v4360
  %v4362 = vpop.f32.mrf.mxu0
  %v4363 = vadd.f32 0.0, %v4362
  %4364 = vmatmul.bf16.gmra.mxu0 %v4197
  %v4365 = vpop.f32.mrf.mxu0
  %v4366 = vadd.f32 0.0, %v4365
  %v4367 = vpop.f32.mrf.mxu0
  %v4368 = vadd.f32 0.0, %v4367
  %4369 = vmatmul.bf16.gmra.mxu0 %v4200
  %v4370 = vpop.f32.mrf.mxu0
  %v4371 = vadd.f32 0.0, %v4370
  %v4372 = vpop.f32.mrf.mxu0
  %v4373 = vadd.f32 0.0, %v4372
  %4374 = vdwg.mxu0
  %v4375 = vmul.f32 %v2030, %v4216
  %v4376 = vmul.f32 %v2031, %v4218
  %v4377 = vmul.f32 %v2032, %v4221
  %v4378 = vmul.f32 %v2033, %v4223
  %v4379 = vmul.f32 %v2034, %v4226
  %v4380 = vmul.f32 %v2035, %v4228
  %v4381 = vmul.f32 %v2036, %v4231
  %v4382 = vmul.f32 %v2037, %v4233
  %v4383 = vmul.f32 %v2038, %v4236
  %v4384 = vmul.f32 %v2039, %v4238
  %v4385 = vmul.f32 %v2040, %v4241
  %v4386 = vmul.f32 %v2041, %v4243
  %v4387 = vmul.f32 %v2042, %v4246
  %v4388 = vmul.f32 %v2043, %v4248
  %v4389 = vmul.f32 %v2044, %v4251
  %v4390 = vmul.f32 %v2045, %v4253
  %v4391 = vmul.f32 %v2046, %v4256
  %v4392 = vmul.f32 %v2047, %v4258
  %v4393 = vmul.f32 %v2048, %v4261
  %v4394 = vmul.f32 %v2049, %v4263
  %v4395 = vmul.f32 %v2050, %v4266
  %v4396 = vmul.f32 %v2051, %v4268
  %v4397 = vmul.f32 %v2052, %v4271
  %v4398 = vmul.f32 %v2053, %v4273
  %v4399 = vmul.f32 %v2054, %v4276
  %v4400 = vmul.f32 %v2055, %v4278
  %v4401 = vmul.f32 %v2056, %v4281
  %v4402 = vmul.f32 %v2057, %v4283
  %v4403 = vmul.f32 %v2058, %v4286
  %v4404 = vmul.f32 %v2059, %v4288
  %v4405 = vmul.f32 %v2060, %v4291
  %v4406 = vmul.f32 %v2061, %v4293
  %v4407 = vmul.f32 %v2062, %v4296
  %v4408 = vmul.f32 %v2063, %v4298
  %v4409 = vmul.f32 %v2064, %v4301
  %v4410 = vmul.f32 %v2065, %v4303
  %v4411 = vmul.f32 %v2066, %v4306
  %v4412 = vmul.f32 %v2067, %v4308
  %v4413 = vmul.f32 %v2068, %v4311
  %v4414 = vmul.f32 %v2069, %v4313
  %v4415 = vmul.f32 %v2070, %v4316
  %v4416 = vmul.f32 %v2071, %v4318
  %v4417 = vmul.f32 %v2072, %v4321
  %v4418 = vmul.f32 %v2073, %v4323
  %v4419 = vmul.f32 %v2074, %v4326
  %v4420 = vmul.f32 %v2075, %v4328
  %v4421 = vmul.f32 %v2076, %v4331
  %v4422 = vmul.f32 %v2077, %v4333
  %v4423 = vmul.f32 %v2078, %v4336
  %v4424 = vmul.f32 %v2079, %v4338
  %v4425 = vmul.f32 %v2080, %v4341
  %v4426 = vmul.f32 %v2081, %v4343
  %v4427 = vmul.f32 %v2082, %v4346
  %v4428 = vmul.f32 %v2083, %v4348
  %v4429 = vmul.f32 %v2084, %v4351
  %v4430 = vmul.f32 %v2085, %v4353
  %v4431 = vmul.f32 %v2086, %v4356
  %v4432 = vmul.f32 %v2087, %v4358
  %v4433 = vmul.f32 %v2088, %v4361
  %v4434 = vmul.f32 %v2089, %v4363
  %v4435 = vmul.f32 %v2090, %v4366
  %v4436 = vmul.f32 %v2091, %v4368
  %v4437 = vmul.f32 %v2092, %v4371
  %v4438 = vmul.f32 %v2093, %v4373
  %v4439 = vsel %vm2398, %v4375, 0.0
  %v4440 = vrot.slane %v4439, 4
  %v4441 = vadd.f32 %v4439, %v4440
  %v4442 = vrot.slane %v4441, 2
  %v4443 = vadd.f32 %v4441, %v4442
  %v4444 = vrot.slane %v4443, 1
  %v4445 = vadd.f32 %v4443, %v4444
  %v4446 = vsel %vm2398, %v4376, 0.0
  %v4447 = vrot.slane %v4446, 4
  %v4448 = vadd.f32 %v4446, %v4447
  %v4449 = vrot.slane %v4448, 2
  %v4450 = vadd.f32 %v4448, %v4449
  %v4451 = vrot.slane %v4450, 1
  %v4452 = vadd.f32 %v4450, %v4451
  %v4453 = vsel %vm2398, %v4377, 0.0
  %v4454 = vrot.slane %v4453, 4
  %v4455 = vadd.f32 %v4453, %v4454
  %v4456 = vrot.slane %v4455, 2
  %v4457 = vadd.f32 %v4455, %v4456
  %v4458 = vrot.slane %v4457, 1
  %v4459 = vadd.f32 %v4457, %v4458
  %v4460 = vsel %vm2398, %v4378, 0.0
  %v4461 = vrot.slane %v4460, 4
  %v4462 = vadd.f32 %v4460, %v4461
  %v4463 = vrot.slane %v4462, 2
  %v4464 = vadd.f32 %v4462, %v4463
  %v4465 = vrot.slane %v4464, 1
  %v4466 = vadd.f32 %v4464, %v4465
  %v4467 = vsel %vm2398, %v4379, 0.0
  %v4468 = vrot.slane %v4467, 4
  %v4469 = vadd.f32 %v4467, %v4468
  %v4470 = vrot.slane %v4469, 2
  %v4471 = vadd.f32 %v4469, %v4470
  %v4472 = vrot.slane %v4471, 1
  %v4473 = vadd.f32 %v4471, %v4472
  %v4474 = vsel %vm2398, %v4380, 0.0
  %v4475 = vrot.slane %v4474, 4
  %v4476 = vadd.f32 %v4474, %v4475
  %v4477 = vrot.slane %v4476, 2
  %v4478 = vadd.f32 %v4476, %v4477
  %v4479 = vrot.slane %v4478, 1
  %v4480 = vadd.f32 %v4478, %v4479
  %v4481 = vsel %vm2398, %v4381, 0.0
  %v4482 = vrot.slane %v4481, 4
  %v4483 = vadd.f32 %v4481, %v4482
  %v4484 = vrot.slane %v4483, 2
  %v4485 = vadd.f32 %v4483, %v4484
  %v4486 = vrot.slane %v4485, 1
  %v4487 = vadd.f32 %v4485, %v4486
  %v4488 = vsel %vm2398, %v4382, 0.0
  %v4489 = vrot.slane %v4488, 4
  %v4490 = vadd.f32 %v4488, %v4489
  %v4491 = vrot.slane %v4490, 2
  %v4492 = vadd.f32 %v4490, %v4491
  %v4493 = vrot.slane %v4492, 1
  %v4494 = vadd.f32 %v4492, %v4493
  %v4495 = vsel %vm2398, %v4383, 0.0
  %v4496 = vrot.slane %v4495, 4
  %v4497 = vadd.f32 %v4495, %v4496
  %v4498 = vrot.slane %v4497, 2
  %v4499 = vadd.f32 %v4497, %v4498
  %v4500 = vrot.slane %v4499, 1
  %v4501 = vadd.f32 %v4499, %v4500
  %v4502 = vsel %vm2398, %v4384, 0.0
  %v4503 = vrot.slane %v4502, 4
  %v4504 = vadd.f32 %v4502, %v4503
  %v4505 = vrot.slane %v4504, 2
  %v4506 = vadd.f32 %v4504, %v4505
  %v4507 = vrot.slane %v4506, 1
  %v4508 = vadd.f32 %v4506, %v4507
  %v4509 = vsel %vm2398, %v4385, 0.0
  %v4510 = vrot.slane %v4509, 4
  %v4511 = vadd.f32 %v4509, %v4510
  %v4512 = vrot.slane %v4511, 2
  %v4513 = vadd.f32 %v4511, %v4512
  %v4514 = vrot.slane %v4513, 1
  %v4515 = vadd.f32 %v4513, %v4514
  %v4516 = vsel %vm2398, %v4386, 0.0
  %v4517 = vrot.slane %v4516, 4
  %v4518 = vadd.f32 %v4516, %v4517
  %v4519 = vrot.slane %v4518, 2
  %v4520 = vadd.f32 %v4518, %v4519
  %v4521 = vrot.slane %v4520, 1
  %v4522 = vadd.f32 %v4520, %v4521
  %v4523 = vsel %vm2398, %v4387, 0.0
  %v4524 = vrot.slane %v4523, 4
  %v4525 = vadd.f32 %v4523, %v4524
  %v4526 = vrot.slane %v4525, 2
  %v4527 = vadd.f32 %v4525, %v4526
  %v4528 = vrot.slane %v4527, 1
  %v4529 = vadd.f32 %v4527, %v4528
  %v4530 = vsel %vm2398, %v4388, 0.0
  %v4531 = vrot.slane %v4530, 4
  %v4532 = vadd.f32 %v4530, %v4531
  %v4533 = vrot.slane %v4532, 2
  %v4534 = vadd.f32 %v4532, %v4533
  %v4535 = vrot.slane %v4534, 1
  %v4536 = vadd.f32 %v4534, %v4535
  %v4537 = vsel %vm2398, %v4389, 0.0
  %v4538 = vrot.slane %v4537, 4
  %v4539 = vadd.f32 %v4537, %v4538
  %v4540 = vrot.slane %v4539, 2
  %v4541 = vadd.f32 %v4539, %v4540
  %v4542 = vrot.slane %v4541, 1
  %v4543 = vadd.f32 %v4541, %v4542
  %v4544 = vsel %vm2398, %v4390, 0.0
  %v4545 = vrot.slane %v4544, 4
  %v4546 = vadd.f32 %v4544, %v4545
  %v4547 = vrot.slane %v4546, 2
  %v4548 = vadd.f32 %v4546, %v4547
  %v4549 = vrot.slane %v4548, 1
  %v4550 = vadd.f32 %v4548, %v4549
  %v4551 = vsel %vm2398, %v4391, 0.0
  %v4552 = vrot.slane %v4551, 4
  %v4553 = vadd.f32 %v4551, %v4552
  %v4554 = vrot.slane %v4553, 2
  %v4555 = vadd.f32 %v4553, %v4554
  %v4556 = vrot.slane %v4555, 1
  %v4557 = vadd.f32 %v4555, %v4556
  %v4558 = vsel %vm2398, %v4392, 0.0
  %v4559 = vrot.slane %v4558, 4
  %v4560 = vadd.f32 %v4558, %v4559
  %v4561 = vrot.slane %v4560, 2
  %v4562 = vadd.f32 %v4560, %v4561
  %v4563 = vrot.slane %v4562, 1
  %v4564 = vadd.f32 %v4562, %v4563
  %v4565 = vsel %vm2398, %v4393, 0.0
  %v4566 = vrot.slane %v4565, 4
  %v4567 = vadd.f32 %v4565, %v4566
  %v4568 = vrot.slane %v4567, 2
  %v4569 = vadd.f32 %v4567, %v4568
  %v4570 = vrot.slane %v4569, 1
  %v4571 = vadd.f32 %v4569, %v4570
  %v4572 = vsel %vm2398, %v4394, 0.0
  %v4573 = vrot.slane %v4572, 4
  %v4574 = vadd.f32 %v4572, %v4573
  %v4575 = vrot.slane %v4574, 2
  %v4576 = vadd.f32 %v4574, %v4575
  %v4577 = vrot.slane %v4576, 1
  %v4578 = vadd.f32 %v4576, %v4577
  %v4579 = vsel %vm2398, %v4395, 0.0
  %v4580 = vrot.slane %v4579, 4
  %v4581 = vadd.f32 %v4579, %v4580
  %v4582 = vrot.slane %v4581, 2
  %v4583 = vadd.f32 %v4581, %v4582
  %v4584 = vrot.slane %v4583, 1
  %v4585 = vadd.f32 %v4583, %v4584
  %v4586 = vsel %vm2398, %v4396, 0.0
  %v4587 = vrot.slane %v4586, 4
  %v4588 = vadd.f32 %v4586, %v4587
  %v4589 = vrot.slane %v4588, 2
  %v4590 = vadd.f32 %v4588, %v4589
  %v4591 = vrot.slane %v4590, 1
  %v4592 = vadd.f32 %v4590, %v4591
  %v4593 = vsel %vm2398, %v4397, 0.0
  %v4594 = vrot.slane %v4593, 4
  %v4595 = vadd.f32 %v4593, %v4594
  %v4596 = vrot.slane %v4595, 2
  %v4597 = vadd.f32 %v4595, %v4596
  %v4598 = vrot.slane %v4597, 1
  %v4599 = vadd.f32 %v4597, %v4598
  %v4600 = vsel %vm2398, %v4398, 0.0
  %v4601 = vrot.slane %v4600, 4
  %v4602 = vadd.f32 %v4600, %v4601
  %v4603 = vrot.slane %v4602, 2
  %v4604 = vadd.f32 %v4602, %v4603
  %v4605 = vrot.slane %v4604, 1
  %v4606 = vadd.f32 %v4604, %v4605
  %v4607 = vsel %vm2398, %v4399, 0.0
  %v4608 = vrot.slane %v4607, 4
  %v4609 = vadd.f32 %v4607, %v4608
  %v4610 = vrot.slane %v4609, 2
  %v4611 = vadd.f32 %v4609, %v4610
  %v4612 = vrot.slane %v4611, 1
  %v4613 = vadd.f32 %v4611, %v4612
  %v4614 = vsel %vm2398, %v4400, 0.0
  %v4615 = vrot.slane %v4614, 4
  %v4616 = vadd.f32 %v4614, %v4615
  %v4617 = vrot.slane %v4616, 2
  %v4618 = vadd.f32 %v4616, %v4617
  %v4619 = vrot.slane %v4618, 1
  %v4620 = vadd.f32 %v4618, %v4619
  %v4621 = vsel %vm2398, %v4401, 0.0
  %v4622 = vrot.slane %v4621, 4
  %v4623 = vadd.f32 %v4621, %v4622
  %v4624 = vrot.slane %v4623, 2
  %v4625 = vadd.f32 %v4623, %v4624
  %v4626 = vrot.slane %v4625, 1
  %v4627 = vadd.f32 %v4625, %v4626
  %v4628 = vsel %vm2398, %v4402, 0.0
  %v4629 = vrot.slane %v4628, 4
  %v4630 = vadd.f32 %v4628, %v4629
  %v4631 = vrot.slane %v4630, 2
  %v4632 = vadd.f32 %v4630, %v4631
  %v4633 = vrot.slane %v4632, 1
  %v4634 = vadd.f32 %v4632, %v4633
  %v4635 = vsel %vm2398, %v4403, 0.0
  %v4636 = vrot.slane %v4635, 4
  %v4637 = vadd.f32 %v4635, %v4636
  %v4638 = vrot.slane %v4637, 2
  %v4639 = vadd.f32 %v4637, %v4638
  %v4640 = vrot.slane %v4639, 1
  %v4641 = vadd.f32 %v4639, %v4640
  %v4642 = vsel %vm2398, %v4404, 0.0
  %v4643 = vrot.slane %v4642, 4
  %v4644 = vadd.f32 %v4642, %v4643
  %v4645 = vrot.slane %v4644, 2
  %v4646 = vadd.f32 %v4644, %v4645
  %v4647 = vrot.slane %v4646, 1
  %v4648 = vadd.f32 %v4646, %v4647
  %v4649 = vsel %vm2398, %v4405, 0.0
  %v4650 = vrot.slane %v4649, 4
  %v4651 = vadd.f32 %v4649, %v4650
  %v4652 = vrot.slane %v4651, 2
  %v4653 = vadd.f32 %v4651, %v4652
  %v4654 = vrot.slane %v4653, 1
  %v4655 = vadd.f32 %v4653, %v4654
  %v4656 = vsel %vm2398, %v4406, 0.0
  %v4657 = vrot.slane %v4656, 4
  %v4658 = vadd.f32 %v4656, %v4657
  %v4659 = vrot.slane %v4658, 2
  %v4660 = vadd.f32 %v4658, %v4659
  %v4661 = vrot.slane %v4660, 1
  %v4662 = vadd.f32 %v4660, %v4661
  %v4663 = vsel %vm2398, %v4407, 0.0
  %v4664 = vrot.slane %v4663, 4
  %v4665 = vadd.f32 %v4663, %v4664
  %v4666 = vrot.slane %v4665, 2
  %v4667 = vadd.f32 %v4665, %v4666
  %v4668 = vrot.slane %v4667, 1
  %v4669 = vadd.f32 %v4667, %v4668
  %v4670 = vsel %vm2398, %v4408, 0.0
  %v4671 = vrot.slane %v4670, 4
  %v4672 = vadd.f32 %v4670, %v4671
  %v4673 = vrot.slane %v4672, 2
  %v4674 = vadd.f32 %v4672, %v4673
  %v4675 = vrot.slane %v4674, 1
  %v4676 = vadd.f32 %v4674, %v4675
  %v4677 = vsel %vm2398, %v4409, 0.0
  %v4678 = vrot.slane %v4677, 4
  %v4679 = vadd.f32 %v4677, %v4678
  %v4680 = vrot.slane %v4679, 2
  %v4681 = vadd.f32 %v4679, %v4680
  %v4682 = vrot.slane %v4681, 1
  %v4683 = vadd.f32 %v4681, %v4682
  %v4684 = vsel %vm2398, %v4410, 0.0
  %v4685 = vrot.slane %v4684, 4
  %v4686 = vadd.f32 %v4684, %v4685
  %v4687 = vrot.slane %v4686, 2
  %v4688 = vadd.f32 %v4686, %v4687
  %v4689 = vrot.slane %v4688, 1
  %v4690 = vadd.f32 %v4688, %v4689
  %v4691 = vsel %vm2398, %v4411, 0.0
  %v4692 = vrot.slane %v4691, 4
  %v4693 = vadd.f32 %v4691, %v4692
  %v4694 = vrot.slane %v4693, 2
  %v4695 = vadd.f32 %v4693, %v4694
  %v4696 = vrot.slane %v4695, 1
  %v4697 = vadd.f32 %v4695, %v4696
  %v4698 = vsel %vm2398, %v4412, 0.0
  %v4699 = vrot.slane %v4698, 4
  %v4700 = vadd.f32 %v4698, %v4699
  %v4701 = vrot.slane %v4700, 2
  %v4702 = vadd.f32 %v4700, %v4701
  %v4703 = vrot.slane %v4702, 1
  %v4704 = vadd.f32 %v4702, %v4703
  %v4705 = vsel %vm2398, %v4413, 0.0
  %v4706 = vrot.slane %v4705, 4
  %v4707 = vadd.f32 %v4705, %v4706
  %v4708 = vrot.slane %v4707, 2
  %v4709 = vadd.f32 %v4707, %v4708
  %v4710 = vrot.slane %v4709, 1
  %v4711 = vadd.f32 %v4709, %v4710
  %v4712 = vsel %vm2398, %v4414, 0.0
  %v4713 = vrot.slane %v4712, 4
  %v4714 = vadd.f32 %v4712, %v4713
  %v4715 = vrot.slane %v4714, 2
  %v4716 = vadd.f32 %v4714, %v4715
  %v4717 = vrot.slane %v4716, 1
  %v4718 = vadd.f32 %v4716, %v4717
  %v4719 = vsel %vm2398, %v4415, 0.0
  %v4720 = vrot.slane %v4719, 4
  %v4721 = vadd.f32 %v4719, %v4720
  %v4722 = vrot.slane %v4721, 2
  %v4723 = vadd.f32 %v4721, %v4722
  %v4724 = vrot.slane %v4723, 1
  %v4725 = vadd.f32 %v4723, %v4724
  %v4726 = vsel %vm2398, %v4416, 0.0
  %v4727 = vrot.slane %v4726, 4
  %v4728 = vadd.f32 %v4726, %v4727
  %v4729 = vrot.slane %v4728, 2
  %v4730 = vadd.f32 %v4728, %v4729
  %v4731 = vrot.slane %v4730, 1
  %v4732 = vadd.f32 %v4730, %v4731
  %v4733 = vsel %vm2398, %v4417, 0.0
  %v4734 = vrot.slane %v4733, 4
  %v4735 = vadd.f32 %v4733, %v4734
  %v4736 = vrot.slane %v4735, 2
  %v4737 = vadd.f32 %v4735, %v4736
  %v4738 = vrot.slane %v4737, 1
  %v4739 = vadd.f32 %v4737, %v4738
  %v4740 = vsel %vm2398, %v4418, 0.0
  %v4741 = vrot.slane %v4740, 4
  %v4742 = vadd.f32 %v4740, %v4741
  %v4743 = vrot.slane %v4742, 2
  %v4744 = vadd.f32 %v4742, %v4743
  %v4745 = vrot.slane %v4744, 1
  %v4746 = vadd.f32 %v4744, %v4745
  %v4747 = vsel %vm2398, %v4419, 0.0
  %v4748 = vrot.slane %v4747, 4
  %v4749 = vadd.f32 %v4747, %v4748
  %v4750 = vrot.slane %v4749, 2
  %v4751 = vadd.f32 %v4749, %v4750
  %v4752 = vrot.slane %v4751, 1
  %v4753 = vadd.f32 %v4751, %v4752
  %v4754 = vsel %vm2398, %v4420, 0.0
  %v4755 = vrot.slane %v4754, 4
  %v4756 = vadd.f32 %v4754, %v4755
  %v4757 = vrot.slane %v4756, 2
  %v4758 = vadd.f32 %v4756, %v4757
  %v4759 = vrot.slane %v4758, 1
  %v4760 = vadd.f32 %v4758, %v4759
  %v4761 = vsel %vm2398, %v4421, 0.0
  %v4762 = vrot.slane %v4761, 4
  %v4763 = vadd.f32 %v4761, %v4762
  %v4764 = vrot.slane %v4763, 2
  %v4765 = vadd.f32 %v4763, %v4764
  %v4766 = vrot.slane %v4765, 1
  %v4767 = vadd.f32 %v4765, %v4766
  %v4768 = vsel %vm2398, %v4422, 0.0
  %v4769 = vrot.slane %v4768, 4
  %v4770 = vadd.f32 %v4768, %v4769
  %v4771 = vrot.slane %v4770, 2
  %v4772 = vadd.f32 %v4770, %v4771
  %v4773 = vrot.slane %v4772, 1
  %v4774 = vadd.f32 %v4772, %v4773
  %v4775 = vsel %vm2398, %v4423, 0.0
  %v4776 = vrot.slane %v4775, 4
  %v4777 = vadd.f32 %v4775, %v4776
  %v4778 = vrot.slane %v4777, 2
  %v4779 = vadd.f32 %v4777, %v4778
  %v4780 = vrot.slane %v4779, 1
  %v4781 = vadd.f32 %v4779, %v4780
  %v4782 = vsel %vm2398, %v4424, 0.0
  %v4783 = vrot.slane %v4782, 4
  %v4784 = vadd.f32 %v4782, %v4783
  %v4785 = vrot.slane %v4784, 2
  %v4786 = vadd.f32 %v4784, %v4785
  %v4787 = vrot.slane %v4786, 1
  %v4788 = vadd.f32 %v4786, %v4787
  %v4789 = vsel %vm2398, %v4425, 0.0
  %v4790 = vrot.slane %v4789, 4
  %v4791 = vadd.f32 %v4789, %v4790
  %v4792 = vrot.slane %v4791, 2
  %v4793 = vadd.f32 %v4791, %v4792
  %v4794 = vrot.slane %v4793, 1
  %v4795 = vadd.f32 %v4793, %v4794
  %v4796 = vsel %vm2398, %v4426, 0.0
  %v4797 = vrot.slane %v4796, 4
  %v4798 = vadd.f32 %v4796, %v4797
  %v4799 = vrot.slane %v4798, 2
  %v4800 = vadd.f32 %v4798, %v4799
  %v4801 = vrot.slane %v4800, 1
  %v4802 = vadd.f32 %v4800, %v4801
  %v4803 = vsel %vm2398, %v4427, 0.0
  %v4804 = vrot.slane %v4803, 4
  %v4805 = vadd.f32 %v4803, %v4804
  %v4806 = vrot.slane %v4805, 2
  %v4807 = vadd.f32 %v4805, %v4806
  %v4808 = vrot.slane %v4807, 1
  %v4809 = vadd.f32 %v4807, %v4808
  %v4810 = vsel %vm2398, %v4428, 0.0
  %v4811 = vrot.slane %v4810, 4
  %v4812 = vadd.f32 %v4810, %v4811
  %v4813 = vrot.slane %v4812, 2
  %v4814 = vadd.f32 %v4812, %v4813
  %v4815 = vrot.slane %v4814, 1
  %v4816 = vadd.f32 %v4814, %v4815
  %v4817 = vsel %vm2398, %v4429, 0.0
  %v4818 = vrot.slane %v4817, 4
  %v4819 = vadd.f32 %v4817, %v4818
  %v4820 = vrot.slane %v4819, 2
  %v4821 = vadd.f32 %v4819, %v4820
  %v4822 = vrot.slane %v4821, 1
  %v4823 = vadd.f32 %v4821, %v4822
  %v4824 = vsel %vm2398, %v4430, 0.0
  %v4825 = vrot.slane %v4824, 4
  %v4826 = vadd.f32 %v4824, %v4825
  %v4827 = vrot.slane %v4826, 2
  %v4828 = vadd.f32 %v4826, %v4827
  %v4829 = vrot.slane %v4828, 1
  %v4830 = vadd.f32 %v4828, %v4829
  %v4831 = vsel %vm2398, %v4431, 0.0
  %v4832 = vrot.slane %v4831, 4
  %v4833 = vadd.f32 %v4831, %v4832
  %v4834 = vrot.slane %v4833, 2
  %v4835 = vadd.f32 %v4833, %v4834
  %v4836 = vrot.slane %v4835, 1
  %v4837 = vadd.f32 %v4835, %v4836
  %v4838 = vsel %vm2398, %v4432, 0.0
  %v4839 = vrot.slane %v4838, 4
  %v4840 = vadd.f32 %v4838, %v4839
  %v4841 = vrot.slane %v4840, 2
  %v4842 = vadd.f32 %v4840, %v4841
  %v4843 = vrot.slane %v4842, 1
  %v4844 = vadd.f32 %v4842, %v4843
  %v4845 = vsel %vm2398, %v4433, 0.0
  %v4846 = vrot.slane %v4845, 4
  %v4847 = vadd.f32 %v4845, %v4846
  %v4848 = vrot.slane %v4847, 2
  %v4849 = vadd.f32 %v4847, %v4848
  %v4850 = vrot.slane %v4849, 1
  %v4851 = vadd.f32 %v4849, %v4850
  %v4852 = vsel %vm2398, %v4434, 0.0
  %v4853 = vrot.slane %v4852, 4
  %v4854 = vadd.f32 %v4852, %v4853
  %v4855 = vrot.slane %v4854, 2
  %v4856 = vadd.f32 %v4854, %v4855
  %v4857 = vrot.slane %v4856, 1
  %v4858 = vadd.f32 %v4856, %v4857
  %v4859 = vsel %vm2398, %v4435, 0.0
  %v4860 = vrot.slane %v4859, 4
  %v4861 = vadd.f32 %v4859, %v4860
  %v4862 = vrot.slane %v4861, 2
  %v4863 = vadd.f32 %v4861, %v4862
  %v4864 = vrot.slane %v4863, 1
  %v4865 = vadd.f32 %v4863, %v4864
  %v4866 = vsel %vm2398, %v4436, 0.0
  %v4867 = vrot.slane %v4866, 4
  %v4868 = vadd.f32 %v4866, %v4867
  %v4869 = vrot.slane %v4868, 2
  %v4870 = vadd.f32 %v4868, %v4869
  %v4871 = vrot.slane %v4870, 1
  %v4872 = vadd.f32 %v4870, %v4871
  %v4873 = vsel %vm2398, %v4437, 0.0
  %v4874 = vrot.slane %v4873, 4
  %v4875 = vadd.f32 %v4873, %v4874
  %v4876 = vrot.slane %v4875, 2
  %v4877 = vadd.f32 %v4875, %v4876
  %v4878 = vrot.slane %v4877, 1
  %v4879 = vadd.f32 %v4877, %v4878
  %v4880 = vsel %vm2398, %v4438, 0.0
  %v4881 = vrot.slane %v4880, 4
  %v4882 = vadd.f32 %v4880, %v4881
  %v4883 = vrot.slane %v4882, 2
  %v4884 = vadd.f32 %v4882, %v4883
  %v4885 = vrot.slane %v4884, 1
  %v4886 = vadd.f32 %v4884, %v4885
  %v4887 = vpack.c.bf16 %v4445, %v4445
  %v4888 = vpack.c.bf16 %v4452, %v4452
  %v4889 = vpack.c.bf16 %v4459, %v4459
  %v4890 = vpack.c.bf16 %v4466, %v4466
  %v4891 = vpack.c.bf16 %v4473, %v4473
  %v4892 = vpack.c.bf16 %v4480, %v4480
  %v4893 = vpack.c.bf16 %v4487, %v4487
  %v4894 = vpack.c.bf16 %v4494, %v4494
  %v4895 = vpack.c.bf16 %v4501, %v4501
  %v4896 = vpack.c.bf16 %v4508, %v4508
  %v4897 = vpack.c.bf16 %v4515, %v4515
  %v4898 = vpack.c.bf16 %v4522, %v4522
  %v4899 = vpack.c.bf16 %v4529, %v4529
  %v4900 = vpack.c.bf16 %v4536, %v4536
  %v4901 = vpack.c.bf16 %v4543, %v4543
  %v4902 = vpack.c.bf16 %v4550, %v4550
  %v4903 = vpack.c.bf16 %v4557, %v4557
  %v4904 = vpack.c.bf16 %v4564, %v4564
  %v4905 = vpack.c.bf16 %v4571, %v4571
  %v4906 = vpack.c.bf16 %v4578, %v4578
  %v4907 = vpack.c.bf16 %v4585, %v4585
  %v4908 = vpack.c.bf16 %v4592, %v4592
  %v4909 = vpack.c.bf16 %v4599, %v4599
  %v4910 = vpack.c.bf16 %v4606, %v4606
  %v4911 = vpack.c.bf16 %v4613, %v4613
  %v4912 = vpack.c.bf16 %v4620, %v4620
  %v4913 = vpack.c.bf16 %v4627, %v4627
  %v4914 = vpack.c.bf16 %v4634, %v4634
  %v4915 = vpack.c.bf16 %v4641, %v4641
  %v4916 = vpack.c.bf16 %v4648, %v4648
  %v4917 = vpack.c.bf16 %v4655, %v4655
  %v4918 = vpack.c.bf16 %v4662, %v4662
  %v4919 = vpack.c.bf16 %v4669, %v4669
  %v4920 = vpack.c.bf16 %v4676, %v4676
  %v4921 = vpack.c.bf16 %v4683, %v4683
  %v4922 = vpack.c.bf16 %v4690, %v4690
  %v4923 = vpack.c.bf16 %v4697, %v4697
  %v4924 = vpack.c.bf16 %v4704, %v4704
  %v4925 = vpack.c.bf16 %v4711, %v4711
  %v4926 = vpack.c.bf16 %v4718, %v4718
  %v4927 = vpack.c.bf16 %v4725, %v4725
  %v4928 = vpack.c.bf16 %v4732, %v4732
  %v4929 = vpack.c.bf16 %v4739, %v4739
  %v4930 = vpack.c.bf16 %v4746, %v4746
  %v4931 = vpack.c.bf16 %v4753, %v4753
  %v4932 = vpack.c.bf16 %v4760, %v4760
  %v4933 = vpack.c.bf16 %v4767, %v4767
  %v4934 = vpack.c.bf16 %v4774, %v4774
  %v4935 = vpack.c.bf16 %v4781, %v4781
  %v4936 = vpack.c.bf16 %v4788, %v4788
  %v4937 = vpack.c.bf16 %v4795, %v4795
  %v4938 = vpack.c.bf16 %v4802, %v4802
  %v4939 = vpack.c.bf16 %v4809, %v4809
  %v4940 = vpack.c.bf16 %v4816, %v4816
  %v4941 = vpack.c.bf16 %v4823, %v4823
  %v4942 = vpack.c.bf16 %v4830, %v4830
  %v4943 = vpack.c.bf16 %v4837, %v4837
  %v4944 = vpack.c.bf16 %v4844, %v4844
  %v4945 = vpack.c.bf16 %v4851, %v4851
  %v4946 = vpack.c.bf16 %v4858, %v4858
  %v4947 = vpack.c.bf16 %v4865, %v4865
  %v4948 = vpack.c.bf16 %v4872, %v4872
  %v4949 = vpack.c.bf16 %v4879, %v4879
  %v4950 = vpack.c.bf16 %v4886, %v4886
  %v4951 = vld [vmem:[%s16] sm:$0xf]
  %v4952 = vld [vmem:[%s16 + $0x4] sm:$0xf]
  %v4953 = vld [vmem:[%s16 + $0x8] sm:$0xf]
  %v4954 = vld [vmem:[%s16 + $0xc] sm:$0xf]
  %v4955 = vld [vmem:[%s17] sm:$0xf]
  %v4956 = vld [vmem:[%s17 + $0x4] sm:$0xf]
  %v4959 = vunpack.c.l.b16 %v4955
  %v4960 = vunpack.c.l.b16 %v4956
  %v4961 = vpack.c.b16 %v4960, %v4959
  %4963 = vmatpush.bf16.msra.mxu0 0
  %4964 = vmatpush.bf16.msra.mxu0 0
  %4965 = vmatpush.bf16.msra.mxu0 0
  %4966 = vmatpush.bf16.msra.mxu0 0
  %4967 = vmatpush.bf16.msra.mxu0 0
  %4968 = vmatpush.bf16.msra.mxu0 0
  %4969 = vmatpush.bf16.msra.mxu0 0
  %4970 = vmatpush.bf16.msra.mxu0 %v4961
  %4971 = vmatmul.bf16.gmra.mxu0 %v444
  %v4972 = vpop.f32.mrf.mxu0
  %v4973 = vadd.f32 0.0, %v4972
  %v4974 = vpop.f32.mrf.mxu0
  %v4975 = vadd.f32 0.0, %v4974
  %4976 = vmatmul.bf16.gmra.mxu0 %v447
  %v4977 = vpop.f32.mrf.mxu0
  %v4978 = vadd.f32 0.0, %v4977
  %v4979 = vpop.f32.mrf.mxu0
  %v4980 = vadd.f32 0.0, %v4979
  %4981 = vmatmul.bf16.gmra.mxu0 %v450
  %v4982 = vpop.f32.mrf.mxu0
  %v4983 = vadd.f32 0.0, %v4982
  %v4984 = vpop.f32.mrf.mxu0
  %v4985 = vadd.f32 0.0, %v4984
  %4986 = vmatmul.bf16.gmra.mxu0 %v453
  %v4987 = vpop.f32.mrf.mxu0
  %v4988 = vadd.f32 0.0, %v4987
  %v4989 = vpop.f32.mrf.mxu0
  %v4990 = vadd.f32 0.0, %v4989
  %4991 = vdwg.mxu0
  %v5056 = vunpack.c.l.b16 %v4887
  %v5057 = vunpack.c.l.b16 %v4888
  %v5058 = vunpack.c.l.b16 %v4889
  %v5059 = vunpack.c.l.b16 %v4890
  %v5060 = vunpack.c.l.b16 %v4891
  %v5061 = vunpack.c.l.b16 %v4892
  %v5062 = vunpack.c.l.b16 %v4893
  %v5063 = vunpack.c.l.b16 %v4894
  %v5064 = vunpack.c.l.b16 %v4895
  %v5065 = vunpack.c.l.b16 %v4896
  %v5066 = vunpack.c.l.b16 %v4897
  %v5067 = vunpack.c.l.b16 %v4898
  %v5068 = vunpack.c.l.b16 %v4899
  %v5069 = vunpack.c.l.b16 %v4900
  %v5070 = vunpack.c.l.b16 %v4901
  %v5071 = vunpack.c.l.b16 %v4902
  %v5072 = vunpack.c.l.b16 %v4903
  %v5073 = vunpack.c.l.b16 %v4904
  %v5074 = vunpack.c.l.b16 %v4905
  %v5075 = vunpack.c.l.b16 %v4906
  %v5076 = vunpack.c.l.b16 %v4907
  %v5077 = vunpack.c.l.b16 %v4908
  %v5078 = vunpack.c.l.b16 %v4909
  %v5079 = vunpack.c.l.b16 %v4910
  %v5080 = vunpack.c.l.b16 %v4911
  %v5081 = vunpack.c.l.b16 %v4912
  %v5082 = vunpack.c.l.b16 %v4913
  %v5083 = vunpack.c.l.b16 %v4914
  %v5084 = vunpack.c.l.b16 %v4915
  %v5085 = vunpack.c.l.b16 %v4916
  %v5086 = vunpack.c.l.b16 %v4917
  %v5087 = vunpack.c.l.b16 %v4918
  %v5088 = vunpack.c.l.b16 %v4919
  %v5089 = vunpack.c.l.b16 %v4920
  %v5090 = vunpack.c.l.b16 %v4921
  %v5091 = vunpack.c.l.b16 %v4922
  %v5092 = vunpack.c.l.b16 %v4923
  %v5093 = vunpack.c.l.b16 %v4924
  %v5094 = vunpack.c.l.b16 %v4925
  %v5095 = vunpack.c.l.b16 %v4926
  %v5096 = vunpack.c.l.b16 %v4927
  %v5097 = vunpack.c.l.b16 %v4928
  %v5098 = vunpack.c.l.b16 %v4929
  %v5099 = vunpack.c.l.b16 %v4930
  %v5100 = vunpack.c.l.b16 %v4931
  %v5101 = vunpack.c.l.b16 %v4932
  %v5102 = vunpack.c.l.b16 %v4933
  %v5103 = vunpack.c.l.b16 %v4934
  %v5104 = vunpack.c.l.b16 %v4935
  %v5105 = vunpack.c.l.b16 %v4936
  %v5106 = vunpack.c.l.b16 %v4937
  %v5107 = vunpack.c.l.b16 %v4938
  %v5108 = vunpack.c.l.b16 %v4939
  %v5109 = vunpack.c.l.b16 %v4940
  %v5110 = vunpack.c.l.b16 %v4941
  %v5111 = vunpack.c.l.b16 %v4942
  %v5112 = vunpack.c.l.b16 %v4943
  %v5113 = vunpack.c.l.b16 %v4944
  %v5114 = vunpack.c.l.b16 %v4945
  %v5115 = vunpack.c.l.b16 %v4946
  %v5116 = vunpack.c.l.b16 %v4947
  %v5117 = vunpack.c.l.b16 %v4948
  %v5118 = vunpack.c.l.b16 %v4949
  %v5119 = vunpack.c.l.b16 %v4950
  %vm5120 = vcmask 1041409
  %v5121 = vsel %vm5120, %v5057, %v5056
  %vm5122 = vcmask 1042434
  %v5123 = vsel %vm5122, %v5058, %v5121
  %vm5124 = vcmask 1043459
  %v5125 = vsel %vm5124, %v5059, %v5123
  %vm5126 = vcmask 1044484
  %v5127 = vsel %vm5126, %v5060, %v5125
  %vm5128 = vcmask 1045509
  %v5129 = vsel %vm5128, %v5061, %v5127
  %vm5130 = vcmask 1046534
  %v5131 = vsel %vm5130, %v5062, %v5129
  %vm5132 = vcmask 1047559
  %v5133 = vsel %vm5132, %v5063, %v5131
  %v5134 = vsel %vm5120, %v5065, %v5064
  %v5135 = vsel %vm5122, %v5066, %v5134
  %v5136 = vsel %vm5124, %v5067, %v5135
  %v5137 = vsel %vm5126, %v5068, %v5136
  %v5138 = vsel %vm5128, %v5069, %v5137
  %v5139 = vsel %vm5130, %v5070, %v5138
  %v5140 = vsel %vm5132, %v5071, %v5139
  %v5141 = vsel %vm5120, %v5073, %v5072
  %v5142 = vsel %vm5122, %v5074, %v5141
  %v5143 = vsel %vm5124, %v5075, %v5142
  %v5144 = vsel %vm5126, %v5076, %v5143
  %v5145 = vsel %vm5128, %v5077, %v5144
  %v5146 = vsel %vm5130, %v5078, %v5145
  %v5147 = vsel %vm5132, %v5079, %v5146
  %v5148 = vsel %vm5120, %v5081, %v5080
  %v5149 = vsel %vm5122, %v5082, %v5148
  %v5150 = vsel %vm5124, %v5083, %v5149
  %v5151 = vsel %vm5126, %v5084, %v5150
  %v5152 = vsel %vm5128, %v5085, %v5151
  %v5153 = vsel %vm5130, %v5086, %v5152
  %v5154 = vsel %vm5132, %v5087, %v5153
  %v5155 = vsel %vm5120, %v5089, %v5088
  %v5156 = vsel %vm5122, %v5090, %v5155
  %v5157 = vsel %vm5124, %v5091, %v5156
  %v5158 = vsel %vm5126, %v5092, %v5157
  %v5159 = vsel %vm5128, %v5093, %v5158
  %v5160 = vsel %vm5130, %v5094, %v5159
  %v5161 = vsel %vm5132, %v5095, %v5160
  %v5162 = vsel %vm5120, %v5097, %v5096
  %v5163 = vsel %vm5122, %v5098, %v5162
  %v5164 = vsel %vm5124, %v5099, %v5163
  %v5165 = vsel %vm5126, %v5100, %v5164
  %v5166 = vsel %vm5128, %v5101, %v5165
  %v5167 = vsel %vm5130, %v5102, %v5166
  %v5168 = vsel %vm5132, %v5103, %v5167
  %v5169 = vsel %vm5120, %v5105, %v5104
  %v5170 = vsel %vm5122, %v5106, %v5169
  %v5171 = vsel %vm5124, %v5107, %v5170
  %v5172 = vsel %vm5126, %v5108, %v5171
  %v5173 = vsel %vm5128, %v5109, %v5172
  %v5174 = vsel %vm5130, %v5110, %v5173
  %v5175 = vsel %vm5132, %v5111, %v5174
  %v5176 = vsel %vm5120, %v5113, %v5112
  %v5177 = vsel %vm5122, %v5114, %v5176
  %v5178 = vsel %vm5124, %v5115, %v5177
  %v5179 = vsel %vm5126, %v5116, %v5178
  %v5180 = vsel %vm5128, %v5117, %v5179
  %v5181 = vsel %vm5130, %v5118, %v5180
  %v5182 = vsel %vm5132, %v5119, %v5181
  %v5183 = vpack.c.b16 %v5140, %v5133
  %v5184 = vpack.c.b16 %v5154, %v5147
  %v5185 = vpack.c.b16 %v5168, %v5161
  %v5186 = vpack.c.b16 %v5182, %v5175
  %v5191 = vunpack.c.l.b16 %v4951
  %v5192 = vunpack.c.l.b16 %v4952
  %v5193 = vunpack.c.l.b16 %v4953
  %v5194 = vunpack.c.l.b16 %v4954
  %v5195 = vpack.c.b16 %v5192, %v5191
  %v5196 = vpack.c.b16 %v5194, %v5193
  %v5200 = vsel %vm2398, %v5183, 0
  %v5203 = vsel %vm2398, %v5184, 0
  %v5206 = vsel %vm2398, %v5185, 0
  %v5209 = vsel %vm2398, %v5186, 0
  %5211 = vmatpush.bf16.msra.mxu0 0
  %5212 = vmatpush.bf16.msra.mxu0 0
  %5213 = vmatpush.bf16.msra.mxu0 0
  %5214 = vmatpush.bf16.msra.mxu0 0
  %5215 = vmatpush.bf16.msra.mxu0 0
  %5216 = vmatpush.bf16.msra.mxu0 0
  %5217 = vmatpush.bf16.msra.mxu0 %v5196
  %5218 = vmatpush.bf16.msra.mxu0 %v5195
  %5219 = vmatmul.bf16.gmra.mxu0 %v5200
  %v5220 = vpop.f32.mrf.mxu0
  %v5221 = vadd.f32 %v4973, %v5220
  %v5222 = vpop.f32.mrf.mxu0
  %v5223 = vadd.f32 %v4975, %v5222
  %5224 = vmatmul.bf16.gmra.mxu0 %v5203
  %v5225 = vpop.f32.mrf.mxu0
  %v5226 = vadd.f32 %v4978, %v5225
  %v5227 = vpop.f32.mrf.mxu0
  %v5228 = vadd.f32 %v4980, %v5227
  %5229 = vmatmul.bf16.gmra.mxu0 %v5206
  %v5230 = vpop.f32.mrf.mxu0
  %v5231 = vadd.f32 %v4983, %v5230
  %v5232 = vpop.f32.mrf.mxu0
  %v5233 = vadd.f32 %v4985, %v5232
  %5234 = vmatmul.bf16.gmra.mxu0 %v5209
  %v5235 = vpop.f32.mrf.mxu0
  %v5236 = vadd.f32 %v4988, %v5235
  %v5237 = vpop.f32.mrf.mxu0
  %v5238 = vadd.f32 %v4990, %v5237
  %5239 = vdwg.mxu0
  %v5240 = vld [vmem:[%s18] sm:$0x1]
  %v5242 = vperm.slane %v5240, 0
  %v5244 = vadd.f32 %v5221, %v5242
  %v5245 = vadd.f32 %v5223, %v5242
  %v5246 = vadd.f32 %v5226, %v5242
  %v5247 = vadd.f32 %v5228, %v5242
  %v5248 = vadd.f32 %v5231, %v5242
  %v5249 = vadd.f32 %v5233, %v5242
  %v5250 = vadd.f32 %v5236, %v5242
  %v5251 = vadd.f32 %v5238, %v5242
  %v5252 = vmax.f32 %v5244, 0.0
  %v5253 = vmax.f32 %v5245, 0.0
  %v5254 = vmax.f32 %v5246, 0.0
  %v5255 = vmax.f32 %v5247, 0.0
  %v5256 = vmax.f32 %v5248, 0.0
  %v5257 = vmax.f32 %v5249, 0.0
  %v5258 = vmax.f32 %v5250, 0.0
  %v5259 = vmax.f32 %v5251, 0.0
  %v5260 = vsel %vm2398, %v5252, 0.0
  %5261 = vadd.xlane.f32.xlu0 %v5260
  %v5262 = vpop.xlane.xlu0 %5261
  %v5263 = vsel %vm2398, %v5253, 0.0
  %5264 = vadd.xlane.f32.xlu0 %v5263
  %v5265 = vpop.xlane.xlu0 %5264
  %v5266 = vsel %vm2398, %v5254, 0.0
  %5267 = vadd.xlane.f32.xlu0 %v5266
  %v5268 = vpop.xlane.xlu0 %5267
  %v5269 = vsel %vm2398, %v5255, 0.0
  %5270 = vadd.xlane.f32.xlu0 %v5269
  %v5271 = vpop.xlane.xlu0 %5270
  %v5272 = vsel %vm2398, %v5256, 0.0
  %5273 = vadd.xlane.f32.xlu0 %v5272
  %v5274 = vpop.xlane.xlu0 %5273
  %v5275 = vsel %vm2398, %v5257, 0.0
  %5276 = vadd.xlane.f32.xlu0 %v5275
  %v5277 = vpop.xlane.xlu0 %5276
  %v5278 = vsel %vm2398, %v5258, 0.0
  %5279 = vadd.xlane.f32.xlu0 %v5278
  %v5280 = vpop.xlane.xlu0 %5279
  %v5281 = vsel %vm2398, %v5259, 0.0
  %5282 = vadd.xlane.f32.xlu0 %v5281
  %v5283 = vpop.xlane.xlu0 %5282
  %v5284 = vrcp.pop 32.0
  %v5285 = vmul.f32 32.0, %v5284
  %v5286 = vsub.f32 1.0, %v5285
  %v5287 = vmul.f32 %v5284, %v5286
  %v5288 = vadd.f32 %v5284, %v5287
  %vm5289 = vweird.f32 %v5284
  %v5290 = vsel %vm5289, %v5284, %v5288
  %v5291 = vmul.f32 %v5262, %v5290
  %v5292 = vmul.f32 %v5265, %v5290
  %v5293 = vmul.f32 %v5268, %v5290
  %v5294 = vmul.f32 %v5271, %v5290
  %v5295 = vmul.f32 %v5274, %v5290
  %v5296 = vmul.f32 %v5277, %v5290
  %v5297 = vmul.f32 %v5280, %v5290
  %v5298 = vmul.f32 %v5283, %v5290
  %v5299 = vsub.f32 %v5252, %v5291
  %v5300 = vsub.f32 %v5253, %v5292
  %v5301 = vsub.f32 %v5254, %v5293
  %v5302 = vsub.f32 %v5255, %v5294
  %v5303 = vsub.f32 %v5256, %v5295
  %v5304 = vsub.f32 %v5257, %v5296
  %v5305 = vsub.f32 %v5258, %v5297
  %v5306 = vsub.f32 %v5259, %v5298
  %v5307 = vmul.f32 %v5299, %v5299
  %v5308 = vmul.f32 %v5300, %v5300
  %v5309 = vmul.f32 %v5301, %v5301
  %v5310 = vmul.f32 %v5302, %v5302
  %v5311 = vmul.f32 %v5303, %v5303
  %v5312 = vmul.f32 %v5304, %v5304
  %v5313 = vmul.f32 %v5305, %v5305
  %v5314 = vmul.f32 %v5306, %v5306
  %v5315 = vsel %vm2398, %v5307, 0.0
  %5316 = vadd.xlane.f32.xlu0 %v5315
  %v5317 = vpop.xlane.xlu0 %5316
  %v5318 = vsel %vm2398, %v5308, 0.0
  %5319 = vadd.xlane.f32.xlu0 %v5318
  %v5320 = vpop.xlane.xlu0 %5319
  %v5321 = vsel %vm2398, %v5309, 0.0
  %5322 = vadd.xlane.f32.xlu0 %v5321
  %v5323 = vpop.xlane.xlu0 %5322
  %v5324 = vsel %vm2398, %v5310, 0.0
  %5325 = vadd.xlane.f32.xlu0 %v5324
  %v5326 = vpop.xlane.xlu0 %5325
  %v5327 = vsel %vm2398, %v5311, 0.0
  %5328 = vadd.xlane.f32.xlu0 %v5327
  %v5329 = vpop.xlane.xlu0 %5328
  %v5330 = vsel %vm2398, %v5312, 0.0
  %5331 = vadd.xlane.f32.xlu0 %v5330
  %v5332 = vpop.xlane.xlu0 %5331
  %v5333 = vsel %vm2398, %v5313, 0.0
  %5334 = vadd.xlane.f32.xlu0 %v5333
  %v5335 = vpop.xlane.xlu0 %5334
  %v5336 = vsel %vm2398, %v5314, 0.0
  %5337 = vadd.xlane.f32.xlu0 %v5336
  %v5338 = vpop.xlane.xlu0 %5337
  %v5339 = vmul.f32 %v5317, %v5290
  %v5340 = vmul.f32 %v5320, %v5290
  %v5341 = vmul.f32 %v5323, %v5290
  %v5342 = vmul.f32 %v5326, %v5290
  %v5343 = vmul.f32 %v5329, %v5290
  %v5344 = vmul.f32 %v5332, %v5290
  %v5345 = vmul.f32 %v5335, %v5290
  %v5346 = vmul.f32 %v5338, %v5290
  %v5347 = vadd.f32 %v5339, 1e-05
  %v5348 = vadd.f32 %v5340, 1e-05
  %v5349 = vadd.f32 %v5341, 1e-05
  %v5350 = vadd.f32 %v5342, 1e-05
  %v5351 = vadd.f32 %v5343, 1e-05
  %v5352 = vadd.f32 %v5344, 1e-05
  %v5353 = vadd.f32 %v5345, 1e-05
  %v5354 = vadd.f32 %v5346, 1e-05
  %v5355 = vrsqrt.pop %v5347
  %v5356 = vmul.f32 %v5355, %v5347
  %v5357 = vmul.f32 %v5356, %v5355
  %v5358 = vmul.f32 0.5, %v5357
  %v5359 = vsub.f32 1.5, %v5358
  %v5360 = vmul.f32 %v5355, %v5359
  %vm5361 = vweird.f32 %v5347
  %vm5362 = vweird.f32 %v5355
  %vm5363 = vmor %vm5361, %vm5362
  %v5364 = vsel %vm5363, %v5355, %v5360
  %v5365 = vrsqrt.pop %v5348
  %v5366 = vmul.f32 %v5365, %v5348
  %v5367 = vmul.f32 %v5366, %v5365
  %v5368 = vmul.f32 0.5, %v5367
  %v5369 = vsub.f32 1.5, %v5368
  %v5370 = vmul.f32 %v5365, %v5369
  %vm5371 = vweird.f32 %v5348
  %vm5372 = vweird.f32 %v5365
  %vm5373 = vmor %vm5371, %vm5372
  %v5374 = vsel %vm5373, %v5365, %v5370
  %v5375 = vrsqrt.pop %v5349
  %v5376 = vmul.f32 %v5375, %v5349
  %v5377 = vmul.f32 %v5376, %v5375
  %v5378 = vmul.f32 0.5, %v5377
  %v5379 = vsub.f32 1.5, %v5378
  %v5380 = vmul.f32 %v5375, %v5379
  %vm5381 = vweird.f32 %v5349
  %vm5382 = vweird.f32 %v5375
  %vm5383 = vmor %vm5381, %vm5382
  %v5384 = vsel %vm5383, %v5375, %v5380
  %v5385 = vrsqrt.pop %v5350
  %v5386 = vmul.f32 %v5385, %v5350
  %v5387 = vmul.f32 %v5386, %v5385
  %v5388 = vmul.f32 0.5, %v5387
  %v5389 = vsub.f32 1.5, %v5388
  %v5390 = vmul.f32 %v5385, %v5389
  %vm5391 = vweird.f32 %v5350
  %vm5392 = vweird.f32 %v5385
  %vm5393 = vmor %vm5391, %vm5392
  %v5394 = vsel %vm5393, %v5385, %v5390
  %v5395 = vrsqrt.pop %v5351
  %v5396 = vmul.f32 %v5395, %v5351
  %v5397 = vmul.f32 %v5396, %v5395
  %v5398 = vmul.f32 0.5, %v5397
  %v5399 = vsub.f32 1.5, %v5398
  %v5400 = vmul.f32 %v5395, %v5399
  %vm5401 = vweird.f32 %v5351
  %vm5402 = vweird.f32 %v5395
  %vm5403 = vmor %vm5401, %vm5402
  %v5404 = vsel %vm5403, %v5395, %v5400
  %v5405 = vrsqrt.pop %v5352
  %v5406 = vmul.f32 %v5405, %v5352
  %v5407 = vmul.f32 %v5406, %v5405
  %v5408 = vmul.f32 0.5, %v5407
  %v5409 = vsub.f32 1.5, %v5408
  %v5410 = vmul.f32 %v5405, %v5409
  %vm5411 = vweird.f32 %v5352
  %vm5412 = vweird.f32 %v5405
  %vm5413 = vmor %vm5411, %vm5412
  %v5414 = vsel %vm5413, %v5405, %v5410
  %v5415 = vrsqrt.pop %v5353
  %v5416 = vmul.f32 %v5415, %v5353
  %v5417 = vmul.f32 %v5416, %v5415
  %v5418 = vmul.f32 0.5, %v5417
  %v5419 = vsub.f32 1.5, %v5418
  %v5420 = vmul.f32 %v5415, %v5419
  %vm5421 = vweird.f32 %v5353
  %vm5422 = vweird.f32 %v5415
  %vm5423 = vmor %vm5421, %vm5422
  %v5424 = vsel %vm5423, %v5415, %v5420
  %v5425 = vrsqrt.pop %v5354
  %v5426 = vmul.f32 %v5425, %v5354
  %v5427 = vmul.f32 %v5426, %v5425
  %v5428 = vmul.f32 0.5, %v5427
  %v5429 = vsub.f32 1.5, %v5428
  %v5430 = vmul.f32 %v5425, %v5429
  %vm5431 = vweird.f32 %v5354
  %vm5432 = vweird.f32 %v5425
  %vm5433 = vmor %vm5431, %vm5432
  %v5434 = vsel %vm5433, %v5425, %v5430
  %v5435 = vmul.f32 %v5299, %v5364
  %v5436 = vmul.f32 %v5300, %v5374
  %v5437 = vmul.f32 %v5301, %v5384
  %v5438 = vmul.f32 %v5302, %v5394
  %v5439 = vmul.f32 %v5303, %v5404
  %v5440 = vmul.f32 %v5304, %v5414
  %v5441 = vmul.f32 %v5305, %v5424
  %v5442 = vmul.f32 %v5306, %v5434
  %v5443 = vld [vmem:[%s19] sm:$0x1]
  %v5445 = vperm.slane %v5443, 0
  %v5447 = vmul.f32 %v5435, %v5445
  %v5448 = vmul.f32 %v5436, %v5445
  %v5449 = vmul.f32 %v5437, %v5445
  %v5450 = vmul.f32 %v5438, %v5445
  %v5451 = vmul.f32 %v5439, %v5445
  %v5452 = vmul.f32 %v5440, %v5445
  %v5453 = vmul.f32 %v5441, %v5445
  %v5454 = vmul.f32 %v5442, %v5445
  %v5455 = vld [vmem:[%s20] sm:$0x1]
  %v5457 = vperm.slane %v5455, 0
  %v5459 = vadd.f32 %v5447, %v5457
  %v5460 = vadd.f32 %v5448, %v5457
  %v5461 = vadd.f32 %v5449, %v5457
  %v5462 = vadd.f32 %v5450, %v5457
  %v5463 = vadd.f32 %v5451, %v5457
  %v5464 = vadd.f32 %v5452, %v5457
  %v5465 = vadd.f32 %v5453, %v5457
  %v5466 = vadd.f32 %v5454, %v5457
  %5467 = vst.msk [vmem:[%s23] sm:$0xff] %vm2398, %v5459
  %5468 = vst.msk [vmem:[%s23 + $0x8] sm:$0xff] %vm2398, %v5460
  %5469 = vst.msk [vmem:[%s23 + $0x10] sm:$0xff] %vm2398, %v5461
  %5470 = vst.msk [vmem:[%s23 + $0x18] sm:$0xff] %vm2398, %v5462
  %5471 = vst.msk [vmem:[%s23 + $0x20] sm:$0xff] %vm2398, %v5463
  %5472 = vst.msk [vmem:[%s23 + $0x28] sm:$0xff] %vm2398, %v5464
  %5473 = vst.msk [vmem:[%s23 + $0x30] sm:$0xff] %vm2398, %v5465
  %5474 = vst.msk [vmem:[%s23 + $0x38] sm:$0xff] %vm2398, %v5466
  // Predicated region
  $region94: #{tpu_custom_call.1} parent=0 // pred_check
    _
  $region95: #{tpu_custom_call.1} parent=0 // pred_check_branch
    %5476 = sbr.rel (0) target = $region97
  $region96: #{tpu_custom_call.1} parent=0 // pred_region
    _
  $region97: #{tpu_custom_call.1} parent=0 // pred_fallthru
    _
  // Predicated region
  $region98: #{tpu_custom_call.1} parent=0 // pred_check
    _
  $region99: #{tpu_custom_call.1} parent=0 // pred_check_branch
    %5478 = sbr.rel (0) target = $region101
  $region100: #{tpu_custom_call.1} parent=0 // pred_region
    _
  $region101: #{tpu_custom_call.1} parent=0 // pred_fallthru
    _

</llo_original>
